<compile_context>
chip_gen: v6e
topology: v6e:2x2x1
jax: 0.10.0
libtpu: 0.0.40
codegen_flags: <defaults>
</compile_context>

<pallas_src>
import jax
import jax.numpy as jnp
from jax.experimental import pallas as pl
from jax.experimental.pallas import tpu as pltpu

# ---------------- model config (small, consistent with the module) ----------
B = 2               # batch
C_IN = 4            # input channels
IMG = 16            # image height/width
PATCH = 4           # patch size
N_PATCH = (IMG // PATCH) ** 2          # 16 patch tokens
EMBED = 32          # embed_dim
HEADS = 4
HEAD_DIM = EMBED // HEADS              # 8
MLP_HIDDEN = 4 * EMBED                 # 128
DEPTH = 2           # number of transformer blocks
NUM_CLASSES = 8
NUM_PREFIX = 1      # cls token only (num_reg_tokens = 0)
T = N_PATCH + NUM_PREFIX               # 17 tokens
KP = C_IN * PATCH * PATCH              # 64 features per patch
LN_EPS = 1e-6
INV_SQRT2 = 0.7071067811865476


# ---------------- small helpers (used in-kernel and in the reference) --------
def _ln(x, g, b, eps=LN_EPS):
    mu = jnp.mean(x, axis=-1, keepdims=True)
    var = jnp.mean(jnp.square(x - mu), axis=-1, keepdims=True)
    return (x - mu) * jax.lax.rsqrt(var + eps) * g + b


def _gelu(x):
    # exact (erf) GELU, matching nn.GELU default
    return 0.5 * x * (1.0 + jax.lax.erf(x * INV_SQRT2))


# ---------------- fused forward kernel ---------------------------------------
def fused_vit_kernel(
    patches_ref, mask_ref,
    pw_ref, tb_ref,
    ln1g_ref, ln1b_ref, qkvw_ref, qkvb_ref, projw_ref, projb_ref,
    ln2g_ref, ln2b_ref, fc1w_ref, fc1b_ref, fc2w_ref, fc2b_ref,
    ng_ref, nb_ref, fng_ref, fnb_ref, hw_ref, hb_ref,
    o_ref,
):
    # Static loop over the (tiny) batch: one grid step total, so per-step
    # pipeline overhead is paid once on single-TC chips.
    for b in range(B):
        # ---- patch embedding (conv with stride==kernel == one matmul) ----
        # row 0 of patches is a zero row for the cls slot; tok_bias already
        # carries cls_token+pos_embed (row 0) and patch_b+pos_embed (rows 1..).
        x = (jnp.dot(patches_ref[b], pw_ref[...],
                     preferred_element_type=jnp.float32) + tb_ref[...])     # (T, D)
        # pos_drop / norm_pre are identity at inference

        for d in range(DEPTH):                                              # static unroll
            # -------- attention --------
            h = _ln(x, ln1g_ref[d], ln1b_ref[d])
            qkv = (jnp.dot(h, qkvw_ref[d], preferred_element_type=jnp.float32)
                   + qkvb_ref[d])                                           # (T, 3D)
            # per-head scores (attention scale pre-folded into the Q weights)
            scores = []
            for hd in range(HEADS):
                lo = hd * HEAD_DIM
                q = qkv[:, lo:lo + HEAD_DIM]
                k = qkv[:, EMBED + lo:EMBED + lo + HEAD_DIM]
                scores.append(jax.lax.dot_general(
                    q, k, (((1,), (1,)), ((), ())),
                    preferred_element_type=jnp.float32))                    # (T, T)
            # batched softmax over all heads at once
            s = jnp.stack(scores, axis=0)                                   # (H, T, T)
            s = s - jnp.max(s, axis=-1, keepdims=True)
            p = jnp.exp(s)
            p = p * pl.reciprocal(jnp.sum(p, axis=-1, keepdims=True), approx=True)
            # per-head PV accumulated through reshaped proj_w (no lane concat)
            attn = projb_ref[d]                                             # (1, D) -> broadcast
            for hd in range(HEADS):
                lo = 2 * EMBED + hd * HEAD_DIM
                v = qkv[:, lo:lo + HEAD_DIM]
                pv = jnp.dot(p[hd], v, preferred_element_type=jnp.float32)  # (T, HD)
                attn = attn + jnp.dot(pv, projw_ref[d, hd],
                                      preferred_element_type=jnp.float32)   # (T, D)
            x = x + attn

            # -------- MLP --------
            h2 = _ln(x, ln2g_ref[d], ln2b_ref[d])
            m = (jnp.dot(h2, fc1w_ref[d], preferred_element_type=jnp.float32)
                 + fc1b_ref[d])
            m = _gelu(m)
            m = (jnp.dot(m, fc2w_ref[d], preferred_element_type=jnp.float32)
                 + fc2b_ref[d])
            x = x + m

        # ---- head: final norm -> late mask + mean-pool (one matvec) ----
        xn = _ln(x, ng_ref[...], nb_ref[...])                               # (T, D)
        # mask_ref[b] is (1, T): zero on prefix, kept patches = 1/N_PATCH, so
        # this single dot == (x[:, prefix:] * mask).mean(dim=1) of the reference.
        pooled = jnp.dot(mask_ref[b], xn, preferred_element_type=jnp.float32)  # (1, D)
        pooled = _ln(pooled, fng_ref[...], fnb_ref[...])                    # fc_norm
        o_ref[b] = (jnp.dot(pooled, hw_ref[...], preferred_element_type=jnp.float32)
                    + hb_ref[...])                                          # (1, NC)


# ---------------- plain-JAX glue ---------------------------------------------
def _patchify(x_nchw):
    # (B, C, H, W) -> (B, N_PATCH, C*p*p); row-major over (Hp, Wp), matching
    # timm's conv patch-embed + flatten(2).transpose(1, 2)
    hp = IMG // PATCH
    x = x_nchw.reshape(B, C_IN, hp, PATCH, hp, PATCH)
    x = x.transpose(0, 2, 4, 1, 3, 5)               # (B, Hp, Wp, C, p, p)
    return x.reshape(B, N_PATCH, KP)


def extract_patches_padded(x_nchw):
    # prepend a zero row for the cls slot -> (B, T, KP); no in-kernel concat needed
    patches = _patchify(x_nchw)
    zero = jnp.zeros((B, NUM_PREFIX, KP), jnp.float32)
    return jnp.concatenate([zero, patches], axis=1)


def prepare_kernel_params(p):
    """One-time weight transforms (done on concrete arrays, outside the kernel)."""
    scale = HEAD_DIM ** -0.5
    kp = dict(p)
    # fold attention scale into the Q portion of the fused QKV projection
    kp["qkv_w"] = p["qkv_w"].at[:, :, :EMBED].multiply(scale)
    kp["qkv_b"] = p["qkv_b"].at[:, :, :EMBED].multiply(scale)
    # head-major reshape of the output projection for per-head accumulation
    kp["proj_w"] = p["proj_w"].reshape(DEPTH, HEADS, HEAD_DIM, EMBED)
    # combined per-token bias: row 0 = cls_token + pos_embed[0];
    # rows 1.. = patch_b + pos_embed[1..]
    kp["tok_bias"] = p["pos_embed"][0] + jnp.concatenate(
        [p["cls_token"][0],
         jnp.broadcast_to(p["patch_b"], (N_PATCH, EMBED))], axis=0)
    return kp


def late_mask_vit_forward(x_img, attn_mask_per_img, kp):
    patches = extract_patches_padded(x_img)                       # (B, T, KP)
    # prefix tokens get weight 0; the 1/N_PATCH mean (over ALL patch tokens,
    # exactly as x.mean(dim=1) in the reference) is folded into the mask
    mask = jnp.concatenate(
        [jnp.zeros((B, NUM_PREFIX), jnp.float32),
         attn_mask_per_img.astype(jnp.float32)], axis=1) * (1.0 / N_PATCH)
    mask = mask.reshape(B, 1, T)

    args = [
        patches, mask,
        kp["patch_w"], kp["tok_bias"],
        kp["ln1_g"], kp["ln1_b"], kp["qkv_w"], kp["qkv_b"],
        kp["proj_w"], kp["proj_b"],
        kp["ln2_g"], kp["ln2_b"], kp["fc1_w"], kp["fc1_b"],
        kp["fc2_w"], kp["fc2_b"],
        kp["norm_g"], kp["norm_b"], kp["fcn_g"], kp["fcn_b"],
        kp["head_w"], kp["head_b"],
    ]
    # Single grid step: everything is one full VMEM-resident block.
    # (On v7x one may prefer grid=(B,) + dimension_semantics=("parallel",) to
    #  split the batch across the two TensorCores -- benchmark before switching.)
    in_specs = [
        pl.BlockSpec(a.shape, (lambda i, nd=a.ndim: (0,) * nd)) for a in args
    ]
    out = pl.pallas_call(
        fused_vit_kernel,
        out_shape=jax.ShapeDtypeStruct((B, 1, NUM_CLASSES), jnp.float32),
        grid=(1,),
        in_specs=in_specs,
        out_specs=pl.BlockSpec((B, 1, NUM_CLASSES), lambda i: (0, 0, 0)),
        compiler_params=pltpu.CompilerParams(
            dimension_semantics=("arbitrary",)),
    )(*args)
    return out.reshape(B, NUM_CLASSES)


# ---------------- pure-JAX reference (original, un-folded semantics) ---------
def reference_forward(p, x_img, attn_mask):
    patches = _patchify(x_img)                                       # (B, Np, KP)
    tok = jnp.einsum("bnk,kd->bnd", patches, p["patch_w"]) + p["patch_b"]
    cls = jnp.broadcast_to(p["cls_token"], (B, 1, EMBED))
    x = jnp.concatenate([cls, tok], axis=1) + p["pos_embed"]
    scale = HEAD_DIM ** -0.5
    for d in range(DEPTH):
        h = _ln(x, p["ln1_g"][d], p["ln1_b"][d])
        qkv = jnp.einsum("btd,de->bte", h, p["qkv_w"][d]) + p["qkv_b"][d]
        q, k, v = jnp.split(qkv, 3, axis=-1)
        q = q.reshape(B, T, HEADS, HEAD_DIM).transpose(0, 2, 1, 3)
        k = k.reshape(B, T, HEADS, HEAD_DIM).transpose(0, 2, 1, 3)
        v = v.reshape(B, T, HEADS, HEAD_DIM).transpose(0, 2, 1, 3)
        s = jnp.einsum("bhqd,bhkd->bhqk", q, k) * scale
        a = jax.nn.softmax(s, axis=-1)
        o = jnp.einsum("bhqk,bhkd->bhqd", a, v).transpose(0, 2, 1, 3).reshape(B, T, EMBED)
        x = x + jnp.einsum("btd,de->bte", o, p["proj_w"][d]) + p["proj_b"][d]
        h2 = _ln(x, p["ln2_g"][d], p["ln2_b"][d])
        m = _gelu(jnp.einsum("btd,dh->bth", h2, p["fc1_w"][d]) + p["fc1_b"][d])
        x = x + jnp.einsum("bth,hd->btd", m, p["fc2_w"][d]) + p["fc2_b"][d]
    x = _ln(x, p["norm_g"], p["norm_b"])
    x = x[:, NUM_PREFIX:, :] * attn_mask[:, :, None]
    x = x.mean(axis=1)
    x = _ln(x, p["fcn_g"], p["fcn_b"])
    return x @ p["head_w"] + p["head_b"]


# ---------------- deterministic synthetic parameters -------------------------
def init_params(key):
    keys = iter(jax.random.split(key, 32))

    def nrm(shape, scale=0.02):
        return (scale * jax.random.normal(next(keys), shape)).astype(jnp.float32)

    ones = lambda s: jnp.ones(s, jnp.float32)
    zeros = lambda s: jnp.zeros(s, jnp.float32)

    return {
        "patch_w": nrm((KP, EMBED)),                 # conv weight as (K, D)
        "patch_b": nrm((1, EMBED)),
        "cls_token": nrm((1, 1, EMBED)),
        "pos_embed": nrm((1, T, EMBED)),
        "ln1_g": ones((DEPTH, 1, EMBED)), "ln1_b": zeros((DEPTH, 1, EMBED)),
        "qkv_w": nrm((DEPTH, EMBED, 3 * EMBED)),     # fused QKV
        "qkv_b": nrm((DEPTH, 1, 3 * EMBED)),
        "proj_w": nrm((DEPTH, EMBED, EMBED)),
        "proj_b": nrm((DEPTH, 1, EMBED)),
        "ln2_g": ones((DEPTH, 1, EMBED)), "ln2_b": zeros((DEPTH, 1, EMBED)),
        "fc1_w": nrm((DEPTH, EMBED, MLP_HIDDEN)),
        "fc1_b": nrm((DEPTH, 1, MLP_HIDDEN)),
        "fc2_w": nrm((DEPTH, MLP_HIDDEN, EMBED)),
        "fc2_b": nrm((DEPTH, 1, EMBED)),
        "norm_g": ones((1, EMBED)), "norm_b": zeros((1, EMBED)),
        "fcn_g": ones((1, EMBED)), "fcn_b": zeros((1, EMBED)),   # fc_norm (LayerNorm)
        "head_w": nrm((EMBED, NUM_CLASSES)),
        "head_b": zeros((1, NUM_CLASSES)),
    }


# ---------------- main --------------------------------------------------------
if __name__ == "__main__":
    key = jax.random.PRNGKey(0)
    k_param, k_img, k_mask = jax.random.split(key, 3)

    raw_params = init_params(k_param)
    kernel_params = prepare_kernel_params(raw_params)   # one-off weight folding

    x_img = jax.random.normal(k_img, (B, C_IN, IMG, IMG), jnp.float32)   # NCHW
    attn_mask = jax.random.bernoulli(k_mask, 0.7, (B, N_PATCH)).astype(jnp.float32)

    fwd = jax.jit(late_mask_vit_forward)
    logits = fwd(x_img, attn_mask, kernel_params)
    jax.block_until_ready(logits)

    ref = reference_forward(raw_params, x_img, attn_mask)

    assert logits.shape == (B, NUM_CLASSES)
    assert bool(jnp.all(jnp.isfinite(logits)))
    # loose tolerance: approx EUP reciprocal in softmax + MXU accumulation order
    assert bool(jnp.allclose(logits, ref, atol=2e-2, rtol=2e-2)), \
        float(jnp.max(jnp.abs(logits - ref)))
    print("KERNEL_OK")
</pallas_src>

<mosaic_0001>
module attributes {stable_mosaic.version = 11 : i64} {
  func.func @fused_vit_kernel(%arg0: i32, %arg1: memref<2x17x64xf32, #tpu.memory_space<vmem>>, %arg2: memref<2x1x17xf32, #tpu.memory_space<vmem>>, %arg3: memref<64x32xf32, #tpu.memory_space<vmem>>, %arg4: memref<17x32xf32, #tpu.memory_space<vmem>>, %arg5: memref<2x1x32xf32, #tpu.memory_space<vmem>>, %arg6: memref<2x1x32xf32, #tpu.memory_space<vmem>>, %arg7: memref<2x32x96xf32, #tpu.memory_space<vmem>>, %arg8: memref<2x1x96xf32, #tpu.memory_space<vmem>>, %arg9: memref<2x4x8x32xf32, #tpu.memory_space<vmem>>, %arg10: memref<2x1x32xf32, #tpu.memory_space<vmem>>, %arg11: memref<2x1x32xf32, #tpu.memory_space<vmem>>, %arg12: memref<2x1x32xf32, #tpu.memory_space<vmem>>, %arg13: memref<2x32x128xf32, #tpu.memory_space<vmem>>, %arg14: memref<2x1x128xf32, #tpu.memory_space<vmem>>, %arg15: memref<2x128x32xf32, #tpu.memory_space<vmem>>, %arg16: memref<2x1x32xf32, #tpu.memory_space<vmem>>, %arg17: memref<1x32xf32, #tpu.memory_space<vmem>>, %arg18: memref<1x32xf32, #tpu.memory_space<vmem>>, %arg19: memref<1x32xf32, #tpu.memory_space<vmem>>, %arg20: memref<1x32xf32, #tpu.memory_space<vmem>>, %arg21: memref<32x8xf32, #tpu.memory_space<vmem>>, %arg22: memref<1x8xf32, #tpu.memory_space<vmem>>, %arg23: memref<2x1x8xf32, #tpu.memory_space<vmem>>) attributes {dimension_semantics = [#tpu.dimension_semantics<arbitrary>], iteration_bounds = array<i64: 1>, scalar_prefetch = 0 : i64, scratch_operands = 0 : i64, tpu.core_type = #tpu.core_type<tc>, window_params = [{pipeline_mode = #tpu.pipeline_mode<synchronous>, transform_indices = @transform_0, window_bounds = array<i64: 2, 17, 64>}, {pipeline_mode = #tpu.pipeline_mode<synchronous>, transform_indices = @transform_1, window_bounds = array<i64: 2, 1, 17>}, {pipeline_mode = #tpu.pipeline_mode<synchronous>, transform_indices = @transform_2, window_bounds = array<i64: 64, 32>}, {pipeline_mode = #tpu.pipeline_mode<synchronous>, transform_indices = @transform_3, window_bounds = array<i64: 17, 32>}, {pipeline_mode = #tpu.pipeline_mode<synchronous>, transform_indices = @transform_4, window_bounds = array<i64: 2, 1, 32>}, {pipeline_mode = #tpu.pipeline_mode<synchronous>, transform_indices = @transform_5, window_bounds = array<i64: 2, 1, 32>}, {pipeline_mode = #tpu.pipeline_mode<synchronous>, transform_indices = @transform_6, window_bounds = array<i64: 2, 32, 96>}, {pipeline_mode = #tpu.pipeline_mode<synchronous>, transform_indices = @transform_7, window_bounds = array<i64: 2, 1, 96>}, {pipeline_mode = #tpu.pipeline_mode<synchronous>, transform_indices = @transform_8, window_bounds = array<i64: 2, 4, 8, 32>}, {pipeline_mode = #tpu.pipeline_mode<synchronous>, transform_indices = @transform_9, window_bounds = array<i64: 2, 1, 32>}, {pipeline_mode = #tpu.pipeline_mode<synchronous>, transform_indices = @transform_10, window_bounds = array<i64: 2, 1, 32>}, {pipeline_mode = #tpu.pipeline_mode<synchronous>, transform_indices = @transform_11, window_bounds = array<i64: 2, 1, 32>}, {pipeline_mode = #tpu.pipeline_mode<synchronous>, transform_indices = @transform_12, window_bounds = array<i64: 2, 32, 128>}, {pipeline_mode = #tpu.pipeline_mode<synchronous>, transform_indices = @transform_13, window_bounds = array<i64: 2, 1, 128>}, {pipeline_mode = #tpu.pipeline_mode<synchronous>, transform_indices = @transform_14, window_bounds = array<i64: 2, 128, 32>}, {pipeline_mode = #tpu.pipeline_mode<synchronous>, transform_indices = @transform_15, window_bounds = array<i64: 2, 1, 32>}, {pipeline_mode = #tpu.pipeline_mode<synchronous>, transform_indices = @transform_16, window_bounds = array<i64: 1, 32>}, {pipeline_mode = #tpu.pipeline_mode<synchronous>, transform_indices = @transform_17, window_bounds = array<i64: 1, 32>}, {pipeline_mode = #tpu.pipeline_mode<synchronous>, transform_indices = @transform_18, window_bounds = array<i64: 1, 32>}, {pipeline_mode = #tpu.pipeline_mode<synchronous>, transform_indices = @transform_19, window_bounds = array<i64: 1, 32>}, {pipeline_mode = #tpu.pipeline_mode<synchronous>, transform_indices = @transform_20, window_bounds = array<i64: 32, 8>}, {pipeline_mode = #tpu.pipeline_mode<synchronous>, transform_indices = @transform_21, window_bounds = array<i64: 1, 8>}, {pipeline_mode = #tpu.pipeline_mode<synchronous>, transform_indices = @transform_22, window_bounds = array<i64: 2, 1, 8>}]} {
    %c0 = arith.constant 0 : index
    %c0_0 = arith.constant 0 : index
    %c0_1 = arith.constant 0 : index
    %0 = vector.load %arg1[%c0, %c0_0, %c0_1] : memref<2x17x64xf32, #tpu.memory_space<vmem>>, vector<1x17x64xf32>
    %1 = vector.shape_cast %0 : vector<1x17x64xf32> to vector<17x64xf32>
    %c0_2 = arith.constant 0 : index
    %c0_3 = arith.constant 0 : index
    %2 = vector.load %arg3[%c0_2, %c0_3] : memref<64x32xf32, #tpu.memory_space<vmem>>, vector<64x32xf32>
    %cst = arith.constant dense<0.000000e+00> : vector<17x32xf32>
    %3 = tpu.matmul %1, %2, %cst {dimension_numbers = #tpu.dot_dimension_numbers<[1], [0], [0], [1], [0, 0, 1, 1], [], []>} : vector<17x64xf32>, vector<64x32xf32>, vector<17x32xf32> -> vector<17x32xf32>
    %c0_4 = arith.constant 0 : index
    %c0_5 = arith.constant 0 : index
    %4 = vector.load %arg4[%c0_4, %c0_5] : memref<17x32xf32, #tpu.memory_space<vmem>>, vector<17x32xf32>
    %5 = arith.addf %3, %4 : vector<17x32xf32>
    %c0_6 = arith.constant 0 : index
    %c0_7 = arith.constant 0 : index
    %c0_8 = arith.constant 0 : index
    %6 = vector.load %arg5[%c0_6, %c0_7, %c0_8] : memref<2x1x32xf32, #tpu.memory_space<vmem>>, vector<1x1x32xf32>
    %7 = vector.shape_cast %6 : vector<1x1x32xf32> to vector<1x32xf32>
    %c0_9 = arith.constant 0 : index
    %c0_10 = arith.constant 0 : index
    %c0_11 = arith.constant 0 : index
    %8 = vector.load %arg6[%c0_9, %c0_10, %c0_11] : memref<2x1x32xf32, #tpu.memory_space<vmem>>, vector<1x1x32xf32>
    %9 = vector.shape_cast %8 : vector<1x1x32xf32> to vector<1x32xf32>
    %cst_12 = arith.constant dense<0.000000e+00> : vector<17xf32>
    %10 = vector.multi_reduction <add>, %5, %cst_12 [1] : vector<17x32xf32> to vector<17xf32>
    %11 = vector.shape_cast %10 : vector<17xf32> to vector<17x1xf32>
    %cst_13 = arith.constant 3.200000e+01 : f32
    %12 = vector.broadcast %cst_13 : f32 to vector<17x1xf32>
    %13 = arith.divf %11, %12 : vector<17x1xf32>
    %14 = vector.broadcast %13 : vector<17x1xf32> to vector<17x32xf32>
    %15 = arith.subf %5, %14 : vector<17x32xf32>
    %16 = arith.mulf %15, %15 : vector<17x32xf32>
    %cst_14 = arith.constant dense<0.000000e+00> : vector<17xf32>
    %17 = vector.multi_reduction <add>, %16, %cst_14 [1] : vector<17x32xf32> to vector<17xf32>
    %18 = vector.shape_cast %17 : vector<17xf32> to vector<17x1xf32>
    %cst_15 = arith.constant 3.200000e+01 : f32
    %19 = vector.broadcast %cst_15 : f32 to vector<17x1xf32>
    %20 = arith.divf %18, %19 : vector<17x1xf32>
    %21 = vector.broadcast %13 : vector<17x1xf32> to vector<17x32xf32>
    %22 = arith.subf %5, %21 : vector<17x32xf32>
    %cst_16 = arith.constant 9.99999997E-7 : f32
    %23 = vector.broadcast %cst_16 : f32 to vector<17x1xf32>
    %24 = arith.addf %20, %23 : vector<17x1xf32>
    %25 = math.rsqrt %24 : vector<17x1xf32>
    %26 = vector.broadcast %25 : vector<17x1xf32> to vector<17x32xf32>
    %27 = arith.mulf %22, %26 : vector<17x32xf32>
    %28 = vector.broadcast %7 : vector<1x32xf32> to vector<17x32xf32>
    %29 = arith.mulf %27, %28 : vector<17x32xf32>
    %30 = vector.broadcast %9 : vector<1x32xf32> to vector<17x32xf32>
    %31 = arith.addf %29, %30 : vector<17x32xf32>
    %c0_17 = arith.constant 0 : index
    %c0_18 = arith.constant 0 : index
    %c0_19 = arith.constant 0 : index
    %32 = vector.load %arg7[%c0_17, %c0_18, %c0_19] : memref<2x32x96xf32, #tpu.memory_space<vmem>>, vector<1x32x96xf32>
    %33 = vector.shape_cast %32 : vector<1x32x96xf32> to vector<32x96xf32>
    %cst_20 = arith.constant dense<0.000000e+00> : vector<17x96xf32>
    %34 = tpu.matmul %31, %33, %cst_20 {dimension_numbers = #tpu.dot_dimension_numbers<[1], [0], [0], [1], [0, 0, 1, 1], [], []>} : vector<17x32xf32>, vector<32x96xf32>, vector<17x96xf32> -> vector<17x96xf32>
    %c0_21 = arith.constant 0 : index
    %c0_22 = arith.constant 0 : index
    %c0_23 = arith.constant 0 : index
    %35 = vector.load %arg8[%c0_21, %c0_22, %c0_23] : memref<2x1x96xf32, #tpu.memory_space<vmem>>, vector<1x1x96xf32>
    %36 = vector.shape_cast %35 : vector<1x1x96xf32> to vector<1x96xf32>
    %37 = vector.broadcast %36 : vector<1x96xf32> to vector<17x96xf32>
    %38 = arith.addf %34, %37 : vector<17x96xf32>
    %39 = vector.extract_strided_slice %38 {offsets = [0, 0], sizes = [17, 8], strides = [1, 1]} : vector<17x96xf32> to vector<17x8xf32>
    %40 = vector.extract_strided_slice %38 {offsets = [0, 32], sizes = [17, 8], strides = [1, 1]} : vector<17x96xf32> to vector<17x8xf32>
    %cst_24 = arith.constant dense<0.000000e+00> : vector<17x17xf32>
    %41 = tpu.matmul %39, %40, %cst_24 {dimension_numbers = #tpu.dot_dimension_numbers<[1], [1], [0], [0], [0, 0, 1, 0], [], []>} : vector<17x8xf32>, vector<17x8xf32>, vector<17x17xf32> -> vector<17x17xf32>
    %42 = vector.extract_strided_slice %38 {offsets = [0, 8], sizes = [17, 8], strides = [1, 1]} : vector<17x96xf32> to vector<17x8xf32>
    %43 = vector.extract_strided_slice %38 {offsets = [0, 40], sizes = [17, 8], strides = [1, 1]} : vector<17x96xf32> to vector<17x8xf32>
    %cst_25 = arith.constant dense<0.000000e+00> : vector<17x17xf32>
    %44 = tpu.matmul %42, %43, %cst_25 {dimension_numbers = #tpu.dot_dimension_numbers<[1], [1], [0], [0], [0, 0, 1, 0], [], []>} : vector<17x8xf32>, vector<17x8xf32>, vector<17x17xf32> -> vector<17x17xf32>
    %45 = vector.extract_strided_slice %38 {offsets = [0, 16], sizes = [17, 8], strides = [1, 1]} : vector<17x96xf32> to vector<17x8xf32>
    %46 = vector.extract_strided_slice %38 {offsets = [0, 48], sizes = [17, 8], strides = [1, 1]} : vector<17x96xf32> to vector<17x8xf32>
    %cst_26 = arith.constant dense<0.000000e+00> : vector<17x17xf32>
    %47 = tpu.matmul %45, %46, %cst_26 {dimension_numbers = #tpu.dot_dimension_numbers<[1], [1], [0], [0], [0, 0, 1, 0], [], []>} : vector<17x8xf32>, vector<17x8xf32>, vector<17x17xf32> -> vector<17x17xf32>
    %48 = vector.extract_strided_slice %38 {offsets = [0, 24], sizes = [17, 8], strides = [1, 1]} : vector<17x96xf32> to vector<17x8xf32>
    %49 = vector.extract_strided_slice %38 {offsets = [0, 56], sizes = [17, 8], strides = [1, 1]} : vector<17x96xf32> to vector<17x8xf32>
    %cst_27 = arith.constant dense<0.000000e+00> : vector<17x17xf32>
    %50 = tpu.matmul %48, %49, %cst_27 {dimension_numbers = #tpu.dot_dimension_numbers<[1], [1], [0], [0], [0, 0, 1, 0], [], []>} : vector<17x8xf32>, vector<17x8xf32>, vector<17x17xf32> -> vector<17x17xf32>
    %51 = vector.shape_cast %41 : vector<17x17xf32> to vector<1x17x17xf32>
    %52 = vector.shape_cast %44 : vector<17x17xf32> to vector<1x17x17xf32>
    %53 = vector.shape_cast %47 : vector<17x17xf32> to vector<1x17x17xf32>
    %54 = vector.shape_cast %50 : vector<17x17xf32> to vector<1x17x17xf32>
    %55 = tpu.concatenate %51, %52, %53, %54 in 0 : vector<1x17x17xf32>, vector<1x17x17xf32>, vector<1x17x17xf32>, vector<1x17x17xf32> -> vector<4x17x17xf32>
    %cst_28 = arith.constant dense<0xFF800000> : vector<4x17xf32>
    %56 = vector.multi_reduction <maximumf>, %55, %cst_28 [2] : vector<4x17x17xf32> to vector<4x17xf32>
    %57 = vector.shape_cast %56 : vector<4x17xf32> to vector<4x17x1xf32>
    %58 = vector.broadcast %57 : vector<4x17x1xf32> to vector<4x17x17xf32>
    %59 = arith.subf %55, %58 : vector<4x17x17xf32>
    %60 = math.exp %59 : vector<4x17x17xf32>
    %cst_29 = arith.constant dense<0.000000e+00> : vector<4x17xf32>
    %61 = vector.multi_reduction <add>, %60, %cst_29 [2] : vector<4x17x17xf32> to vector<4x17xf32>
    %62 = vector.shape_cast %61 : vector<4x17xf32> to vector<4x17x1xf32>
    %63 = tpu.reciprocal %62 {approx = true} : vector<4x17x1xf32> -> vector<4x17x1xf32>
    %64 = vector.broadcast %63 : vector<4x17x1xf32> to vector<4x17x17xf32>
    %65 = arith.mulf %60, %64 : vector<4x17x17xf32>
    %c0_30 = arith.constant 0 : index
    %c0_31 = arith.constant 0 : index
    %c0_32 = arith.constant 0 : index
    %66 = vector.load %arg10[%c0_30, %c0_31, %c0_32] : memref<2x1x32xf32, #tpu.memory_space<vmem>>, vector<1x1x32xf32>
    %67 = vector.shape_cast %66 : vector<1x1x32xf32> to vector<1x32xf32>
    %68 = vector.extract_strided_slice %38 {offsets = [0, 64], sizes = [17, 8], strides = [1, 1]} : vector<17x96xf32> to vector<17x8xf32>
    %69 = vector.extract_strided_slice %65 {offsets = [0, 0, 0], sizes = [1, 17, 17], strides = [1, 1, 1]} : vector<4x17x17xf32> to vector<1x17x17xf32>
    %70 = vector.shape_cast %69 : vector<1x17x17xf32> to vector<17x17xf32>
    %cst_33 = arith.constant dense<0.000000e+00> : vector<17x8xf32>
    %71 = tpu.matmul %70, %68, %cst_33 {dimension_numbers = #tpu.dot_dimension_numbers<[1], [0], [0], [1], [0, 0, 1, 1], [], []>} : vector<17x17xf32>, vector<17x8xf32>, vector<17x8xf32> -> vector<17x8xf32>
    %c0_34 = arith.constant 0 : index
    %c0_35 = arith.constant 0 : index
    %c0_36 = arith.constant 0 : index
    %c0_37 = arith.constant 0 : index
    %72 = vector.load %arg9[%c0_34, %c0_35, %c0_36, %c0_37] : memref<2x4x8x32xf32, #tpu.memory_space<vmem>>, vector<1x1x8x32xf32>
    %73 = vector.shape_cast %72 : vector<1x1x8x32xf32> to vector<8x32xf32>
    %cst_38 = arith.constant dense<0.000000e+00> : vector<17x32xf32>
    %74 = tpu.matmul %71, %73, %cst_38 {dimension_numbers = #tpu.dot_dimension_numbers<[1], [0], [0], [1], [0, 0, 1, 1], [], []>} : vector<17x8xf32>, vector<8x32xf32>, vector<17x32xf32> -> vector<17x32xf32>
    %75 = vector.broadcast %67 : vector<1x32xf32> to vector<17x32xf32>
    %76 = arith.addf %75, %74 : vector<17x32xf32>
    %77 = vector.extract_strided_slice %38 {offsets = [0, 72], sizes = [17, 8], strides = [1, 1]} : vector<17x96xf32> to vector<17x8xf32>
    %78 = vector.extract_strided_slice %65 {offsets = [1, 0, 0], sizes = [1, 17, 17], strides = [1, 1, 1]} : vector<4x17x17xf32> to vector<1x17x17xf32>
    %79 = vector.shape_cast %78 : vector<1x17x17xf32> to vector<17x17xf32>
    %cst_39 = arith.constant dense<0.000000e+00> : vector<17x8xf32>
    %80 = tpu.matmul %79, %77, %cst_39 {dimension_numbers = #tpu.dot_dimension_numbers<[1], [0], [0], [1], [0, 0, 1, 1], [], []>} : vector<17x17xf32>, vector<17x8xf32>, vector<17x8xf32> -> vector<17x8xf32>
    %c0_40 = arith.constant 0 : index
    %c1 = arith.constant 1 : index
    %c0_41 = arith.constant 0 : index
    %c0_42 = arith.constant 0 : index
    %81 = vector.load %arg9[%c0_40, %c1, %c0_41, %c0_42] : memref<2x4x8x32xf32, #tpu.memory_space<vmem>>, vector<1x1x8x32xf32>
    %82 = vector.shape_cast %81 : vector<1x1x8x32xf32> to vector<8x32xf32>
    %cst_43 = arith.constant dense<0.000000e+00> : vector<17x32xf32>
    %83 = tpu.matmul %80, %82, %cst_43 {dimension_numbers = #tpu.dot_dimension_numbers<[1], [0], [0], [1], [0, 0, 1, 1], [], []>} : vector<17x8xf32>, vector<8x32xf32>, vector<17x32xf32> -> vector<17x32xf32>
    %84 = arith.addf %76, %83 : vector<17x32xf32>
    %85 = vector.extract_strided_slice %38 {offsets = [0, 80], sizes = [17, 8], strides = [1, 1]} : vector<17x96xf32> to vector<17x8xf32>
    %86 = vector.extract_strided_slice %65 {offsets = [2, 0, 0], sizes = [1, 17, 17], strides = [1, 1, 1]} : vector<4x17x17xf32> to vector<1x17x17xf32>
    %87 = vector.shape_cast %86 : vector<1x17x17xf32> to vector<17x17xf32>
    %cst_44 = arith.constant dense<0.000000e+00> : vector<17x8xf32>
    %88 = tpu.matmul %87, %85, %cst_44 {dimension_numbers = #tpu.dot_dimension_numbers<[1], [0], [0], [1], [0, 0, 1, 1], [], []>} : vector<17x17xf32>, vector<17x8xf32>, vector<17x8xf32> -> vector<17x8xf32>
    %c0_45 = arith.constant 0 : index
    %c2 = arith.constant 2 : index
    %c0_46 = arith.constant 0 : index
    %c0_47 = arith.constant 0 : index
    %89 = vector.load %arg9[%c0_45, %c2, %c0_46, %c0_47] : memref<2x4x8x32xf32, #tpu.memory_space<vmem>>, vector<1x1x8x32xf32>
    %90 = vector.shape_cast %89 : vector<1x1x8x32xf32> to vector<8x32xf32>
    %cst_48 = arith.constant dense<0.000000e+00> : vector<17x32xf32>
    %91 = tpu.matmul %88, %90, %cst_48 {dimension_numbers = #tpu.dot_dimension_numbers<[1], [0], [0], [1], [0, 0, 1, 1], [], []>} : vector<17x8xf32>, vector<8x32xf32>, vector<17x32xf32> -> vector<17x32xf32>
    %92 = arith.addf %84, %91 : vector<17x32xf32>
    %93 = vector.extract_strided_slice %38 {offsets = [0, 88], sizes = [17, 8], strides = [1, 1]} : vector<17x96xf32> to vector<17x8xf32>
    %94 = vector.extract_strided_slice %65 {offsets = [3, 0, 0], sizes = [1, 17, 17], strides = [1, 1, 1]} : vector<4x17x17xf32> to vector<1x17x17xf32>
    %95 = vector.shape_cast %94 : vector<1x17x17xf32> to vector<17x17xf32>
    %cst_49 = arith.constant dense<0.000000e+00> : vector<17x8xf32>
    %96 = tpu.matmul %95, %93, %cst_49 {dimension_numbers = #tpu.dot_dimension_numbers<[1], [0], [0], [1], [0, 0, 1, 1], [], []>} : vector<17x17xf32>, vector<17x8xf32>, vector<17x8xf32> -> vector<17x8xf32>
    %c0_50 = arith.constant 0 : index
    %c3 = arith.constant 3 : index
    %c0_51 = arith.constant 0 : index
    %c0_52 = arith.constant 0 : index
    %97 = vector.load %arg9[%c0_50, %c3, %c0_51, %c0_52] : memref<2x4x8x32xf32, #tpu.memory_space<vmem>>, vector<1x1x8x32xf32>
    %98 = vector.shape_cast %97 : vector<1x1x8x32xf32> to vector<8x32xf32>
    %cst_53 = arith.constant dense<0.000000e+00> : vector<17x32xf32>
    %99 = tpu.matmul %96, %98, %cst_53 {dimension_numbers = #tpu.dot_dimension_numbers<[1], [0], [0], [1], [0, 0, 1, 1], [], []>} : vector<17x8xf32>, vector<8x32xf32>, vector<17x32xf32> -> vector<17x32xf32>
    %100 = arith.addf %92, %99 : vector<17x32xf32>
    %101 = arith.addf %5, %100 : vector<17x32xf32>
    %c0_54 = arith.constant 0 : index
    %c0_55 = arith.constant 0 : index
    %c0_56 = arith.constant 0 : index
    %102 = vector.load %arg11[%c0_54, %c0_55, %c0_56] : memref<2x1x32xf32, #tpu.memory_space<vmem>>, vector<1x1x32xf32>
    %103 = vector.shape_cast %102 : vector<1x1x32xf32> to vector<1x32xf32>
    %c0_57 = arith.constant 0 : index
    %c0_58 = arith.constant 0 : index
    %c0_59 = arith.constant 0 : index
    %104 = vector.load %arg12[%c0_57, %c0_58, %c0_59] : memref<2x1x32xf32, #tpu.memory_space<vmem>>, vector<1x1x32xf32>
    %105 = vector.shape_cast %104 : vector<1x1x32xf32> to vector<1x32xf32>
    %cst_60 = arith.constant dense<0.000000e+00> : vector<17xf32>
    %106 = vector.multi_reduction <add>, %101, %cst_60 [1] : vector<17x32xf32> to vector<17xf32>
    %107 = vector.shape_cast %106 : vector<17xf32> to vector<17x1xf32>
    %cst_61 = arith.constant 3.200000e+01 : f32
    %108 = vector.broadcast %cst_61 : f32 to vector<17x1xf32>
    %109 = arith.divf %107, %108 : vector<17x1xf32>
    %110 = vector.broadcast %109 : vector<17x1xf32> to vector<17x32xf32>
    %111 = arith.subf %101, %110 : vector<17x32xf32>
    %112 = arith.mulf %111, %111 : vector<17x32xf32>
    %cst_62 = arith.constant dense<0.000000e+00> : vector<17xf32>
    %113 = vector.multi_reduction <add>, %112, %cst_62 [1] : vector<17x32xf32> to vector<17xf32>
    %114 = vector.shape_cast %113 : vector<17xf32> to vector<17x1xf32>
    %cst_63 = arith.constant 3.200000e+01 : f32
    %115 = vector.broadcast %cst_63 : f32 to vector<17x1xf32>
    %116 = arith.divf %114, %115 : vector<17x1xf32>
    %117 = vector.broadcast %109 : vector<17x1xf32> to vector<17x32xf32>
    %118 = arith.subf %101, %117 : vector<17x32xf32>
    %cst_64 = arith.constant 9.99999997E-7 : f32
    %119 = vector.broadcast %cst_64 : f32 to vector<17x1xf32>
    %120 = arith.addf %116, %119 : vector<17x1xf32>
    %121 = math.rsqrt %120 : vector<17x1xf32>
    %122 = vector.broadcast %121 : vector<17x1xf32> to vector<17x32xf32>
    %123 = arith.mulf %118, %122 : vector<17x32xf32>
    %124 = vector.broadcast %103 : vector<1x32xf32> to vector<17x32xf32>
    %125 = arith.mulf %123, %124 : vector<17x32xf32>
    %126 = vector.broadcast %105 : vector<1x32xf32> to vector<17x32xf32>
    %127 = arith.addf %125, %126 : vector<17x32xf32>
    %c0_65 = arith.constant 0 : index
    %c0_66 = arith.constant 0 : index
    %c0_67 = arith.constant 0 : index
    %128 = vector.load %arg13[%c0_65, %c0_66, %c0_67] : memref<2x32x128xf32, #tpu.memory_space<vmem>>, vector<1x32x128xf32>
    %129 = vector.shape_cast %128 : vector<1x32x128xf32> to vector<32x128xf32>
    %cst_68 = arith.constant dense<0.000000e+00> : vector<17x128xf32>
    %130 = tpu.matmul %127, %129, %cst_68 {dimension_numbers = #tpu.dot_dimension_numbers<[1], [0], [0], [1], [0, 0, 1, 1], [], []>} : vector<17x32xf32>, vector<32x128xf32>, vector<17x128xf32> -> vector<17x128xf32>
    %c0_69 = arith.constant 0 : index
    %c0_70 = arith.constant 0 : index
    %c0_71 = arith.constant 0 : index
    %131 = vector.load %arg14[%c0_69, %c0_70, %c0_71] : memref<2x1x128xf32, #tpu.memory_space<vmem>>, vector<1x1x128xf32>
    %132 = vector.shape_cast %131 : vector<1x1x128xf32> to vector<1x128xf32>
    %133 = vector.broadcast %132 : vector<1x128xf32> to vector<17x128xf32>
    %134 = arith.addf %130, %133 : vector<17x128xf32>
    %cst_72 = arith.constant 5.000000e-01 : f32
    %135 = vector.broadcast %cst_72 : f32 to vector<17x128xf32>
    %136 = arith.mulf %135, %134 : vector<17x128xf32>
    %cst_73 = arith.constant 0.707106769 : f32
    %137 = vector.broadcast %cst_73 : f32 to vector<17x128xf32>
    %138 = arith.mulf %134, %137 : vector<17x128xf32>
    %139 = math.erf %138 : vector<17x128xf32>
    %cst_74 = arith.constant 1.000000e+00 : f32
    %140 = vector.broadcast %cst_74 : f32 to vector<17x128xf32>
    %141 = arith.addf %140, %139 : vector<17x128xf32>
    %142 = arith.mulf %136, %141 : vector<17x128xf32>
    %c0_75 = arith.constant 0 : index
    %c0_76 = arith.constant 0 : index
    %c0_77 = arith.constant 0 : index
    %143 = vector.load %arg15[%c0_75, %c0_76, %c0_77] : memref<2x128x32xf32, #tpu.memory_space<vmem>>, vector<1x128x32xf32>
    %144 = vector.shape_cast %143 : vector<1x128x32xf32> to vector<128x32xf32>
    %cst_78 = arith.constant dense<0.000000e+00> : vector<17x32xf32>
    %145 = tpu.matmul %142, %144, %cst_78 {dimension_numbers = #tpu.dot_dimension_numbers<[1], [0], [0], [1], [0, 0, 1, 1], [], []>} : vector<17x128xf32>, vector<128x32xf32>, vector<17x32xf32> -> vector<17x32xf32>
    %c0_79 = arith.constant 0 : index
    %c0_80 = arith.constant 0 : index
    %c0_81 = arith.constant 0 : index
    %146 = vector.load %arg16[%c0_79, %c0_80, %c0_81] : memref<2x1x32xf32, #tpu.memory_space<vmem>>, vector<1x1x32xf32>
    %147 = vector.shape_cast %146 : vector<1x1x32xf32> to vector<1x32xf32>
    %148 = vector.broadcast %147 : vector<1x32xf32> to vector<17x32xf32>
    %149 = arith.addf %145, %148 : vector<17x32xf32>
    %150 = arith.addf %101, %149 : vector<17x32xf32>
    %c1_82 = arith.constant 1 : index
    %c0_83 = arith.constant 0 : index
    %c0_84 = arith.constant 0 : index
    %151 = vector.load %arg5[%c1_82, %c0_83, %c0_84] : memref<2x1x32xf32, #tpu.memory_space<vmem>>, vector<1x1x32xf32>
    %152 = vector.shape_cast %151 : vector<1x1x32xf32> to vector<1x32xf32>
    %c1_85 = arith.constant 1 : index
    %c0_86 = arith.constant 0 : index
    %c0_87 = arith.constant 0 : index
    %153 = vector.load %arg6[%c1_85, %c0_86, %c0_87] : memref<2x1x32xf32, #tpu.memory_space<vmem>>, vector<1x1x32xf32>
    %154 = vector.shape_cast %153 : vector<1x1x32xf32> to vector<1x32xf32>
    %cst_88 = arith.constant dense<0.000000e+00> : vector<17xf32>
    %155 = vector.multi_reduction <add>, %150, %cst_88 [1] : vector<17x32xf32> to vector<17xf32>
    %156 = vector.shape_cast %155 : vector<17xf32> to vector<17x1xf32>
    %cst_89 = arith.constant 3.200000e+01 : f32
    %157 = vector.broadcast %cst_89 : f32 to vector<17x1xf32>
    %158 = arith.divf %156, %157 : vector<17x1xf32>
    %159 = vector.broadcast %158 : vector<17x1xf32> to vector<17x32xf32>
    %160 = arith.subf %150, %159 : vector<17x32xf32>
    %161 = arith.mulf %160, %160 : vector<17x32xf32>
    %cst_90 = arith.constant dense<0.000000e+00> : vector<17xf32>
    %162 = vector.multi_reduction <add>, %161, %cst_90 [1] : vector<17x32xf32> to vector<17xf32>
    %163 = vector.shape_cast %162 : vector<17xf32> to vector<17x1xf32>
    %cst_91 = arith.constant 3.200000e+01 : f32
    %164 = vector.broadcast %cst_91 : f32 to vector<17x1xf32>
    %165 = arith.divf %163, %164 : vector<17x1xf32>
    %166 = vector.broadcast %158 : vector<17x1xf32> to vector<17x32xf32>
    %167 = arith.subf %150, %166 : vector<17x32xf32>
    %cst_92 = arith.constant 9.99999997E-7 : f32
    %168 = vector.broadcast %cst_92 : f32 to vector<17x1xf32>
    %169 = arith.addf %165, %168 : vector<17x1xf32>
    %170 = math.rsqrt %169 : vector<17x1xf32>
    %171 = vector.broadcast %170 : vector<17x1xf32> to vector<17x32xf32>
    %172 = arith.mulf %167, %171 : vector<17x32xf32>
    %173 = vector.broadcast %152 : vector<1x32xf32> to vector<17x32xf32>
    %174 = arith.mulf %172, %173 : vector<17x32xf32>
    %175 = vector.broadcast %154 : vector<1x32xf32> to vector<17x32xf32>
    %176 = arith.addf %174, %175 : vector<17x32xf32>
    %c1_93 = arith.constant 1 : index
    %c0_94 = arith.constant 0 : index
    %c0_95 = arith.constant 0 : index
    %177 = vector.load %arg7[%c1_93, %c0_94, %c0_95] : memref<2x32x96xf32, #tpu.memory_space<vmem>>, vector<1x32x96xf32>
    %178 = vector.shape_cast %177 : vector<1x32x96xf32> to vector<32x96xf32>
    %cst_96 = arith.constant dense<0.000000e+00> : vector<17x96xf32>
    %179 = tpu.matmul %176, %178, %cst_96 {dimension_numbers = #tpu.dot_dimension_numbers<[1], [0], [0], [1], [0, 0, 1, 1], [], []>} : vector<17x32xf32>, vector<32x96xf32>, vector<17x96xf32> -> vector<17x96xf32>
    %c1_97 = arith.constant 1 : index
    %c0_98 = arith.constant 0 : index
    %c0_99 = arith.constant 0 : index
    %180 = vector.load %arg8[%c1_97, %c0_98, %c0_99] : memref<2x1x96xf32, #tpu.memory_space<vmem>>, vector<1x1x96xf32>
    %181 = vector.shape_cast %180 : vector<1x1x96xf32> to vector<1x96xf32>
    %182 = vector.broadcast %181 : vector<1x96xf32> to vector<17x96xf32>
    %183 = arith.addf %179, %182 : vector<17x96xf32>
    %184 = vector.extract_strided_slice %183 {offsets = [0, 0], sizes = [17, 8], strides = [1, 1]} : vector<17x96xf32> to vector<17x8xf32>
    %185 = vector.extract_strided_slice %183 {offsets = [0, 32], sizes = [17, 8], strides = [1, 1]} : vector<17x96xf32> to vector<17x8xf32>
    %cst_100 = arith.constant dense<0.000000e+00> : vector<17x17xf32>
    %186 = tpu.matmul %184, %185, %cst_100 {dimension_numbers = #tpu.dot_dimension_numbers<[1], [1], [0], [0], [0, 0, 1, 0], [], []>} : vector<17x8xf32>, vector<17x8xf32>, vector<17x17xf32> -> vector<17x17xf32>
    %187 = vector.extract_strided_slice %183 {offsets = [0, 8], sizes = [17, 8], strides = [1, 1]} : vector<17x96xf32> to vector<17x8xf32>
    %188 = vector.extract_strided_slice %183 {offsets = [0, 40], sizes = [17, 8], strides = [1, 1]} : vector<17x96xf32> to vector<17x8xf32>
    %cst_101 = arith.constant dense<0.000000e+00> : vector<17x17xf32>
    %189 = tpu.matmul %187, %188, %cst_101 {dimension_numbers = #tpu.dot_dimension_numbers<[1], [1], [0], [0], [0, 0, 1, 0], [], []>} : vector<17x8xf32>, vector<17x8xf32>, vector<17x17xf32> -> vector<17x17xf32>
    %190 = vector.extract_strided_slice %183 {offsets = [0, 16], sizes = [17, 8], strides = [1, 1]} : vector<17x96xf32> to vector<17x8xf32>
    %191 = vector.extract_strided_slice %183 {offsets = [0, 48], sizes = [17, 8], strides = [1, 1]} : vector<17x96xf32> to vector<17x8xf32>
    %cst_102 = arith.constant dense<0.000000e+00> : vector<17x17xf32>
    %192 = tpu.matmul %190, %191, %cst_102 {dimension_numbers = #tpu.dot_dimension_numbers<[1], [1], [0], [0], [0, 0, 1, 0], [], []>} : vector<17x8xf32>, vector<17x8xf32>, vector<17x17xf32> -> vector<17x17xf32>
    %193 = vector.extract_strided_slice %183 {offsets = [0, 24], sizes = [17, 8], strides = [1, 1]} : vector<17x96xf32> to vector<17x8xf32>
    %194 = vector.extract_strided_slice %183 {offsets = [0, 56], sizes = [17, 8], strides = [1, 1]} : vector<17x96xf32> to vector<17x8xf32>
    %cst_103 = arith.constant dense<0.000000e+00> : vector<17x17xf32>
    %195 = tpu.matmul %193, %194, %cst_103 {dimension_numbers = #tpu.dot_dimension_numbers<[1], [1], [0], [0], [0, 0, 1, 0], [], []>} : vector<17x8xf32>, vector<17x8xf32>, vector<17x17xf32> -> vector<17x17xf32>
    %196 = vector.shape_cast %186 : vector<17x17xf32> to vector<1x17x17xf32>
    %197 = vector.shape_cast %189 : vector<17x17xf32> to vector<1x17x17xf32>
    %198 = vector.shape_cast %192 : vector<17x17xf32> to vector<1x17x17xf32>
    %199 = vector.shape_cast %195 : vector<17x17xf32> to vector<1x17x17xf32>
    %200 = tpu.concatenate %196, %197, %198, %199 in 0 : vector<1x17x17xf32>, vector<1x17x17xf32>, vector<1x17x17xf32>, vector<1x17x17xf32> -> vector<4x17x17xf32>
    %cst_104 = arith.constant dense<0xFF800000> : vector<4x17xf32>
    %201 = vector.multi_reduction <maximumf>, %200, %cst_104 [2] : vector<4x17x17xf32> to vector<4x17xf32>
    %202 = vector.shape_cast %201 : vector<4x17xf32> to vector<4x17x1xf32>
    %203 = vector.broadcast %202 : vector<4x17x1xf32> to vector<4x17x17xf32>
    %204 = arith.subf %200, %203 : vector<4x17x17xf32>
    %205 = math.exp %204 : vector<4x17x17xf32>
    %cst_105 = arith.constant dense<0.000000e+00> : vector<4x17xf32>
    %206 = vector.multi_reduction <add>, %205, %cst_105 [2] : vector<4x17x17xf32> to vector<4x17xf32>
    %207 = vector.shape_cast %206 : vector<4x17xf32> to vector<4x17x1xf32>
    %208 = tpu.reciprocal %207 {approx = true} : vector<4x17x1xf32> -> vector<4x17x1xf32>
    %209 = vector.broadcast %208 : vector<4x17x1xf32> to vector<4x17x17xf32>
    %210 = arith.mulf %205, %209 : vector<4x17x17xf32>
    %c1_106 = arith.constant 1 : index
    %c0_107 = arith.constant 0 : index
    %c0_108 = arith.constant 0 : index
    %211 = vector.load %arg10[%c1_106, %c0_107, %c0_108] : memref<2x1x32xf32, #tpu.memory_space<vmem>>, vector<1x1x32xf32>
    %212 = vector.shape_cast %211 : vector<1x1x32xf32> to vector<1x32xf32>
    %213 = vector.extract_strided_slice %183 {offsets = [0, 64], sizes = [17, 8], strides = [1, 1]} : vector<17x96xf32> to vector<17x8xf32>
    %214 = vector.extract_strided_slice %210 {offsets = [0, 0, 0], sizes = [1, 17, 17], strides = [1, 1, 1]} : vector<4x17x17xf32> to vector<1x17x17xf32>
    %215 = vector.shape_cast %214 : vector<1x17x17xf32> to vector<17x17xf32>
    %cst_109 = arith.constant dense<0.000000e+00> : vector<17x8xf32>
    %216 = tpu.matmul %215, %213, %cst_109 {dimension_numbers = #tpu.dot_dimension_numbers<[1], [0], [0], [1], [0, 0, 1, 1], [], []>} : vector<17x17xf32>, vector<17x8xf32>, vector<17x8xf32> -> vector<17x8xf32>
    %c1_110 = arith.constant 1 : index
    %c0_111 = arith.constant 0 : index
    %c0_112 = arith.constant 0 : index
    %c0_113 = arith.constant 0 : index
    %217 = vector.load %arg9[%c1_110, %c0_111, %c0_112, %c0_113] : memref<2x4x8x32xf32, #tpu.memory_space<vmem>>, vector<1x1x8x32xf32>
    %218 = vector.shape_cast %217 : vector<1x1x8x32xf32> to vector<8x32xf32>
    %cst_114 = arith.constant dense<0.000000e+00> : vector<17x32xf32>
    %219 = tpu.matmul %216, %218, %cst_114 {dimension_numbers = #tpu.dot_dimension_numbers<[1], [0], [0], [1], [0, 0, 1, 1], [], []>} : vector<17x8xf32>, vector<8x32xf32>, vector<17x32xf32> -> vector<17x32xf32>
    %220 = vector.broadcast %212 : vector<1x32xf32> to vector<17x32xf32>
    %221 = arith.addf %220, %219 : vector<17x32xf32>
    %222 = vector.extract_strided_slice %183 {offsets = [0, 72], sizes = [17, 8], strides = [1, 1]} : vector<17x96xf32> to vector<17x8xf32>
    %223 = vector.extract_strided_slice %210 {offsets = [1, 0, 0], sizes = [1, 17, 17], strides = [1, 1, 1]} : vector<4x17x17xf32> to vector<1x17x17xf32>
    %224 = vector.shape_cast %223 : vector<1x17x17xf32> to vector<17x17xf32>
    %cst_115 = arith.constant dense<0.000000e+00> : vector<17x8xf32>
    %225 = tpu.matmul %224, %222, %cst_115 {dimension_numbers = #tpu.dot_dimension_numbers<[1], [0], [0], [1], [0, 0, 1, 1], [], []>} : vector<17x17xf32>, vector<17x8xf32>, vector<17x8xf32> -> vector<17x8xf32>
    %c1_116 = arith.constant 1 : index
    %c1_117 = arith.constant 1 : index
    %c0_118 = arith.constant 0 : index
    %c0_119 = arith.constant 0 : index
    %226 = vector.load %arg9[%c1_116, %c1_117, %c0_118, %c0_119] : memref<2x4x8x32xf32, #tpu.memory_space<vmem>>, vector<1x1x8x32xf32>
    %227 = vector.shape_cast %226 : vector<1x1x8x32xf32> to vector<8x32xf32>
    %cst_120 = arith.constant dense<0.000000e+00> : vector<17x32xf32>
    %228 = tpu.matmul %225, %227, %cst_120 {dimension_numbers = #tpu.dot_dimension_numbers<[1], [0], [0], [1], [0, 0, 1, 1], [], []>} : vector<17x8xf32>, vector<8x32xf32>, vector<17x32xf32> -> vector<17x32xf32>
    %229 = arith.addf %221, %228 : vector<17x32xf32>
    %230 = vector.extract_strided_slice %183 {offsets = [0, 80], sizes = [17, 8], strides = [1, 1]} : vector<17x96xf32> to vector<17x8xf32>
    %231 = vector.extract_strided_slice %210 {offsets = [2, 0, 0], sizes = [1, 17, 17], strides = [1, 1, 1]} : vector<4x17x17xf32> to vector<1x17x17xf32>
    %232 = vector.shape_cast %231 : vector<1x17x17xf32> to vector<17x17xf32>
    %cst_121 = arith.constant dense<0.000000e+00> : vector<17x8xf32>
    %233 = tpu.matmul %232, %230, %cst_121 {dimension_numbers = #tpu.dot_dimension_numbers<[1], [0], [0], [1], [0, 0, 1, 1], [], []>} : vector<17x17xf32>, vector<17x8xf32>, vector<17x8xf32> -> vector<17x8xf32>
    %c1_122 = arith.constant 1 : index
    %c2_123 = arith.constant 2 : index
    %c0_124 = arith.constant 0 : index
    %c0_125 = arith.constant 0 : index
    %234 = vector.load %arg9[%c1_122, %c2_123, %c0_124, %c0_125] : memref<2x4x8x32xf32, #tpu.memory_space<vmem>>, vector<1x1x8x32xf32>
    %235 = vector.shape_cast %234 : vector<1x1x8x32xf32> to vector<8x32xf32>
    %cst_126 = arith.constant dense<0.000000e+00> : vector<17x32xf32>
    %236 = tpu.matmul %233, %235, %cst_126 {dimension_numbers = #tpu.dot_dimension_numbers<[1], [0], [0], [1], [0, 0, 1, 1], [], []>} : vector<17x8xf32>, vector<8x32xf32>, vector<17x32xf32> -> vector<17x32xf32>
    %237 = arith.addf %229, %236 : vector<17x32xf32>
    %238 = vector.extract_strided_slice %183 {offsets = [0, 88], sizes = [17, 8], strides = [1, 1]} : vector<17x96xf32> to vector<17x8xf32>
    %239 = vector.extract_strided_slice %210 {offsets = [3, 0, 0], sizes = [1, 17, 17], strides = [1, 1, 1]} : vector<4x17x17xf32> to vector<1x17x17xf32>
    %240 = vector.shape_cast %239 : vector<1x17x17xf32> to vector<17x17xf32>
    %cst_127 = arith.constant dense<0.000000e+00> : vector<17x8xf32>
    %241 = tpu.matmul %240, %238, %cst_127 {dimension_numbers = #tpu.dot_dimension_numbers<[1], [0], [0], [1], [0, 0, 1, 1], [], []>} : vector<17x17xf32>, vector<17x8xf32>, vector<17x8xf32> -> vector<17x8xf32>
    %c1_128 = arith.constant 1 : index
    %c3_129 = arith.constant 3 : index
    %c0_130 = arith.constant 0 : index
    %c0_131 = arith.constant 0 : index
    %242 = vector.load %arg9[%c1_128, %c3_129, %c0_130, %c0_131] : memref<2x4x8x32xf32, #tpu.memory_space<vmem>>, vector<1x1x8x32xf32>
    %243 = vector.shape_cast %242 : vector<1x1x8x32xf32> to vector<8x32xf32>
    %cst_132 = arith.constant dense<0.000000e+00> : vector<17x32xf32>
    %244 = tpu.matmul %241, %243, %cst_132 {dimension_numbers = #tpu.dot_dimension_numbers<[1], [0], [0], [1], [0, 0, 1, 1], [], []>} : vector<17x8xf32>, vector<8x32xf32>, vector<17x32xf32> -> vector<17x32xf32>
    %245 = arith.addf %237, %244 : vector<17x32xf32>
    %246 = arith.addf %150, %245 : vector<17x32xf32>
    %c1_133 = arith.constant 1 : index
    %c0_134 = arith.constant 0 : index
    %c0_135 = arith.constant 0 : index
    %247 = vector.load %arg11[%c1_133, %c0_134, %c0_135] : memref<2x1x32xf32, #tpu.memory_space<vmem>>, vector<1x1x32xf32>
    %248 = vector.shape_cast %247 : vector<1x1x32xf32> to vector<1x32xf32>
    %c1_136 = arith.constant 1 : index
    %c0_137 = arith.constant 0 : index
    %c0_138 = arith.constant 0 : index
    %249 = vector.load %arg12[%c1_136, %c0_137, %c0_138] : memref<2x1x32xf32, #tpu.memory_space<vmem>>, vector<1x1x32xf32>
    %250 = vector.shape_cast %249 : vector<1x1x32xf32> to vector<1x32xf32>
    %cst_139 = arith.constant dense<0.000000e+00> : vector<17xf32>
    %251 = vector.multi_reduction <add>, %246, %cst_139 [1] : vector<17x32xf32> to vector<17xf32>
    %252 = vector.shape_cast %251 : vector<17xf32> to vector<17x1xf32>
    %cst_140 = arith.constant 3.200000e+01 : f32
    %253 = vector.broadcast %cst_140 : f32 to vector<17x1xf32>
    %254 = arith.divf %252, %253 : vector<17x1xf32>
    %255 = vector.broadcast %254 : vector<17x1xf32> to vector<17x32xf32>
    %256 = arith.subf %246, %255 : vector<17x32xf32>
    %257 = arith.mulf %256, %256 : vector<17x32xf32>
    %cst_141 = arith.constant dense<0.000000e+00> : vector<17xf32>
    %258 = vector.multi_reduction <add>, %257, %cst_141 [1] : vector<17x32xf32> to vector<17xf32>
    %259 = vector.shape_cast %258 : vector<17xf32> to vector<17x1xf32>
    %cst_142 = arith.constant 3.200000e+01 : f32
    %260 = vector.broadcast %cst_142 : f32 to vector<17x1xf32>
    %261 = arith.divf %259, %260 : vector<17x1xf32>
    %262 = vector.broadcast %254 : vector<17x1xf32> to vector<17x32xf32>
    %263 = arith.subf %246, %262 : vector<17x32xf32>
    %cst_143 = arith.constant 9.99999997E-7 : f32
    %264 = vector.broadcast %cst_143 : f32 to vector<17x1xf32>
    %265 = arith.addf %261, %264 : vector<17x1xf32>
    %266 = math.rsqrt %265 : vector<17x1xf32>
    %267 = vector.broadcast %266 : vector<17x1xf32> to vector<17x32xf32>
    %268 = arith.mulf %263, %267 : vector<17x32xf32>
    %269 = vector.broadcast %248 : vector<1x32xf32> to vector<17x32xf32>
    %270 = arith.mulf %268, %269 : vector<17x32xf32>
    %271 = vector.broadcast %250 : vector<1x32xf32> to vector<17x32xf32>
    %272 = arith.addf %270, %271 : vector<17x32xf32>
    %c1_144 = arith.constant 1 : index
    %c0_145 = arith.constant 0 : index
    %c0_146 = arith.constant 0 : index
    %273 = vector.load %arg13[%c1_144, %c0_145, %c0_146] : memref<2x32x128xf32, #tpu.memory_space<vmem>>, vector<1x32x128xf32>
    %274 = vector.shape_cast %273 : vector<1x32x128xf32> to vector<32x128xf32>
    %cst_147 = arith.constant dense<0.000000e+00> : vector<17x128xf32>
    %275 = tpu.matmul %272, %274, %cst_147 {dimension_numbers = #tpu.dot_dimension_numbers<[1], [0], [0], [1], [0, 0, 1, 1], [], []>} : vector<17x32xf32>, vector<32x128xf32>, vector<17x128xf32> -> vector<17x128xf32>
    %c1_148 = arith.constant 1 : index
    %c0_149 = arith.constant 0 : index
    %c0_150 = arith.constant 0 : index
    %276 = vector.load %arg14[%c1_148, %c0_149, %c0_150] : memref<2x1x128xf32, #tpu.memory_space<vmem>>, vector<1x1x128xf32>
    %277 = vector.shape_cast %276 : vector<1x1x128xf32> to vector<1x128xf32>
    %278 = vector.broadcast %277 : vector<1x128xf32> to vector<17x128xf32>
    %279 = arith.addf %275, %278 : vector<17x128xf32>
    %cst_151 = arith.constant 5.000000e-01 : f32
    %280 = vector.broadcast %cst_151 : f32 to vector<17x128xf32>
    %281 = arith.mulf %280, %279 : vector<17x128xf32>
    %cst_152 = arith.constant 0.707106769 : f32
    %282 = vector.broadcast %cst_152 : f32 to vector<17x128xf32>
    %283 = arith.mulf %279, %282 : vector<17x128xf32>
    %284 = math.erf %283 : vector<17x128xf32>
    %cst_153 = arith.constant 1.000000e+00 : f32
    %285 = vector.broadcast %cst_153 : f32 to vector<17x128xf32>
    %286 = arith.addf %285, %284 : vector<17x128xf32>
    %287 = arith.mulf %281, %286 : vector<17x128xf32>
    %c1_154 = arith.constant 1 : index
    %c0_155 = arith.constant 0 : index
    %c0_156 = arith.constant 0 : index
    %288 = vector.load %arg15[%c1_154, %c0_155, %c0_156] : memref<2x128x32xf32, #tpu.memory_space<vmem>>, vector<1x128x32xf32>
    %289 = vector.shape_cast %288 : vector<1x128x32xf32> to vector<128x32xf32>
    %cst_157 = arith.constant dense<0.000000e+00> : vector<17x32xf32>
    %290 = tpu.matmul %287, %289, %cst_157 {dimension_numbers = #tpu.dot_dimension_numbers<[1], [0], [0], [1], [0, 0, 1, 1], [], []>} : vector<17x128xf32>, vector<128x32xf32>, vector<17x32xf32> -> vector<17x32xf32>
    %c1_158 = arith.constant 1 : index
    %c0_159 = arith.constant 0 : index
    %c0_160 = arith.constant 0 : index
    %291 = vector.load %arg16[%c1_158, %c0_159, %c0_160] : memref<2x1x32xf32, #tpu.memory_space<vmem>>, vector<1x1x32xf32>
    %292 = vector.shape_cast %291 : vector<1x1x32xf32> to vector<1x32xf32>
    %293 = vector.broadcast %292 : vector<1x32xf32> to vector<17x32xf32>
    %294 = arith.addf %290, %293 : vector<17x32xf32>
    %295 = arith.addf %246, %294 : vector<17x32xf32>
    %c0_161 = arith.constant 0 : index
    %c0_162 = arith.constant 0 : index
    %296 = vector.load %arg17[%c0_161, %c0_162] : memref<1x32xf32, #tpu.memory_space<vmem>>, vector<1x32xf32>
    %c0_163 = arith.constant 0 : index
    %c0_164 = arith.constant 0 : index
    %297 = vector.load %arg18[%c0_163, %c0_164] : memref<1x32xf32, #tpu.memory_space<vmem>>, vector<1x32xf32>
    %cst_165 = arith.constant dense<0.000000e+00> : vector<17xf32>
    %298 = vector.multi_reduction <add>, %295, %cst_165 [1] : vector<17x32xf32> to vector<17xf32>
    %299 = vector.shape_cast %298 : vector<17xf32> to vector<17x1xf32>
    %cst_166 = arith.constant 3.200000e+01 : f32
    %300 = vector.broadcast %cst_166 : f32 to vector<17x1xf32>
    %301 = arith.divf %299, %300 : vector<17x1xf32>
    %302 = vector.broadcast %301 : vector<17x1xf32> to vector<17x32xf32>
    %303 = arith.subf %295, %302 : vector<17x32xf32>
    %304 = arith.mulf %303, %303 : vector<17x32xf32>
    %cst_167 = arith.constant dense<0.000000e+00> : vector<17xf32>
    %305 = vector.multi_reduction <add>, %304, %cst_167 [1] : vector<17x32xf32> to vector<17xf32>
    %306 = vector.shape_cast %305 : vector<17xf32> to vector<17x1xf32>
    %cst_168 = arith.constant 3.200000e+01 : f32
    %307 = vector.broadcast %cst_168 : f32 to vector<17x1xf32>
    %308 = arith.divf %306, %307 : vector<17x1xf32>
    %309 = vector.broadcast %301 : vector<17x1xf32> to vector<17x32xf32>
    %310 = arith.subf %295, %309 : vector<17x32xf32>
    %cst_169 = arith.constant 9.99999997E-7 : f32
    %311 = vector.broadcast %cst_169 : f32 to vector<17x1xf32>
    %312 = arith.addf %308, %311 : vector<17x1xf32>
    %313 = math.rsqrt %312 : vector<17x1xf32>
    %314 = vector.broadcast %313 : vector<17x1xf32> to vector<17x32xf32>
    %315 = arith.mulf %310, %314 : vector<17x32xf32>
    %316 = vector.broadcast %296 : vector<1x32xf32> to vector<17x32xf32>
    %317 = arith.mulf %315, %316 : vector<17x32xf32>
    %318 = vector.broadcast %297 : vector<1x32xf32> to vector<17x32xf32>
    %319 = arith.addf %317, %318 : vector<17x32xf32>
    %c0_170 = arith.constant 0 : index
    %c0_171 = arith.constant 0 : index
    %c0_172 = arith.constant 0 : index
    %320 = vector.load %arg2[%c0_170, %c0_171, %c0_172] : memref<2x1x17xf32, #tpu.memory_space<vmem>>, vector<1x1x17xf32>
    %321 = vector.shape_cast %320 : vector<1x1x17xf32> to vector<1x17xf32>
    %cst_173 = arith.constant dense<0.000000e+00> : vector<1x32xf32>
    %322 = tpu.matmul %321, %319, %cst_173 {dimension_numbers = #tpu.dot_dimension_numbers<[1], [0], [0], [1], [0, 0, 1, 1], [], []>} : vector<1x17xf32>, vector<17x32xf32>, vector<1x32xf32> -> vector<1x32xf32>
    %c0_174 = arith.constant 0 : index
    %c0_175 = arith.constant 0 : index
    %323 = vector.load %arg19[%c0_174, %c0_175] : memref<1x32xf32, #tpu.memory_space<vmem>>, vector<1x32xf32>
    %c0_176 = arith.constant 0 : index
    %c0_177 = arith.constant 0 : index
    %324 = vector.load %arg20[%c0_176, %c0_177] : memref<1x32xf32, #tpu.memory_space<vmem>>, vector<1x32xf32>
    %cst_178 = arith.constant dense<0.000000e+00> : vector<1xf32>
    %325 = vector.multi_reduction <add>, %322, %cst_178 [1] : vector<1x32xf32> to vector<1xf32>
    %326 = vector.shape_cast %325 : vector<1xf32> to vector<1x1xf32>
    %cst_179 = arith.constant 3.200000e+01 : f32
    %327 = vector.broadcast %cst_179 : f32 to vector<1x1xf32>
    %328 = arith.divf %326, %327 : vector<1x1xf32>
    %329 = vector.broadcast %328 : vector<1x1xf32> to vector<1x32xf32>
    %330 = arith.subf %322, %329 : vector<1x32xf32>
    %331 = arith.mulf %330, %330 : vector<1x32xf32>
    %cst_180 = arith.constant dense<0.000000e+00> : vector<1xf32>
    %332 = vector.multi_reduction <add>, %331, %cst_180 [1] : vector<1x32xf32> to vector<1xf32>
    %333 = vector.shape_cast %332 : vector<1xf32> to vector<1x1xf32>
    %cst_181 = arith.constant 3.200000e+01 : f32
    %334 = vector.broadcast %cst_181 : f32 to vector<1x1xf32>
    %335 = arith.divf %333, %334 : vector<1x1xf32>
    %336 = vector.broadcast %328 : vector<1x1xf32> to vector<1x32xf32>
    %337 = arith.subf %322, %336 : vector<1x32xf32>
    %cst_182 = arith.constant 9.99999997E-7 : f32
    %338 = vector.broadcast %cst_182 : f32 to vector<1x1xf32>
    %339 = arith.addf %335, %338 : vector<1x1xf32>
    %340 = math.rsqrt %339 : vector<1x1xf32>
    %341 = vector.broadcast %340 : vector<1x1xf32> to vector<1x32xf32>
    %342 = arith.mulf %337, %341 : vector<1x32xf32>
    %343 = arith.mulf %342, %323 : vector<1x32xf32>
    %344 = arith.addf %343, %324 : vector<1x32xf32>
    %c0_183 = arith.constant 0 : index
    %c0_184 = arith.constant 0 : index
    %345 = vector.load %arg21[%c0_183, %c0_184] : memref<32x8xf32, #tpu.memory_space<vmem>>, vector<32x8xf32>
    %cst_185 = arith.constant dense<0.000000e+00> : vector<1x8xf32>
    %346 = tpu.matmul %344, %345, %cst_185 {dimension_numbers = #tpu.dot_dimension_numbers<[1], [0], [0], [1], [0, 0, 1, 1], [], []>} : vector<1x32xf32>, vector<32x8xf32>, vector<1x8xf32> -> vector<1x8xf32>
    %c0_186 = arith.constant 0 : index
    %c0_187 = arith.constant 0 : index
    %347 = vector.load %arg22[%c0_186, %c0_187] : memref<1x8xf32, #tpu.memory_space<vmem>>, vector<1x8xf32>
    %348 = arith.addf %346, %347 : vector<1x8xf32>
    %c0_188 = arith.constant 0 : index
    %c0_189 = arith.constant 0 : index
    %c0_190 = arith.constant 0 : index
    %349 = vector.load %arg23[%c0_188, %c0_189, %c0_190] : memref<2x1x8xf32, #tpu.memory_space<vmem>>, vector<1x1x8xf32>
    %350 = vector.shape_cast %349 : vector<1x1x8xf32> to vector<1x8xf32>
    %351 = vector.shape_cast %348 : vector<1x8xf32> to vector<1x1x8xf32>
    tpu.vector_store %arg23[%c0_188, %c0_189, %c0_190], %351 {strides = array<i32>} : memref<2x1x8xf32, #tpu.memory_space<vmem>>, vector<1x1x8xf32>,
    %c1_191 = arith.constant 1 : index
    %c0_192 = arith.constant 0 : index
    %c0_193 = arith.constant 0 : index
    %352 = vector.load %arg1[%c1_191, %c0_192, %c0_193] : memref<2x17x64xf32, #tpu.memory_space<vmem>>, vector<1x17x64xf32>
    %353 = vector.shape_cast %352 : vector<1x17x64xf32> to vector<17x64xf32>
    %c0_194 = arith.constant 0 : index
    %c0_195 = arith.constant 0 : index
    %354 = vector.load %arg3[%c0_194, %c0_195] : memref<64x32xf32, #tpu.memory_space<vmem>>, vector<64x32xf32>
    %cst_196 = arith.constant dense<0.000000e+00> : vector<17x32xf32>
    %355 = tpu.matmul %353, %354, %cst_196 {dimension_numbers = #tpu.dot_dimension_numbers<[1], [0], [0], [1], [0, 0, 1, 1], [], []>} : vector<17x64xf32>, vector<64x32xf32>, vector<17x32xf32> -> vector<17x32xf32>
    %c0_197 = arith.constant 0 : index
    %c0_198 = arith.constant 0 : index
    %356 = vector.load %arg4[%c0_197, %c0_198] : memref<17x32xf32, #tpu.memory_space<vmem>>, vector<17x32xf32>
    %357 = arith.addf %355, %356 : vector<17x32xf32>
    %c0_199 = arith.constant 0 : index
    %c0_200 = arith.constant 0 : index
    %c0_201 = arith.constant 0 : index
    %358 = vector.load %arg5[%c0_199, %c0_200, %c0_201] : memref<2x1x32xf32, #tpu.memory_space<vmem>>, vector<1x1x32xf32>
    %359 = vector.shape_cast %358 : vector<1x1x32xf32> to vector<1x32xf32>
    %c0_202 = arith.constant 0 : index
    %c0_203 = arith.constant 0 : index
    %c0_204 = arith.constant 0 : index
    %360 = vector.load %arg6[%c0_202, %c0_203, %c0_204] : memref<2x1x32xf32, #tpu.memory_space<vmem>>, vector<1x1x32xf32>
    %361 = vector.shape_cast %360 : vector<1x1x32xf32> to vector<1x32xf32>
    %cst_205 = arith.constant dense<0.000000e+00> : vector<17xf32>
    %362 = vector.multi_reduction <add>, %357, %cst_205 [1] : vector<17x32xf32> to vector<17xf32>
    %363 = vector.shape_cast %362 : vector<17xf32> to vector<17x1xf32>
    %cst_206 = arith.constant 3.200000e+01 : f32
    %364 = vector.broadcast %cst_206 : f32 to vector<17x1xf32>
    %365 = arith.divf %363, %364 : vector<17x1xf32>
    %366 = vector.broadcast %365 : vector<17x1xf32> to vector<17x32xf32>
    %367 = arith.subf %357, %366 : vector<17x32xf32>
    %368 = arith.mulf %367, %367 : vector<17x32xf32>
    %cst_207 = arith.constant dense<0.000000e+00> : vector<17xf32>
    %369 = vector.multi_reduction <add>, %368, %cst_207 [1] : vector<17x32xf32> to vector<17xf32>
    %370 = vector.shape_cast %369 : vector<17xf32> to vector<17x1xf32>
    %cst_208 = arith.constant 3.200000e+01 : f32
    %371 = vector.broadcast %cst_208 : f32 to vector<17x1xf32>
    %372 = arith.divf %370, %371 : vector<17x1xf32>
    %373 = vector.broadcast %365 : vector<17x1xf32> to vector<17x32xf32>
    %374 = arith.subf %357, %373 : vector<17x32xf32>
    %cst_209 = arith.constant 9.99999997E-7 : f32
    %375 = vector.broadcast %cst_209 : f32 to vector<17x1xf32>
    %376 = arith.addf %372, %375 : vector<17x1xf32>
    %377 = math.rsqrt %376 : vector<17x1xf32>
    %378 = vector.broadcast %377 : vector<17x1xf32> to vector<17x32xf32>
    %379 = arith.mulf %374, %378 : vector<17x32xf32>
    %380 = vector.broadcast %359 : vector<1x32xf32> to vector<17x32xf32>
    %381 = arith.mulf %379, %380 : vector<17x32xf32>
    %382 = vector.broadcast %361 : vector<1x32xf32> to vector<17x32xf32>
    %383 = arith.addf %381, %382 : vector<17x32xf32>
    %c0_210 = arith.constant 0 : index
    %c0_211 = arith.constant 0 : index
    %c0_212 = arith.constant 0 : index
    %384 = vector.load %arg7[%c0_210, %c0_211, %c0_212] : memref<2x32x96xf32, #tpu.memory_space<vmem>>, vector<1x32x96xf32>
    %385 = vector.shape_cast %384 : vector<1x32x96xf32> to vector<32x96xf32>
    %cst_213 = arith.constant dense<0.000000e+00> : vector<17x96xf32>
    %386 = tpu.matmul %383, %385, %cst_213 {dimension_numbers = #tpu.dot_dimension_numbers<[1], [0], [0], [1], [0, 0, 1, 1], [], []>} : vector<17x32xf32>, vector<32x96xf32>, vector<17x96xf32> -> vector<17x96xf32>
    %c0_214 = arith.constant 0 : index
    %c0_215 = arith.constant 0 : index
    %c0_216 = arith.constant 0 : index
    %387 = vector.load %arg8[%c0_214, %c0_215, %c0_216] : memref<2x1x96xf32, #tpu.memory_space<vmem>>, vector<1x1x96xf32>
    %388 = vector.shape_cast %387 : vector<1x1x96xf32> to vector<1x96xf32>
    %389 = vector.broadcast %388 : vector<1x96xf32> to vector<17x96xf32>
    %390 = arith.addf %386, %389 : vector<17x96xf32>
    %391 = vector.extract_strided_slice %390 {offsets = [0, 0], sizes = [17, 8], strides = [1, 1]} : vector<17x96xf32> to vector<17x8xf32>
    %392 = vector.extract_strided_slice %390 {offsets = [0, 32], sizes = [17, 8], strides = [1, 1]} : vector<17x96xf32> to vector<17x8xf32>
    %cst_217 = arith.constant dense<0.000000e+00> : vector<17x17xf32>
    %393 = tpu.matmul %391, %392, %cst_217 {dimension_numbers = #tpu.dot_dimension_numbers<[1], [1], [0], [0], [0, 0, 1, 0], [], []>} : vector<17x8xf32>, vector<17x8xf32>, vector<17x17xf32> -> vector<17x17xf32>
    %394 = vector.extract_strided_slice %390 {offsets = [0, 8], sizes = [17, 8], strides = [1, 1]} : vector<17x96xf32> to vector<17x8xf32>
    %395 = vector.extract_strided_slice %390 {offsets = [0, 40], sizes = [17, 8], strides = [1, 1]} : vector<17x96xf32> to vector<17x8xf32>
    %cst_218 = arith.constant dense<0.000000e+00> : vector<17x17xf32>
    %396 = tpu.matmul %394, %395, %cst_218 {dimension_numbers = #tpu.dot_dimension_numbers<[1], [1], [0], [0], [0, 0, 1, 0], [], []>} : vector<17x8xf32>, vector<17x8xf32>, vector<17x17xf32> -> vector<17x17xf32>
    %397 = vector.extract_strided_slice %390 {offsets = [0, 16], sizes = [17, 8], strides = [1, 1]} : vector<17x96xf32> to vector<17x8xf32>
    %398 = vector.extract_strided_slice %390 {offsets = [0, 48], sizes = [17, 8], strides = [1, 1]} : vector<17x96xf32> to vector<17x8xf32>
    %cst_219 = arith.constant dense<0.000000e+00> : vector<17x17xf32>
    %399 = tpu.matmul %397, %398, %cst_219 {dimension_numbers = #tpu.dot_dimension_numbers<[1], [1], [0], [0], [0, 0, 1, 0], [], []>} : vector<17x8xf32>, vector<17x8xf32>, vector<17x17xf32> -> vector<17x17xf32>
    %400 = vector.extract_strided_slice %390 {offsets = [0, 24], sizes = [17, 8], strides = [1, 1]} : vector<17x96xf32> to vector<17x8xf32>
    %401 = vector.extract_strided_slice %390 {offsets = [0, 56], sizes = [17, 8], strides = [1, 1]} : vector<17x96xf32> to vector<17x8xf32>
    %cst_220 = arith.constant dense<0.000000e+00> : vector<17x17xf32>
    %402 = tpu.matmul %400, %401, %cst_220 {dimension_numbers = #tpu.dot_dimension_numbers<[1], [1], [0], [0], [0, 0, 1, 0], [], []>} : vector<17x8xf32>, vector<17x8xf32>, vector<17x17xf32> -> vector<17x17xf32>
    %403 = vector.shape_cast %393 : vector<17x17xf32> to vector<1x17x17xf32>
    %404 = vector.shape_cast %396 : vector<17x17xf32> to vector<1x17x17xf32>
    %405 = vector.shape_cast %399 : vector<17x17xf32> to vector<1x17x17xf32>
    %406 = vector.shape_cast %402 : vector<17x17xf32> to vector<1x17x17xf32>
    %407 = tpu.concatenate %403, %404, %405, %406 in 0 : vector<1x17x17xf32>, vector<1x17x17xf32>, vector<1x17x17xf32>, vector<1x17x17xf32> -> vector<4x17x17xf32>
    %cst_221 = arith.constant dense<0xFF800000> : vector<4x17xf32>
    %408 = vector.multi_reduction <maximumf>, %407, %cst_221 [2] : vector<4x17x17xf32> to vector<4x17xf32>
    %409 = vector.shape_cast %408 : vector<4x17xf32> to vector<4x17x1xf32>
    %410 = vector.broadcast %409 : vector<4x17x1xf32> to vector<4x17x17xf32>
    %411 = arith.subf %407, %410 : vector<4x17x17xf32>
    %412 = math.exp %411 : vector<4x17x17xf32>
    %cst_222 = arith.constant dense<0.000000e+00> : vector<4x17xf32>
    %413 = vector.multi_reduction <add>, %412, %cst_222 [2] : vector<4x17x17xf32> to vector<4x17xf32>
    %414 = vector.shape_cast %413 : vector<4x17xf32> to vector<4x17x1xf32>
    %415 = tpu.reciprocal %414 {approx = true} : vector<4x17x1xf32> -> vector<4x17x1xf32>
    %416 = vector.broadcast %415 : vector<4x17x1xf32> to vector<4x17x17xf32>
    %417 = arith.mulf %412, %416 : vector<4x17x17xf32>
    %c0_223 = arith.constant 0 : index
    %c0_224 = arith.constant 0 : index
    %c0_225 = arith.constant 0 : index
    %418 = vector.load %arg10[%c0_223, %c0_224, %c0_225] : memref<2x1x32xf32, #tpu.memory_space<vmem>>, vector<1x1x32xf32>
    %419 = vector.shape_cast %418 : vector<1x1x32xf32> to vector<1x32xf32>
    %420 = vector.extract_strided_slice %390 {offsets = [0, 64], sizes = [17, 8], strides = [1, 1]} : vector<17x96xf32> to vector<17x8xf32>
    %421 = vector.extract_strided_slice %417 {offsets = [0, 0, 0], sizes = [1, 17, 17], strides = [1, 1, 1]} : vector<4x17x17xf32> to vector<1x17x17xf32>
    %422 = vector.shape_cast %421 : vector<1x17x17xf32> to vector<17x17xf32>
    %cst_226 = arith.constant dense<0.000000e+00> : vector<17x8xf32>
    %423 = tpu.matmul %422, %420, %cst_226 {dimension_numbers = #tpu.dot_dimension_numbers<[1], [0], [0], [1], [0, 0, 1, 1], [], []>} : vector<17x17xf32>, vector<17x8xf32>, vector<17x8xf32> -> vector<17x8xf32>
    %c0_227 = arith.constant 0 : index
    %c0_228 = arith.constant 0 : index
    %c0_229 = arith.constant 0 : index
    %c0_230 = arith.constant 0 : index
    %424 = vector.load %arg9[%c0_227, %c0_228, %c0_229, %c0_230] : memref<2x4x8x32xf32, #tpu.memory_space<vmem>>, vector<1x1x8x32xf32>
    %425 = vector.shape_cast %424 : vector<1x1x8x32xf32> to vector<8x32xf32>
    %cst_231 = arith.constant dense<0.000000e+00> : vector<17x32xf32>
    %426 = tpu.matmul %423, %425, %cst_231 {dimension_numbers = #tpu.dot_dimension_numbers<[1], [0], [0], [1], [0, 0, 1, 1], [], []>} : vector<17x8xf32>, vector<8x32xf32>, vector<17x32xf32> -> vector<17x32xf32>
    %427 = vector.broadcast %419 : vector<1x32xf32> to vector<17x32xf32>
    %428 = arith.addf %427, %426 : vector<17x32xf32>
    %429 = vector.extract_strided_slice %390 {offsets = [0, 72], sizes = [17, 8], strides = [1, 1]} : vector<17x96xf32> to vector<17x8xf32>
    %430 = vector.extract_strided_slice %417 {offsets = [1, 0, 0], sizes = [1, 17, 17], strides = [1, 1, 1]} : vector<4x17x17xf32> to vector<1x17x17xf32>
    %431 = vector.shape_cast %430 : vector<1x17x17xf32> to vector<17x17xf32>
    %cst_232 = arith.constant dense<0.000000e+00> : vector<17x8xf32>
    %432 = tpu.matmul %431, %429, %cst_232 {dimension_numbers = #tpu.dot_dimension_numbers<[1], [0], [0], [1], [0, 0, 1, 1], [], []>} : vector<17x17xf32>, vector<17x8xf32>, vector<17x8xf32> -> vector<17x8xf32>
    %c0_233 = arith.constant 0 : index
    %c1_234 = arith.constant 1 : index
    %c0_235 = arith.constant 0 : index
    %c0_236 = arith.constant 0 : index
    %433 = vector.load %arg9[%c0_233, %c1_234, %c0_235, %c0_236] : memref<2x4x8x32xf32, #tpu.memory_space<vmem>>, vector<1x1x8x32xf32>
    %434 = vector.shape_cast %433 : vector<1x1x8x32xf32> to vector<8x32xf32>
    %cst_237 = arith.constant dense<0.000000e+00> : vector<17x32xf32>
    %435 = tpu.matmul %432, %434, %cst_237 {dimension_numbers = #tpu.dot_dimension_numbers<[1], [0], [0], [1], [0, 0, 1, 1], [], []>} : vector<17x8xf32>, vector<8x32xf32>, vector<17x32xf32> -> vector<17x32xf32>
    %436 = arith.addf %428, %435 : vector<17x32xf32>
    %437 = vector.extract_strided_slice %390 {offsets = [0, 80], sizes = [17, 8], strides = [1, 1]} : vector<17x96xf32> to vector<17x8xf32>
    %438 = vector.extract_strided_slice %417 {offsets = [2, 0, 0], sizes = [1, 17, 17], strides = [1, 1, 1]} : vector<4x17x17xf32> to vector<1x17x17xf32>
    %439 = vector.shape_cast %438 : vector<1x17x17xf32> to vector<17x17xf32>
    %cst_238 = arith.constant dense<0.000000e+00> : vector<17x8xf32>
    %440 = tpu.matmul %439, %437, %cst_238 {dimension_numbers = #tpu.dot_dimension_numbers<[1], [0], [0], [1], [0, 0, 1, 1], [], []>} : vector<17x17xf32>, vector<17x8xf32>, vector<17x8xf32> -> vector<17x8xf32>
    %c0_239 = arith.constant 0 : index
    %c2_240 = arith.constant 2 : index
    %c0_241 = arith.constant 0 : index
    %c0_242 = arith.constant 0 : index
    %441 = vector.load %arg9[%c0_239, %c2_240, %c0_241, %c0_242] : memref<2x4x8x32xf32, #tpu.memory_space<vmem>>, vector<1x1x8x32xf32>
    %442 = vector.shape_cast %441 : vector<1x1x8x32xf32> to vector<8x32xf32>
    %cst_243 = arith.constant dense<0.000000e+00> : vector<17x32xf32>
    %443 = tpu.matmul %440, %442, %cst_243 {dimension_numbers = #tpu.dot_dimension_numbers<[1], [0], [0], [1], [0, 0, 1, 1], [], []>} : vector<17x8xf32>, vector<8x32xf32>, vector<17x32xf32> -> vector<17x32xf32>
    %444 = arith.addf %436, %443 : vector<17x32xf32>
    %445 = vector.extract_strided_slice %390 {offsets = [0, 88], sizes = [17, 8], strides = [1, 1]} : vector<17x96xf32> to vector<17x8xf32>
    %446 = vector.extract_strided_slice %417 {offsets = [3, 0, 0], sizes = [1, 17, 17], strides = [1, 1, 1]} : vector<4x17x17xf32> to vector<1x17x17xf32>
    %447 = vector.shape_cast %446 : vector<1x17x17xf32> to vector<17x17xf32>
    %cst_244 = arith.constant dense<0.000000e+00> : vector<17x8xf32>
    %448 = tpu.matmul %447, %445, %cst_244 {dimension_numbers = #tpu.dot_dimension_numbers<[1], [0], [0], [1], [0, 0, 1, 1], [], []>} : vector<17x17xf32>, vector<17x8xf32>, vector<17x8xf32> -> vector<17x8xf32>
    %c0_245 = arith.constant 0 : index
    %c3_246 = arith.constant 3 : index
    %c0_247 = arith.constant 0 : index
    %c0_248 = arith.constant 0 : index
    %449 = vector.load %arg9[%c0_245, %c3_246, %c0_247, %c0_248] : memref<2x4x8x32xf32, #tpu.memory_space<vmem>>, vector<1x1x8x32xf32>
    %450 = vector.shape_cast %449 : vector<1x1x8x32xf32> to vector<8x32xf32>
    %cst_249 = arith.constant dense<0.000000e+00> : vector<17x32xf32>
    %451 = tpu.matmul %448, %450, %cst_249 {dimension_numbers = #tpu.dot_dimension_numbers<[1], [0], [0], [1], [0, 0, 1, 1], [], []>} : vector<17x8xf32>, vector<8x32xf32>, vector<17x32xf32> -> vector<17x32xf32>
    %452 = arith.addf %444, %451 : vector<17x32xf32>
    %453 = arith.addf %357, %452 : vector<17x32xf32>
    %c0_250 = arith.constant 0 : index
    %c0_251 = arith.constant 0 : index
    %c0_252 = arith.constant 0 : index
    %454 = vector.load %arg11[%c0_250, %c0_251, %c0_252] : memref<2x1x32xf32, #tpu.memory_space<vmem>>, vector<1x1x32xf32>
    %455 = vector.shape_cast %454 : vector<1x1x32xf32> to vector<1x32xf32>
    %c0_253 = arith.constant 0 : index
    %c0_254 = arith.constant 0 : index
    %c0_255 = arith.constant 0 : index
    %456 = vector.load %arg12[%c0_253, %c0_254, %c0_255] : memref<2x1x32xf32, #tpu.memory_space<vmem>>, vector<1x1x32xf32>
    %457 = vector.shape_cast %456 : vector<1x1x32xf32> to vector<1x32xf32>
    %cst_256 = arith.constant dense<0.000000e+00> : vector<17xf32>
    %458 = vector.multi_reduction <add>, %453, %cst_256 [1] : vector<17x32xf32> to vector<17xf32>
    %459 = vector.shape_cast %458 : vector<17xf32> to vector<17x1xf32>
    %cst_257 = arith.constant 3.200000e+01 : f32
    %460 = vector.broadcast %cst_257 : f32 to vector<17x1xf32>
    %461 = arith.divf %459, %460 : vector<17x1xf32>
    %462 = vector.broadcast %461 : vector<17x1xf32> to vector<17x32xf32>
    %463 = arith.subf %453, %462 : vector<17x32xf32>
    %464 = arith.mulf %463, %463 : vector<17x32xf32>
    %cst_258 = arith.constant dense<0.000000e+00> : vector<17xf32>
    %465 = vector.multi_reduction <add>, %464, %cst_258 [1] : vector<17x32xf32> to vector<17xf32>
    %466 = vector.shape_cast %465 : vector<17xf32> to vector<17x1xf32>
    %cst_259 = arith.constant 3.200000e+01 : f32
    %467 = vector.broadcast %cst_259 : f32 to vector<17x1xf32>
    %468 = arith.divf %466, %467 : vector<17x1xf32>
    %469 = vector.broadcast %461 : vector<17x1xf32> to vector<17x32xf32>
    %470 = arith.subf %453, %469 : vector<17x32xf32>
    %cst_260 = arith.constant 9.99999997E-7 : f32
    %471 = vector.broadcast %cst_260 : f32 to vector<17x1xf32>
    %472 = arith.addf %468, %471 : vector<17x1xf32>
    %473 = math.rsqrt %472 : vector<17x1xf32>
    %474 = vector.broadcast %473 : vector<17x1xf32> to vector<17x32xf32>
    %475 = arith.mulf %470, %474 : vector<17x32xf32>
    %476 = vector.broadcast %455 : vector<1x32xf32> to vector<17x32xf32>
    %477 = arith.mulf %475, %476 : vector<17x32xf32>
    %478 = vector.broadcast %457 : vector<1x32xf32> to vector<17x32xf32>
    %479 = arith.addf %477, %478 : vector<17x32xf32>
    %c0_261 = arith.constant 0 : index
    %c0_262 = arith.constant 0 : index
    %c0_263 = arith.constant 0 : index
    %480 = vector.load %arg13[%c0_261, %c0_262, %c0_263] : memref<2x32x128xf32, #tpu.memory_space<vmem>>, vector<1x32x128xf32>
    %481 = vector.shape_cast %480 : vector<1x32x128xf32> to vector<32x128xf32>
    %cst_264 = arith.constant dense<0.000000e+00> : vector<17x128xf32>
    %482 = tpu.matmul %479, %481, %cst_264 {dimension_numbers = #tpu.dot_dimension_numbers<[1], [0], [0], [1], [0, 0, 1, 1], [], []>} : vector<17x32xf32>, vector<32x128xf32>, vector<17x128xf32> -> vector<17x128xf32>
    %c0_265 = arith.constant 0 : index
    %c0_266 = arith.constant 0 : index
    %c0_267 = arith.constant 0 : index
    %483 = vector.load %arg14[%c0_265, %c0_266, %c0_267] : memref<2x1x128xf32, #tpu.memory_space<vmem>>, vector<1x1x128xf32>
    %484 = vector.shape_cast %483 : vector<1x1x128xf32> to vector<1x128xf32>
    %485 = vector.broadcast %484 : vector<1x128xf32> to vector<17x128xf32>
    %486 = arith.addf %482, %485 : vector<17x128xf32>
    %cst_268 = arith.constant 5.000000e-01 : f32
    %487 = vector.broadcast %cst_268 : f32 to vector<17x128xf32>
    %488 = arith.mulf %487, %486 : vector<17x128xf32>
    %cst_269 = arith.constant 0.707106769 : f32
    %489 = vector.broadcast %cst_269 : f32 to vector<17x128xf32>
    %490 = arith.mulf %486, %489 : vector<17x128xf32>
    %491 = math.erf %490 : vector<17x128xf32>
    %cst_270 = arith.constant 1.000000e+00 : f32
    %492 = vector.broadcast %cst_270 : f32 to vector<17x128xf32>
    %493 = arith.addf %492, %491 : vector<17x128xf32>
    %494 = arith.mulf %488, %493 : vector<17x128xf32>
    %c0_271 = arith.constant 0 : index
    %c0_272 = arith.constant 0 : index
    %c0_273 = arith.constant 0 : index
    %495 = vector.load %arg15[%c0_271, %c0_272, %c0_273] : memref<2x128x32xf32, #tpu.memory_space<vmem>>, vector<1x128x32xf32>
    %496 = vector.shape_cast %495 : vector<1x128x32xf32> to vector<128x32xf32>
    %cst_274 = arith.constant dense<0.000000e+00> : vector<17x32xf32>
    %497 = tpu.matmul %494, %496, %cst_274 {dimension_numbers = #tpu.dot_dimension_numbers<[1], [0], [0], [1], [0, 0, 1, 1], [], []>} : vector<17x128xf32>, vector<128x32xf32>, vector<17x32xf32> -> vector<17x32xf32>
    %c0_275 = arith.constant 0 : index
    %c0_276 = arith.constant 0 : index
    %c0_277 = arith.constant 0 : index
    %498 = vector.load %arg16[%c0_275, %c0_276, %c0_277] : memref<2x1x32xf32, #tpu.memory_space<vmem>>, vector<1x1x32xf32>
    %499 = vector.shape_cast %498 : vector<1x1x32xf32> to vector<1x32xf32>
    %500 = vector.broadcast %499 : vector<1x32xf32> to vector<17x32xf32>
    %501 = arith.addf %497, %500 : vector<17x32xf32>
    %502 = arith.addf %453, %501 : vector<17x32xf32>
    %c1_278 = arith.constant 1 : index
    %c0_279 = arith.constant 0 : index
    %c0_280 = arith.constant 0 : index
    %503 = vector.load %arg5[%c1_278, %c0_279, %c0_280] : memref<2x1x32xf32, #tpu.memory_space<vmem>>, vector<1x1x32xf32>
    %504 = vector.shape_cast %503 : vector<1x1x32xf32> to vector<1x32xf32>
    %c1_281 = arith.constant 1 : index
    %c0_282 = arith.constant 0 : index
    %c0_283 = arith.constant 0 : index
    %505 = vector.load %arg6[%c1_281, %c0_282, %c0_283] : memref<2x1x32xf32, #tpu.memory_space<vmem>>, vector<1x1x32xf32>
    %506 = vector.shape_cast %505 : vector<1x1x32xf32> to vector<1x32xf32>
    %cst_284 = arith.constant dense<0.000000e+00> : vector<17xf32>
    %507 = vector.multi_reduction <add>, %502, %cst_284 [1] : vector<17x32xf32> to vector<17xf32>
    %508 = vector.shape_cast %507 : vector<17xf32> to vector<17x1xf32>
    %cst_285 = arith.constant 3.200000e+01 : f32
    %509 = vector.broadcast %cst_285 : f32 to vector<17x1xf32>
    %510 = arith.divf %508, %509 : vector<17x1xf32>
    %511 = vector.broadcast %510 : vector<17x1xf32> to vector<17x32xf32>
    %512 = arith.subf %502, %511 : vector<17x32xf32>
    %513 = arith.mulf %512, %512 : vector<17x32xf32>
    %cst_286 = arith.constant dense<0.000000e+00> : vector<17xf32>
    %514 = vector.multi_reduction <add>, %513, %cst_286 [1] : vector<17x32xf32> to vector<17xf32>
    %515 = vector.shape_cast %514 : vector<17xf32> to vector<17x1xf32>
    %cst_287 = arith.constant 3.200000e+01 : f32
    %516 = vector.broadcast %cst_287 : f32 to vector<17x1xf32>
    %517 = arith.divf %515, %516 : vector<17x1xf32>
    %518 = vector.broadcast %510 : vector<17x1xf32> to vector<17x32xf32>
    %519 = arith.subf %502, %518 : vector<17x32xf32>
    %cst_288 = arith.constant 9.99999997E-7 : f32
    %520 = vector.broadcast %cst_288 : f32 to vector<17x1xf32>
    %521 = arith.addf %517, %520 : vector<17x1xf32>
    %522 = math.rsqrt %521 : vector<17x1xf32>
    %523 = vector.broadcast %522 : vector<17x1xf32> to vector<17x32xf32>
    %524 = arith.mulf %519, %523 : vector<17x32xf32>
    %525 = vector.broadcast %504 : vector<1x32xf32> to vector<17x32xf32>
    %526 = arith.mulf %524, %525 : vector<17x32xf32>
    %527 = vector.broadcast %506 : vector<1x32xf32> to vector<17x32xf32>
    %528 = arith.addf %526, %527 : vector<17x32xf32>
    %c1_289 = arith.constant 1 : index
    %c0_290 = arith.constant 0 : index
    %c0_291 = arith.constant 0 : index
    %529 = vector.load %arg7[%c1_289, %c0_290, %c0_291] : memref<2x32x96xf32, #tpu.memory_space<vmem>>, vector<1x32x96xf32>
    %530 = vector.shape_cast %529 : vector<1x32x96xf32> to vector<32x96xf32>
    %cst_292 = arith.constant dense<0.000000e+00> : vector<17x96xf32>
    %531 = tpu.matmul %528, %530, %cst_292 {dimension_numbers = #tpu.dot_dimension_numbers<[1], [0], [0], [1], [0, 0, 1, 1], [], []>} : vector<17x32xf32>, vector<32x96xf32>, vector<17x96xf32> -> vector<17x96xf32>
    %c1_293 = arith.constant 1 : index
    %c0_294 = arith.constant 0 : index
    %c0_295 = arith.constant 0 : index
    %532 = vector.load %arg8[%c1_293, %c0_294, %c0_295] : memref<2x1x96xf32, #tpu.memory_space<vmem>>, vector<1x1x96xf32>
    %533 = vector.shape_cast %532 : vector<1x1x96xf32> to vector<1x96xf32>
    %534 = vector.broadcast %533 : vector<1x96xf32> to vector<17x96xf32>
    %535 = arith.addf %531, %534 : vector<17x96xf32>
    %536 = vector.extract_strided_slice %535 {offsets = [0, 0], sizes = [17, 8], strides = [1, 1]} : vector<17x96xf32> to vector<17x8xf32>
    %537 = vector.extract_strided_slice %535 {offsets = [0, 32], sizes = [17, 8], strides = [1, 1]} : vector<17x96xf32> to vector<17x8xf32>
    %cst_296 = arith.constant dense<0.000000e+00> : vector<17x17xf32>
    %538 = tpu.matmul %536, %537, %cst_296 {dimension_numbers = #tpu.dot_dimension_numbers<[1], [1], [0], [0], [0, 0, 1, 0], [], []>} : vector<17x8xf32>, vector<17x8xf32>, vector<17x17xf32> -> vector<17x17xf32>
    %539 = vector.extract_strided_slice %535 {offsets = [0, 8], sizes = [17, 8], strides = [1, 1]} : vector<17x96xf32> to vector<17x8xf32>
    %540 = vector.extract_strided_slice %535 {offsets = [0, 40], sizes = [17, 8], strides = [1, 1]} : vector<17x96xf32> to vector<17x8xf32>
    %cst_297 = arith.constant dense<0.000000e+00> : vector<17x17xf32>
    %541 = tpu.matmul %539, %540, %cst_297 {dimension_numbers = #tpu.dot_dimension_numbers<[1], [1], [0], [0], [0, 0, 1, 0], [], []>} : vector<17x8xf32>, vector<17x8xf32>, vector<17x17xf32> -> vector<17x17xf32>
    %542 = vector.extract_strided_slice %535 {offsets = [0, 16], sizes = [17, 8], strides = [1, 1]} : vector<17x96xf32> to vector<17x8xf32>
    %543 = vector.extract_strided_slice %535 {offsets = [0, 48], sizes = [17, 8], strides = [1, 1]} : vector<17x96xf32> to vector<17x8xf32>
    %cst_298 = arith.constant dense<0.000000e+00> : vector<17x17xf32>
    %544 = tpu.matmul %542, %543, %cst_298 {dimension_numbers = #tpu.dot_dimension_numbers<[1], [1], [0], [0], [0, 0, 1, 0], [], []>} : vector<17x8xf32>, vector<17x8xf32>, vector<17x17xf32> -> vector<17x17xf32>
    %545 = vector.extract_strided_slice %535 {offsets = [0, 24], sizes = [17, 8], strides = [1, 1]} : vector<17x96xf32> to vector<17x8xf32>
    %546 = vector.extract_strided_slice %535 {offsets = [0, 56], sizes = [17, 8], strides = [1, 1]} : vector<17x96xf32> to vector<17x8xf32>
    %cst_299 = arith.constant dense<0.000000e+00> : vector<17x17xf32>
    %547 = tpu.matmul %545, %546, %cst_299 {dimension_numbers = #tpu.dot_dimension_numbers<[1], [1], [0], [0], [0, 0, 1, 0], [], []>} : vector<17x8xf32>, vector<17x8xf32>, vector<17x17xf32> -> vector<17x17xf32>
    %548 = vector.shape_cast %538 : vector<17x17xf32> to vector<1x17x17xf32>
    %549 = vector.shape_cast %541 : vector<17x17xf32> to vector<1x17x17xf32>
    %550 = vector.shape_cast %544 : vector<17x17xf32> to vector<1x17x17xf32>
    %551 = vector.shape_cast %547 : vector<17x17xf32> to vector<1x17x17xf32>
    %552 = tpu.concatenate %548, %549, %550, %551 in 0 : vector<1x17x17xf32>, vector<1x17x17xf32>, vector<1x17x17xf32>, vector<1x17x17xf32> -> vector<4x17x17xf32>
    %cst_300 = arith.constant dense<0xFF800000> : vector<4x17xf32>
    %553 = vector.multi_reduction <maximumf>, %552, %cst_300 [2] : vector<4x17x17xf32> to vector<4x17xf32>
    %554 = vector.shape_cast %553 : vector<4x17xf32> to vector<4x17x1xf32>
    %555 = vector.broadcast %554 : vector<4x17x1xf32> to vector<4x17x17xf32>
    %556 = arith.subf %552, %555 : vector<4x17x17xf32>
    %557 = math.exp %556 : vector<4x17x17xf32>
    %cst_301 = arith.constant dense<0.000000e+00> : vector<4x17xf32>
    %558 = vector.multi_reduction <add>, %557, %cst_301 [2] : vector<4x17x17xf32> to vector<4x17xf32>
    %559 = vector.shape_cast %558 : vector<4x17xf32> to vector<4x17x1xf32>
    %560 = tpu.reciprocal %559 {approx = true} : vector<4x17x1xf32> -> vector<4x17x1xf32>
    %561 = vector.broadcast %560 : vector<4x17x1xf32> to vector<4x17x17xf32>
    %562 = arith.mulf %557, %561 : vector<4x17x17xf32>
    %c1_302 = arith.constant 1 : index
    %c0_303 = arith.constant 0 : index
    %c0_304 = arith.constant 0 : index
    %563 = vector.load %arg10[%c1_302, %c0_303, %c0_304] : memref<2x1x32xf32, #tpu.memory_space<vmem>>, vector<1x1x32xf32>
    %564 = vector.shape_cast %563 : vector<1x1x32xf32> to vector<1x32xf32>
    %565 = vector.extract_strided_slice %535 {offsets = [0, 64], sizes = [17, 8], strides = [1, 1]} : vector<17x96xf32> to vector<17x8xf32>
    %566 = vector.extract_strided_slice %562 {offsets = [0, 0, 0], sizes = [1, 17, 17], strides = [1, 1, 1]} : vector<4x17x17xf32> to vector<1x17x17xf32>
    %567 = vector.shape_cast %566 : vector<1x17x17xf32> to vector<17x17xf32>
    %cst_305 = arith.constant dense<0.000000e+00> : vector<17x8xf32>
    %568 = tpu.matmul %567, %565, %cst_305 {dimension_numbers = #tpu.dot_dimension_numbers<[1], [0], [0], [1], [0, 0, 1, 1], [], []>} : vector<17x17xf32>, vector<17x8xf32>, vector<17x8xf32> -> vector<17x8xf32>
    %c1_306 = arith.constant 1 : index
    %c0_307 = arith.constant 0 : index
    %c0_308 = arith.constant 0 : index
    %c0_309 = arith.constant 0 : index
    %569 = vector.load %arg9[%c1_306, %c0_307, %c0_308, %c0_309] : memref<2x4x8x32xf32, #tpu.memory_space<vmem>>, vector<1x1x8x32xf32>
    %570 = vector.shape_cast %569 : vector<1x1x8x32xf32> to vector<8x32xf32>
    %cst_310 = arith.constant dense<0.000000e+00> : vector<17x32xf32>
    %571 = tpu.matmul %568, %570, %cst_310 {dimension_numbers = #tpu.dot_dimension_numbers<[1], [0], [0], [1], [0, 0, 1, 1], [], []>} : vector<17x8xf32>, vector<8x32xf32>, vector<17x32xf32> -> vector<17x32xf32>
    %572 = vector.broadcast %564 : vector<1x32xf32> to vector<17x32xf32>
    %573 = arith.addf %572, %571 : vector<17x32xf32>
    %574 = vector.extract_strided_slice %535 {offsets = [0, 72], sizes = [17, 8], strides = [1, 1]} : vector<17x96xf32> to vector<17x8xf32>
    %575 = vector.extract_strided_slice %562 {offsets = [1, 0, 0], sizes = [1, 17, 17], strides = [1, 1, 1]} : vector<4x17x17xf32> to vector<1x17x17xf32>
    %576 = vector.shape_cast %575 : vector<1x17x17xf32> to vector<17x17xf32>
    %cst_311 = arith.constant dense<0.000000e+00> : vector<17x8xf32>
    %577 = tpu.matmul %576, %574, %cst_311 {dimension_numbers = #tpu.dot_dimension_numbers<[1], [0], [0], [1], [0, 0, 1, 1], [], []>} : vector<17x17xf32>, vector<17x8xf32>, vector<17x8xf32> -> vector<17x8xf32>
    %c1_312 = arith.constant 1 : index
    %c1_313 = arith.constant 1 : index
    %c0_314 = arith.constant 0 : index
    %c0_315 = arith.constant 0 : index
    %578 = vector.load %arg9[%c1_312, %c1_313, %c0_314, %c0_315] : memref<2x4x8x32xf32, #tpu.memory_space<vmem>>, vector<1x1x8x32xf32>
    %579 = vector.shape_cast %578 : vector<1x1x8x32xf32> to vector<8x32xf32>
    %cst_316 = arith.constant dense<0.000000e+00> : vector<17x32xf32>
    %580 = tpu.matmul %577, %579, %cst_316 {dimension_numbers = #tpu.dot_dimension_numbers<[1], [0], [0], [1], [0, 0, 1, 1], [], []>} : vector<17x8xf32>, vector<8x32xf32>, vector<17x32xf32> -> vector<17x32xf32>
    %581 = arith.addf %573, %580 : vector<17x32xf32>
    %582 = vector.extract_strided_slice %535 {offsets = [0, 80], sizes = [17, 8], strides = [1, 1]} : vector<17x96xf32> to vector<17x8xf32>
    %583 = vector.extract_strided_slice %562 {offsets = [2, 0, 0], sizes = [1, 17, 17], strides = [1, 1, 1]} : vector<4x17x17xf32> to vector<1x17x17xf32>
    %584 = vector.shape_cast %583 : vector<1x17x17xf32> to vector<17x17xf32>
    %cst_317 = arith.constant dense<0.000000e+00> : vector<17x8xf32>
    %585 = tpu.matmul %584, %582, %cst_317 {dimension_numbers = #tpu.dot_dimension_numbers<[1], [0], [0], [1], [0, 0, 1, 1], [], []>} : vector<17x17xf32>, vector<17x8xf32>, vector<17x8xf32> -> vector<17x8xf32>
    %c1_318 = arith.constant 1 : index
    %c2_319 = arith.constant 2 : index
    %c0_320 = arith.constant 0 : index
    %c0_321 = arith.constant 0 : index
    %586 = vector.load %arg9[%c1_318, %c2_319, %c0_320, %c0_321] : memref<2x4x8x32xf32, #tpu.memory_space<vmem>>, vector<1x1x8x32xf32>
    %587 = vector.shape_cast %586 : vector<1x1x8x32xf32> to vector<8x32xf32>
    %cst_322 = arith.constant dense<0.000000e+00> : vector<17x32xf32>
    %588 = tpu.matmul %585, %587, %cst_322 {dimension_numbers = #tpu.dot_dimension_numbers<[1], [0], [0], [1], [0, 0, 1, 1], [], []>} : vector<17x8xf32>, vector<8x32xf32>, vector<17x32xf32> -> vector<17x32xf32>
    %589 = arith.addf %581, %588 : vector<17x32xf32>
    %590 = vector.extract_strided_slice %535 {offsets = [0, 88], sizes = [17, 8], strides = [1, 1]} : vector<17x96xf32> to vector<17x8xf32>
    %591 = vector.extract_strided_slice %562 {offsets = [3, 0, 0], sizes = [1, 17, 17], strides = [1, 1, 1]} : vector<4x17x17xf32> to vector<1x17x17xf32>
    %592 = vector.shape_cast %591 : vector<1x17x17xf32> to vector<17x17xf32>
    %cst_323 = arith.constant dense<0.000000e+00> : vector<17x8xf32>
    %593 = tpu.matmul %592, %590, %cst_323 {dimension_numbers = #tpu.dot_dimension_numbers<[1], [0], [0], [1], [0, 0, 1, 1], [], []>} : vector<17x17xf32>, vector<17x8xf32>, vector<17x8xf32> -> vector<17x8xf32>
    %c1_324 = arith.constant 1 : index
    %c3_325 = arith.constant 3 : index
    %c0_326 = arith.constant 0 : index
    %c0_327 = arith.constant 0 : index
    %594 = vector.load %arg9[%c1_324, %c3_325, %c0_326, %c0_327] : memref<2x4x8x32xf32, #tpu.memory_space<vmem>>, vector<1x1x8x32xf32>
    %595 = vector.shape_cast %594 : vector<1x1x8x32xf32> to vector<8x32xf32>
    %cst_328 = arith.constant dense<0.000000e+00> : vector<17x32xf32>
    %596 = tpu.matmul %593, %595, %cst_328 {dimension_numbers = #tpu.dot_dimension_numbers<[1], [0], [0], [1], [0, 0, 1, 1], [], []>} : vector<17x8xf32>, vector<8x32xf32>, vector<17x32xf32> -> vector<17x32xf32>
    %597 = arith.addf %589, %596 : vector<17x32xf32>
    %598 = arith.addf %502, %597 : vector<17x32xf32>
    %c1_329 = arith.constant 1 : index
    %c0_330 = arith.constant 0 : index
    %c0_331 = arith.constant 0 : index
    %599 = vector.load %arg11[%c1_329, %c0_330, %c0_331] : memref<2x1x32xf32, #tpu.memory_space<vmem>>, vector<1x1x32xf32>
    %600 = vector.shape_cast %599 : vector<1x1x32xf32> to vector<1x32xf32>
    %c1_332 = arith.constant 1 : index
    %c0_333 = arith.constant 0 : index
    %c0_334 = arith.constant 0 : index
    %601 = vector.load %arg12[%c1_332, %c0_333, %c0_334] : memref<2x1x32xf32, #tpu.memory_space<vmem>>, vector<1x1x32xf32>
    %602 = vector.shape_cast %601 : vector<1x1x32xf32> to vector<1x32xf32>
    %cst_335 = arith.constant dense<0.000000e+00> : vector<17xf32>
    %603 = vector.multi_reduction <add>, %598, %cst_335 [1] : vector<17x32xf32> to vector<17xf32>
    %604 = vector.shape_cast %603 : vector<17xf32> to vector<17x1xf32>
    %cst_336 = arith.constant 3.200000e+01 : f32
    %605 = vector.broadcast %cst_336 : f32 to vector<17x1xf32>
    %606 = arith.divf %604, %605 : vector<17x1xf32>
    %607 = vector.broadcast %606 : vector<17x1xf32> to vector<17x32xf32>
    %608 = arith.subf %598, %607 : vector<17x32xf32>
    %609 = arith.mulf %608, %608 : vector<17x32xf32>
    %cst_337 = arith.constant dense<0.000000e+00> : vector<17xf32>
    %610 = vector.multi_reduction <add>, %609, %cst_337 [1] : vector<17x32xf32> to vector<17xf32>
    %611 = vector.shape_cast %610 : vector<17xf32> to vector<17x1xf32>
    %cst_338 = arith.constant 3.200000e+01 : f32
    %612 = vector.broadcast %cst_338 : f32 to vector<17x1xf32>
    %613 = arith.divf %611, %612 : vector<17x1xf32>
    %614 = vector.broadcast %606 : vector<17x1xf32> to vector<17x32xf32>
    %615 = arith.subf %598, %614 : vector<17x32xf32>
    %cst_339 = arith.constant 9.99999997E-7 : f32
    %616 = vector.broadcast %cst_339 : f32 to vector<17x1xf32>
    %617 = arith.addf %613, %616 : vector<17x1xf32>
    %618 = math.rsqrt %617 : vector<17x1xf32>
    %619 = vector.broadcast %618 : vector<17x1xf32> to vector<17x32xf32>
    %620 = arith.mulf %615, %619 : vector<17x32xf32>
    %621 = vector.broadcast %600 : vector<1x32xf32> to vector<17x32xf32>
    %622 = arith.mulf %620, %621 : vector<17x32xf32>
    %623 = vector.broadcast %602 : vector<1x32xf32> to vector<17x32xf32>
    %624 = arith.addf %622, %623 : vector<17x32xf32>
    %c1_340 = arith.constant 1 : index
    %c0_341 = arith.constant 0 : index
    %c0_342 = arith.constant 0 : index
    %625 = vector.load %arg13[%c1_340, %c0_341, %c0_342] : memref<2x32x128xf32, #tpu.memory_space<vmem>>, vector<1x32x128xf32>
    %626 = vector.shape_cast %625 : vector<1x32x128xf32> to vector<32x128xf32>
    %cst_343 = arith.constant dense<0.000000e+00> : vector<17x128xf32>
    %627 = tpu.matmul %624, %626, %cst_343 {dimension_numbers = #tpu.dot_dimension_numbers<[1], [0], [0], [1], [0, 0, 1, 1], [], []>} : vector<17x32xf32>, vector<32x128xf32>, vector<17x128xf32> -> vector<17x128xf32>
    %c1_344 = arith.constant 1 : index
    %c0_345 = arith.constant 0 : index
    %c0_346 = arith.constant 0 : index
    %628 = vector.load %arg14[%c1_344, %c0_345, %c0_346] : memref<2x1x128xf32, #tpu.memory_space<vmem>>, vector<1x1x128xf32>
    %629 = vector.shape_cast %628 : vector<1x1x128xf32> to vector<1x128xf32>
    %630 = vector.broadcast %629 : vector<1x128xf32> to vector<17x128xf32>
    %631 = arith.addf %627, %630 : vector<17x128xf32>
    %cst_347 = arith.constant 5.000000e-01 : f32
    %632 = vector.broadcast %cst_347 : f32 to vector<17x128xf32>
    %633 = arith.mulf %632, %631 : vector<17x128xf32>
    %cst_348 = arith.constant 0.707106769 : f32
    %634 = vector.broadcast %cst_348 : f32 to vector<17x128xf32>
    %635 = arith.mulf %631, %634 : vector<17x128xf32>
    %636 = math.erf %635 : vector<17x128xf32>
    %cst_349 = arith.constant 1.000000e+00 : f32
    %637 = vector.broadcast %cst_349 : f32 to vector<17x128xf32>
    %638 = arith.addf %637, %636 : vector<17x128xf32>
    %639 = arith.mulf %633, %638 : vector<17x128xf32>
    %c1_350 = arith.constant 1 : index
    %c0_351 = arith.constant 0 : index
    %c0_352 = arith.constant 0 : index
    %640 = vector.load %arg15[%c1_350, %c0_351, %c0_352] : memref<2x128x32xf32, #tpu.memory_space<vmem>>, vector<1x128x32xf32>
    %641 = vector.shape_cast %640 : vector<1x128x32xf32> to vector<128x32xf32>
    %cst_353 = arith.constant dense<0.000000e+00> : vector<17x32xf32>
    %642 = tpu.matmul %639, %641, %cst_353 {dimension_numbers = #tpu.dot_dimension_numbers<[1], [0], [0], [1], [0, 0, 1, 1], [], []>} : vector<17x128xf32>, vector<128x32xf32>, vector<17x32xf32> -> vector<17x32xf32>
    %c1_354 = arith.constant 1 : index
    %c0_355 = arith.constant 0 : index
    %c0_356 = arith.constant 0 : index
    %643 = vector.load %arg16[%c1_354, %c0_355, %c0_356] : memref<2x1x32xf32, #tpu.memory_space<vmem>>, vector<1x1x32xf32>
    %644 = vector.shape_cast %643 : vector<1x1x32xf32> to vector<1x32xf32>
    %645 = vector.broadcast %644 : vector<1x32xf32> to vector<17x32xf32>
    %646 = arith.addf %642, %645 : vector<17x32xf32>
    %647 = arith.addf %598, %646 : vector<17x32xf32>
    %c0_357 = arith.constant 0 : index
    %c0_358 = arith.constant 0 : index
    %648 = vector.load %arg17[%c0_357, %c0_358] : memref<1x32xf32, #tpu.memory_space<vmem>>, vector<1x32xf32>
    %c0_359 = arith.constant 0 : index
    %c0_360 = arith.constant 0 : index
    %649 = vector.load %arg18[%c0_359, %c0_360] : memref<1x32xf32, #tpu.memory_space<vmem>>, vector<1x32xf32>
    %cst_361 = arith.constant dense<0.000000e+00> : vector<17xf32>
    %650 = vector.multi_reduction <add>, %647, %cst_361 [1] : vector<17x32xf32> to vector<17xf32>
    %651 = vector.shape_cast %650 : vector<17xf32> to vector<17x1xf32>
    %cst_362 = arith.constant 3.200000e+01 : f32
    %652 = vector.broadcast %cst_362 : f32 to vector<17x1xf32>
    %653 = arith.divf %651, %652 : vector<17x1xf32>
    %654 = vector.broadcast %653 : vector<17x1xf32> to vector<17x32xf32>
    %655 = arith.subf %647, %654 : vector<17x32xf32>
    %656 = arith.mulf %655, %655 : vector<17x32xf32>
    %cst_363 = arith.constant dense<0.000000e+00> : vector<17xf32>
    %657 = vector.multi_reduction <add>, %656, %cst_363 [1] : vector<17x32xf32> to vector<17xf32>
    %658 = vector.shape_cast %657 : vector<17xf32> to vector<17x1xf32>
    %cst_364 = arith.constant 3.200000e+01 : f32
    %659 = vector.broadcast %cst_364 : f32 to vector<17x1xf32>
    %660 = arith.divf %658, %659 : vector<17x1xf32>
    %661 = vector.broadcast %653 : vector<17x1xf32> to vector<17x32xf32>
    %662 = arith.subf %647, %661 : vector<17x32xf32>
    %cst_365 = arith.constant 9.99999997E-7 : f32
    %663 = vector.broadcast %cst_365 : f32 to vector<17x1xf32>
    %664 = arith.addf %660, %663 : vector<17x1xf32>
    %665 = math.rsqrt %664 : vector<17x1xf32>
    %666 = vector.broadcast %665 : vector<17x1xf32> to vector<17x32xf32>
    %667 = arith.mulf %662, %666 : vector<17x32xf32>
    %668 = vector.broadcast %648 : vector<1x32xf32> to vector<17x32xf32>
    %669 = arith.mulf %667, %668 : vector<17x32xf32>
    %670 = vector.broadcast %649 : vector<1x32xf32> to vector<17x32xf32>
    %671 = arith.addf %669, %670 : vector<17x32xf32>
    %c1_366 = arith.constant 1 : index
    %c0_367 = arith.constant 0 : index
    %c0_368 = arith.constant 0 : index
    %672 = vector.load %arg2[%c1_366, %c0_367, %c0_368] : memref<2x1x17xf32, #tpu.memory_space<vmem>>, vector<1x1x17xf32>
    %673 = vector.shape_cast %672 : vector<1x1x17xf32> to vector<1x17xf32>
    %cst_369 = arith.constant dense<0.000000e+00> : vector<1x32xf32>
    %674 = tpu.matmul %673, %671, %cst_369 {dimension_numbers = #tpu.dot_dimension_numbers<[1], [0], [0], [1], [0, 0, 1, 1], [], []>} : vector<1x17xf32>, vector<17x32xf32>, vector<1x32xf32> -> vector<1x32xf32>
    %c0_370 = arith.constant 0 : index
    %c0_371 = arith.constant 0 : index
    %675 = vector.load %arg19[%c0_370, %c0_371] : memref<1x32xf32, #tpu.memory_space<vmem>>, vector<1x32xf32>
    %c0_372 = arith.constant 0 : index
    %c0_373 = arith.constant 0 : index
    %676 = vector.load %arg20[%c0_372, %c0_373] : memref<1x32xf32, #tpu.memory_space<vmem>>, vector<1x32xf32>
    %cst_374 = arith.constant dense<0.000000e+00> : vector<1xf32>
    %677 = vector.multi_reduction <add>, %674, %cst_374 [1] : vector<1x32xf32> to vector<1xf32>
    %678 = vector.shape_cast %677 : vector<1xf32> to vector<1x1xf32>
    %cst_375 = arith.constant 3.200000e+01 : f32
    %679 = vector.broadcast %cst_375 : f32 to vector<1x1xf32>
    %680 = arith.divf %678, %679 : vector<1x1xf32>
    %681 = vector.broadcast %680 : vector<1x1xf32> to vector<1x32xf32>
    %682 = arith.subf %674, %681 : vector<1x32xf32>
    %683 = arith.mulf %682, %682 : vector<1x32xf32>
    %cst_376 = arith.constant dense<0.000000e+00> : vector<1xf32>
    %684 = vector.multi_reduction <add>, %683, %cst_376 [1] : vector<1x32xf32> to vector<1xf32>
    %685 = vector.shape_cast %684 : vector<1xf32> to vector<1x1xf32>
    %cst_377 = arith.constant 3.200000e+01 : f32
    %686 = vector.broadcast %cst_377 : f32 to vector<1x1xf32>
    %687 = arith.divf %685, %686 : vector<1x1xf32>
    %688 = vector.broadcast %680 : vector<1x1xf32> to vector<1x32xf32>
    %689 = arith.subf %674, %688 : vector<1x32xf32>
    %cst_378 = arith.constant 9.99999997E-7 : f32
    %690 = vector.broadcast %cst_378 : f32 to vector<1x1xf32>
    %691 = arith.addf %687, %690 : vector<1x1xf32>
    %692 = math.rsqrt %691 : vector<1x1xf32>
    %693 = vector.broadcast %692 : vector<1x1xf32> to vector<1x32xf32>
    %694 = arith.mulf %689, %693 : vector<1x32xf32>
    %695 = arith.mulf %694, %675 : vector<1x32xf32>
    %696 = arith.addf %695, %676 : vector<1x32xf32>
    %c0_379 = arith.constant 0 : index
    %c0_380 = arith.constant 0 : index
    %697 = vector.load %arg21[%c0_379, %c0_380] : memref<32x8xf32, #tpu.memory_space<vmem>>, vector<32x8xf32>
    %cst_381 = arith.constant dense<0.000000e+00> : vector<1x8xf32>
    %698 = tpu.matmul %696, %697, %cst_381 {dimension_numbers = #tpu.dot_dimension_numbers<[1], [0], [0], [1], [0, 0, 1, 1], [], []>} : vector<1x32xf32>, vector<32x8xf32>, vector<1x8xf32> -> vector<1x8xf32>
    %c0_382 = arith.constant 0 : index
    %c0_383 = arith.constant 0 : index
    %699 = vector.load %arg22[%c0_382, %c0_383] : memref<1x8xf32, #tpu.memory_space<vmem>>, vector<1x8xf32>
    %700 = arith.addf %698, %699 : vector<1x8xf32>
    %c1_384 = arith.constant 1 : index
    %c0_385 = arith.constant 0 : index
    %c0_386 = arith.constant 0 : index
    %701 = vector.load %arg23[%c1_384, %c0_385, %c0_386] : memref<2x1x8xf32, #tpu.memory_space<vmem>>, vector<1x1x8xf32>
    %702 = vector.shape_cast %701 : vector<1x1x8xf32> to vector<1x8xf32>
    %703 = vector.shape_cast %700 : vector<1x8xf32> to vector<1x1x8xf32>
    tpu.vector_store %arg23[%c1_384, %c0_385, %c0_386], %703 {strides = array<i32>} : memref<2x1x8xf32, #tpu.memory_space<vmem>>, vector<1x1x8xf32>,
    return
  }
  func.func @transform_0(%arg0: i32) -> (i32, i32, i32) {
    %c0_i32 = arith.constant 0 : i32
    %c0_i32_0 = arith.constant 0 : i32
    %c0_i32_1 = arith.constant 0 : i32
    %c0_i32_2 = arith.constant 0 : i32
    return %c0_i32, %c0_i32_0, %c0_i32_1 : i32, i32, i32
  }
  func.func @transform_1(%arg0: i32) -> (i32, i32, i32) {
    %c0_i32 = arith.constant 0 : i32
    %c0_i32_0 = arith.constant 0 : i32
    %c0_i32_1 = arith.constant 0 : i32
    %c0_i32_2 = arith.constant 0 : i32
    return %c0_i32, %c0_i32_0, %c0_i32_1 : i32, i32, i32
  }
  func.func @transform_2(%arg0: i32) -> (i32, i32) {
    %c0_i32 = arith.constant 0 : i32
    %c0_i32_0 = arith.constant 0 : i32
    %c0_i32_1 = arith.constant 0 : i32
    return %c0_i32, %c0_i32_0 : i32, i32
  }
  func.func @transform_3(%arg0: i32) -> (i32, i32) {
    %c0_i32 = arith.constant 0 : i32
    %c0_i32_0 = arith.constant 0 : i32
    %c0_i32_1 = arith.constant 0 : i32
    return %c0_i32, %c0_i32_0 : i32, i32
  }
  func.func @transform_4(%arg0: i32) -> (i32, i32, i32) {
    %c0_i32 = arith.constant 0 : i32
    %c0_i32_0 = arith.constant 0 : i32
    %c0_i32_1 = arith.constant 0 : i32
    %c0_i32_2 = arith.constant 0 : i32
    return %c0_i32, %c0_i32_0, %c0_i32_1 : i32, i32, i32
  }
  func.func @transform_5(%arg0: i32) -> (i32, i32, i32) {
    %c0_i32 = arith.constant 0 : i32
    %c0_i32_0 = arith.constant 0 : i32
    %c0_i32_1 = arith.constant 0 : i32
    %c0_i32_2 = arith.constant 0 : i32
    return %c0_i32, %c0_i32_0, %c0_i32_1 : i32, i32, i32
  }
  func.func @transform_6(%arg0: i32) -> (i32, i32, i32) {
    %c0_i32 = arith.constant 0 : i32
    %c0_i32_0 = arith.constant 0 : i32
    %c0_i32_1 = arith.constant 0 : i32
    %c0_i32_2 = arith.constant 0 : i32
    return %c0_i32, %c0_i32_0, %c0_i32_1 : i32, i32, i32
  }
  func.func @transform_7(%arg0: i32) -> (i32, i32, i32) {
    %c0_i32 = arith.constant 0 : i32
    %c0_i32_0 = arith.constant 0 : i32
    %c0_i32_1 = arith.constant 0 : i32
    %c0_i32_2 = arith.constant 0 : i32
    return %c0_i32, %c0_i32_0, %c0_i32_1 : i32, i32, i32
  }
  func.func @transform_8(%arg0: i32) -> (i32, i32, i32, i32) {
    %c0_i32 = arith.constant 0 : i32
    %c0_i32_0 = arith.constant 0 : i32
    %c0_i32_1 = arith.constant 0 : i32
    %c0_i32_2 = arith.constant 0 : i32
    %c0_i32_3 = arith.constant 0 : i32
    return %c0_i32, %c0_i32_0, %c0_i32_1, %c0_i32_2 : i32, i32, i32, i32
  }
  func.func @transform_9(%arg0: i32) -> (i32, i32, i32) {
    %c0_i32 = arith.constant 0 : i32
    %c0_i32_0 = arith.constant 0 : i32
    %c0_i32_1 = arith.constant 0 : i32
    %c0_i32_2 = arith.constant 0 : i32
    return %c0_i32, %c0_i32_0, %c0_i32_1 : i32, i32, i32
  }
  func.func @transform_10(%arg0: i32) -> (i32, i32, i32) {
    %c0_i32 = arith.constant 0 : i32
    %c0_i32_0 = arith.constant 0 : i32
    %c0_i32_1 = arith.constant 0 : i32
    %c0_i32_2 = arith.constant 0 : i32
    return %c0_i32, %c0_i32_0, %c0_i32_1 : i32, i32, i32
  }
  func.func @transform_11(%arg0: i32) -> (i32, i32, i32) {
    %c0_i32 = arith.constant 0 : i32
    %c0_i32_0 = arith.constant 0 : i32
    %c0_i32_1 = arith.constant 0 : i32
    %c0_i32_2 = arith.constant 0 : i32
    return %c0_i32, %c0_i32_0, %c0_i32_1 : i32, i32, i32
  }
  func.func @transform_12(%arg0: i32) -> (i32, i32, i32) {
    %c0_i32 = arith.constant 0 : i32
    %c0_i32_0 = arith.constant 0 : i32
    %c0_i32_1 = arith.constant 0 : i32
    %c0_i32_2 = arith.constant 0 : i32
    return %c0_i32, %c0_i32_0, %c0_i32_1 : i32, i32, i32
  }
  func.func @transform_13(%arg0: i32) -> (i32, i32, i32) {
    %c0_i32 = arith.constant 0 : i32
    %c0_i32_0 = arith.constant 0 : i32
    %c0_i32_1 = arith.constant 0 : i32
    %c0_i32_2 = arith.constant 0 : i32
    return %c0_i32, %c0_i32_0, %c0_i32_1 : i32, i32, i32
  }
  func.func @transform_14(%arg0: i32) -> (i32, i32, i32) {
    %c0_i32 = arith.constant 0 : i32
    %c0_i32_0 = arith.constant 0 : i32
    %c0_i32_1 = arith.constant 0 : i32
    %c0_i32_2 = arith.constant 0 : i32
    return %c0_i32, %c0_i32_0, %c0_i32_1 : i32, i32, i32
  }
  func.func @transform_15(%arg0: i32) -> (i32, i32, i32) {
    %c0_i32 = arith.constant 0 : i32
    %c0_i32_0 = arith.constant 0 : i32
    %c0_i32_1 = arith.constant 0 : i32
    %c0_i32_2 = arith.constant 0 : i32
    return %c0_i32, %c0_i32_0, %c0_i32_1 : i32, i32, i32
  }
  func.func @transform_16(%arg0: i32) -> (i32, i32) {
    %c0_i32 = arith.constant 0 : i32
    %c0_i32_0 = arith.constant 0 : i32
    %c0_i32_1 = arith.constant 0 : i32
    return %c0_i32, %c0_i32_0 : i32, i32
  }
  func.func @transform_17(%arg0: i32) -> (i32, i32) {
    %c0_i32 = arith.constant 0 : i32
    %c0_i32_0 = arith.constant 0 : i32
    %c0_i32_1 = arith.constant 0 : i32
    return %c0_i32, %c0_i32_0 : i32, i32
  }
  func.func @transform_18(%arg0: i32) -> (i32, i32) {
    %c0_i32 = arith.constant 0 : i32
    %c0_i32_0 = arith.constant 0 : i32
    %c0_i32_1 = arith.constant 0 : i32
    return %c0_i32, %c0_i32_0 : i32, i32
  }
  func.func @transform_19(%arg0: i32) -> (i32, i32) {
    %c0_i32 = arith.constant 0 : i32
    %c0_i32_0 = arith.constant 0 : i32
    %c0_i32_1 = arith.constant 0 : i32
    return %c0_i32, %c0_i32_0 : i32, i32
  }
  func.func @transform_20(%arg0: i32) -> (i32, i32) {
    %c0_i32 = arith.constant 0 : i32
    %c0_i32_0 = arith.constant 0 : i32
    %c0_i32_1 = arith.constant 0 : i32
    return %c0_i32, %c0_i32_0 : i32, i32
  }
  func.func @transform_21(%arg0: i32) -> (i32, i32) {
    %c0_i32 = arith.constant 0 : i32
    %c0_i32_0 = arith.constant 0 : i32
    %c0_i32_1 = arith.constant 0 : i32
    return %c0_i32, %c0_i32_0 : i32, i32
  }
  func.func @transform_22(%arg0: i32) -> (i32, i32, i32) {
    %c0_i32 = arith.constant 0 : i32
    %c0_i32_0 = arith.constant 0 : i32
    %c0_i32_1 = arith.constant 0 : i32
    %c0_i32_2 = arith.constant 0 : i32
    return %c0_i32, %c0_i32_0, %c0_i32_1 : i32, i32, i32
  }
}

</mosaic_0001>

<llo_original>
// kernel: late_mask_vit_forward.1
$region0: #{late_mask_vit_forward.1}
  #allocation0 [shape = 'u32[]', space=smem, size = 0x4, offset = 0x4, fixed_abs, tag = 'smem constant byte address 0x4 - core index']
  #allocation1 [shape = 'u32[144,128]{1,0:T(1,128)}', space=vmem, size = 0x12000, scoped, tag = 'internal scratch']
  %s0 = inlined_call_operand.vmem [shape: f32[2,17,64], index: 0, kind: input, shape index: {}]
  %s1 = inlined_call_operand.vmem [shape: f32[2,1,17], index: 1, kind: input, shape index: {}]
  %s2 = inlined_call_operand.vmem [shape: f32[64,32], index: 2, kind: input, shape index: {}]
  %s3 = inlined_call_operand.vmem [shape: f32[17,32], index: 3, kind: input, shape index: {}]
  %s4 = inlined_call_operand.vmem [shape: f32[2,1,32], index: 4, kind: input, shape index: {}]
  %s5 = inlined_call_operand.vmem [shape: f32[2,1,32], index: 5, kind: input, shape index: {}]
  %s6 = inlined_call_operand.vmem [shape: f32[2,32,96], index: 6, kind: input, shape index: {}]
  %s7 = inlined_call_operand.vmem [shape: f32[2,1,96], index: 7, kind: input, shape index: {}]
  %s8 = inlined_call_operand.vmem [shape: f32[2,4,8,32], index: 8, kind: input, shape index: {}]
  %s9 = inlined_call_operand.vmem [shape: f32[2,1,32], index: 9, kind: input, shape index: {}]
  %s10 = inlined_call_operand.vmem [shape: f32[2,1,32], index: 10, kind: input, shape index: {}]
  %s11 = inlined_call_operand.vmem [shape: f32[2,1,32], index: 11, kind: input, shape index: {}]
  %s12 = inlined_call_operand.vmem [shape: f32[2,32,128], index: 12, kind: input, shape index: {}]
  %s13 = inlined_call_operand.vmem [shape: f32[2,1,128], index: 13, kind: input, shape index: {}]
  %s14 = inlined_call_operand.vmem [shape: f32[2,128,32], index: 14, kind: input, shape index: {}]
  %s15 = inlined_call_operand.vmem [shape: f32[2,1,32], index: 15, kind: input, shape index: {}]
  %s16 = inlined_call_operand.vmem [shape: f32[1,32], index: 16, kind: input, shape index: {}]
  %s17 = inlined_call_operand.vmem [shape: f32[1,32], index: 17, kind: input, shape index: {}]
  %s18 = inlined_call_operand.vmem [shape: f32[1,32], index: 18, kind: input, shape index: {}]
  %s19 = inlined_call_operand.vmem [shape: f32[1,32], index: 19, kind: input, shape index: {}]
  %s20 = inlined_call_operand.vmem [shape: f32[32,8], index: 20, kind: input, shape index: {}]
  %s21 = inlined_call_operand.vmem [shape: f32[1,8], index: 21, kind: input, shape index: {}]
  %s22 = inlined_call_operand.hbm [shape: f32[2,1,8], index: 22, kind: output, shape index: {}]
  %s23 = sld [smem:[#allocation0]]
  $region98: #{late_mask_vit_forward.1} parent=0
    _
  %s25 = ssub.s32 1, %s23
  %s26 = scalar_select 0, %s25, %s23
  $region1: #{late_mask_vit_forward.1} parent=0
    #allocation2 [shape = 'u8[1024]{0}', space=vmem, size = 0x400, scoped, tag = 'output window, operand 0, single buffered']
    #allocation3 [shape = 's32[1]{0}', space=sflag, size = 0x4, scoped, tag = 'scoped memory for late_mask_vit_forward.1']
    %27 = vsyncpa [#allocation3], 0
    // Predicated region
    $region2: #{late_mask_vit_forward.1} parent=1 // pred_check
      _
    $region3: #{late_mask_vit_forward.1} parent=1 // pred_check_branch
      %29 = sbr.rel (0) target = $region5
    $region4: #{late_mask_vit_forward.1} parent=1 // pred_region
      _
    $region5: #{late_mask_vit_forward.1} parent=1 // pred_fallthru
      _
    // Predicated region
    $region6: #{late_mask_vit_forward.1} parent=1 // pred_check
      _
    $region7: #{late_mask_vit_forward.1} parent=1 // pred_check_branch
      %31 = sbr.rel (0) target = $region9
    $region8: #{late_mask_vit_forward.1} parent=1 // pred_region
      _
    $region9: #{late_mask_vit_forward.1} parent=1 // pred_fallthru
      _
    // Predicated region
    $region10: #{late_mask_vit_forward.1} parent=1 // pred_check
      _
    $region11: #{late_mask_vit_forward.1} parent=1 // pred_check_branch
      %33 = sbr.rel (0) target = $region13
    $region12: #{late_mask_vit_forward.1} parent=1 // pred_region
      _
    $region13: #{late_mask_vit_forward.1} parent=1 // pred_fallthru
      _
    // Predicated region
    $region14: #{late_mask_vit_forward.1} parent=1 // pred_check
      _
    $region15: #{late_mask_vit_forward.1} parent=1 // pred_check_branch
      %35 = sbr.rel (0) target = $region17
    $region16: #{late_mask_vit_forward.1} parent=1 // pred_region
      _
    $region17: #{late_mask_vit_forward.1} parent=1 // pred_fallthru
      _
    // Predicated region
    $region18: #{late_mask_vit_forward.1} parent=1 // pred_check
      _
    $region19: #{late_mask_vit_forward.1} parent=1 // pred_check_branch
      %37 = sbr.rel (0) target = $region21
    $region20: #{late_mask_vit_forward.1} parent=1 // pred_region
      _
    $region21: #{late_mask_vit_forward.1} parent=1 // pred_fallthru
      _
    // Predicated region
    $region22: #{late_mask_vit_forward.1} parent=1 // pred_check
      _
    $region23: #{late_mask_vit_forward.1} parent=1 // pred_check_branch
      %39 = sbr.rel (0) target = $region25
    $region24: #{late_mask_vit_forward.1} parent=1 // pred_region
      _
    $region25: #{late_mask_vit_forward.1} parent=1 // pred_fallthru
      _
    // Predicated region
    $region26: #{late_mask_vit_forward.1} parent=1 // pred_check
      _
    $region27: #{late_mask_vit_forward.1} parent=1 // pred_check_branch
      %41 = sbr.rel (0) target = $region29
    $region28: #{late_mask_vit_forward.1} parent=1 // pred_region
      _
    $region29: #{late_mask_vit_forward.1} parent=1 // pred_fallthru
      _
    // Predicated region
    $region30: #{late_mask_vit_forward.1} parent=1 // pred_check
      _
    $region31: #{late_mask_vit_forward.1} parent=1 // pred_check_branch
      %43 = sbr.rel (0) target = $region33
    $region32: #{late_mask_vit_forward.1} parent=1 // pred_region
      _
    $region33: #{late_mask_vit_forward.1} parent=1 // pred_fallthru
      _
    // Predicated region
    $region34: #{late_mask_vit_forward.1} parent=1 // pred_check
      _
    $region35: #{late_mask_vit_forward.1} parent=1 // pred_check_branch
      %45 = sbr.rel (0) target = $region37
    $region36: #{late_mask_vit_forward.1} parent=1 // pred_region
      _
    $region37: #{late_mask_vit_forward.1} parent=1 // pred_fallthru
      _
    // Predicated region
    $region38: #{late_mask_vit_forward.1} parent=1 // pred_check
      _
    $region39: #{late_mask_vit_forward.1} parent=1 // pred_check_branch
      %47 = sbr.rel (0) target = $region41
    $region40: #{late_mask_vit_forward.1} parent=1 // pred_region
      _
    $region41: #{late_mask_vit_forward.1} parent=1 // pred_fallthru
      _
    // Predicated region
    $region42: #{late_mask_vit_forward.1} parent=1 // pred_check
      _
    $region43: #{late_mask_vit_forward.1} parent=1 // pred_check_branch
      %49 = sbr.rel (0) target = $region45
    $region44: #{late_mask_vit_forward.1} parent=1 // pred_region
      _
    $region45: #{late_mask_vit_forward.1} parent=1 // pred_fallthru
      _
    // Predicated region
    $region46: #{late_mask_vit_forward.1} parent=1 // pred_check
      _
    $region47: #{late_mask_vit_forward.1} parent=1 // pred_check_branch
      %51 = sbr.rel (0) target = $region49
    $region48: #{late_mask_vit_forward.1} parent=1 // pred_region
      _
    $region49: #{late_mask_vit_forward.1} parent=1 // pred_fallthru
      _
    // Predicated region
    $region50: #{late_mask_vit_forward.1} parent=1 // pred_check
      _
    $region51: #{late_mask_vit_forward.1} parent=1 // pred_check_branch
      %53 = sbr.rel (0) target = $region53
    $region52: #{late_mask_vit_forward.1} parent=1 // pred_region
      _
    $region53: #{late_mask_vit_forward.1} parent=1 // pred_fallthru
      _
    // Predicated region
    $region54: #{late_mask_vit_forward.1} parent=1 // pred_check
      _
    $region55: #{late_mask_vit_forward.1} parent=1 // pred_check_branch
      %55 = sbr.rel (0) target = $region57
    $region56: #{late_mask_vit_forward.1} parent=1 // pred_region
      _
    $region57: #{late_mask_vit_forward.1} parent=1 // pred_fallthru
      _
    // Predicated region
    $region58: #{late_mask_vit_forward.1} parent=1 // pred_check
      _
    $region59: #{late_mask_vit_forward.1} parent=1 // pred_check_branch
      %57 = sbr.rel (0) target = $region61
    $region60: #{late_mask_vit_forward.1} parent=1 // pred_region
      _
    $region61: #{late_mask_vit_forward.1} parent=1 // pred_fallthru
      _
    // Predicated region
    $region62: #{late_mask_vit_forward.1} parent=1 // pred_check
      _
    $region63: #{late_mask_vit_forward.1} parent=1 // pred_check_branch
      %59 = sbr.rel (0) target = $region65
    $region64: #{late_mask_vit_forward.1} parent=1 // pred_region
      _
    $region65: #{late_mask_vit_forward.1} parent=1 // pred_fallthru
      _
    // Predicated region
    $region66: #{late_mask_vit_forward.1} parent=1 // pred_check
      _
    $region67: #{late_mask_vit_forward.1} parent=1 // pred_check_branch
      %61 = sbr.rel (0) target = $region69
    $region68: #{late_mask_vit_forward.1} parent=1 // pred_region
      _
    $region69: #{late_mask_vit_forward.1} parent=1 // pred_fallthru
      _
    // Predicated region
    $region70: #{late_mask_vit_forward.1} parent=1 // pred_check
      _
    $region71: #{late_mask_vit_forward.1} parent=1 // pred_check_branch
      %63 = sbr.rel (0) target = $region73
    $region72: #{late_mask_vit_forward.1} parent=1 // pred_region
      _
    $region73: #{late_mask_vit_forward.1} parent=1 // pred_fallthru
      _
    // Predicated region
    $region74: #{late_mask_vit_forward.1} parent=1 // pred_check
      _
    $region75: #{late_mask_vit_forward.1} parent=1 // pred_check_branch
      %65 = sbr.rel (0) target = $region77
    $region76: #{late_mask_vit_forward.1} parent=1 // pred_region
      _
    $region77: #{late_mask_vit_forward.1} parent=1 // pred_fallthru
      _
    // Predicated region
    $region78: #{late_mask_vit_forward.1} parent=1 // pred_check
      _
    $region79: #{late_mask_vit_forward.1} parent=1 // pred_check_branch
      %67 = sbr.rel (0) target = $region81
    $region80: #{late_mask_vit_forward.1} parent=1 // pred_region
      _
    $region81: #{late_mask_vit_forward.1} parent=1 // pred_fallthru
      _
    // Predicated region
    $region82: #{late_mask_vit_forward.1} parent=1 // pred_check
      _
    $region83: #{late_mask_vit_forward.1} parent=1 // pred_check_branch
      %69 = sbr.rel (0) target = $region85
    $region84: #{late_mask_vit_forward.1} parent=1 // pred_region
      _
    $region85: #{late_mask_vit_forward.1} parent=1 // pred_fallthru
      _
    // Predicated region
    $region86: #{late_mask_vit_forward.1} parent=1 // pred_check
      _
    $region87: #{late_mask_vit_forward.1} parent=1 // pred_check_branch
      %71 = sbr.rel (0) target = $region89
    $region88: #{late_mask_vit_forward.1} parent=1 // pred_region
      _
    $region89: #{late_mask_vit_forward.1} parent=1 // pred_fallthru
      _
    %v72 = vld [vmem:[%s0] sm:$0xff]
    %v73 = vld [vmem:[%s0 + $0x8] sm:$0xff]
    %v74 = vld [vmem:[%s0 + $0x10] sm:$0x1]
    %v75 = vld [vmem:[%s2] sm:$0xff]
    %v76 = vld [vmem:[%s2 + $0x8] sm:$0xff]
    %v77 = vld [vmem:[%s2 + $0x10] sm:$0xff]
    %v78 = vld [vmem:[%s2 + $0x18] sm:$0xff]
    %v79 = vld [vmem:[%s2 + $0x20] sm:$0xff]
    %v80 = vld [vmem:[%s2 + $0x28] sm:$0xff]
    %v81 = vld [vmem:[%s2 + $0x30] sm:$0xff]
    %v82 = vld [vmem:[%s2 + $0x38] sm:$0xff]
    %v83 = vld [vmem:[%s3] sm:$0xff]
    %v84 = vld [vmem:[%s3 + $0x8] sm:$0xff]
    %v85 = vld [vmem:[%s3 + $0x10] sm:$0x1]
    %vm86 = vcmask 523264
    %v88 = vsel %vm86, %v72, 0
    %v91 = vsel %vm86, %v73, 0
    %v94 = vsel %vm86, %v74, 0
    %96 = vmatprep.subr.mxu0 0.0
    %97 = vmatpush1.msra.mxu0 0.0
    %98 = vmatprep.subr.mxu0 0.0
    %99 = vmatpush1.msra.mxu0 0.0
    %100 = vmatprep.subr.mxu0 0.0
    %101 = vmatpush1.msra.mxu0 0.0
    %102 = vmatprep.subr.mxu0 0.0
    %103 = vmatpush1.msra.mxu0 0.0
    %104 = vmatprep.subr.mxu0 0.0
    %105 = vmatpush1.msra.mxu0 0.0
    %106 = vmatprep.subr.mxu0 0.0
    %107 = vmatpush1.msra.mxu0 0.0
    %108 = vmatprep.subr.mxu0 0.0
    %109 = vmatpush1.msra.mxu0 0.0
    %110 = vmatprep.subr.mxu0 0.0
    %111 = vmatpush1.msra.mxu0 0.0
    %112 = vmatprep.subr.mxu0 0.0
    %113 = vmatpush1.msra.mxu0 %v82
    %114 = vmatprep.subr.mxu0 0.0
    %115 = vmatpush1.msra.mxu0 %v81
    %116 = vmatprep.subr.mxu0 0.0
    %117 = vmatpush1.msra.mxu0 %v80
    %118 = vmatprep.subr.mxu0 0.0
    %119 = vmatpush1.msra.mxu0 %v79
    %120 = vmatprep.subr.mxu0 0.0
    %121 = vmatpush1.msra.mxu0 %v78
    %122 = vmatprep.subr.mxu0 0.0
    %123 = vmatpush1.msra.mxu0 %v77
    %124 = vmatprep.subr.mxu0 0.0
    %125 = vmatpush1.msra.mxu0 %v76
    %126 = vmatprep.subr.mxu0 0.0
    %127 = vmatpush1.msra.mxu0 %v75
    %128 = vmatprep.subr.mxu0 0.0
    %129 = vmatpush2.msra.mxu0 0.0
    %130 = vmatprep.subr.mxu0 0.0
    %131 = vmatpush2.msra.mxu0 0.0
    %132 = vmatprep.subr.mxu0 0.0
    %133 = vmatpush2.msra.mxu0 0.0
    %134 = vmatprep.subr.mxu0 0.0
    %135 = vmatpush2.msra.mxu0 0.0
    %136 = vmatprep.subr.mxu0 0.0
    %137 = vmatpush2.msra.mxu0 0.0
    %138 = vmatprep.subr.mxu0 0.0
    %139 = vmatpush2.msra.mxu0 0.0
    %140 = vmatprep.subr.mxu0 0.0
    %141 = vmatpush2.msra.mxu0 0.0
    %142 = vmatprep.subr.mxu0 0.0
    %143 = vmatpush2.msra.mxu0 0.0
    %144 = vmatprep.subr.mxu0 0.0
    %145 = vmatpush2.msra.mxu0 0.0
    %146 = vmatprep.subr.mxu0 0.0
    %147 = vmatpush2.msra.mxu0 0.0
    %148 = vmatprep.subr.mxu0 0.0
    %149 = vmatpush2.msra.mxu0 0.0
    %150 = vmatprep.subr.mxu0 0.0
    %151 = vmatpush2.msra.mxu0 0.0
    %152 = vmatprep.subr.mxu0 0.0
    %153 = vmatpush2.msra.mxu0 0.0
    %154 = vmatprep.subr.mxu0 0.0
    %155 = vmatpush2.msra.mxu0 0.0
    %156 = vmatprep.subr.mxu0 0.0
    %157 = vmatpush2.msra.mxu0 0.0
    %158 = vmatprep.subr.mxu0 0.0
    %159 = vmatpush2.msra.mxu0 0.0
    %160 = vmatprep.mubr.f32.mxu0 0.0
    %161 = vmatmul.mubr.f32.gmra.mxu0 %v88
    %v162 = vpop.f32.mrf.mxu0
    %v163 = vadd.f32 %v83, %v162
    %v164 = vpop.f32.mrf.mxu0
    %165 = vmatprep.mubr.f32.mxu0 0.0
    %166 = vmatmul.mubr.f32.gmra.mxu0 %v91
    %v167 = vpop.f32.mrf.mxu0
    %v168 = vadd.f32 %v84, %v167
    %v169 = vpop.f32.mrf.mxu0
    %170 = vmatprep.mubr.f32.mxu0 0.0
    %171 = vmatmul.mubr.f32.gmra.mxu0 %v94
    %v172 = vpop.f32.mrf.mxu0
    %v173 = vadd.f32 %v85, %v172
    %v174 = vpop.f32.mrf.mxu0
    %175 = vdwg.mxu0
    %v176 = vld [vmem:[%s4] sm:$0x1]
    %v177 = vld [vmem:[%s5] sm:$0x1]
    %vm178 = vcmask 261120
    %v179 = vsel %vm178, %v163, 0.0
    %180 = vadd.xlane.f32.xlu0 %v179
    %v181 = vpop.xlane.xlu0 %180
    %v182 = vsel %vm178, %v168, 0.0
    %183 = vadd.xlane.f32.xlu0 %v182
    %v184 = vpop.xlane.xlu0 %183
    %vm185 = vcmask 253952
    %v186 = vsel %vm185, %v173, 0.0
    %187 = vadd.xlane.f32.xlu0 %v186
    %v188 = vpop.xlane.xlu0 %187
    %v189 = vrcp.pop 32.0
    %v190 = vmul.f32 %v181, %v189
    %v191 = vmul.f32 %v184, %v189
    %v192 = vmul.f32 %v188, %v189
    %v193 = vsub.f32 %v163, %v190
    %v194 = vsub.f32 %v168, %v191
    %v195 = vsub.f32 %v173, %v192
    %v196 = vmul.f32 %v193, %v193
    %v197 = vmul.f32 %v194, %v194
    %v198 = vmul.f32 %v195, %v195
    %v199 = vsel %vm178, %v196, 0.0
    %200 = vadd.xlane.f32.xlu0 %v199
    %v201 = vpop.xlane.xlu0 %200
    %v202 = vsel %vm178, %v197, 0.0
    %203 = vadd.xlane.f32.xlu0 %v202
    %v204 = vpop.xlane.xlu0 %203
    %v205 = vsel %vm185, %v198, 0.0
    %206 = vadd.xlane.f32.xlu0 %v205
    %v207 = vpop.xlane.xlu0 %206
    %v208 = vmul.f32 %v201, %v189
    %v209 = vmul.f32 %v204, %v189
    %v210 = vmul.f32 %v207, %v189
    %v211 = vadd.f32 %v208, 1e-06
    %v212 = vadd.f32 %v209, 1e-06
    %v213 = vadd.f32 %v210, 1e-06
    %v214 = vrsqrt.pop %v211
    %v215 = vrsqrt.pop %v212
    %v216 = vrsqrt.pop %v213
    %v217 = vmul.f32 %v193, %v214
    %v218 = vmul.f32 %v194, %v215
    %v219 = vmul.f32 %v195, %v216
    %v221 = vlaneseq
    %v222 = vshrl.u32 %v221, 7
    %v223 = vsub.s32 0, %v222
    %v224 = vrot.slane %v176, %v223
    %v226 = vmul.f32 %v217, %v224
    %v227 = vmul.f32 %v218, %v224
    %v228 = vmul.f32 %v219, %v224
    %v230 = vlaneseq
    %v231 = vshrl.u32 %v230, 7
    %v232 = vsub.s32 0, %v231
    %v233 = vrot.slane %v177, %v232
    %v235 = vadd.f32 %v226, %v233
    %v236 = vadd.f32 %v227, %v233
    %v237 = vadd.f32 %v228, %v233
    %v238 = vld [vmem:[%s6] sm:$0xff]
    %v239 = vld [vmem:[%s6 + $0x8] sm:$0xff]
    %v240 = vld [vmem:[%s6 + $0x10] sm:$0xff]
    %v241 = vld [vmem:[%s6 + $0x18] sm:$0xff]
    %v242 = vld [vmem:[%s7] sm:$0x1]
    %v244 = vlaneseq
    %v245 = vshrl.u32 %v244, 7
    %v246 = vsub.s32 0, %v245
    %v247 = vrot.slane %v242, %v246
    %v250 = vsel %vm178, %v235, 0
    %v253 = vsel %vm178, %v236, 0
    %v256 = vsel %vm178, %v237, 0
    %258 = vmatprep.subr.mxu0 0.0
    %259 = vmatpush1.msra.mxu0 0.0
    %260 = vmatprep.subr.mxu0 0.0
    %261 = vmatpush1.msra.mxu0 0.0
    %262 = vmatprep.subr.mxu0 0.0
    %263 = vmatpush1.msra.mxu0 0.0
    %264 = vmatprep.subr.mxu0 0.0
    %265 = vmatpush1.msra.mxu0 0.0
    %266 = vmatprep.subr.mxu0 0.0
    %267 = vmatpush1.msra.mxu0 0.0
    %268 = vmatprep.subr.mxu0 0.0
    %269 = vmatpush1.msra.mxu0 0.0
    %270 = vmatprep.subr.mxu0 0.0
    %271 = vmatpush1.msra.mxu0 0.0
    %272 = vmatprep.subr.mxu0 0.0
    %273 = vmatpush1.msra.mxu0 0.0
    %274 = vmatprep.subr.mxu0 0.0
    %275 = vmatpush1.msra.mxu0 0.0
    %276 = vmatprep.subr.mxu0 0.0
    %277 = vmatpush1.msra.mxu0 0.0
    %278 = vmatprep.subr.mxu0 0.0
    %279 = vmatpush1.msra.mxu0 0.0
    %280 = vmatprep.subr.mxu0 0.0
    %281 = vmatpush1.msra.mxu0 0.0
    %282 = vmatprep.subr.mxu0 0.0
    %283 = vmatpush1.msra.mxu0 %v241
    %284 = vmatprep.subr.mxu0 0.0
    %285 = vmatpush1.msra.mxu0 %v240
    %286 = vmatprep.subr.mxu0 0.0
    %287 = vmatpush1.msra.mxu0 %v239
    %288 = vmatprep.subr.mxu0 0.0
    %289 = vmatpush1.msra.mxu0 %v238
    %290 = vmatprep.subr.mxu0 0.0
    %291 = vmatpush2.msra.mxu0 0.0
    %292 = vmatprep.subr.mxu0 0.0
    %293 = vmatpush2.msra.mxu0 0.0
    %294 = vmatprep.subr.mxu0 0.0
    %295 = vmatpush2.msra.mxu0 0.0
    %296 = vmatprep.subr.mxu0 0.0
    %297 = vmatpush2.msra.mxu0 0.0
    %298 = vmatprep.subr.mxu0 0.0
    %299 = vmatpush2.msra.mxu0 0.0
    %300 = vmatprep.subr.mxu0 0.0
    %301 = vmatpush2.msra.mxu0 0.0
    %302 = vmatprep.subr.mxu0 0.0
    %303 = vmatpush2.msra.mxu0 0.0
    %304 = vmatprep.subr.mxu0 0.0
    %305 = vmatpush2.msra.mxu0 0.0
    %306 = vmatprep.subr.mxu0 0.0
    %307 = vmatpush2.msra.mxu0 0.0
    %308 = vmatprep.subr.mxu0 0.0
    %309 = vmatpush2.msra.mxu0 0.0
    %310 = vmatprep.subr.mxu0 0.0
    %311 = vmatpush2.msra.mxu0 0.0
    %312 = vmatprep.subr.mxu0 0.0
    %313 = vmatpush2.msra.mxu0 0.0
    %314 = vmatprep.subr.mxu0 0.0
    %315 = vmatpush2.msra.mxu0 0.0
    %316 = vmatprep.subr.mxu0 0.0
    %317 = vmatpush2.msra.mxu0 0.0
    %318 = vmatprep.subr.mxu0 0.0
    %319 = vmatpush2.msra.mxu0 0.0
    %320 = vmatprep.subr.mxu0 0.0
    %321 = vmatpush2.msra.mxu0 0.0
    %322 = vmatprep.mubr.f32.mxu0 0.0
    %323 = vmatmul.mubr.f32.gmra.mxu0 %v250
    %v324 = vpop.f32.mrf.mxu0
    %v325 = vadd.f32 %v247, %v324
    %v326 = vpop.f32.mrf.mxu0
    %327 = vmatprep.mubr.f32.mxu0 0.0
    %328 = vmatmul.mubr.f32.gmra.mxu0 %v253
    %v329 = vpop.f32.mrf.mxu0
    %v330 = vadd.f32 %v247, %v329
    %v331 = vpop.f32.mrf.mxu0
    %332 = vmatprep.mubr.f32.mxu0 0.0
    %333 = vmatmul.mubr.f32.gmra.mxu0 %v256
    %v334 = vpop.f32.mrf.mxu0
    %v335 = vadd.f32 %v247, %v334
    %v336 = vpop.f32.mrf.mxu0
    %337 = vdwg.mxu0
    %341 = vrot.lane.b32.xlu0 %v325, 96
    %v342 = vpop.permute.xlu0 %341
    %343 = vrot.lane.b32.xlu0 %v330, 96
    %v344 = vpop.permute.xlu0 %343
    %345 = vrot.lane.b32.xlu0 %v335, 96
    %v346 = vpop.permute.xlu0 %345
    %vm347 = vcmask 64512
    %v348 = vsel %vm347, %v325, 0
    %v350 = vsel %vm347, %v330, 0
    %v352 = vsel %vm347, %v335, 0
    %v354 = vsel %vm347, %v342, 0
    %v356 = vsel %vm347, %v344, 0
    %v358 = vsel %vm347, %v346, 0
    %360 = vmatprep.subr.mxu0 0.0
    %361 = vmatpush1.xpose.msra.mxu0 0.0
    %362 = vmatprep.subr.mxu0 0.0
    %363 = vmatpush1.xpose.msra.mxu0 0.0
    %364 = vmatprep.subr.mxu0 0.0
    %365 = vmatpush1.xpose.msra.mxu0 0.0
    %366 = vmatprep.subr.mxu0 0.0
    %367 = vmatpush1.xpose.msra.mxu0 0.0
    %368 = vmatprep.subr.mxu0 0.0
    %369 = vmatpush1.xpose.msra.mxu0 0.0
    %370 = vmatprep.subr.mxu0 0.0
    %371 = vmatpush1.xpose.msra.mxu0 0.0
    %372 = vmatprep.subr.mxu0 0.0
    %373 = vmatpush1.xpose.msra.mxu0 0.0
    %374 = vmatprep.subr.mxu0 0.0
    %375 = vmatpush1.xpose.msra.mxu0 0.0
    %376 = vmatprep.subr.mxu0 0.0
    %377 = vmatpush1.xpose.msra.mxu0 0.0
    %378 = vmatprep.subr.mxu0 0.0
    %379 = vmatpush1.xpose.msra.mxu0 0.0
    %380 = vmatprep.subr.mxu0 0.0
    %381 = vmatpush1.xpose.msra.mxu0 0.0
    %382 = vmatprep.subr.mxu0 0.0
    %383 = vmatpush1.xpose.msra.mxu0 0.0
    %384 = vmatprep.subr.mxu0 0.0
    %385 = vmatpush1.xpose.msra.mxu0 0.0
    %386 = vmatprep.subr.mxu0 0.0
    %387 = vmatpush1.xpose.msra.mxu0 %v358
    %388 = vmatprep.subr.mxu0 0.0
    %389 = vmatpush1.xpose.msra.mxu0 %v356
    %390 = vmatprep.subr.mxu0 0.0
    %391 = vmatpush1.xpose.msra.mxu0 %v354
    %392 = vmatprep.subr.mxu0 0.0
    %393 = vmatpush2.xpose.msra.mxu0 0.0
    %394 = vmatprep.subr.mxu0 0.0
    %395 = vmatpush2.xpose.msra.mxu0 0.0
    %396 = vmatprep.subr.mxu0 0.0
    %397 = vmatpush2.xpose.msra.mxu0 0.0
    %398 = vmatprep.subr.mxu0 0.0
    %399 = vmatpush2.xpose.msra.mxu0 0.0
    %400 = vmatprep.subr.mxu0 0.0
    %401 = vmatpush2.xpose.msra.mxu0 0.0
    %402 = vmatprep.subr.mxu0 0.0
    %403 = vmatpush2.xpose.msra.mxu0 0.0
    %404 = vmatprep.subr.mxu0 0.0
    %405 = vmatpush2.xpose.msra.mxu0 0.0
    %406 = vmatprep.subr.mxu0 0.0
    %407 = vmatpush2.xpose.msra.mxu0 0.0
    %408 = vmatprep.subr.mxu0 0.0
    %409 = vmatpush2.xpose.msra.mxu0 0.0
    %410 = vmatprep.subr.mxu0 0.0
    %411 = vmatpush2.xpose.msra.mxu0 0.0
    %412 = vmatprep.subr.mxu0 0.0
    %413 = vmatpush2.xpose.msra.mxu0 0.0
    %414 = vmatprep.subr.mxu0 0.0
    %415 = vmatpush2.xpose.msra.mxu0 0.0
    %416 = vmatprep.subr.mxu0 0.0
    %417 = vmatpush2.xpose.msra.mxu0 0.0
    %418 = vmatprep.subr.mxu0 0.0
    %419 = vmatpush2.xpose.msra.mxu0 0.0
    %420 = vmatprep.subr.mxu0 0.0
    %421 = vmatpush2.xpose.msra.mxu0 0.0
    %422 = vmatprep.subr.mxu0 0.0
    %423 = vmatpush2.xpose.msra.mxu0 0.0
    %424 = vmatprep.mubr.f32.mxu0 0.0
    %425 = vmatmul.mubr.f32.gmra.mxu0 %v348
    %v426 = vpop.f32.mrf.mxu0
    %v427 = vadd.f32 0.0, %v426
    %v428 = vpop.f32.mrf.mxu0
    %429 = vmatprep.mubr.f32.mxu0 0.0
    %430 = vmatmul.mubr.f32.gmra.mxu0 %v350
    %v431 = vpop.f32.mrf.mxu0
    %v432 = vadd.f32 0.0, %v431
    %v433 = vpop.f32.mrf.mxu0
    %434 = vmatprep.mubr.f32.mxu0 0.0
    %435 = vmatmul.mubr.f32.gmra.mxu0 %v352
    %v436 = vpop.f32.mrf.mxu0
    %v437 = vadd.f32 0.0, %v436
    %v438 = vpop.f32.mrf.mxu0
    %439 = vdwg.mxu0
    %440 = vrot.lane.b32.xlu0 %v325, 120
    %v441 = vpop.permute.xlu0 %440
    %442 = vrot.lane.b32.xlu0 %v330, 120
    %v443 = vpop.permute.xlu0 %442
    %444 = vrot.lane.b32.xlu0 %v335, 120
    %v445 = vpop.permute.xlu0 %444
    %446 = vrot.lane.b32.xlu0 %v325, 88
    %v447 = vpop.permute.xlu0 %446
    %448 = vrot.lane.b32.xlu0 %v330, 88
    %v449 = vpop.permute.xlu0 %448
    %450 = vrot.lane.b32.xlu0 %v335, 88
    %v451 = vpop.permute.xlu0 %450
    %v452 = vsel %vm347, %v441, 0
    %v454 = vsel %vm347, %v443, 0
    %v456 = vsel %vm347, %v445, 0
    %v458 = vsel %vm347, %v447, 0
    %v460 = vsel %vm347, %v449, 0
    %v462 = vsel %vm347, %v451, 0
    %464 = vmatprep.subr.mxu0 0.0
    %465 = vmatpush1.xpose.msra.mxu0 0.0
    %466 = vmatprep.subr.mxu0 0.0
    %467 = vmatpush1.xpose.msra.mxu0 0.0
    %468 = vmatprep.subr.mxu0 0.0
    %469 = vmatpush1.xpose.msra.mxu0 0.0
    %470 = vmatprep.subr.mxu0 0.0
    %471 = vmatpush1.xpose.msra.mxu0 0.0
    %472 = vmatprep.subr.mxu0 0.0
    %473 = vmatpush1.xpose.msra.mxu0 0.0
    %474 = vmatprep.subr.mxu0 0.0
    %475 = vmatpush1.xpose.msra.mxu0 0.0
    %476 = vmatprep.subr.mxu0 0.0
    %477 = vmatpush1.xpose.msra.mxu0 0.0
    %478 = vmatprep.subr.mxu0 0.0
    %479 = vmatpush1.xpose.msra.mxu0 0.0
    %480 = vmatprep.subr.mxu0 0.0
    %481 = vmatpush1.xpose.msra.mxu0 0.0
    %482 = vmatprep.subr.mxu0 0.0
    %483 = vmatpush1.xpose.msra.mxu0 0.0
    %484 = vmatprep.subr.mxu0 0.0
    %485 = vmatpush1.xpose.msra.mxu0 0.0
    %486 = vmatprep.subr.mxu0 0.0
    %487 = vmatpush1.xpose.msra.mxu0 0.0
    %488 = vmatprep.subr.mxu0 0.0
    %489 = vmatpush1.xpose.msra.mxu0 0.0
    %490 = vmatprep.subr.mxu0 0.0
    %491 = vmatpush1.xpose.msra.mxu0 %v462
    %492 = vmatprep.subr.mxu0 0.0
    %493 = vmatpush1.xpose.msra.mxu0 %v460
    %494 = vmatprep.subr.mxu0 0.0
    %495 = vmatpush1.xpose.msra.mxu0 %v458
    %496 = vmatprep.subr.mxu0 0.0
    %497 = vmatpush2.xpose.msra.mxu0 0.0
    %498 = vmatprep.subr.mxu0 0.0
    %499 = vmatpush2.xpose.msra.mxu0 0.0
    %500 = vmatprep.subr.mxu0 0.0
    %501 = vmatpush2.xpose.msra.mxu0 0.0
    %502 = vmatprep.subr.mxu0 0.0
    %503 = vmatpush2.xpose.msra.mxu0 0.0
    %504 = vmatprep.subr.mxu0 0.0
    %505 = vmatpush2.xpose.msra.mxu0 0.0
    %506 = vmatprep.subr.mxu0 0.0
    %507 = vmatpush2.xpose.msra.mxu0 0.0
    %508 = vmatprep.subr.mxu0 0.0
    %509 = vmatpush2.xpose.msra.mxu0 0.0
    %510 = vmatprep.subr.mxu0 0.0
    %511 = vmatpush2.xpose.msra.mxu0 0.0
    %512 = vmatprep.subr.mxu0 0.0
    %513 = vmatpush2.xpose.msra.mxu0 0.0
    %514 = vmatprep.subr.mxu0 0.0
    %515 = vmatpush2.xpose.msra.mxu0 0.0
    %516 = vmatprep.subr.mxu0 0.0
    %517 = vmatpush2.xpose.msra.mxu0 0.0
    %518 = vmatprep.subr.mxu0 0.0
    %519 = vmatpush2.xpose.msra.mxu0 0.0
    %520 = vmatprep.subr.mxu0 0.0
    %521 = vmatpush2.xpose.msra.mxu0 0.0
    %522 = vmatprep.subr.mxu0 0.0
    %523 = vmatpush2.xpose.msra.mxu0 0.0
    %524 = vmatprep.subr.mxu0 0.0
    %525 = vmatpush2.xpose.msra.mxu0 0.0
    %526 = vmatprep.subr.mxu0 0.0
    %527 = vmatpush2.xpose.msra.mxu0 0.0
    %528 = vmatprep.mubr.f32.mxu0 0.0
    %529 = vmatmul.mubr.f32.gmra.mxu0 %v452
    %v530 = vpop.f32.mrf.mxu0
    %v531 = vadd.f32 0.0, %v530
    %v532 = vpop.f32.mrf.mxu0
    %533 = vmatprep.mubr.f32.mxu0 0.0
    %534 = vmatmul.mubr.f32.gmra.mxu0 %v454
    %v535 = vpop.f32.mrf.mxu0
    %v536 = vadd.f32 0.0, %v535
    %v537 = vpop.f32.mrf.mxu0
    %538 = vmatprep.mubr.f32.mxu0 0.0
    %539 = vmatmul.mubr.f32.gmra.mxu0 %v456
    %v540 = vpop.f32.mrf.mxu0
    %v541 = vadd.f32 0.0, %v540
    %v542 = vpop.f32.mrf.mxu0
    %543 = vdwg.mxu0
    %544 = vrot.lane.b32.xlu0 %v325, 112
    %v545 = vpop.permute.xlu0 %544
    %546 = vrot.lane.b32.xlu0 %v330, 112
    %v547 = vpop.permute.xlu0 %546
    %548 = vrot.lane.b32.xlu0 %v335, 112
    %v549 = vpop.permute.xlu0 %548
    %550 = vrot.lane.b32.xlu0 %v325, 80
    %v551 = vpop.permute.xlu0 %550
    %552 = vrot.lane.b32.xlu0 %v330, 80
    %v553 = vpop.permute.xlu0 %552
    %554 = vrot.lane.b32.xlu0 %v335, 80
    %v555 = vpop.permute.xlu0 %554
    %v556 = vsel %vm347, %v545, 0
    %v558 = vsel %vm347, %v547, 0
    %v560 = vsel %vm347, %v549, 0
    %v562 = vsel %vm347, %v551, 0
    %v564 = vsel %vm347, %v553, 0
    %v566 = vsel %vm347, %v555, 0
    %568 = vmatprep.subr.mxu0 0.0
    %569 = vmatpush1.xpose.msra.mxu0 0.0
    %570 = vmatprep.subr.mxu0 0.0
    %571 = vmatpush1.xpose.msra.mxu0 0.0
    %572 = vmatprep.subr.mxu0 0.0
    %573 = vmatpush1.xpose.msra.mxu0 0.0
    %574 = vmatprep.subr.mxu0 0.0
    %575 = vmatpush1.xpose.msra.mxu0 0.0
    %576 = vmatprep.subr.mxu0 0.0
    %577 = vmatpush1.xpose.msra.mxu0 0.0
    %578 = vmatprep.subr.mxu0 0.0
    %579 = vmatpush1.xpose.msra.mxu0 0.0
    %580 = vmatprep.subr.mxu0 0.0
    %581 = vmatpush1.xpose.msra.mxu0 0.0
    %582 = vmatprep.subr.mxu0 0.0
    %583 = vmatpush1.xpose.msra.mxu0 0.0
    %584 = vmatprep.subr.mxu0 0.0
    %585 = vmatpush1.xpose.msra.mxu0 0.0
    %586 = vmatprep.subr.mxu0 0.0
    %587 = vmatpush1.xpose.msra.mxu0 0.0
    %588 = vmatprep.subr.mxu0 0.0
    %589 = vmatpush1.xpose.msra.mxu0 0.0
    %590 = vmatprep.subr.mxu0 0.0
    %591 = vmatpush1.xpose.msra.mxu0 0.0
    %592 = vmatprep.subr.mxu0 0.0
    %593 = vmatpush1.xpose.msra.mxu0 0.0
    %594 = vmatprep.subr.mxu0 0.0
    %595 = vmatpush1.xpose.msra.mxu0 %v566
    %596 = vmatprep.subr.mxu0 0.0
    %597 = vmatpush1.xpose.msra.mxu0 %v564
    %598 = vmatprep.subr.mxu0 0.0
    %599 = vmatpush1.xpose.msra.mxu0 %v562
    %600 = vmatprep.subr.mxu0 0.0
    %601 = vmatpush2.xpose.msra.mxu0 0.0
    %602 = vmatprep.subr.mxu0 0.0
    %603 = vmatpush2.xpose.msra.mxu0 0.0
    %604 = vmatprep.subr.mxu0 0.0
    %605 = vmatpush2.xpose.msra.mxu0 0.0
    %606 = vmatprep.subr.mxu0 0.0
    %607 = vmatpush2.xpose.msra.mxu0 0.0
    %608 = vmatprep.subr.mxu0 0.0
    %609 = vmatpush2.xpose.msra.mxu0 0.0
    %610 = vmatprep.subr.mxu0 0.0
    %611 = vmatpush2.xpose.msra.mxu0 0.0
    %612 = vmatprep.subr.mxu0 0.0
    %613 = vmatpush2.xpose.msra.mxu0 0.0
    %614 = vmatprep.subr.mxu0 0.0
    %615 = vmatpush2.xpose.msra.mxu0 0.0
    %616 = vmatprep.subr.mxu0 0.0
    %617 = vmatpush2.xpose.msra.mxu0 0.0
    %618 = vmatprep.subr.mxu0 0.0
    %619 = vmatpush2.xpose.msra.mxu0 0.0
    %620 = vmatprep.subr.mxu0 0.0
    %621 = vmatpush2.xpose.msra.mxu0 0.0
    %622 = vmatprep.subr.mxu0 0.0
    %623 = vmatpush2.xpose.msra.mxu0 0.0
    %624 = vmatprep.subr.mxu0 0.0
    %625 = vmatpush2.xpose.msra.mxu0 0.0
    %626 = vmatprep.subr.mxu0 0.0
    %627 = vmatpush2.xpose.msra.mxu0 0.0
    %628 = vmatprep.subr.mxu0 0.0
    %629 = vmatpush2.xpose.msra.mxu0 0.0
    %630 = vmatprep.subr.mxu0 0.0
    %631 = vmatpush2.xpose.msra.mxu0 0.0
    %632 = vmatprep.mubr.f32.mxu0 0.0
    %633 = vmatmul.mubr.f32.gmra.mxu0 %v556
    %v634 = vpop.f32.mrf.mxu0
    %v635 = vadd.f32 0.0, %v634
    %v636 = vpop.f32.mrf.mxu0
    %637 = vmatprep.mubr.f32.mxu0 0.0
    %638 = vmatmul.mubr.f32.gmra.mxu0 %v558
    %v639 = vpop.f32.mrf.mxu0
    %v640 = vadd.f32 0.0, %v639
    %v641 = vpop.f32.mrf.mxu0
    %642 = vmatprep.mubr.f32.mxu0 0.0
    %643 = vmatmul.mubr.f32.gmra.mxu0 %v560
    %v644 = vpop.f32.mrf.mxu0
    %v645 = vadd.f32 0.0, %v644
    %v646 = vpop.f32.mrf.mxu0
    %647 = vdwg.mxu0
    %648 = vrot.lane.b32.xlu0 %v325, 104
    %v649 = vpop.permute.xlu0 %648
    %650 = vrot.lane.b32.xlu0 %v330, 104
    %v651 = vpop.permute.xlu0 %650
    %652 = vrot.lane.b32.xlu0 %v335, 104
    %v653 = vpop.permute.xlu0 %652
    %654 = vrot.lane.b32.xlu0 %v325, 72
    %v655 = vpop.permute.xlu0 %654
    %656 = vrot.lane.b32.xlu0 %v330, 72
    %v657 = vpop.permute.xlu0 %656
    %658 = vrot.lane.b32.xlu0 %v335, 72
    %v659 = vpop.permute.xlu0 %658
    %v660 = vsel %vm347, %v649, 0
    %v662 = vsel %vm347, %v651, 0
    %v664 = vsel %vm347, %v653, 0
    %v666 = vsel %vm347, %v655, 0
    %v668 = vsel %vm347, %v657, 0
    %v670 = vsel %vm347, %v659, 0
    %672 = vmatprep.subr.mxu0 0.0
    %673 = vmatpush1.xpose.msra.mxu0 0.0
    %674 = vmatprep.subr.mxu0 0.0
    %675 = vmatpush1.xpose.msra.mxu0 0.0
    %676 = vmatprep.subr.mxu0 0.0
    %677 = vmatpush1.xpose.msra.mxu0 0.0
    %678 = vmatprep.subr.mxu0 0.0
    %679 = vmatpush1.xpose.msra.mxu0 0.0
    %680 = vmatprep.subr.mxu0 0.0
    %681 = vmatpush1.xpose.msra.mxu0 0.0
    %682 = vmatprep.subr.mxu0 0.0
    %683 = vmatpush1.xpose.msra.mxu0 0.0
    %684 = vmatprep.subr.mxu0 0.0
    %685 = vmatpush1.xpose.msra.mxu0 0.0
    %686 = vmatprep.subr.mxu0 0.0
    %687 = vmatpush1.xpose.msra.mxu0 0.0
    %688 = vmatprep.subr.mxu0 0.0
    %689 = vmatpush1.xpose.msra.mxu0 0.0
    %690 = vmatprep.subr.mxu0 0.0
    %691 = vmatpush1.xpose.msra.mxu0 0.0
    %692 = vmatprep.subr.mxu0 0.0
    %693 = vmatpush1.xpose.msra.mxu0 0.0
    %694 = vmatprep.subr.mxu0 0.0
    %695 = vmatpush1.xpose.msra.mxu0 0.0
    %696 = vmatprep.subr.mxu0 0.0
    %697 = vmatpush1.xpose.msra.mxu0 0.0
    %698 = vmatprep.subr.mxu0 0.0
    %699 = vmatpush1.xpose.msra.mxu0 %v670
    %700 = vmatprep.subr.mxu0 0.0
    %701 = vmatpush1.xpose.msra.mxu0 %v668
    %702 = vmatprep.subr.mxu0 0.0
    %703 = vmatpush1.xpose.msra.mxu0 %v666
    %704 = vmatprep.subr.mxu0 0.0
    %705 = vmatpush2.xpose.msra.mxu0 0.0
    %706 = vmatprep.subr.mxu0 0.0
    %707 = vmatpush2.xpose.msra.mxu0 0.0
    %708 = vmatprep.subr.mxu0 0.0
    %709 = vmatpush2.xpose.msra.mxu0 0.0
    %710 = vmatprep.subr.mxu0 0.0
    %711 = vmatpush2.xpose.msra.mxu0 0.0
    %712 = vmatprep.subr.mxu0 0.0
    %713 = vmatpush2.xpose.msra.mxu0 0.0
    %714 = vmatprep.subr.mxu0 0.0
    %715 = vmatpush2.xpose.msra.mxu0 0.0
    %716 = vmatprep.subr.mxu0 0.0
    %717 = vmatpush2.xpose.msra.mxu0 0.0
    %718 = vmatprep.subr.mxu0 0.0
    %719 = vmatpush2.xpose.msra.mxu0 0.0
    %720 = vmatprep.subr.mxu0 0.0
    %721 = vmatpush2.xpose.msra.mxu0 0.0
    %722 = vmatprep.subr.mxu0 0.0
    %723 = vmatpush2.xpose.msra.mxu0 0.0
    %724 = vmatprep.subr.mxu0 0.0
    %725 = vmatpush2.xpose.msra.mxu0 0.0
    %726 = vmatprep.subr.mxu0 0.0
    %727 = vmatpush2.xpose.msra.mxu0 0.0
    %728 = vmatprep.subr.mxu0 0.0
    %729 = vmatpush2.xpose.msra.mxu0 0.0
    %730 = vmatprep.subr.mxu0 0.0
    %731 = vmatpush2.xpose.msra.mxu0 0.0
    %732 = vmatprep.subr.mxu0 0.0
    %733 = vmatpush2.xpose.msra.mxu0 0.0
    %734 = vmatprep.subr.mxu0 0.0
    %735 = vmatpush2.xpose.msra.mxu0 0.0
    %736 = vmatprep.mubr.f32.mxu0 0.0
    %737 = vmatmul.mubr.f32.gmra.mxu0 %v660
    %v738 = vpop.f32.mrf.mxu0
    %v739 = vadd.f32 0.0, %v738
    %v740 = vpop.f32.mrf.mxu0
    %741 = vmatprep.mubr.f32.mxu0 0.0
    %742 = vmatmul.mubr.f32.gmra.mxu0 %v662
    %v743 = vpop.f32.mrf.mxu0
    %v744 = vadd.f32 0.0, %v743
    %v745 = vpop.f32.mrf.mxu0
    %746 = vmatprep.mubr.f32.mxu0 0.0
    %747 = vmatmul.mubr.f32.gmra.mxu0 %v664
    %v748 = vpop.f32.mrf.mxu0
    %v749 = vadd.f32 0.0, %v748
    %v750 = vpop.f32.mrf.mxu0
    %751 = vdwg.mxu0
    %vm752 = vcmask 138240
    %v753 = vsel %vm752, %v427, -inf
    %754 = vmax.xlane.f32.xlu0 %v753
    %v755 = vpop.xlane.xlu0 %754
    %v756 = vsel %vm752, %v432, -inf
    %757 = vmax.xlane.f32.xlu0 %v756
    %v758 = vpop.xlane.xlu0 %757
    %vm759 = vcmask 131072
    %v760 = vsel %vm759, %v437, -inf
    %761 = vmax.xlane.f32.xlu0 %v760
    %v762 = vpop.xlane.xlu0 %761
    %v763 = vsel %vm752, %v531, -inf
    %764 = vmax.xlane.f32.xlu0 %v763
    %v765 = vpop.xlane.xlu0 %764
    %v766 = vsel %vm752, %v536, -inf
    %767 = vmax.xlane.f32.xlu0 %v766
    %v768 = vpop.xlane.xlu0 %767
    %v769 = vsel %vm759, %v541, -inf
    %770 = vmax.xlane.f32.xlu0 %v769
    %v771 = vpop.xlane.xlu0 %770
    %v772 = vsel %vm752, %v635, -inf
    %773 = vmax.xlane.f32.xlu0 %v772
    %v774 = vpop.xlane.xlu0 %773
    %v775 = vsel %vm752, %v640, -inf
    %776 = vmax.xlane.f32.xlu0 %v775
    %v777 = vpop.xlane.xlu0 %776
    %v778 = vsel %vm759, %v645, -inf
    %779 = vmax.xlane.f32.xlu0 %v778
    %v780 = vpop.xlane.xlu0 %779
    %v781 = vsel %vm752, %v739, -inf
    %782 = vmax.xlane.f32.xlu0 %v781
    %v783 = vpop.xlane.xlu0 %782
    %v784 = vsel %vm752, %v744, -inf
    %785 = vmax.xlane.f32.xlu0 %v784
    %v786 = vpop.xlane.xlu0 %785
    %v787 = vsel %vm759, %v749, -inf
    %788 = vmax.xlane.f32.xlu0 %v787
    %v789 = vpop.xlane.xlu0 %788
    %v790 = vsub.f32 %v427, %v755
    %v791 = vsub.f32 %v432, %v758
    %v792 = vsub.f32 %v437, %v762
    %v793 = vsub.f32 %v531, %v765
    %v794 = vsub.f32 %v536, %v768
    %v795 = vsub.f32 %v541, %v771
    %v796 = vsub.f32 %v635, %v774
    %v797 = vsub.f32 %v640, %v777
    %v798 = vsub.f32 %v645, %v780
    %v799 = vsub.f32 %v739, %v783
    %v800 = vsub.f32 %v744, %v786
    %v801 = vsub.f32 %v749, %v789
    %v802 = vmul.f32 %v790, 1.442695
    %v803 = vpow.pop %v802
    %v804 = vmul.f32 %v791, 1.442695
    %v805 = vpow.pop %v804
    %v806 = vmul.f32 %v792, 1.442695
    %v807 = vpow.pop %v806
    %v808 = vmul.f32 %v793, 1.442695
    %v809 = vpow.pop %v808
    %v810 = vmul.f32 %v794, 1.442695
    %v811 = vpow.pop %v810
    %v812 = vmul.f32 %v795, 1.442695
    %v813 = vpow.pop %v812
    %v814 = vmul.f32 %v796, 1.442695
    %v815 = vpow.pop %v814
    %v816 = vmul.f32 %v797, 1.442695
    %v817 = vpow.pop %v816
    %v818 = vmul.f32 %v798, 1.442695
    %v819 = vpow.pop %v818
    %v820 = vmul.f32 %v799, 1.442695
    %v821 = vpow.pop %v820
    %v822 = vmul.f32 %v800, 1.442695
    %v823 = vpow.pop %v822
    %v824 = vmul.f32 %v801, 1.442695
    %v825 = vpow.pop %v824
    %v826 = vsel %vm752, %v803, 0.0
    %827 = vadd.xlane.f32.xlu0 %v826
    %v828 = vpop.xlane.xlu0 %827
    %v829 = vsel %vm752, %v805, 0.0
    %830 = vadd.xlane.f32.xlu0 %v829
    %v831 = vpop.xlane.xlu0 %830
    %v832 = vsel %vm759, %v807, 0.0
    %833 = vadd.xlane.f32.xlu0 %v832
    %v834 = vpop.xlane.xlu0 %833
    %v835 = vsel %vm752, %v809, 0.0
    %836 = vadd.xlane.f32.xlu0 %v835
    %v837 = vpop.xlane.xlu0 %836
    %v838 = vsel %vm752, %v811, 0.0
    %839 = vadd.xlane.f32.xlu0 %v838
    %v840 = vpop.xlane.xlu0 %839
    %v841 = vsel %vm759, %v813, 0.0
    %842 = vadd.xlane.f32.xlu0 %v841
    %v843 = vpop.xlane.xlu0 %842
    %v844 = vsel %vm752, %v815, 0.0
    %845 = vadd.xlane.f32.xlu0 %v844
    %v846 = vpop.xlane.xlu0 %845
    %v847 = vsel %vm752, %v817, 0.0
    %848 = vadd.xlane.f32.xlu0 %v847
    %v849 = vpop.xlane.xlu0 %848
    %v850 = vsel %vm759, %v819, 0.0
    %851 = vadd.xlane.f32.xlu0 %v850
    %v852 = vpop.xlane.xlu0 %851
    %v853 = vsel %vm752, %v821, 0.0
    %854 = vadd.xlane.f32.xlu0 %v853
    %v855 = vpop.xlane.xlu0 %854
    %v856 = vsel %vm752, %v823, 0.0
    %857 = vadd.xlane.f32.xlu0 %v856
    %v858 = vpop.xlane.xlu0 %857
    %v859 = vsel %vm759, %v825, 0.0
    %860 = vadd.xlane.f32.xlu0 %v859
    %v861 = vpop.xlane.xlu0 %860
    %v862 = vrcp.pop %v828
    %v863 = vrcp.pop %v831
    %v864 = vrcp.pop %v834
    %v865 = vrcp.pop %v837
    %v866 = vrcp.pop %v840
    %v867 = vrcp.pop %v843
    %v868 = vrcp.pop %v846
    %v869 = vrcp.pop %v849
    %v870 = vrcp.pop %v852
    %v871 = vrcp.pop %v855
    %v872 = vrcp.pop %v858
    %v873 = vrcp.pop %v861
    %v874 = vmul.f32 %v803, %v862
    %v875 = vmul.f32 %v805, %v863
    %v876 = vmul.f32 %v807, %v864
    %v877 = vmul.f32 %v809, %v865
    %v878 = vmul.f32 %v811, %v866
    %v879 = vmul.f32 %v813, %v867
    %v880 = vmul.f32 %v815, %v868
    %v881 = vmul.f32 %v817, %v869
    %v882 = vmul.f32 %v819, %v870
    %v883 = vmul.f32 %v821, %v871
    %v884 = vmul.f32 %v823, %v872
    %v885 = vmul.f32 %v825, %v873
    %v886 = vld [vmem:[%s9] sm:$0x1]
    %887 = vrot.lane.b32.xlu0 %v325, 64
    %v888 = vpop.permute.xlu0 %887
    %889 = vrot.lane.b32.xlu0 %v330, 64
    %v890 = vpop.permute.xlu0 %889
    %891 = vrot.lane.b32.xlu0 %v335, 64
    %v892 = vpop.permute.xlu0 %891
    %v896 = vsel %vm752, %v874, 0
    %v899 = vsel %vm752, %v875, 0
    %v902 = vsel %vm752, %v876, 0
    %vm904 = vcmask 1040384
    %v905 = vsel %vm904, %v892, 0
    %907 = vmatprep.subr.mxu0 0.0
    %908 = vmatpush1.msra.mxu0 0.0
    %909 = vmatprep.subr.mxu0 0.0
    %910 = vmatpush1.msra.mxu0 0.0
    %911 = vmatprep.subr.mxu0 0.0
    %912 = vmatpush1.msra.mxu0 0.0
    %913 = vmatprep.subr.mxu0 0.0
    %914 = vmatpush1.msra.mxu0 0.0
    %915 = vmatprep.subr.mxu0 0.0
    %916 = vmatpush1.msra.mxu0 0.0
    %917 = vmatprep.subr.mxu0 0.0
    %918 = vmatpush1.msra.mxu0 0.0
    %919 = vmatprep.subr.mxu0 0.0
    %920 = vmatpush1.msra.mxu0 0.0
    %921 = vmatprep.subr.mxu0 0.0
    %922 = vmatpush1.msra.mxu0 0.0
    %923 = vmatprep.subr.mxu0 0.0
    %924 = vmatpush1.msra.mxu0 0.0
    %925 = vmatprep.subr.mxu0 0.0
    %926 = vmatpush1.msra.mxu0 0.0
    %927 = vmatprep.subr.mxu0 0.0
    %928 = vmatpush1.msra.mxu0 0.0
    %929 = vmatprep.subr.mxu0 0.0
    %930 = vmatpush1.msra.mxu0 0.0
    %931 = vmatprep.subr.mxu0 0.0
    %932 = vmatpush1.msra.mxu0 0.0
    %933 = vmatprep.subr.mxu0 0.0
    %934 = vmatpush1.msra.mxu0 %v905
    %935 = vmatprep.subr.mxu0 0.0
    %936 = vmatpush1.msra.mxu0 %v890
    %937 = vmatprep.subr.mxu0 0.0
    %938 = vmatpush1.msra.mxu0 %v888
    %939 = vmatprep.subr.mxu0 0.0
    %940 = vmatpush2.msra.mxu0 0.0
    %941 = vmatprep.subr.mxu0 0.0
    %942 = vmatpush2.msra.mxu0 0.0
    %943 = vmatprep.subr.mxu0 0.0
    %944 = vmatpush2.msra.mxu0 0.0
    %945 = vmatprep.subr.mxu0 0.0
    %946 = vmatpush2.msra.mxu0 0.0
    %947 = vmatprep.subr.mxu0 0.0
    %948 = vmatpush2.msra.mxu0 0.0
    %949 = vmatprep.subr.mxu0 0.0
    %950 = vmatpush2.msra.mxu0 0.0
    %951 = vmatprep.subr.mxu0 0.0
    %952 = vmatpush2.msra.mxu0 0.0
    %953 = vmatprep.subr.mxu0 0.0
    %954 = vmatpush2.msra.mxu0 0.0
    %955 = vmatprep.subr.mxu0 0.0
    %956 = vmatpush2.msra.mxu0 0.0
    %957 = vmatprep.subr.mxu0 0.0
    %958 = vmatpush2.msra.mxu0 0.0
    %959 = vmatprep.subr.mxu0 0.0
    %960 = vmatpush2.msra.mxu0 0.0
    %961 = vmatprep.subr.mxu0 0.0
    %962 = vmatpush2.msra.mxu0 0.0
    %963 = vmatprep.subr.mxu0 0.0
    %964 = vmatpush2.msra.mxu0 0.0
    %965 = vmatprep.subr.mxu0 0.0
    %966 = vmatpush2.msra.mxu0 0.0
    %967 = vmatprep.subr.mxu0 0.0
    %968 = vmatpush2.msra.mxu0 0.0
    %969 = vmatprep.subr.mxu0 0.0
    %970 = vmatpush2.msra.mxu0 0.0
    %971 = vmatprep.mubr.f32.mxu0 0.0
    %972 = vmatmul.mubr.f32.gmra.mxu0 %v896
    %v973 = vpop.f32.mrf.mxu0
    %v974 = vadd.f32 0.0, %v973
    %v975 = vpop.f32.mrf.mxu0
    %976 = vmatprep.mubr.f32.mxu0 0.0
    %977 = vmatmul.mubr.f32.gmra.mxu0 %v899
    %v978 = vpop.f32.mrf.mxu0
    %v979 = vadd.f32 0.0, %v978
    %v980 = vpop.f32.mrf.mxu0
    %981 = vmatprep.mubr.f32.mxu0 0.0
    %982 = vmatmul.mubr.f32.gmra.mxu0 %v902
    %v983 = vpop.f32.mrf.mxu0
    %v984 = vadd.f32 0.0, %v983
    %v985 = vpop.f32.mrf.mxu0
    %986 = vdwg.mxu0
    %v987 = vld [vmem:[%s8] sm:$0xff]
    %v989 = vsel %vm347, %v974, 0
    %v992 = vsel %vm347, %v979, 0
    %v995 = vsel %vm347, %v984, 0
    %997 = vmatprep.subr.mxu0 0.0
    %998 = vmatpush1.msra.mxu0 0.0
    %999 = vmatprep.subr.mxu0 0.0
    %1000 = vmatpush1.msra.mxu0 0.0
    %1001 = vmatprep.subr.mxu0 0.0
    %1002 = vmatpush1.msra.mxu0 0.0
    %1003 = vmatprep.subr.mxu0 0.0
    %1004 = vmatpush1.msra.mxu0 0.0
    %1005 = vmatprep.subr.mxu0 0.0
    %1006 = vmatpush1.msra.mxu0 0.0
    %1007 = vmatprep.subr.mxu0 0.0
    %1008 = vmatpush1.msra.mxu0 0.0
    %1009 = vmatprep.subr.mxu0 0.0
    %1010 = vmatpush1.msra.mxu0 0.0
    %1011 = vmatprep.subr.mxu0 0.0
    %1012 = vmatpush1.msra.mxu0 0.0
    %1013 = vmatprep.subr.mxu0 0.0
    %1014 = vmatpush1.msra.mxu0 0.0
    %1015 = vmatprep.subr.mxu0 0.0
    %1016 = vmatpush1.msra.mxu0 0.0
    %1017 = vmatprep.subr.mxu0 0.0
    %1018 = vmatpush1.msra.mxu0 0.0
    %1019 = vmatprep.subr.mxu0 0.0
    %1020 = vmatpush1.msra.mxu0 0.0
    %1021 = vmatprep.subr.mxu0 0.0
    %1022 = vmatpush1.msra.mxu0 0.0
    %1023 = vmatprep.subr.mxu0 0.0
    %1024 = vmatpush1.msra.mxu0 0.0
    %1025 = vmatprep.subr.mxu0 0.0
    %1026 = vmatpush1.msra.mxu0 0.0
    %1027 = vmatprep.subr.mxu0 0.0
    %1028 = vmatpush1.msra.mxu0 %v987
    %1029 = vmatprep.subr.mxu0 0.0
    %1030 = vmatpush2.msra.mxu0 0.0
    %1031 = vmatprep.subr.mxu0 0.0
    %1032 = vmatpush2.msra.mxu0 0.0
    %1033 = vmatprep.subr.mxu0 0.0
    %1034 = vmatpush2.msra.mxu0 0.0
    %1035 = vmatprep.subr.mxu0 0.0
    %1036 = vmatpush2.msra.mxu0 0.0
    %1037 = vmatprep.subr.mxu0 0.0
    %1038 = vmatpush2.msra.mxu0 0.0
    %1039 = vmatprep.subr.mxu0 0.0
    %1040 = vmatpush2.msra.mxu0 0.0
    %1041 = vmatprep.subr.mxu0 0.0
    %1042 = vmatpush2.msra.mxu0 0.0
    %1043 = vmatprep.subr.mxu0 0.0
    %1044 = vmatpush2.msra.mxu0 0.0
    %1045 = vmatprep.subr.mxu0 0.0
    %1046 = vmatpush2.msra.mxu0 0.0
    %1047 = vmatprep.subr.mxu0 0.0
    %1048 = vmatpush2.msra.mxu0 0.0
    %1049 = vmatprep.subr.mxu0 0.0
    %1050 = vmatpush2.msra.mxu0 0.0
    %1051 = vmatprep.subr.mxu0 0.0
    %1052 = vmatpush2.msra.mxu0 0.0
    %1053 = vmatprep.subr.mxu0 0.0
    %1054 = vmatpush2.msra.mxu0 0.0
    %1055 = vmatprep.subr.mxu0 0.0
    %1056 = vmatpush2.msra.mxu0 0.0
    %1057 = vmatprep.subr.mxu0 0.0
    %1058 = vmatpush2.msra.mxu0 0.0
    %1059 = vmatprep.subr.mxu0 0.0
    %1060 = vmatpush2.msra.mxu0 0.0
    %1061 = vmatprep.mubr.f32.mxu0 0.0
    %1062 = vmatmul.mubr.f32.gmra.mxu0 %v989
    %v1063 = vpop.f32.mrf.mxu0
    %v1064 = vadd.f32 0.0, %v1063
    %v1065 = vpop.f32.mrf.mxu0
    %1066 = vmatprep.mubr.f32.mxu0 0.0
    %1067 = vmatmul.mubr.f32.gmra.mxu0 %v992
    %v1068 = vpop.f32.mrf.mxu0
    %v1069 = vadd.f32 0.0, %v1068
    %v1070 = vpop.f32.mrf.mxu0
    %1071 = vmatprep.mubr.f32.mxu0 0.0
    %1072 = vmatmul.mubr.f32.gmra.mxu0 %v995
    %v1073 = vpop.f32.mrf.mxu0
    %v1074 = vadd.f32 0.0, %v1073
    %v1075 = vpop.f32.mrf.mxu0
    %1076 = vdwg.mxu0
    %v1078 = vlaneseq
    %v1079 = vshrl.u32 %v1078, 7
    %v1080 = vsub.s32 0, %v1079
    %v1081 = vrot.slane %v886, %v1080
    %v1083 = vadd.f32 %v1081, %v1064
    %v1084 = vadd.f32 %v1081, %v1069
    %v1085 = vadd.f32 %v1081, %v1074
    %1086 = vrot.lane.b32.xlu0 %v325, 56
    %v1087 = vpop.permute.xlu0 %1086
    %1088 = vrot.lane.b32.xlu0 %v330, 56
    %v1089 = vpop.permute.xlu0 %1088
    %1090 = vrot.lane.b32.xlu0 %v335, 56
    %v1091 = vpop.permute.xlu0 %1090
    %v1095 = vsel %vm752, %v877, 0
    %v1098 = vsel %vm752, %v878, 0
    %v1101 = vsel %vm752, %v879, 0
    %v1103 = vsel %vm904, %v1091, 0
    %1105 = vmatprep.subr.mxu0 0.0
    %1106 = vmatpush1.msra.mxu0 0.0
    %1107 = vmatprep.subr.mxu0 0.0
    %1108 = vmatpush1.msra.mxu0 0.0
    %1109 = vmatprep.subr.mxu0 0.0
    %1110 = vmatpush1.msra.mxu0 0.0
    %1111 = vmatprep.subr.mxu0 0.0
    %1112 = vmatpush1.msra.mxu0 0.0
    %1113 = vmatprep.subr.mxu0 0.0
    %1114 = vmatpush1.msra.mxu0 0.0
    %1115 = vmatprep.subr.mxu0 0.0
    %1116 = vmatpush1.msra.mxu0 0.0
    %1117 = vmatprep.subr.mxu0 0.0
    %1118 = vmatpush1.msra.mxu0 0.0
    %1119 = vmatprep.subr.mxu0 0.0
    %1120 = vmatpush1.msra.mxu0 0.0
    %1121 = vmatprep.subr.mxu0 0.0
    %1122 = vmatpush1.msra.mxu0 0.0
    %1123 = vmatprep.subr.mxu0 0.0
    %1124 = vmatpush1.msra.mxu0 0.0
    %1125 = vmatprep.subr.mxu0 0.0
    %1126 = vmatpush1.msra.mxu0 0.0
    %1127 = vmatprep.subr.mxu0 0.0
    %1128 = vmatpush1.msra.mxu0 0.0
    %1129 = vmatprep.subr.mxu0 0.0
    %1130 = vmatpush1.msra.mxu0 0.0
    %1131 = vmatprep.subr.mxu0 0.0
    %1132 = vmatpush1.msra.mxu0 %v1103
    %1133 = vmatprep.subr.mxu0 0.0
    %1134 = vmatpush1.msra.mxu0 %v1089
    %1135 = vmatprep.subr.mxu0 0.0
    %1136 = vmatpush1.msra.mxu0 %v1087
    %1137 = vmatprep.subr.mxu0 0.0
    %1138 = vmatpush2.msra.mxu0 0.0
    %1139 = vmatprep.subr.mxu0 0.0
    %1140 = vmatpush2.msra.mxu0 0.0
    %1141 = vmatprep.subr.mxu0 0.0
    %1142 = vmatpush2.msra.mxu0 0.0
    %1143 = vmatprep.subr.mxu0 0.0
    %1144 = vmatpush2.msra.mxu0 0.0
    %1145 = vmatprep.subr.mxu0 0.0
    %1146 = vmatpush2.msra.mxu0 0.0
    %1147 = vmatprep.subr.mxu0 0.0
    %1148 = vmatpush2.msra.mxu0 0.0
    %1149 = vmatprep.subr.mxu0 0.0
    %1150 = vmatpush2.msra.mxu0 0.0
    %1151 = vmatprep.subr.mxu0 0.0
    %1152 = vmatpush2.msra.mxu0 0.0
    %1153 = vmatprep.subr.mxu0 0.0
    %1154 = vmatpush2.msra.mxu0 0.0
    %1155 = vmatprep.subr.mxu0 0.0
    %1156 = vmatpush2.msra.mxu0 0.0
    %1157 = vmatprep.subr.mxu0 0.0
    %1158 = vmatpush2.msra.mxu0 0.0
    %1159 = vmatprep.subr.mxu0 0.0
    %1160 = vmatpush2.msra.mxu0 0.0
    %1161 = vmatprep.subr.mxu0 0.0
    %1162 = vmatpush2.msra.mxu0 0.0
    %1163 = vmatprep.subr.mxu0 0.0
    %1164 = vmatpush2.msra.mxu0 0.0
    %1165 = vmatprep.subr.mxu0 0.0
    %1166 = vmatpush2.msra.mxu0 0.0
    %1167 = vmatprep.subr.mxu0 0.0
    %1168 = vmatpush2.msra.mxu0 0.0
    %1169 = vmatprep.mubr.f32.mxu0 0.0
    %1170 = vmatmul.mubr.f32.gmra.mxu0 %v1095
    %v1171 = vpop.f32.mrf.mxu0
    %v1172 = vadd.f32 0.0, %v1171
    %v1173 = vpop.f32.mrf.mxu0
    %1174 = vmatprep.mubr.f32.mxu0 0.0
    %1175 = vmatmul.mubr.f32.gmra.mxu0 %v1098
    %v1176 = vpop.f32.mrf.mxu0
    %v1177 = vadd.f32 0.0, %v1176
    %v1178 = vpop.f32.mrf.mxu0
    %1179 = vmatprep.mubr.f32.mxu0 0.0
    %1180 = vmatmul.mubr.f32.gmra.mxu0 %v1101
    %v1181 = vpop.f32.mrf.mxu0
    %v1182 = vadd.f32 0.0, %v1181
    %v1183 = vpop.f32.mrf.mxu0
    %1184 = vdwg.mxu0
    %s1185 = scalar_lea.vmem %s8, 8
    %v1186 = vld [vmem:[%s1185] sm:$0xff]
    %v1188 = vsel %vm347, %v1172, 0
    %v1191 = vsel %vm347, %v1177, 0
    %v1194 = vsel %vm347, %v1182, 0
    %1196 = vmatprep.subr.mxu0 0.0
    %1197 = vmatpush1.msra.mxu0 0.0
    %1198 = vmatprep.subr.mxu0 0.0
    %1199 = vmatpush1.msra.mxu0 0.0
    %1200 = vmatprep.subr.mxu0 0.0
    %1201 = vmatpush1.msra.mxu0 0.0
    %1202 = vmatprep.subr.mxu0 0.0
    %1203 = vmatpush1.msra.mxu0 0.0
    %1204 = vmatprep.subr.mxu0 0.0
    %1205 = vmatpush1.msra.mxu0 0.0
    %1206 = vmatprep.subr.mxu0 0.0
    %1207 = vmatpush1.msra.mxu0 0.0
    %1208 = vmatprep.subr.mxu0 0.0
    %1209 = vmatpush1.msra.mxu0 0.0
    %1210 = vmatprep.subr.mxu0 0.0
    %1211 = vmatpush1.msra.mxu0 0.0
    %1212 = vmatprep.subr.mxu0 0.0
    %1213 = vmatpush1.msra.mxu0 0.0
    %1214 = vmatprep.subr.mxu0 0.0
    %1215 = vmatpush1.msra.mxu0 0.0
    %1216 = vmatprep.subr.mxu0 0.0
    %1217 = vmatpush1.msra.mxu0 0.0
    %1218 = vmatprep.subr.mxu0 0.0
    %1219 = vmatpush1.msra.mxu0 0.0
    %1220 = vmatprep.subr.mxu0 0.0
    %1221 = vmatpush1.msra.mxu0 0.0
    %1222 = vmatprep.subr.mxu0 0.0
    %1223 = vmatpush1.msra.mxu0 0.0
    %1224 = vmatprep.subr.mxu0 0.0
    %1225 = vmatpush1.msra.mxu0 0.0
    %1226 = vmatprep.subr.mxu0 0.0
    %1227 = vmatpush1.msra.mxu0 %v1186
    %1228 = vmatprep.subr.mxu0 0.0
    %1229 = vmatpush2.msra.mxu0 0.0
    %1230 = vmatprep.subr.mxu0 0.0
    %1231 = vmatpush2.msra.mxu0 0.0
    %1232 = vmatprep.subr.mxu0 0.0
    %1233 = vmatpush2.msra.mxu0 0.0
    %1234 = vmatprep.subr.mxu0 0.0
    %1235 = vmatpush2.msra.mxu0 0.0
    %1236 = vmatprep.subr.mxu0 0.0
    %1237 = vmatpush2.msra.mxu0 0.0
    %1238 = vmatprep.subr.mxu0 0.0
    %1239 = vmatpush2.msra.mxu0 0.0
    %1240 = vmatprep.subr.mxu0 0.0
    %1241 = vmatpush2.msra.mxu0 0.0
    %1242 = vmatprep.subr.mxu0 0.0
    %1243 = vmatpush2.msra.mxu0 0.0
    %1244 = vmatprep.subr.mxu0 0.0
    %1245 = vmatpush2.msra.mxu0 0.0
    %1246 = vmatprep.subr.mxu0 0.0
    %1247 = vmatpush2.msra.mxu0 0.0
    %1248 = vmatprep.subr.mxu0 0.0
    %1249 = vmatpush2.msra.mxu0 0.0
    %1250 = vmatprep.subr.mxu0 0.0
    %1251 = vmatpush2.msra.mxu0 0.0
    %1252 = vmatprep.subr.mxu0 0.0
    %1253 = vmatpush2.msra.mxu0 0.0
    %1254 = vmatprep.subr.mxu0 0.0
    %1255 = vmatpush2.msra.mxu0 0.0
    %1256 = vmatprep.subr.mxu0 0.0
    %1257 = vmatpush2.msra.mxu0 0.0
    %1258 = vmatprep.subr.mxu0 0.0
    %1259 = vmatpush2.msra.mxu0 0.0
    %1260 = vmatprep.mubr.f32.mxu0 0.0
    %1261 = vmatmul.mubr.f32.gmra.mxu0 %v1188
    %v1262 = vpop.f32.mrf.mxu0
    %v1263 = vadd.f32 0.0, %v1262
    %v1264 = vpop.f32.mrf.mxu0
    %1265 = vmatprep.mubr.f32.mxu0 0.0
    %1266 = vmatmul.mubr.f32.gmra.mxu0 %v1191
    %v1267 = vpop.f32.mrf.mxu0
    %v1268 = vadd.f32 0.0, %v1267
    %v1269 = vpop.f32.mrf.mxu0
    %1270 = vmatprep.mubr.f32.mxu0 0.0
    %1271 = vmatmul.mubr.f32.gmra.mxu0 %v1194
    %v1272 = vpop.f32.mrf.mxu0
    %v1273 = vadd.f32 0.0, %v1272
    %v1274 = vpop.f32.mrf.mxu0
    %1275 = vdwg.mxu0
    %v1276 = vadd.f32 %v1083, %v1263
    %v1277 = vadd.f32 %v1084, %v1268
    %v1278 = vadd.f32 %v1085, %v1273
    %1279 = vrot.lane.b32.xlu0 %v325, 48
    %v1280 = vpop.permute.xlu0 %1279
    %1281 = vrot.lane.b32.xlu0 %v330, 48
    %v1282 = vpop.permute.xlu0 %1281
    %1283 = vrot.lane.b32.xlu0 %v335, 48
    %v1284 = vpop.permute.xlu0 %1283
    %v1288 = vsel %vm752, %v880, 0
    %v1291 = vsel %vm752, %v881, 0
    %v1294 = vsel %vm752, %v882, 0
    %v1296 = vsel %vm904, %v1284, 0
    %1298 = vmatprep.subr.mxu0 0.0
    %1299 = vmatpush1.msra.mxu0 0.0
    %1300 = vmatprep.subr.mxu0 0.0
    %1301 = vmatpush1.msra.mxu0 0.0
    %1302 = vmatprep.subr.mxu0 0.0
    %1303 = vmatpush1.msra.mxu0 0.0
    %1304 = vmatprep.subr.mxu0 0.0
    %1305 = vmatpush1.msra.mxu0 0.0
    %1306 = vmatprep.subr.mxu0 0.0
    %1307 = vmatpush1.msra.mxu0 0.0
    %1308 = vmatprep.subr.mxu0 0.0
    %1309 = vmatpush1.msra.mxu0 0.0
    %1310 = vmatprep.subr.mxu0 0.0
    %1311 = vmatpush1.msra.mxu0 0.0
    %1312 = vmatprep.subr.mxu0 0.0
    %1313 = vmatpush1.msra.mxu0 0.0
    %1314 = vmatprep.subr.mxu0 0.0
    %1315 = vmatpush1.msra.mxu0 0.0
    %1316 = vmatprep.subr.mxu0 0.0
    %1317 = vmatpush1.msra.mxu0 0.0
    %1318 = vmatprep.subr.mxu0 0.0
    %1319 = vmatpush1.msra.mxu0 0.0
    %1320 = vmatprep.subr.mxu0 0.0
    %1321 = vmatpush1.msra.mxu0 0.0
    %1322 = vmatprep.subr.mxu0 0.0
    %1323 = vmatpush1.msra.mxu0 0.0
    %1324 = vmatprep.subr.mxu0 0.0
    %1325 = vmatpush1.msra.mxu0 %v1296
    %1326 = vmatprep.subr.mxu0 0.0
    %1327 = vmatpush1.msra.mxu0 %v1282
    %1328 = vmatprep.subr.mxu0 0.0
    %1329 = vmatpush1.msra.mxu0 %v1280
    %1330 = vmatprep.subr.mxu0 0.0
    %1331 = vmatpush2.msra.mxu0 0.0
    %1332 = vmatprep.subr.mxu0 0.0
    %1333 = vmatpush2.msra.mxu0 0.0
    %1334 = vmatprep.subr.mxu0 0.0
    %1335 = vmatpush2.msra.mxu0 0.0
    %1336 = vmatprep.subr.mxu0 0.0
    %1337 = vmatpush2.msra.mxu0 0.0
    %1338 = vmatprep.subr.mxu0 0.0
    %1339 = vmatpush2.msra.mxu0 0.0
    %1340 = vmatprep.subr.mxu0 0.0
    %1341 = vmatpush2.msra.mxu0 0.0
    %1342 = vmatprep.subr.mxu0 0.0
    %1343 = vmatpush2.msra.mxu0 0.0
    %1344 = vmatprep.subr.mxu0 0.0
    %1345 = vmatpush2.msra.mxu0 0.0
    %1346 = vmatprep.subr.mxu0 0.0
    %1347 = vmatpush2.msra.mxu0 0.0
    %1348 = vmatprep.subr.mxu0 0.0
    %1349 = vmatpush2.msra.mxu0 0.0
    %1350 = vmatprep.subr.mxu0 0.0
    %1351 = vmatpush2.msra.mxu0 0.0
    %1352 = vmatprep.subr.mxu0 0.0
    %1353 = vmatpush2.msra.mxu0 0.0
    %1354 = vmatprep.subr.mxu0 0.0
    %1355 = vmatpush2.msra.mxu0 0.0
    %1356 = vmatprep.subr.mxu0 0.0
    %1357 = vmatpush2.msra.mxu0 0.0
    %1358 = vmatprep.subr.mxu0 0.0
    %1359 = vmatpush2.msra.mxu0 0.0
    %1360 = vmatprep.subr.mxu0 0.0
    %1361 = vmatpush2.msra.mxu0 0.0
    %1362 = vmatprep.mubr.f32.mxu0 0.0
    %1363 = vmatmul.mubr.f32.gmra.mxu0 %v1288
    %v1364 = vpop.f32.mrf.mxu0
    %v1365 = vadd.f32 0.0, %v1364
    %v1366 = vpop.f32.mrf.mxu0
    %1367 = vmatprep.mubr.f32.mxu0 0.0
    %1368 = vmatmul.mubr.f32.gmra.mxu0 %v1291
    %v1369 = vpop.f32.mrf.mxu0
    %v1370 = vadd.f32 0.0, %v1369
    %v1371 = vpop.f32.mrf.mxu0
    %1372 = vmatprep.mubr.f32.mxu0 0.0
    %1373 = vmatmul.mubr.f32.gmra.mxu0 %v1294
    %v1374 = vpop.f32.mrf.mxu0
    %v1375 = vadd.f32 0.0, %v1374
    %v1376 = vpop.f32.mrf.mxu0
    %1377 = vdwg.mxu0
    %s1378 = scalar_lea.vmem %s8, 16
    %v1379 = vld [vmem:[%s1378] sm:$0xff]
    %v1381 = vsel %vm347, %v1365, 0
    %v1384 = vsel %vm347, %v1370, 0
    %v1387 = vsel %vm347, %v1375, 0
    %1389 = vmatprep.subr.mxu0 0.0
    %1390 = vmatpush1.msra.mxu0 0.0
    %1391 = vmatprep.subr.mxu0 0.0
    %1392 = vmatpush1.msra.mxu0 0.0
    %1393 = vmatprep.subr.mxu0 0.0
    %1394 = vmatpush1.msra.mxu0 0.0
    %1395 = vmatprep.subr.mxu0 0.0
    %1396 = vmatpush1.msra.mxu0 0.0
    %1397 = vmatprep.subr.mxu0 0.0
    %1398 = vmatpush1.msra.mxu0 0.0
    %1399 = vmatprep.subr.mxu0 0.0
    %1400 = vmatpush1.msra.mxu0 0.0
    %1401 = vmatprep.subr.mxu0 0.0
    %1402 = vmatpush1.msra.mxu0 0.0
    %1403 = vmatprep.subr.mxu0 0.0
    %1404 = vmatpush1.msra.mxu0 0.0
    %1405 = vmatprep.subr.mxu0 0.0
    %1406 = vmatpush1.msra.mxu0 0.0
    %1407 = vmatprep.subr.mxu0 0.0
    %1408 = vmatpush1.msra.mxu0 0.0
    %1409 = vmatprep.subr.mxu0 0.0
    %1410 = vmatpush1.msra.mxu0 0.0
    %1411 = vmatprep.subr.mxu0 0.0
    %1412 = vmatpush1.msra.mxu0 0.0
    %1413 = vmatprep.subr.mxu0 0.0
    %1414 = vmatpush1.msra.mxu0 0.0
    %1415 = vmatprep.subr.mxu0 0.0
    %1416 = vmatpush1.msra.mxu0 0.0
    %1417 = vmatprep.subr.mxu0 0.0
    %1418 = vmatpush1.msra.mxu0 0.0
    %1419 = vmatprep.subr.mxu0 0.0
    %1420 = vmatpush1.msra.mxu0 %v1379
    %1421 = vmatprep.subr.mxu0 0.0
    %1422 = vmatpush2.msra.mxu0 0.0
    %1423 = vmatprep.subr.mxu0 0.0
    %1424 = vmatpush2.msra.mxu0 0.0
    %1425 = vmatprep.subr.mxu0 0.0
    %1426 = vmatpush2.msra.mxu0 0.0
    %1427 = vmatprep.subr.mxu0 0.0
    %1428 = vmatpush2.msra.mxu0 0.0
    %1429 = vmatprep.subr.mxu0 0.0
    %1430 = vmatpush2.msra.mxu0 0.0
    %1431 = vmatprep.subr.mxu0 0.0
    %1432 = vmatpush2.msra.mxu0 0.0
    %1433 = vmatprep.subr.mxu0 0.0
    %1434 = vmatpush2.msra.mxu0 0.0
    %1435 = vmatprep.subr.mxu0 0.0
    %1436 = vmatpush2.msra.mxu0 0.0
    %1437 = vmatprep.subr.mxu0 0.0
    %1438 = vmatpush2.msra.mxu0 0.0
    %1439 = vmatprep.subr.mxu0 0.0
    %1440 = vmatpush2.msra.mxu0 0.0
    %1441 = vmatprep.subr.mxu0 0.0
    %1442 = vmatpush2.msra.mxu0 0.0
    %1443 = vmatprep.subr.mxu0 0.0
    %1444 = vmatpush2.msra.mxu0 0.0
    %1445 = vmatprep.subr.mxu0 0.0
    %1446 = vmatpush2.msra.mxu0 0.0
    %1447 = vmatprep.subr.mxu0 0.0
    %1448 = vmatpush2.msra.mxu0 0.0
    %1449 = vmatprep.subr.mxu0 0.0
    %1450 = vmatpush2.msra.mxu0 0.0
    %1451 = vmatprep.subr.mxu0 0.0
    %1452 = vmatpush2.msra.mxu0 0.0
    %1453 = vmatprep.mubr.f32.mxu0 0.0
    %1454 = vmatmul.mubr.f32.gmra.mxu0 %v1381
    %v1455 = vpop.f32.mrf.mxu0
    %v1456 = vadd.f32 0.0, %v1455
    %v1457 = vpop.f32.mrf.mxu0
    %1458 = vmatprep.mubr.f32.mxu0 0.0
    %1459 = vmatmul.mubr.f32.gmra.mxu0 %v1384
    %v1460 = vpop.f32.mrf.mxu0
    %v1461 = vadd.f32 0.0, %v1460
    %v1462 = vpop.f32.mrf.mxu0
    %1463 = vmatprep.mubr.f32.mxu0 0.0
    %1464 = vmatmul.mubr.f32.gmra.mxu0 %v1387
    %v1465 = vpop.f32.mrf.mxu0
    %v1466 = vadd.f32 0.0, %v1465
    %v1467 = vpop.f32.mrf.mxu0
    %1468 = vdwg.mxu0
    %v1469 = vadd.f32 %v1276, %v1456
    %v1470 = vadd.f32 %v1277, %v1461
    %v1471 = vadd.f32 %v1278, %v1466
    %1472 = vrot.lane.b32.xlu0 %v325, 40
    %v1473 = vpop.permute.xlu0 %1472
    %1474 = vrot.lane.b32.xlu0 %v330, 40
    %v1475 = vpop.permute.xlu0 %1474
    %1476 = vrot.lane.b32.xlu0 %v335, 40
    %v1477 = vpop.permute.xlu0 %1476
    %v1481 = vsel %vm752, %v883, 0
    %v1484 = vsel %vm752, %v884, 0
    %v1487 = vsel %vm752, %v885, 0
    %v1489 = vsel %vm904, %v1477, 0
    %1491 = vmatprep.subr.mxu0 0.0
    %1492 = vmatpush1.msra.mxu0 0.0
    %1493 = vmatprep.subr.mxu0 0.0
    %1494 = vmatpush1.msra.mxu0 0.0
    %1495 = vmatprep.subr.mxu0 0.0
    %1496 = vmatpush1.msra.mxu0 0.0
    %1497 = vmatprep.subr.mxu0 0.0
    %1498 = vmatpush1.msra.mxu0 0.0
    %1499 = vmatprep.subr.mxu0 0.0
    %1500 = vmatpush1.msra.mxu0 0.0
    %1501 = vmatprep.subr.mxu0 0.0
    %1502 = vmatpush1.msra.mxu0 0.0
    %1503 = vmatprep.subr.mxu0 0.0
    %1504 = vmatpush1.msra.mxu0 0.0
    %1505 = vmatprep.subr.mxu0 0.0
    %1506 = vmatpush1.msra.mxu0 0.0
    %1507 = vmatprep.subr.mxu0 0.0
    %1508 = vmatpush1.msra.mxu0 0.0
    %1509 = vmatprep.subr.mxu0 0.0
    %1510 = vmatpush1.msra.mxu0 0.0
    %1511 = vmatprep.subr.mxu0 0.0
    %1512 = vmatpush1.msra.mxu0 0.0
    %1513 = vmatprep.subr.mxu0 0.0
    %1514 = vmatpush1.msra.mxu0 0.0
    %1515 = vmatprep.subr.mxu0 0.0
    %1516 = vmatpush1.msra.mxu0 0.0
    %1517 = vmatprep.subr.mxu0 0.0
    %1518 = vmatpush1.msra.mxu0 %v1489
    %1519 = vmatprep.subr.mxu0 0.0
    %1520 = vmatpush1.msra.mxu0 %v1475
    %1521 = vmatprep.subr.mxu0 0.0
    %1522 = vmatpush1.msra.mxu0 %v1473
    %1523 = vmatprep.subr.mxu0 0.0
    %1524 = vmatpush2.msra.mxu0 0.0
    %1525 = vmatprep.subr.mxu0 0.0
    %1526 = vmatpush2.msra.mxu0 0.0
    %1527 = vmatprep.subr.mxu0 0.0
    %1528 = vmatpush2.msra.mxu0 0.0
    %1529 = vmatprep.subr.mxu0 0.0
    %1530 = vmatpush2.msra.mxu0 0.0
    %1531 = vmatprep.subr.mxu0 0.0
    %1532 = vmatpush2.msra.mxu0 0.0
    %1533 = vmatprep.subr.mxu0 0.0
    %1534 = vmatpush2.msra.mxu0 0.0
    %1535 = vmatprep.subr.mxu0 0.0
    %1536 = vmatpush2.msra.mxu0 0.0
    %1537 = vmatprep.subr.mxu0 0.0
    %1538 = vmatpush2.msra.mxu0 0.0
    %1539 = vmatprep.subr.mxu0 0.0
    %1540 = vmatpush2.msra.mxu0 0.0
    %1541 = vmatprep.subr.mxu0 0.0
    %1542 = vmatpush2.msra.mxu0 0.0
    %1543 = vmatprep.subr.mxu0 0.0
    %1544 = vmatpush2.msra.mxu0 0.0
    %1545 = vmatprep.subr.mxu0 0.0
    %1546 = vmatpush2.msra.mxu0 0.0
    %1547 = vmatprep.subr.mxu0 0.0
    %1548 = vmatpush2.msra.mxu0 0.0
    %1549 = vmatprep.subr.mxu0 0.0
    %1550 = vmatpush2.msra.mxu0 0.0
    %1551 = vmatprep.subr.mxu0 0.0
    %1552 = vmatpush2.msra.mxu0 0.0
    %1553 = vmatprep.subr.mxu0 0.0
    %1554 = vmatpush2.msra.mxu0 0.0
    %1555 = vmatprep.mubr.f32.mxu0 0.0
    %1556 = vmatmul.mubr.f32.gmra.mxu0 %v1481
    %v1557 = vpop.f32.mrf.mxu0
    %v1558 = vadd.f32 0.0, %v1557
    %v1559 = vpop.f32.mrf.mxu0
    %1560 = vmatprep.mubr.f32.mxu0 0.0
    %1561 = vmatmul.mubr.f32.gmra.mxu0 %v1484
    %v1562 = vpop.f32.mrf.mxu0
    %v1563 = vadd.f32 0.0, %v1562
    %v1564 = vpop.f32.mrf.mxu0
    %1565 = vmatprep.mubr.f32.mxu0 0.0
    %1566 = vmatmul.mubr.f32.gmra.mxu0 %v1487
    %v1567 = vpop.f32.mrf.mxu0
    %v1568 = vadd.f32 0.0, %v1567
    %v1569 = vpop.f32.mrf.mxu0
    %1570 = vdwg.mxu0
    %s1571 = scalar_lea.vmem %s8, 24
    %v1572 = vld [vmem:[%s1571] sm:$0xff]
    %v1574 = vsel %vm347, %v1558, 0
    %v1577 = vsel %vm347, %v1563, 0
    %v1580 = vsel %vm347, %v1568, 0
    %1582 = vmatprep.subr.mxu0 0.0
    %1583 = vmatpush1.msra.mxu0 0.0
    %1584 = vmatprep.subr.mxu0 0.0
    %1585 = vmatpush1.msra.mxu0 0.0
    %1586 = vmatprep.subr.mxu0 0.0
    %1587 = vmatpush1.msra.mxu0 0.0
    %1588 = vmatprep.subr.mxu0 0.0
    %1589 = vmatpush1.msra.mxu0 0.0
    %1590 = vmatprep.subr.mxu0 0.0
    %1591 = vmatpush1.msra.mxu0 0.0
    %1592 = vmatprep.subr.mxu0 0.0
    %1593 = vmatpush1.msra.mxu0 0.0
    %1594 = vmatprep.subr.mxu0 0.0
    %1595 = vmatpush1.msra.mxu0 0.0
    %1596 = vmatprep.subr.mxu0 0.0
    %1597 = vmatpush1.msra.mxu0 0.0
    %1598 = vmatprep.subr.mxu0 0.0
    %1599 = vmatpush1.msra.mxu0 0.0
    %1600 = vmatprep.subr.mxu0 0.0
    %1601 = vmatpush1.msra.mxu0 0.0
    %1602 = vmatprep.subr.mxu0 0.0
    %1603 = vmatpush1.msra.mxu0 0.0
    %1604 = vmatprep.subr.mxu0 0.0
    %1605 = vmatpush1.msra.mxu0 0.0
    %1606 = vmatprep.subr.mxu0 0.0
    %1607 = vmatpush1.msra.mxu0 0.0
    %1608 = vmatprep.subr.mxu0 0.0
    %1609 = vmatpush1.msra.mxu0 0.0
    %1610 = vmatprep.subr.mxu0 0.0
    %1611 = vmatpush1.msra.mxu0 0.0
    %1612 = vmatprep.subr.mxu0 0.0
    %1613 = vmatpush1.msra.mxu0 %v1572
    %1614 = vmatprep.subr.mxu0 0.0
    %1615 = vmatpush2.msra.mxu0 0.0
    %1616 = vmatprep.subr.mxu0 0.0
    %1617 = vmatpush2.msra.mxu0 0.0
    %1618 = vmatprep.subr.mxu0 0.0
    %1619 = vmatpush2.msra.mxu0 0.0
    %1620 = vmatprep.subr.mxu0 0.0
    %1621 = vmatpush2.msra.mxu0 0.0
    %1622 = vmatprep.subr.mxu0 0.0
    %1623 = vmatpush2.msra.mxu0 0.0
    %1624 = vmatprep.subr.mxu0 0.0
    %1625 = vmatpush2.msra.mxu0 0.0
    %1626 = vmatprep.subr.mxu0 0.0
    %1627 = vmatpush2.msra.mxu0 0.0
    %1628 = vmatprep.subr.mxu0 0.0
    %1629 = vmatpush2.msra.mxu0 0.0
    %1630 = vmatprep.subr.mxu0 0.0
    %1631 = vmatpush2.msra.mxu0 0.0
    %1632 = vmatprep.subr.mxu0 0.0
    %1633 = vmatpush2.msra.mxu0 0.0
    %1634 = vmatprep.subr.mxu0 0.0
    %1635 = vmatpush2.msra.mxu0 0.0
    %1636 = vmatprep.subr.mxu0 0.0
    %1637 = vmatpush2.msra.mxu0 0.0
    %1638 = vmatprep.subr.mxu0 0.0
    %1639 = vmatpush2.msra.mxu0 0.0
    %1640 = vmatprep.subr.mxu0 0.0
    %1641 = vmatpush2.msra.mxu0 0.0
    %1642 = vmatprep.subr.mxu0 0.0
    %1643 = vmatpush2.msra.mxu0 0.0
    %1644 = vmatprep.subr.mxu0 0.0
    %1645 = vmatpush2.msra.mxu0 0.0
    %1646 = vmatprep.mubr.f32.mxu0 0.0
    %1647 = vmatmul.mubr.f32.gmra.mxu0 %v1574
    %v1648 = vpop.f32.mrf.mxu0
    %v1649 = vadd.f32 0.0, %v1648
    %v1650 = vpop.f32.mrf.mxu0
    %1651 = vmatprep.mubr.f32.mxu0 0.0
    %1652 = vmatmul.mubr.f32.gmra.mxu0 %v1577
    %v1653 = vpop.f32.mrf.mxu0
    %v1654 = vadd.f32 0.0, %v1653
    %v1655 = vpop.f32.mrf.mxu0
    %1656 = vmatprep.mubr.f32.mxu0 0.0
    %1657 = vmatmul.mubr.f32.gmra.mxu0 %v1580
    %v1658 = vpop.f32.mrf.mxu0
    %v1659 = vadd.f32 0.0, %v1658
    %v1660 = vpop.f32.mrf.mxu0
    %1661 = vdwg.mxu0
    %v1662 = vadd.f32 %v1469, %v1649
    %v1663 = vadd.f32 %v1470, %v1654
    %v1664 = vadd.f32 %v1471, %v1659
    %v1665 = vadd.f32 %v163, %v1662
    %v1666 = vadd.f32 %v168, %v1663
    %v1667 = vadd.f32 %v173, %v1664
    %v1668 = vld [vmem:[%s10] sm:$0x1]
    %v1669 = vld [vmem:[%s11] sm:$0x1]
    %v1670 = vsel %vm178, %v1665, 0.0
    %1671 = vadd.xlane.f32.xlu0 %v1670
    %v1672 = vpop.xlane.xlu0 %1671
    %v1673 = vsel %vm178, %v1666, 0.0
    %1674 = vadd.xlane.f32.xlu0 %v1673
    %v1675 = vpop.xlane.xlu0 %1674
    %v1676 = vsel %vm185, %v1667, 0.0
    %1677 = vadd.xlane.f32.xlu0 %v1676
    %v1678 = vpop.xlane.xlu0 %1677
    %v1679 = vmul.f32 %v1672, %v189
    %v1680 = vmul.f32 %v1675, %v189
    %v1681 = vmul.f32 %v1678, %v189
    %v1682 = vsub.f32 %v1665, %v1679
    %v1683 = vsub.f32 %v1666, %v1680
    %v1684 = vsub.f32 %v1667, %v1681
    %v1685 = vmul.f32 %v1682, %v1682
    %v1686 = vmul.f32 %v1683, %v1683
    %v1687 = vmul.f32 %v1684, %v1684
    %v1688 = vsel %vm178, %v1685, 0.0
    %1689 = vadd.xlane.f32.xlu0 %v1688
    %v1690 = vpop.xlane.xlu0 %1689
    %v1691 = vsel %vm178, %v1686, 0.0
    %1692 = vadd.xlane.f32.xlu0 %v1691
    %v1693 = vpop.xlane.xlu0 %1692
    %v1694 = vsel %vm185, %v1687, 0.0
    %1695 = vadd.xlane.f32.xlu0 %v1694
    %v1696 = vpop.xlane.xlu0 %1695
    %v1697 = vmul.f32 %v1690, %v189
    %v1698 = vmul.f32 %v1693, %v189
    %v1699 = vmul.f32 %v1696, %v189
    %v1700 = vadd.f32 %v1697, 1e-06
    %v1701 = vadd.f32 %v1698, 1e-06
    %v1702 = vadd.f32 %v1699, 1e-06
    %v1703 = vrsqrt.pop %v1700
    %v1704 = vrsqrt.pop %v1701
    %v1705 = vrsqrt.pop %v1702
    %v1706 = vmul.f32 %v1682, %v1703
    %v1707 = vmul.f32 %v1683, %v1704
    %v1708 = vmul.f32 %v1684, %v1705
    %v1710 = vlaneseq
    %v1711 = vshrl.u32 %v1710, 7
    %v1712 = vsub.s32 0, %v1711
    %v1713 = vrot.slane %v1668, %v1712
    %v1715 = vmul.f32 %v1706, %v1713
    %v1716 = vmul.f32 %v1707, %v1713
    %v1717 = vmul.f32 %v1708, %v1713
    %v1719 = vlaneseq
    %v1720 = vshrl.u32 %v1719, 7
    %v1721 = vsub.s32 0, %v1720
    %v1722 = vrot.slane %v1669, %v1721
    %v1724 = vadd.f32 %v1715, %v1722
    %v1725 = vadd.f32 %v1716, %v1722
    %v1726 = vadd.f32 %v1717, %v1722
    %v1727 = vld [vmem:[%s12] sm:$0xff]
    %v1728 = vld [vmem:[%s12 + $0x8] sm:$0xff]
    %v1729 = vld [vmem:[%s12 + $0x10] sm:$0xff]
    %v1730 = vld [vmem:[%s12 + $0x18] sm:$0xff]
    %v1731 = vld [vmem:[%s13] sm:$0x1]
    %v1733 = vlaneseq
    %v1734 = vshrl.u32 %v1733, 7
    %v1735 = vsub.s32 0, %v1734
    %v1736 = vrot.slane %v1731, %v1735
    %v1739 = vsel %vm178, %v1724, 0
    %v1742 = vsel %vm178, %v1725, 0
    %v1745 = vsel %vm178, %v1726, 0
    %1747 = vmatprep.subr.mxu0 0.0
    %1748 = vmatpush1.msra.mxu0 0.0
    %1749 = vmatprep.subr.mxu0 0.0
    %1750 = vmatpush1.msra.mxu0 0.0
    %1751 = vmatprep.subr.mxu0 0.0
    %1752 = vmatpush1.msra.mxu0 0.0
    %1753 = vmatprep.subr.mxu0 0.0
    %1754 = vmatpush1.msra.mxu0 0.0
    %1755 = vmatprep.subr.mxu0 0.0
    %1756 = vmatpush1.msra.mxu0 0.0
    %1757 = vmatprep.subr.mxu0 0.0
    %1758 = vmatpush1.msra.mxu0 0.0
    %1759 = vmatprep.subr.mxu0 0.0
    %1760 = vmatpush1.msra.mxu0 0.0
    %1761 = vmatprep.subr.mxu0 0.0
    %1762 = vmatpush1.msra.mxu0 0.0
    %1763 = vmatprep.subr.mxu0 0.0
    %1764 = vmatpush1.msra.mxu0 0.0
    %1765 = vmatprep.subr.mxu0 0.0
    %1766 = vmatpush1.msra.mxu0 0.0
    %1767 = vmatprep.subr.mxu0 0.0
    %1768 = vmatpush1.msra.mxu0 0.0
    %1769 = vmatprep.subr.mxu0 0.0
    %1770 = vmatpush1.msra.mxu0 0.0
    %1771 = vmatprep.subr.mxu0 0.0
    %1772 = vmatpush1.msra.mxu0 %v1730
    %1773 = vmatprep.subr.mxu0 0.0
    %1774 = vmatpush1.msra.mxu0 %v1729
    %1775 = vmatprep.subr.mxu0 0.0
    %1776 = vmatpush1.msra.mxu0 %v1728
    %1777 = vmatprep.subr.mxu0 0.0
    %1778 = vmatpush1.msra.mxu0 %v1727
    %1779 = vmatprep.subr.mxu0 0.0
    %1780 = vmatpush2.msra.mxu0 0.0
    %1781 = vmatprep.subr.mxu0 0.0
    %1782 = vmatpush2.msra.mxu0 0.0
    %1783 = vmatprep.subr.mxu0 0.0
    %1784 = vmatpush2.msra.mxu0 0.0
    %1785 = vmatprep.subr.mxu0 0.0
    %1786 = vmatpush2.msra.mxu0 0.0
    %1787 = vmatprep.subr.mxu0 0.0
    %1788 = vmatpush2.msra.mxu0 0.0
    %1789 = vmatprep.subr.mxu0 0.0
    %1790 = vmatpush2.msra.mxu0 0.0
    %1791 = vmatprep.subr.mxu0 0.0
    %1792 = vmatpush2.msra.mxu0 0.0
    %1793 = vmatprep.subr.mxu0 0.0
    %1794 = vmatpush2.msra.mxu0 0.0
    %1795 = vmatprep.subr.mxu0 0.0
    %1796 = vmatpush2.msra.mxu0 0.0
    %1797 = vmatprep.subr.mxu0 0.0
    %1798 = vmatpush2.msra.mxu0 0.0
    %1799 = vmatprep.subr.mxu0 0.0
    %1800 = vmatpush2.msra.mxu0 0.0
    %1801 = vmatprep.subr.mxu0 0.0
    %1802 = vmatpush2.msra.mxu0 0.0
    %1803 = vmatprep.subr.mxu0 0.0
    %1804 = vmatpush2.msra.mxu0 0.0
    %1805 = vmatprep.subr.mxu0 0.0
    %1806 = vmatpush2.msra.mxu0 0.0
    %1807 = vmatprep.subr.mxu0 0.0
    %1808 = vmatpush2.msra.mxu0 0.0
    %1809 = vmatprep.subr.mxu0 0.0
    %1810 = vmatpush2.msra.mxu0 0.0
    %1811 = vmatprep.mubr.f32.mxu0 0.0
    %1812 = vmatmul.mubr.f32.gmra.mxu0 %v1739
    %v1813 = vpop.f32.mrf.mxu0
    %v1814 = vadd.f32 %v1736, %v1813
    %v1815 = vpop.f32.mrf.mxu0
    %1816 = vmatprep.mubr.f32.mxu0 0.0
    %1817 = vmatmul.mubr.f32.gmra.mxu0 %v1742
    %v1818 = vpop.f32.mrf.mxu0
    %v1819 = vadd.f32 %v1736, %v1818
    %v1820 = vpop.f32.mrf.mxu0
    %1821 = vmatprep.mubr.f32.mxu0 0.0
    %1822 = vmatmul.mubr.f32.gmra.mxu0 %v1745
    %v1823 = vpop.f32.mrf.mxu0
    %v1824 = vadd.f32 %v1736, %v1823
    %v1825 = vpop.f32.mrf.mxu0
    %1826 = vdwg.mxu0
    %v1827 = vmul.f32 %v1814, 0.5
    %v1828 = vmul.f32 %v1819, 0.5
    %v1829 = vmul.f32 %v1824, 0.5
    %v1830 = vmul.f32 %v1814, 0.70710677
    %v1831 = vmul.f32 %v1819, 0.70710677
    %v1832 = vmul.f32 %v1824, 0.70710677
    %v1833 = verf.f32.pop %v1830
    %v1834 = verf.f32.pop %v1831
    %v1835 = verf.f32.pop %v1832
    %v1836 = vadd.f32 %v1833, 1.0
    %v1837 = vadd.f32 %v1834, 1.0
    %v1838 = vadd.f32 %v1835, 1.0
    %v1839 = vmul.f32 %v1827, %v1836
    %v1840 = vmul.f32 %v1828, %v1837
    %v1841 = vmul.f32 %v1829, %v1838
    %v1842 = vld [vmem:[%s14] sm:$0xff]
    %v1843 = vld [vmem:[%s14 + $0x8] sm:$0xff]
    %v1844 = vld [vmem:[%s14 + $0x10] sm:$0xff]
    %v1845 = vld [vmem:[%s14 + $0x18] sm:$0xff]
    %v1846 = vld [vmem:[%s14 + $0x20] sm:$0xff]
    %v1847 = vld [vmem:[%s14 + $0x28] sm:$0xff]
    %v1848 = vld [vmem:[%s14 + $0x30] sm:$0xff]
    %v1849 = vld [vmem:[%s14 + $0x38] sm:$0xff]
    %v1850 = vld [vmem:[%s14 + $0x40] sm:$0xff]
    %v1851 = vld [vmem:[%s14 + $0x48] sm:$0xff]
    %v1852 = vld [vmem:[%s14 + $0x50] sm:$0xff]
    %v1853 = vld [vmem:[%s14 + $0x58] sm:$0xff]
    %v1854 = vld [vmem:[%s14 + $0x60] sm:$0xff]
    %v1855 = vld [vmem:[%s14 + $0x68] sm:$0xff]
    %v1856 = vld [vmem:[%s14 + $0x70] sm:$0xff]
    %v1857 = vld [vmem:[%s14 + $0x78] sm:$0xff]
    %v1858 = vld [vmem:[%s15] sm:$0x1]
    %v1860 = vlaneseq
    %v1861 = vshrl.u32 %v1860, 7
    %v1862 = vsub.s32 0, %v1861
    %v1863 = vrot.slane %v1858, %v1862
    %1865 = vmatprep.subr.mxu0 0.0
    %1866 = vmatpush1.msra.mxu0 %v1857
    %1867 = vmatprep.subr.mxu0 0.0
    %1868 = vmatpush1.msra.mxu0 %v1856
    %1869 = vmatprep.subr.mxu0 0.0
    %1870 = vmatpush1.msra.mxu0 %v1855
    %1871 = vmatprep.subr.mxu0 0.0
    %1872 = vmatpush1.msra.mxu0 %v1854
    %1873 = vmatprep.subr.mxu0 0.0
    %1874 = vmatpush1.msra.mxu0 %v1853
    %1875 = vmatprep.subr.mxu0 0.0
    %1876 = vmatpush1.msra.mxu0 %v1852
    %1877 = vmatprep.subr.mxu0 0.0
    %1878 = vmatpush1.msra.mxu0 %v1851
    %1879 = vmatprep.subr.mxu0 0.0
    %1880 = vmatpush1.msra.mxu0 %v1850
    %1881 = vmatprep.subr.mxu0 0.0
    %1882 = vmatpush1.msra.mxu0 %v1849
    %1883 = vmatprep.subr.mxu0 0.0
    %1884 = vmatpush1.msra.mxu0 %v1848
    %1885 = vmatprep.subr.mxu0 0.0
    %1886 = vmatpush1.msra.mxu0 %v1847
    %1887 = vmatprep.subr.mxu0 0.0
    %1888 = vmatpush1.msra.mxu0 %v1846
    %1889 = vmatprep.subr.mxu0 0.0
    %1890 = vmatpush1.msra.mxu0 %v1845
    %1891 = vmatprep.subr.mxu0 0.0
    %1892 = vmatpush1.msra.mxu0 %v1844
    %1893 = vmatprep.subr.mxu0 0.0
    %1894 = vmatpush1.msra.mxu0 %v1843
    %1895 = vmatprep.subr.mxu0 0.0
    %1896 = vmatpush1.msra.mxu0 %v1842
    %1897 = vmatprep.subr.mxu0 0.0
    %1898 = vmatpush2.msra.mxu0 0.0
    %1899 = vmatprep.subr.mxu0 0.0
    %1900 = vmatpush2.msra.mxu0 0.0
    %1901 = vmatprep.subr.mxu0 0.0
    %1902 = vmatpush2.msra.mxu0 0.0
    %1903 = vmatprep.subr.mxu0 0.0
    %1904 = vmatpush2.msra.mxu0 0.0
    %1905 = vmatprep.subr.mxu0 0.0
    %1906 = vmatpush2.msra.mxu0 0.0
    %1907 = vmatprep.subr.mxu0 0.0
    %1908 = vmatpush2.msra.mxu0 0.0
    %1909 = vmatprep.subr.mxu0 0.0
    %1910 = vmatpush2.msra.mxu0 0.0
    %1911 = vmatprep.subr.mxu0 0.0
    %1912 = vmatpush2.msra.mxu0 0.0
    %1913 = vmatprep.subr.mxu0 0.0
    %1914 = vmatpush2.msra.mxu0 0.0
    %1915 = vmatprep.subr.mxu0 0.0
    %1916 = vmatpush2.msra.mxu0 0.0
    %1917 = vmatprep.subr.mxu0 0.0
    %1918 = vmatpush2.msra.mxu0 0.0
    %1919 = vmatprep.subr.mxu0 0.0
    %1920 = vmatpush2.msra.mxu0 0.0
    %1921 = vmatprep.subr.mxu0 0.0
    %1922 = vmatpush2.msra.mxu0 0.0
    %1923 = vmatprep.subr.mxu0 0.0
    %1924 = vmatpush2.msra.mxu0 0.0
    %1925 = vmatprep.subr.mxu0 0.0
    %1926 = vmatpush2.msra.mxu0 0.0
    %1927 = vmatprep.subr.mxu0 0.0
    %1928 = vmatpush2.msra.mxu0 0.0
    %1929 = vmatprep.mubr.f32.mxu0 0.0
    %1930 = vmatmul.mubr.f32.gmra.mxu0 %v1839
    %v1931 = vpop.f32.mrf.mxu0
    %v1932 = vadd.f32 %v1863, %v1931
    %v1933 = vpop.f32.mrf.mxu0
    %1934 = vmatprep.mubr.f32.mxu0 0.0
    %1935 = vmatmul.mubr.f32.gmra.mxu0 %v1840
    %v1936 = vpop.f32.mrf.mxu0
    %v1937 = vadd.f32 %v1863, %v1936
    %v1938 = vpop.f32.mrf.mxu0
    %1939 = vmatprep.mubr.f32.mxu0 0.0
    %1940 = vmatmul.mubr.f32.gmra.mxu0 %v1841
    %v1941 = vpop.f32.mrf.mxu0
    %v1942 = vadd.f32 %v1863, %v1941
    %v1943 = vpop.f32.mrf.mxu0
    %1944 = vdwg.mxu0
    %v1945 = vadd.f32 %v1665, %v1932
    %v1946 = vadd.f32 %v1666, %v1937
    %v1947 = vadd.f32 %v1667, %v1942
    %s1948 = scalar_lea.vmem %s4, 1
    %v1949 = vld [vmem:[%s1948] sm:$0x1]
    %s1950 = scalar_lea.vmem %s5, 1
    %v1951 = vld [vmem:[%s1950] sm:$0x1]
    %v1952 = vsel %vm178, %v1945, 0.0
    %1953 = vadd.xlane.f32.xlu0 %v1952
    %v1954 = vpop.xlane.xlu0 %1953
    %v1955 = vsel %vm178, %v1946, 0.0
    %1956 = vadd.xlane.f32.xlu0 %v1955
    %v1957 = vpop.xlane.xlu0 %1956
    %v1958 = vsel %vm185, %v1947, 0.0
    %1959 = vadd.xlane.f32.xlu0 %v1958
    %v1960 = vpop.xlane.xlu0 %1959
    %v1961 = vmul.f32 %v1954, %v189
    %v1962 = vmul.f32 %v1957, %v189
    %v1963 = vmul.f32 %v1960, %v189
    %v1964 = vsub.f32 %v1945, %v1961
    %v1965 = vsub.f32 %v1946, %v1962
    %v1966 = vsub.f32 %v1947, %v1963
    %v1967 = vmul.f32 %v1964, %v1964
    %v1968 = vmul.f32 %v1965, %v1965
    %v1969 = vmul.f32 %v1966, %v1966
    %v1970 = vsel %vm178, %v1967, 0.0
    %1971 = vadd.xlane.f32.xlu0 %v1970
    %v1972 = vpop.xlane.xlu0 %1971
    %v1973 = vsel %vm178, %v1968, 0.0
    %1974 = vadd.xlane.f32.xlu0 %v1973
    %v1975 = vpop.xlane.xlu0 %1974
    %v1976 = vsel %vm185, %v1969, 0.0
    %1977 = vadd.xlane.f32.xlu0 %v1976
    %v1978 = vpop.xlane.xlu0 %1977
    %v1979 = vmul.f32 %v1972, %v189
    %v1980 = vmul.f32 %v1975, %v189
    %v1981 = vmul.f32 %v1978, %v189
    %v1982 = vadd.f32 %v1979, 1e-06
    %v1983 = vadd.f32 %v1980, 1e-06
    %v1984 = vadd.f32 %v1981, 1e-06
    %v1985 = vrsqrt.pop %v1982
    %v1986 = vrsqrt.pop %v1983
    %v1987 = vrsqrt.pop %v1984
    %v1988 = vmul.f32 %v1964, %v1985
    %v1989 = vmul.f32 %v1965, %v1986
    %v1990 = vmul.f32 %v1966, %v1987
    %v1992 = vlaneseq
    %v1993 = vshrl.u32 %v1992, 7
    %v1994 = vsub.s32 0, %v1993
    %v1995 = vrot.slane %v1949, %v1994
    %v1997 = vmul.f32 %v1988, %v1995
    %v1998 = vmul.f32 %v1989, %v1995
    %v1999 = vmul.f32 %v1990, %v1995
    %v2001 = vlaneseq
    %v2002 = vshrl.u32 %v2001, 7
    %v2003 = vsub.s32 0, %v2002
    %v2004 = vrot.slane %v1951, %v2003
    %v2006 = vadd.f32 %v1997, %v2004
    %v2007 = vadd.f32 %v1998, %v2004
    %v2008 = vadd.f32 %v1999, %v2004
    %s2009 = scalar_lea.vmem %s6, 32
    %v2010 = vld [vmem:[%s2009] sm:$0xff]
    %v2011 = vld [vmem:[%s2009 + $0x8] sm:$0xff]
    %v2012 = vld [vmem:[%s2009 + $0x10] sm:$0xff]
    %v2013 = vld [vmem:[%s2009 + $0x18] sm:$0xff]
    %s2014 = scalar_lea.vmem %s7, 1
    %v2015 = vld [vmem:[%s2014] sm:$0x1]
    %v2017 = vlaneseq
    %v2018 = vshrl.u32 %v2017, 7
    %v2019 = vsub.s32 0, %v2018
    %v2020 = vrot.slane %v2015, %v2019
    %v2023 = vsel %vm178, %v2006, 0
    %v2026 = vsel %vm178, %v2007, 0
    %v2029 = vsel %vm178, %v2008, 0
    %2031 = vmatprep.subr.mxu0 0.0
    %2032 = vmatpush1.msra.mxu0 0.0
    %2033 = vmatprep.subr.mxu0 0.0
    %2034 = vmatpush1.msra.mxu0 0.0
    %2035 = vmatprep.subr.mxu0 0.0
    %2036 = vmatpush1.msra.mxu0 0.0
    %2037 = vmatprep.subr.mxu0 0.0
    %2038 = vmatpush1.msra.mxu0 0.0
    %2039 = vmatprep.subr.mxu0 0.0
    %2040 = vmatpush1.msra.mxu0 0.0
    %2041 = vmatprep.subr.mxu0 0.0
    %2042 = vmatpush1.msra.mxu0 0.0
    %2043 = vmatprep.subr.mxu0 0.0
    %2044 = vmatpush1.msra.mxu0 0.0
    %2045 = vmatprep.subr.mxu0 0.0
    %2046 = vmatpush1.msra.mxu0 0.0
    %2047 = vmatprep.subr.mxu0 0.0
    %2048 = vmatpush1.msra.mxu0 0.0
    %2049 = vmatprep.subr.mxu0 0.0
    %2050 = vmatpush1.msra.mxu0 0.0
    %2051 = vmatprep.subr.mxu0 0.0
    %2052 = vmatpush1.msra.mxu0 0.0
    %2053 = vmatprep.subr.mxu0 0.0
    %2054 = vmatpush1.msra.mxu0 0.0
    %2055 = vmatprep.subr.mxu0 0.0
    %2056 = vmatpush1.msra.mxu0 %v2013
    %2057 = vmatprep.subr.mxu0 0.0
    %2058 = vmatpush1.msra.mxu0 %v2012
    %2059 = vmatprep.subr.mxu0 0.0
    %2060 = vmatpush1.msra.mxu0 %v2011
    %2061 = vmatprep.subr.mxu0 0.0
    %2062 = vmatpush1.msra.mxu0 %v2010
    %2063 = vmatprep.subr.mxu0 0.0
    %2064 = vmatpush2.msra.mxu0 0.0
    %2065 = vmatprep.subr.mxu0 0.0
    %2066 = vmatpush2.msra.mxu0 0.0
    %2067 = vmatprep.subr.mxu0 0.0
    %2068 = vmatpush2.msra.mxu0 0.0
    %2069 = vmatprep.subr.mxu0 0.0
    %2070 = vmatpush2.msra.mxu0 0.0
    %2071 = vmatprep.subr.mxu0 0.0
    %2072 = vmatpush2.msra.mxu0 0.0
    %2073 = vmatprep.subr.mxu0 0.0
    %2074 = vmatpush2.msra.mxu0 0.0
    %2075 = vmatprep.subr.mxu0 0.0
    %2076 = vmatpush2.msra.mxu0 0.0
    %2077 = vmatprep.subr.mxu0 0.0
    %2078 = vmatpush2.msra.mxu0 0.0
    %2079 = vmatprep.subr.mxu0 0.0
    %2080 = vmatpush2.msra.mxu0 0.0
    %2081 = vmatprep.subr.mxu0 0.0
    %2082 = vmatpush2.msra.mxu0 0.0
    %2083 = vmatprep.subr.mxu0 0.0
    %2084 = vmatpush2.msra.mxu0 0.0
    %2085 = vmatprep.subr.mxu0 0.0
    %2086 = vmatpush2.msra.mxu0 0.0
    %2087 = vmatprep.subr.mxu0 0.0
    %2088 = vmatpush2.msra.mxu0 0.0
    %2089 = vmatprep.subr.mxu0 0.0
    %2090 = vmatpush2.msra.mxu0 0.0
    %2091 = vmatprep.subr.mxu0 0.0
    %2092 = vmatpush2.msra.mxu0 0.0
    %2093 = vmatprep.subr.mxu0 0.0
    %2094 = vmatpush2.msra.mxu0 0.0
    %2095 = vmatprep.mubr.f32.mxu0 0.0
    %2096 = vmatmul.mubr.f32.gmra.mxu0 %v2023
    %v2097 = vpop.f32.mrf.mxu0
    %v2098 = vadd.f32 %v2020, %v2097
    %v2099 = vpop.f32.mrf.mxu0
    %2100 = vmatprep.mubr.f32.mxu0 0.0
    %2101 = vmatmul.mubr.f32.gmra.mxu0 %v2026
    %v2102 = vpop.f32.mrf.mxu0
    %v2103 = vadd.f32 %v2020, %v2102
    %v2104 = vpop.f32.mrf.mxu0
    %2105 = vmatprep.mubr.f32.mxu0 0.0
    %2106 = vmatmul.mubr.f32.gmra.mxu0 %v2029
    %v2107 = vpop.f32.mrf.mxu0
    %v2108 = vadd.f32 %v2020, %v2107
    %v2109 = vpop.f32.mrf.mxu0
    %2110 = vdwg.mxu0
    %2114 = vrot.lane.b32.xlu0 %v2098, 96
    %v2115 = vpop.permute.xlu0 %2114
    %2116 = vrot.lane.b32.xlu0 %v2103, 96
    %v2117 = vpop.permute.xlu0 %2116
    %2118 = vrot.lane.b32.xlu0 %v2108, 96
    %v2119 = vpop.permute.xlu0 %2118
    %v2120 = vsel %vm347, %v2098, 0
    %v2122 = vsel %vm347, %v2103, 0
    %v2124 = vsel %vm347, %v2108, 0
    %v2126 = vsel %vm347, %v2115, 0
    %v2128 = vsel %vm347, %v2117, 0
    %v2130 = vsel %vm347, %v2119, 0
    %2132 = vmatprep.subr.mxu0 0.0
    %2133 = vmatpush1.xpose.msra.mxu0 0.0
    %2134 = vmatprep.subr.mxu0 0.0
    %2135 = vmatpush1.xpose.msra.mxu0 0.0
    %2136 = vmatprep.subr.mxu0 0.0
    %2137 = vmatpush1.xpose.msra.mxu0 0.0
    %2138 = vmatprep.subr.mxu0 0.0
    %2139 = vmatpush1.xpose.msra.mxu0 0.0
    %2140 = vmatprep.subr.mxu0 0.0
    %2141 = vmatpush1.xpose.msra.mxu0 0.0
    %2142 = vmatprep.subr.mxu0 0.0
    %2143 = vmatpush1.xpose.msra.mxu0 0.0
    %2144 = vmatprep.subr.mxu0 0.0
    %2145 = vmatpush1.xpose.msra.mxu0 0.0
    %2146 = vmatprep.subr.mxu0 0.0
    %2147 = vmatpush1.xpose.msra.mxu0 0.0
    %2148 = vmatprep.subr.mxu0 0.0
    %2149 = vmatpush1.xpose.msra.mxu0 0.0
    %2150 = vmatprep.subr.mxu0 0.0
    %2151 = vmatpush1.xpose.msra.mxu0 0.0
    %2152 = vmatprep.subr.mxu0 0.0
    %2153 = vmatpush1.xpose.msra.mxu0 0.0
    %2154 = vmatprep.subr.mxu0 0.0
    %2155 = vmatpush1.xpose.msra.mxu0 0.0
    %2156 = vmatprep.subr.mxu0 0.0
    %2157 = vmatpush1.xpose.msra.mxu0 0.0
    %2158 = vmatprep.subr.mxu0 0.0
    %2159 = vmatpush1.xpose.msra.mxu0 %v2130
    %2160 = vmatprep.subr.mxu0 0.0
    %2161 = vmatpush1.xpose.msra.mxu0 %v2128
    %2162 = vmatprep.subr.mxu0 0.0
    %2163 = vmatpush1.xpose.msra.mxu0 %v2126
    %2164 = vmatprep.subr.mxu0 0.0
    %2165 = vmatpush2.xpose.msra.mxu0 0.0
    %2166 = vmatprep.subr.mxu0 0.0
    %2167 = vmatpush2.xpose.msra.mxu0 0.0
    %2168 = vmatprep.subr.mxu0 0.0
    %2169 = vmatpush2.xpose.msra.mxu0 0.0
    %2170 = vmatprep.subr.mxu0 0.0
    %2171 = vmatpush2.xpose.msra.mxu0 0.0
    %2172 = vmatprep.subr.mxu0 0.0
    %2173 = vmatpush2.xpose.msra.mxu0 0.0
    %2174 = vmatprep.subr.mxu0 0.0
    %2175 = vmatpush2.xpose.msra.mxu0 0.0
    %2176 = vmatprep.subr.mxu0 0.0
    %2177 = vmatpush2.xpose.msra.mxu0 0.0
    %2178 = vmatprep.subr.mxu0 0.0
    %2179 = vmatpush2.xpose.msra.mxu0 0.0
    %2180 = vmatprep.subr.mxu0 0.0
    %2181 = vmatpush2.xpose.msra.mxu0 0.0
    %2182 = vmatprep.subr.mxu0 0.0
    %2183 = vmatpush2.xpose.msra.mxu0 0.0
    %2184 = vmatprep.subr.mxu0 0.0
    %2185 = vmatpush2.xpose.msra.mxu0 0.0
    %2186 = vmatprep.subr.mxu0 0.0
    %2187 = vmatpush2.xpose.msra.mxu0 0.0
    %2188 = vmatprep.subr.mxu0 0.0
    %2189 = vmatpush2.xpose.msra.mxu0 0.0
    %2190 = vmatprep.subr.mxu0 0.0
    %2191 = vmatpush2.xpose.msra.mxu0 0.0
    %2192 = vmatprep.subr.mxu0 0.0
    %2193 = vmatpush2.xpose.msra.mxu0 0.0
    %2194 = vmatprep.subr.mxu0 0.0
    %2195 = vmatpush2.xpose.msra.mxu0 0.0
    %2196 = vmatprep.mubr.f32.mxu0 0.0
    %2197 = vmatmul.mubr.f32.gmra.mxu0 %v2120
    %v2198 = vpop.f32.mrf.mxu0
    %v2199 = vadd.f32 0.0, %v2198
    %v2200 = vpop.f32.mrf.mxu0
    %2201 = vmatprep.mubr.f32.mxu0 0.0
    %2202 = vmatmul.mubr.f32.gmra.mxu0 %v2122
    %v2203 = vpop.f32.mrf.mxu0
    %v2204 = vadd.f32 0.0, %v2203
    %v2205 = vpop.f32.mrf.mxu0
    %2206 = vmatprep.mubr.f32.mxu0 0.0
    %2207 = vmatmul.mubr.f32.gmra.mxu0 %v2124
    %v2208 = vpop.f32.mrf.mxu0
    %v2209 = vadd.f32 0.0, %v2208
    %v2210 = vpop.f32.mrf.mxu0
    %2211 = vdwg.mxu0
    %2212 = vrot.lane.b32.xlu0 %v2098, 120
    %v2213 = vpop.permute.xlu0 %2212
    %2214 = vrot.lane.b32.xlu0 %v2103, 120
    %v2215 = vpop.permute.xlu0 %2214
    %2216 = vrot.lane.b32.xlu0 %v2108, 120
    %v2217 = vpop.permute.xlu0 %2216
    %2218 = vrot.lane.b32.xlu0 %v2098, 88
    %v2219 = vpop.permute.xlu0 %2218
    %2220 = vrot.lane.b32.xlu0 %v2103, 88
    %v2221 = vpop.permute.xlu0 %2220
    %2222 = vrot.lane.b32.xlu0 %v2108, 88
    %v2223 = vpop.permute.xlu0 %2222
    %v2224 = vsel %vm347, %v2213, 0
    %v2226 = vsel %vm347, %v2215, 0
    %v2228 = vsel %vm347, %v2217, 0
    %v2230 = vsel %vm347, %v2219, 0
    %v2232 = vsel %vm347, %v2221, 0
    %v2234 = vsel %vm347, %v2223, 0
    %2236 = vmatprep.subr.mxu0 0.0
    %2237 = vmatpush1.xpose.msra.mxu0 0.0
    %2238 = vmatprep.subr.mxu0 0.0
    %2239 = vmatpush1.xpose.msra.mxu0 0.0
    %2240 = vmatprep.subr.mxu0 0.0
    %2241 = vmatpush1.xpose.msra.mxu0 0.0
    %2242 = vmatprep.subr.mxu0 0.0
    %2243 = vmatpush1.xpose.msra.mxu0 0.0
    %2244 = vmatprep.subr.mxu0 0.0
    %2245 = vmatpush1.xpose.msra.mxu0 0.0
    %2246 = vmatprep.subr.mxu0 0.0
    %2247 = vmatpush1.xpose.msra.mxu0 0.0
    %2248 = vmatprep.subr.mxu0 0.0
    %2249 = vmatpush1.xpose.msra.mxu0 0.0
    %2250 = vmatprep.subr.mxu0 0.0
    %2251 = vmatpush1.xpose.msra.mxu0 0.0
    %2252 = vmatprep.subr.mxu0 0.0
    %2253 = vmatpush1.xpose.msra.mxu0 0.0
    %2254 = vmatprep.subr.mxu0 0.0
    %2255 = vmatpush1.xpose.msra.mxu0 0.0
    %2256 = vmatprep.subr.mxu0 0.0
    %2257 = vmatpush1.xpose.msra.mxu0 0.0
    %2258 = vmatprep.subr.mxu0 0.0
    %2259 = vmatpush1.xpose.msra.mxu0 0.0
    %2260 = vmatprep.subr.mxu0 0.0
    %2261 = vmatpush1.xpose.msra.mxu0 0.0
    %2262 = vmatprep.subr.mxu0 0.0
    %2263 = vmatpush1.xpose.msra.mxu0 %v2234
    %2264 = vmatprep.subr.mxu0 0.0
    %2265 = vmatpush1.xpose.msra.mxu0 %v2232
    %2266 = vmatprep.subr.mxu0 0.0
    %2267 = vmatpush1.xpose.msra.mxu0 %v2230
    %2268 = vmatprep.subr.mxu0 0.0
    %2269 = vmatpush2.xpose.msra.mxu0 0.0
    %2270 = vmatprep.subr.mxu0 0.0
    %2271 = vmatpush2.xpose.msra.mxu0 0.0
    %2272 = vmatprep.subr.mxu0 0.0
    %2273 = vmatpush2.xpose.msra.mxu0 0.0
    %2274 = vmatprep.subr.mxu0 0.0
    %2275 = vmatpush2.xpose.msra.mxu0 0.0
    %2276 = vmatprep.subr.mxu0 0.0
    %2277 = vmatpush2.xpose.msra.mxu0 0.0
    %2278 = vmatprep.subr.mxu0 0.0
    %2279 = vmatpush2.xpose.msra.mxu0 0.0
    %2280 = vmatprep.subr.mxu0 0.0
    %2281 = vmatpush2.xpose.msra.mxu0 0.0
    %2282 = vmatprep.subr.mxu0 0.0
    %2283 = vmatpush2.xpose.msra.mxu0 0.0
    %2284 = vmatprep.subr.mxu0 0.0
    %2285 = vmatpush2.xpose.msra.mxu0 0.0
    %2286 = vmatprep.subr.mxu0 0.0
    %2287 = vmatpush2.xpose.msra.mxu0 0.0
    %2288 = vmatprep.subr.mxu0 0.0
    %2289 = vmatpush2.xpose.msra.mxu0 0.0
    %2290 = vmatprep.subr.mxu0 0.0
    %2291 = vmatpush2.xpose.msra.mxu0 0.0
    %2292 = vmatprep.subr.mxu0 0.0
    %2293 = vmatpush2.xpose.msra.mxu0 0.0
    %2294 = vmatprep.subr.mxu0 0.0
    %2295 = vmatpush2.xpose.msra.mxu0 0.0
    %2296 = vmatprep.subr.mxu0 0.0
    %2297 = vmatpush2.xpose.msra.mxu0 0.0
    %2298 = vmatprep.subr.mxu0 0.0
    %2299 = vmatpush2.xpose.msra.mxu0 0.0
    %2300 = vmatprep.mubr.f32.mxu0 0.0
    %2301 = vmatmul.mubr.f32.gmra.mxu0 %v2224
    %v2302 = vpop.f32.mrf.mxu0
    %v2303 = vadd.f32 0.0, %v2302
    %v2304 = vpop.f32.mrf.mxu0
    %2305 = vmatprep.mubr.f32.mxu0 0.0
    %2306 = vmatmul.mubr.f32.gmra.mxu0 %v2226
    %v2307 = vpop.f32.mrf.mxu0
    %v2308 = vadd.f32 0.0, %v2307
    %v2309 = vpop.f32.mrf.mxu0
    %2310 = vmatprep.mubr.f32.mxu0 0.0
    %2311 = vmatmul.mubr.f32.gmra.mxu0 %v2228
    %v2312 = vpop.f32.mrf.mxu0
    %v2313 = vadd.f32 0.0, %v2312
    %v2314 = vpop.f32.mrf.mxu0
    %2315 = vdwg.mxu0
    %2316 = vrot.lane.b32.xlu0 %v2098, 112
    %v2317 = vpop.permute.xlu0 %2316
    %2318 = vrot.lane.b32.xlu0 %v2103, 112
    %v2319 = vpop.permute.xlu0 %2318
    %2320 = vrot.lane.b32.xlu0 %v2108, 112
    %v2321 = vpop.permute.xlu0 %2320
    %2322 = vrot.lane.b32.xlu0 %v2098, 80
    %v2323 = vpop.permute.xlu0 %2322
    %2324 = vrot.lane.b32.xlu0 %v2103, 80
    %v2325 = vpop.permute.xlu0 %2324
    %2326 = vrot.lane.b32.xlu0 %v2108, 80
    %v2327 = vpop.permute.xlu0 %2326
    %v2328 = vsel %vm347, %v2317, 0
    %v2330 = vsel %vm347, %v2319, 0
    %v2332 = vsel %vm347, %v2321, 0
    %v2334 = vsel %vm347, %v2323, 0
    %v2336 = vsel %vm347, %v2325, 0
    %v2338 = vsel %vm347, %v2327, 0
    %2340 = vmatprep.subr.mxu0 0.0
    %2341 = vmatpush1.xpose.msra.mxu0 0.0
    %2342 = vmatprep.subr.mxu0 0.0
    %2343 = vmatpush1.xpose.msra.mxu0 0.0
    %2344 = vmatprep.subr.mxu0 0.0
    %2345 = vmatpush1.xpose.msra.mxu0 0.0
    %2346 = vmatprep.subr.mxu0 0.0
    %2347 = vmatpush1.xpose.msra.mxu0 0.0
    %2348 = vmatprep.subr.mxu0 0.0
    %2349 = vmatpush1.xpose.msra.mxu0 0.0
    %2350 = vmatprep.subr.mxu0 0.0
    %2351 = vmatpush1.xpose.msra.mxu0 0.0
    %2352 = vmatprep.subr.mxu0 0.0
    %2353 = vmatpush1.xpose.msra.mxu0 0.0
    %2354 = vmatprep.subr.mxu0 0.0
    %2355 = vmatpush1.xpose.msra.mxu0 0.0
    %2356 = vmatprep.subr.mxu0 0.0
    %2357 = vmatpush1.xpose.msra.mxu0 0.0
    %2358 = vmatprep.subr.mxu0 0.0
    %2359 = vmatpush1.xpose.msra.mxu0 0.0
    %2360 = vmatprep.subr.mxu0 0.0
    %2361 = vmatpush1.xpose.msra.mxu0 0.0
    %2362 = vmatprep.subr.mxu0 0.0
    %2363 = vmatpush1.xpose.msra.mxu0 0.0
    %2364 = vmatprep.subr.mxu0 0.0
    %2365 = vmatpush1.xpose.msra.mxu0 0.0
    %2366 = vmatprep.subr.mxu0 0.0
    %2367 = vmatpush1.xpose.msra.mxu0 %v2338
    %2368 = vmatprep.subr.mxu0 0.0
    %2369 = vmatpush1.xpose.msra.mxu0 %v2336
    %2370 = vmatprep.subr.mxu0 0.0
    %2371 = vmatpush1.xpose.msra.mxu0 %v2334
    %2372 = vmatprep.subr.mxu0 0.0
    %2373 = vmatpush2.xpose.msra.mxu0 0.0
    %2374 = vmatprep.subr.mxu0 0.0
    %2375 = vmatpush2.xpose.msra.mxu0 0.0
    %2376 = vmatprep.subr.mxu0 0.0
    %2377 = vmatpush2.xpose.msra.mxu0 0.0
    %2378 = vmatprep.subr.mxu0 0.0
    %2379 = vmatpush2.xpose.msra.mxu0 0.0
    %2380 = vmatprep.subr.mxu0 0.0
    %2381 = vmatpush2.xpose.msra.mxu0 0.0
    %2382 = vmatprep.subr.mxu0 0.0
    %2383 = vmatpush2.xpose.msra.mxu0 0.0
    %2384 = vmatprep.subr.mxu0 0.0
    %2385 = vmatpush2.xpose.msra.mxu0 0.0
    %2386 = vmatprep.subr.mxu0 0.0
    %2387 = vmatpush2.xpose.msra.mxu0 0.0
    %2388 = vmatprep.subr.mxu0 0.0
    %2389 = vmatpush2.xpose.msra.mxu0 0.0
    %2390 = vmatprep.subr.mxu0 0.0
    %2391 = vmatpush2.xpose.msra.mxu0 0.0
    %2392 = vmatprep.subr.mxu0 0.0
    %2393 = vmatpush2.xpose.msra.mxu0 0.0
    %2394 = vmatprep.subr.mxu0 0.0
    %2395 = vmatpush2.xpose.msra.mxu0 0.0
    %2396 = vmatprep.subr.mxu0 0.0
    %2397 = vmatpush2.xpose.msra.mxu0 0.0
    %2398 = vmatprep.subr.mxu0 0.0
    %2399 = vmatpush2.xpose.msra.mxu0 0.0
    %2400 = vmatprep.subr.mxu0 0.0
    %2401 = vmatpush2.xpose.msra.mxu0 0.0
    %2402 = vmatprep.subr.mxu0 0.0
    %2403 = vmatpush2.xpose.msra.mxu0 0.0
    %2404 = vmatprep.mubr.f32.mxu0 0.0
    %2405 = vmatmul.mubr.f32.gmra.mxu0 %v2328
    %v2406 = vpop.f32.mrf.mxu0
    %v2407 = vadd.f32 0.0, %v2406
    %v2408 = vpop.f32.mrf.mxu0
    %2409 = vmatprep.mubr.f32.mxu0 0.0
    %2410 = vmatmul.mubr.f32.gmra.mxu0 %v2330
    %v2411 = vpop.f32.mrf.mxu0
    %v2412 = vadd.f32 0.0, %v2411
    %v2413 = vpop.f32.mrf.mxu0
    %2414 = vmatprep.mubr.f32.mxu0 0.0
    %2415 = vmatmul.mubr.f32.gmra.mxu0 %v2332
    %v2416 = vpop.f32.mrf.mxu0
    %v2417 = vadd.f32 0.0, %v2416
    %v2418 = vpop.f32.mrf.mxu0
    %2419 = vdwg.mxu0
    %2420 = vrot.lane.b32.xlu0 %v2098, 104
    %v2421 = vpop.permute.xlu0 %2420
    %2422 = vrot.lane.b32.xlu0 %v2103, 104
    %v2423 = vpop.permute.xlu0 %2422
    %2424 = vrot.lane.b32.xlu0 %v2108, 104
    %v2425 = vpop.permute.xlu0 %2424
    %2426 = vrot.lane.b32.xlu0 %v2098, 72
    %v2427 = vpop.permute.xlu0 %2426
    %2428 = vrot.lane.b32.xlu0 %v2103, 72
    %v2429 = vpop.permute.xlu0 %2428
    %2430 = vrot.lane.b32.xlu0 %v2108, 72
    %v2431 = vpop.permute.xlu0 %2430
    %v2432 = vsel %vm347, %v2421, 0
    %v2434 = vsel %vm347, %v2423, 0
    %v2436 = vsel %vm347, %v2425, 0
    %v2438 = vsel %vm347, %v2427, 0
    %v2440 = vsel %vm347, %v2429, 0
    %v2442 = vsel %vm347, %v2431, 0
    %2444 = vmatprep.subr.mxu0 0.0
    %2445 = vmatpush1.xpose.msra.mxu0 0.0
    %2446 = vmatprep.subr.mxu0 0.0
    %2447 = vmatpush1.xpose.msra.mxu0 0.0
    %2448 = vmatprep.subr.mxu0 0.0
    %2449 = vmatpush1.xpose.msra.mxu0 0.0
    %2450 = vmatprep.subr.mxu0 0.0
    %2451 = vmatpush1.xpose.msra.mxu0 0.0
    %2452 = vmatprep.subr.mxu0 0.0
    %2453 = vmatpush1.xpose.msra.mxu0 0.0
    %2454 = vmatprep.subr.mxu0 0.0
    %2455 = vmatpush1.xpose.msra.mxu0 0.0
    %2456 = vmatprep.subr.mxu0 0.0
    %2457 = vmatpush1.xpose.msra.mxu0 0.0
    %2458 = vmatprep.subr.mxu0 0.0
    %2459 = vmatpush1.xpose.msra.mxu0 0.0
    %2460 = vmatprep.subr.mxu0 0.0
    %2461 = vmatpush1.xpose.msra.mxu0 0.0
    %2462 = vmatprep.subr.mxu0 0.0
    %2463 = vmatpush1.xpose.msra.mxu0 0.0
    %2464 = vmatprep.subr.mxu0 0.0
    %2465 = vmatpush1.xpose.msra.mxu0 0.0
    %2466 = vmatprep.subr.mxu0 0.0
    %2467 = vmatpush1.xpose.msra.mxu0 0.0
    %2468 = vmatprep.subr.mxu0 0.0
    %2469 = vmatpush1.xpose.msra.mxu0 0.0
    %2470 = vmatprep.subr.mxu0 0.0
    %2471 = vmatpush1.xpose.msra.mxu0 %v2442
    %2472 = vmatprep.subr.mxu0 0.0
    %2473 = vmatpush1.xpose.msra.mxu0 %v2440
    %2474 = vmatprep.subr.mxu0 0.0
    %2475 = vmatpush1.xpose.msra.mxu0 %v2438
    %2476 = vmatprep.subr.mxu0 0.0
    %2477 = vmatpush2.xpose.msra.mxu0 0.0
    %2478 = vmatprep.subr.mxu0 0.0
    %2479 = vmatpush2.xpose.msra.mxu0 0.0
    %2480 = vmatprep.subr.mxu0 0.0
    %2481 = vmatpush2.xpose.msra.mxu0 0.0
    %2482 = vmatprep.subr.mxu0 0.0
    %2483 = vmatpush2.xpose.msra.mxu0 0.0
    %2484 = vmatprep.subr.mxu0 0.0
    %2485 = vmatpush2.xpose.msra.mxu0 0.0
    %2486 = vmatprep.subr.mxu0 0.0
    %2487 = vmatpush2.xpose.msra.mxu0 0.0
    %2488 = vmatprep.subr.mxu0 0.0
    %2489 = vmatpush2.xpose.msra.mxu0 0.0
    %2490 = vmatprep.subr.mxu0 0.0
    %2491 = vmatpush2.xpose.msra.mxu0 0.0
    %2492 = vmatprep.subr.mxu0 0.0
    %2493 = vmatpush2.xpose.msra.mxu0 0.0
    %2494 = vmatprep.subr.mxu0 0.0
    %2495 = vmatpush2.xpose.msra.mxu0 0.0
    %2496 = vmatprep.subr.mxu0 0.0
    %2497 = vmatpush2.xpose.msra.mxu0 0.0
    %2498 = vmatprep.subr.mxu0 0.0
    %2499 = vmatpush2.xpose.msra.mxu0 0.0
    %2500 = vmatprep.subr.mxu0 0.0
    %2501 = vmatpush2.xpose.msra.mxu0 0.0
    %2502 = vmatprep.subr.mxu0 0.0
    %2503 = vmatpush2.xpose.msra.mxu0 0.0
    %2504 = vmatprep.subr.mxu0 0.0
    %2505 = vmatpush2.xpose.msra.mxu0 0.0
    %2506 = vmatprep.subr.mxu0 0.0
    %2507 = vmatpush2.xpose.msra.mxu0 0.0
    %2508 = vmatprep.mubr.f32.mxu0 0.0
    %2509 = vmatmul.mubr.f32.gmra.mxu0 %v2432
    %v2510 = vpop.f32.mrf.mxu0
    %v2511 = vadd.f32 0.0, %v2510
    %v2512 = vpop.f32.mrf.mxu0
    %2513 = vmatprep.mubr.f32.mxu0 0.0
    %2514 = vmatmul.mubr.f32.gmra.mxu0 %v2434
    %v2515 = vpop.f32.mrf.mxu0
    %v2516 = vadd.f32 0.0, %v2515
    %v2517 = vpop.f32.mrf.mxu0
    %2518 = vmatprep.mubr.f32.mxu0 0.0
    %2519 = vmatmul.mubr.f32.gmra.mxu0 %v2436
    %v2520 = vpop.f32.mrf.mxu0
    %v2521 = vadd.f32 0.0, %v2520
    %v2522 = vpop.f32.mrf.mxu0
    %2523 = vdwg.mxu0
    %v2524 = vsel %vm752, %v2199, -inf
    %2525 = vmax.xlane.f32.xlu0 %v2524
    %v2526 = vpop.xlane.xlu0 %2525
    %v2527 = vsel %vm752, %v2204, -inf
    %2528 = vmax.xlane.f32.xlu0 %v2527
    %v2529 = vpop.xlane.xlu0 %2528
    %v2530 = vsel %vm759, %v2209, -inf
    %2531 = vmax.xlane.f32.xlu0 %v2530
    %v2532 = vpop.xlane.xlu0 %2531
    %v2533 = vsel %vm752, %v2303, -inf
    %2534 = vmax.xlane.f32.xlu0 %v2533
    %v2535 = vpop.xlane.xlu0 %2534
    %v2536 = vsel %vm752, %v2308, -inf
    %2537 = vmax.xlane.f32.xlu0 %v2536
    %v2538 = vpop.xlane.xlu0 %2537
    %v2539 = vsel %vm759, %v2313, -inf
    %2540 = vmax.xlane.f32.xlu0 %v2539
    %v2541 = vpop.xlane.xlu0 %2540
    %v2542 = vsel %vm752, %v2407, -inf
    %2543 = vmax.xlane.f32.xlu0 %v2542
    %v2544 = vpop.xlane.xlu0 %2543
    %v2545 = vsel %vm752, %v2412, -inf
    %2546 = vmax.xlane.f32.xlu0 %v2545
    %v2547 = vpop.xlane.xlu0 %2546
    %v2548 = vsel %vm759, %v2417, -inf
    %2549 = vmax.xlane.f32.xlu0 %v2548
    %v2550 = vpop.xlane.xlu0 %2549
    %v2551 = vsel %vm752, %v2511, -inf
    %2552 = vmax.xlane.f32.xlu0 %v2551
    %v2553 = vpop.xlane.xlu0 %2552
    %v2554 = vsel %vm752, %v2516, -inf
    %2555 = vmax.xlane.f32.xlu0 %v2554
    %v2556 = vpop.xlane.xlu0 %2555
    %v2557 = vsel %vm759, %v2521, -inf
    %2558 = vmax.xlane.f32.xlu0 %v2557
    %v2559 = vpop.xlane.xlu0 %2558
    %v2560 = vsub.f32 %v2199, %v2526
    %v2561 = vsub.f32 %v2204, %v2529
    %v2562 = vsub.f32 %v2209, %v2532
    %v2563 = vsub.f32 %v2303, %v2535
    %v2564 = vsub.f32 %v2308, %v2538
    %v2565 = vsub.f32 %v2313, %v2541
    %v2566 = vsub.f32 %v2407, %v2544
    %v2567 = vsub.f32 %v2412, %v2547
    %v2568 = vsub.f32 %v2417, %v2550
    %v2569 = vsub.f32 %v2511, %v2553
    %v2570 = vsub.f32 %v2516, %v2556
    %v2571 = vsub.f32 %v2521, %v2559
    %v2572 = vmul.f32 %v2560, 1.442695
    %v2573 = vpow.pop %v2572
    %v2574 = vmul.f32 %v2561, 1.442695
    %v2575 = vpow.pop %v2574
    %v2576 = vmul.f32 %v2562, 1.442695
    %v2577 = vpow.pop %v2576
    %v2578 = vmul.f32 %v2563, 1.442695
    %v2579 = vpow.pop %v2578
    %v2580 = vmul.f32 %v2564, 1.442695
    %v2581 = vpow.pop %v2580
    %v2582 = vmul.f32 %v2565, 1.442695
    %v2583 = vpow.pop %v2582
    %v2584 = vmul.f32 %v2566, 1.442695
    %v2585 = vpow.pop %v2584
    %v2586 = vmul.f32 %v2567, 1.442695
    %v2587 = vpow.pop %v2586
    %v2588 = vmul.f32 %v2568, 1.442695
    %v2589 = vpow.pop %v2588
    %v2590 = vmul.f32 %v2569, 1.442695
    %v2591 = vpow.pop %v2590
    %v2592 = vmul.f32 %v2570, 1.442695
    %v2593 = vpow.pop %v2592
    %v2594 = vmul.f32 %v2571, 1.442695
    %v2595 = vpow.pop %v2594
    %v2596 = vsel %vm752, %v2573, 0.0
    %2597 = vadd.xlane.f32.xlu0 %v2596
    %v2598 = vpop.xlane.xlu0 %2597
    %v2599 = vsel %vm752, %v2575, 0.0
    %2600 = vadd.xlane.f32.xlu0 %v2599
    %v2601 = vpop.xlane.xlu0 %2600
    %v2602 = vsel %vm759, %v2577, 0.0
    %2603 = vadd.xlane.f32.xlu0 %v2602
    %v2604 = vpop.xlane.xlu0 %2603
    %v2605 = vsel %vm752, %v2579, 0.0
    %2606 = vadd.xlane.f32.xlu0 %v2605
    %v2607 = vpop.xlane.xlu0 %2606
    %v2608 = vsel %vm752, %v2581, 0.0
    %2609 = vadd.xlane.f32.xlu0 %v2608
    %v2610 = vpop.xlane.xlu0 %2609
    %v2611 = vsel %vm759, %v2583, 0.0
    %2612 = vadd.xlane.f32.xlu0 %v2611
    %v2613 = vpop.xlane.xlu0 %2612
    %v2614 = vsel %vm752, %v2585, 0.0
    %2615 = vadd.xlane.f32.xlu0 %v2614
    %v2616 = vpop.xlane.xlu0 %2615
    %v2617 = vsel %vm752, %v2587, 0.0
    %2618 = vadd.xlane.f32.xlu0 %v2617
    %v2619 = vpop.xlane.xlu0 %2618
    %v2620 = vsel %vm759, %v2589, 0.0
    %2621 = vadd.xlane.f32.xlu0 %v2620
    %v2622 = vpop.xlane.xlu0 %2621
    %v2623 = vsel %vm752, %v2591, 0.0
    %2624 = vadd.xlane.f32.xlu0 %v2623
    %v2625 = vpop.xlane.xlu0 %2624
    %v2626 = vsel %vm752, %v2593, 0.0
    %2627 = vadd.xlane.f32.xlu0 %v2626
    %v2628 = vpop.xlane.xlu0 %2627
    %v2629 = vsel %vm759, %v2595, 0.0
    %2630 = vadd.xlane.f32.xlu0 %v2629
    %v2631 = vpop.xlane.xlu0 %2630
    %v2632 = vrcp.pop %v2598
    %v2633 = vrcp.pop %v2601
    %v2634 = vrcp.pop %v2604
    %v2635 = vrcp.pop %v2607
    %v2636 = vrcp.pop %v2610
    %v2637 = vrcp.pop %v2613
    %v2638 = vrcp.pop %v2616
    %v2639 = vrcp.pop %v2619
    %v2640 = vrcp.pop %v2622
    %v2641 = vrcp.pop %v2625
    %v2642 = vrcp.pop %v2628
    %v2643 = vrcp.pop %v2631
    %v2644 = vmul.f32 %v2573, %v2632
    %v2645 = vmul.f32 %v2575, %v2633
    %v2646 = vmul.f32 %v2577, %v2634
    %v2647 = vmul.f32 %v2579, %v2635
    %v2648 = vmul.f32 %v2581, %v2636
    %v2649 = vmul.f32 %v2583, %v2637
    %v2650 = vmul.f32 %v2585, %v2638
    %v2651 = vmul.f32 %v2587, %v2639
    %v2652 = vmul.f32 %v2589, %v2640
    %v2653 = vmul.f32 %v2591, %v2641
    %v2654 = vmul.f32 %v2593, %v2642
    %v2655 = vmul.f32 %v2595, %v2643
    %s2656 = scalar_lea.vmem %s9, 1
    %v2657 = vld [vmem:[%s2656] sm:$0x1]
    %2658 = vrot.lane.b32.xlu0 %v2098, 64
    %v2659 = vpop.permute.xlu0 %2658
    %2660 = vrot.lane.b32.xlu0 %v2103, 64
    %v2661 = vpop.permute.xlu0 %2660
    %2662 = vrot.lane.b32.xlu0 %v2108, 64
    %v2663 = vpop.permute.xlu0 %2662
    %v2667 = vsel %vm752, %v2644, 0
    %v2670 = vsel %vm752, %v2645, 0
    %v2673 = vsel %vm752, %v2646, 0
    %v2675 = vsel %vm904, %v2663, 0
    %2677 = vmatprep.subr.mxu0 0.0
    %2678 = vmatpush1.msra.mxu0 0.0
    %2679 = vmatprep.subr.mxu0 0.0
    %2680 = vmatpush1.msra.mxu0 0.0
    %2681 = vmatprep.subr.mxu0 0.0
    %2682 = vmatpush1.msra.mxu0 0.0
    %2683 = vmatprep.subr.mxu0 0.0
    %2684 = vmatpush1.msra.mxu0 0.0
    %2685 = vmatprep.subr.mxu0 0.0
    %2686 = vmatpush1.msra.mxu0 0.0
    %2687 = vmatprep.subr.mxu0 0.0
    %2688 = vmatpush1.msra.mxu0 0.0
    %2689 = vmatprep.subr.mxu0 0.0
    %2690 = vmatpush1.msra.mxu0 0.0
    %2691 = vmatprep.subr.mxu0 0.0
    %2692 = vmatpush1.msra.mxu0 0.0
    %2693 = vmatprep.subr.mxu0 0.0
    %2694 = vmatpush1.msra.mxu0 0.0
    %2695 = vmatprep.subr.mxu0 0.0
    %2696 = vmatpush1.msra.mxu0 0.0
    %2697 = vmatprep.subr.mxu0 0.0
    %2698 = vmatpush1.msra.mxu0 0.0
    %2699 = vmatprep.subr.mxu0 0.0
    %2700 = vmatpush1.msra.mxu0 0.0
    %2701 = vmatprep.subr.mxu0 0.0
    %2702 = vmatpush1.msra.mxu0 0.0
    %2703 = vmatprep.subr.mxu0 0.0
    %2704 = vmatpush1.msra.mxu0 %v2675
    %2705 = vmatprep.subr.mxu0 0.0
    %2706 = vmatpush1.msra.mxu0 %v2661
    %2707 = vmatprep.subr.mxu0 0.0
    %2708 = vmatpush1.msra.mxu0 %v2659
    %2709 = vmatprep.subr.mxu0 0.0
    %2710 = vmatpush2.msra.mxu0 0.0
    %2711 = vmatprep.subr.mxu0 0.0
    %2712 = vmatpush2.msra.mxu0 0.0
    %2713 = vmatprep.subr.mxu0 0.0
    %2714 = vmatpush2.msra.mxu0 0.0
    %2715 = vmatprep.subr.mxu0 0.0
    %2716 = vmatpush2.msra.mxu0 0.0
    %2717 = vmatprep.subr.mxu0 0.0
    %2718 = vmatpush2.msra.mxu0 0.0
    %2719 = vmatprep.subr.mxu0 0.0
    %2720 = vmatpush2.msra.mxu0 0.0
    %2721 = vmatprep.subr.mxu0 0.0
    %2722 = vmatpush2.msra.mxu0 0.0
    %2723 = vmatprep.subr.mxu0 0.0
    %2724 = vmatpush2.msra.mxu0 0.0
    %2725 = vmatprep.subr.mxu0 0.0
    %2726 = vmatpush2.msra.mxu0 0.0
    %2727 = vmatprep.subr.mxu0 0.0
    %2728 = vmatpush2.msra.mxu0 0.0
    %2729 = vmatprep.subr.mxu0 0.0
    %2730 = vmatpush2.msra.mxu0 0.0
    %2731 = vmatprep.subr.mxu0 0.0
    %2732 = vmatpush2.msra.mxu0 0.0
    %2733 = vmatprep.subr.mxu0 0.0
    %2734 = vmatpush2.msra.mxu0 0.0
    %2735 = vmatprep.subr.mxu0 0.0
    %2736 = vmatpush2.msra.mxu0 0.0
    %2737 = vmatprep.subr.mxu0 0.0
    %2738 = vmatpush2.msra.mxu0 0.0
    %2739 = vmatprep.subr.mxu0 0.0
    %2740 = vmatpush2.msra.mxu0 0.0
    %2741 = vmatprep.mubr.f32.mxu0 0.0
    %2742 = vmatmul.mubr.f32.gmra.mxu0 %v2667
    %v2743 = vpop.f32.mrf.mxu0
    %v2744 = vadd.f32 0.0, %v2743
    %v2745 = vpop.f32.mrf.mxu0
    %2746 = vmatprep.mubr.f32.mxu0 0.0
    %2747 = vmatmul.mubr.f32.gmra.mxu0 %v2670
    %v2748 = vpop.f32.mrf.mxu0
    %v2749 = vadd.f32 0.0, %v2748
    %v2750 = vpop.f32.mrf.mxu0
    %2751 = vmatprep.mubr.f32.mxu0 0.0
    %2752 = vmatmul.mubr.f32.gmra.mxu0 %v2673
    %v2753 = vpop.f32.mrf.mxu0
    %v2754 = vadd.f32 0.0, %v2753
    %v2755 = vpop.f32.mrf.mxu0
    %2756 = vdwg.mxu0
    %s2757 = scalar_lea.vmem %s8, 32
    %v2758 = vld [vmem:[%s2757] sm:$0xff]
    %v2760 = vsel %vm347, %v2744, 0
    %v2763 = vsel %vm347, %v2749, 0
    %v2766 = vsel %vm347, %v2754, 0
    %2768 = vmatprep.subr.mxu0 0.0
    %2769 = vmatpush1.msra.mxu0 0.0
    %2770 = vmatprep.subr.mxu0 0.0
    %2771 = vmatpush1.msra.mxu0 0.0
    %2772 = vmatprep.subr.mxu0 0.0
    %2773 = vmatpush1.msra.mxu0 0.0
    %2774 = vmatprep.subr.mxu0 0.0
    %2775 = vmatpush1.msra.mxu0 0.0
    %2776 = vmatprep.subr.mxu0 0.0
    %2777 = vmatpush1.msra.mxu0 0.0
    %2778 = vmatprep.subr.mxu0 0.0
    %2779 = vmatpush1.msra.mxu0 0.0
    %2780 = vmatprep.subr.mxu0 0.0
    %2781 = vmatpush1.msra.mxu0 0.0
    %2782 = vmatprep.subr.mxu0 0.0
    %2783 = vmatpush1.msra.mxu0 0.0
    %2784 = vmatprep.subr.mxu0 0.0
    %2785 = vmatpush1.msra.mxu0 0.0
    %2786 = vmatprep.subr.mxu0 0.0
    %2787 = vmatpush1.msra.mxu0 0.0
    %2788 = vmatprep.subr.mxu0 0.0
    %2789 = vmatpush1.msra.mxu0 0.0
    %2790 = vmatprep.subr.mxu0 0.0
    %2791 = vmatpush1.msra.mxu0 0.0
    %2792 = vmatprep.subr.mxu0 0.0
    %2793 = vmatpush1.msra.mxu0 0.0
    %2794 = vmatprep.subr.mxu0 0.0
    %2795 = vmatpush1.msra.mxu0 0.0
    %2796 = vmatprep.subr.mxu0 0.0
    %2797 = vmatpush1.msra.mxu0 0.0
    %2798 = vmatprep.subr.mxu0 0.0
    %2799 = vmatpush1.msra.mxu0 %v2758
    %2800 = vmatprep.subr.mxu0 0.0
    %2801 = vmatpush2.msra.mxu0 0.0
    %2802 = vmatprep.subr.mxu0 0.0
    %2803 = vmatpush2.msra.mxu0 0.0
    %2804 = vmatprep.subr.mxu0 0.0
    %2805 = vmatpush2.msra.mxu0 0.0
    %2806 = vmatprep.subr.mxu0 0.0
    %2807 = vmatpush2.msra.mxu0 0.0
    %2808 = vmatprep.subr.mxu0 0.0
    %2809 = vmatpush2.msra.mxu0 0.0
    %2810 = vmatprep.subr.mxu0 0.0
    %2811 = vmatpush2.msra.mxu0 0.0
    %2812 = vmatprep.subr.mxu0 0.0
    %2813 = vmatpush2.msra.mxu0 0.0
    %2814 = vmatprep.subr.mxu0 0.0
    %2815 = vmatpush2.msra.mxu0 0.0
    %2816 = vmatprep.subr.mxu0 0.0
    %2817 = vmatpush2.msra.mxu0 0.0
    %2818 = vmatprep.subr.mxu0 0.0
    %2819 = vmatpush2.msra.mxu0 0.0
    %2820 = vmatprep.subr.mxu0 0.0
    %2821 = vmatpush2.msra.mxu0 0.0
    %2822 = vmatprep.subr.mxu0 0.0
    %2823 = vmatpush2.msra.mxu0 0.0
    %2824 = vmatprep.subr.mxu0 0.0
    %2825 = vmatpush2.msra.mxu0 0.0
    %2826 = vmatprep.subr.mxu0 0.0
    %2827 = vmatpush2.msra.mxu0 0.0
    %2828 = vmatprep.subr.mxu0 0.0
    %2829 = vmatpush2.msra.mxu0 0.0
    %2830 = vmatprep.subr.mxu0 0.0
    %2831 = vmatpush2.msra.mxu0 0.0
    %2832 = vmatprep.mubr.f32.mxu0 0.0
    %2833 = vmatmul.mubr.f32.gmra.mxu0 %v2760
    %v2834 = vpop.f32.mrf.mxu0
    %v2835 = vadd.f32 0.0, %v2834
    %v2836 = vpop.f32.mrf.mxu0
    %2837 = vmatprep.mubr.f32.mxu0 0.0
    %2838 = vmatmul.mubr.f32.gmra.mxu0 %v2763
    %v2839 = vpop.f32.mrf.mxu0
    %v2840 = vadd.f32 0.0, %v2839
    %v2841 = vpop.f32.mrf.mxu0
    %2842 = vmatprep.mubr.f32.mxu0 0.0
    %2843 = vmatmul.mubr.f32.gmra.mxu0 %v2766
    %v2844 = vpop.f32.mrf.mxu0
    %v2845 = vadd.f32 0.0, %v2844
    %v2846 = vpop.f32.mrf.mxu0
    %2847 = vdwg.mxu0
    %v2849 = vlaneseq
    %v2850 = vshrl.u32 %v2849, 7
    %v2851 = vsub.s32 0, %v2850
    %v2852 = vrot.slane %v2657, %v2851
    %v2854 = vadd.f32 %v2852, %v2835
    %v2855 = vadd.f32 %v2852, %v2840
    %v2856 = vadd.f32 %v2852, %v2845
    %2857 = vrot.lane.b32.xlu0 %v2098, 56
    %v2858 = vpop.permute.xlu0 %2857
    %2859 = vrot.lane.b32.xlu0 %v2103, 56
    %v2860 = vpop.permute.xlu0 %2859
    %2861 = vrot.lane.b32.xlu0 %v2108, 56
    %v2862 = vpop.permute.xlu0 %2861
    %v2866 = vsel %vm752, %v2647, 0
    %v2869 = vsel %vm752, %v2648, 0
    %v2872 = vsel %vm752, %v2649, 0
    %v2874 = vsel %vm904, %v2862, 0
    %2876 = vmatprep.subr.mxu0 0.0
    %2877 = vmatpush1.msra.mxu0 0.0
    %2878 = vmatprep.subr.mxu0 0.0
    %2879 = vmatpush1.msra.mxu0 0.0
    %2880 = vmatprep.subr.mxu0 0.0
    %2881 = vmatpush1.msra.mxu0 0.0
    %2882 = vmatprep.subr.mxu0 0.0
    %2883 = vmatpush1.msra.mxu0 0.0
    %2884 = vmatprep.subr.mxu0 0.0
    %2885 = vmatpush1.msra.mxu0 0.0
    %2886 = vmatprep.subr.mxu0 0.0
    %2887 = vmatpush1.msra.mxu0 0.0
    %2888 = vmatprep.subr.mxu0 0.0
    %2889 = vmatpush1.msra.mxu0 0.0
    %2890 = vmatprep.subr.mxu0 0.0
    %2891 = vmatpush1.msra.mxu0 0.0
    %2892 = vmatprep.subr.mxu0 0.0
    %2893 = vmatpush1.msra.mxu0 0.0
    %2894 = vmatprep.subr.mxu0 0.0
    %2895 = vmatpush1.msra.mxu0 0.0
    %2896 = vmatprep.subr.mxu0 0.0
    %2897 = vmatpush1.msra.mxu0 0.0
    %2898 = vmatprep.subr.mxu0 0.0
    %2899 = vmatpush1.msra.mxu0 0.0
    %2900 = vmatprep.subr.mxu0 0.0
    %2901 = vmatpush1.msra.mxu0 0.0
    %2902 = vmatprep.subr.mxu0 0.0
    %2903 = vmatpush1.msra.mxu0 %v2874
    %2904 = vmatprep.subr.mxu0 0.0
    %2905 = vmatpush1.msra.mxu0 %v2860
    %2906 = vmatprep.subr.mxu0 0.0
    %2907 = vmatpush1.msra.mxu0 %v2858
    %2908 = vmatprep.subr.mxu0 0.0
    %2909 = vmatpush2.msra.mxu0 0.0
    %2910 = vmatprep.subr.mxu0 0.0
    %2911 = vmatpush2.msra.mxu0 0.0
    %2912 = vmatprep.subr.mxu0 0.0
    %2913 = vmatpush2.msra.mxu0 0.0
    %2914 = vmatprep.subr.mxu0 0.0
    %2915 = vmatpush2.msra.mxu0 0.0
    %2916 = vmatprep.subr.mxu0 0.0
    %2917 = vmatpush2.msra.mxu0 0.0
    %2918 = vmatprep.subr.mxu0 0.0
    %2919 = vmatpush2.msra.mxu0 0.0
    %2920 = vmatprep.subr.mxu0 0.0
    %2921 = vmatpush2.msra.mxu0 0.0
    %2922 = vmatprep.subr.mxu0 0.0
    %2923 = vmatpush2.msra.mxu0 0.0
    %2924 = vmatprep.subr.mxu0 0.0
    %2925 = vmatpush2.msra.mxu0 0.0
    %2926 = vmatprep.subr.mxu0 0.0
    %2927 = vmatpush2.msra.mxu0 0.0
    %2928 = vmatprep.subr.mxu0 0.0
    %2929 = vmatpush2.msra.mxu0 0.0
    %2930 = vmatprep.subr.mxu0 0.0
    %2931 = vmatpush2.msra.mxu0 0.0
    %2932 = vmatprep.subr.mxu0 0.0
    %2933 = vmatpush2.msra.mxu0 0.0
    %2934 = vmatprep.subr.mxu0 0.0
    %2935 = vmatpush2.msra.mxu0 0.0
    %2936 = vmatprep.subr.mxu0 0.0
    %2937 = vmatpush2.msra.mxu0 0.0
    %2938 = vmatprep.subr.mxu0 0.0
    %2939 = vmatpush2.msra.mxu0 0.0
    %2940 = vmatprep.mubr.f32.mxu0 0.0
    %2941 = vmatmul.mubr.f32.gmra.mxu0 %v2866
    %v2942 = vpop.f32.mrf.mxu0
    %v2943 = vadd.f32 0.0, %v2942
    %v2944 = vpop.f32.mrf.mxu0
    %2945 = vmatprep.mubr.f32.mxu0 0.0
    %2946 = vmatmul.mubr.f32.gmra.mxu0 %v2869
    %v2947 = vpop.f32.mrf.mxu0
    %v2948 = vadd.f32 0.0, %v2947
    %v2949 = vpop.f32.mrf.mxu0
    %2950 = vmatprep.mubr.f32.mxu0 0.0
    %2951 = vmatmul.mubr.f32.gmra.mxu0 %v2872
    %v2952 = vpop.f32.mrf.mxu0
    %v2953 = vadd.f32 0.0, %v2952
    %v2954 = vpop.f32.mrf.mxu0
    %2955 = vdwg.mxu0
    %s2956 = scalar_lea.vmem %s8, 40
    %v2957 = vld [vmem:[%s2956] sm:$0xff]
    %v2959 = vsel %vm347, %v2943, 0
    %v2962 = vsel %vm347, %v2948, 0
    %v2965 = vsel %vm347, %v2953, 0
    %2967 = vmatprep.subr.mxu0 0.0
    %2968 = vmatpush1.msra.mxu0 0.0
    %2969 = vmatprep.subr.mxu0 0.0
    %2970 = vmatpush1.msra.mxu0 0.0
    %2971 = vmatprep.subr.mxu0 0.0
    %2972 = vmatpush1.msra.mxu0 0.0
    %2973 = vmatprep.subr.mxu0 0.0
    %2974 = vmatpush1.msra.mxu0 0.0
    %2975 = vmatprep.subr.mxu0 0.0
    %2976 = vmatpush1.msra.mxu0 0.0
    %2977 = vmatprep.subr.mxu0 0.0
    %2978 = vmatpush1.msra.mxu0 0.0
    %2979 = vmatprep.subr.mxu0 0.0
    %2980 = vmatpush1.msra.mxu0 0.0
    %2981 = vmatprep.subr.mxu0 0.0
    %2982 = vmatpush1.msra.mxu0 0.0
    %2983 = vmatprep.subr.mxu0 0.0
    %2984 = vmatpush1.msra.mxu0 0.0
    %2985 = vmatprep.subr.mxu0 0.0
    %2986 = vmatpush1.msra.mxu0 0.0
    %2987 = vmatprep.subr.mxu0 0.0
    %2988 = vmatpush1.msra.mxu0 0.0
    %2989 = vmatprep.subr.mxu0 0.0
    %2990 = vmatpush1.msra.mxu0 0.0
    %2991 = vmatprep.subr.mxu0 0.0
    %2992 = vmatpush1.msra.mxu0 0.0
    %2993 = vmatprep.subr.mxu0 0.0
    %2994 = vmatpush1.msra.mxu0 0.0
    %2995 = vmatprep.subr.mxu0 0.0
    %2996 = vmatpush1.msra.mxu0 0.0
    %2997 = vmatprep.subr.mxu0 0.0
    %2998 = vmatpush1.msra.mxu0 %v2957
    %2999 = vmatprep.subr.mxu0 0.0
    %3000 = vmatpush2.msra.mxu0 0.0
    %3001 = vmatprep.subr.mxu0 0.0
    %3002 = vmatpush2.msra.mxu0 0.0
    %3003 = vmatprep.subr.mxu0 0.0
    %3004 = vmatpush2.msra.mxu0 0.0
    %3005 = vmatprep.subr.mxu0 0.0
    %3006 = vmatpush2.msra.mxu0 0.0
    %3007 = vmatprep.subr.mxu0 0.0
    %3008 = vmatpush2.msra.mxu0 0.0
    %3009 = vmatprep.subr.mxu0 0.0
    %3010 = vmatpush2.msra.mxu0 0.0
    %3011 = vmatprep.subr.mxu0 0.0
    %3012 = vmatpush2.msra.mxu0 0.0
    %3013 = vmatprep.subr.mxu0 0.0
    %3014 = vmatpush2.msra.mxu0 0.0
    %3015 = vmatprep.subr.mxu0 0.0
    %3016 = vmatpush2.msra.mxu0 0.0
    %3017 = vmatprep.subr.mxu0 0.0
    %3018 = vmatpush2.msra.mxu0 0.0
    %3019 = vmatprep.subr.mxu0 0.0
    %3020 = vmatpush2.msra.mxu0 0.0
    %3021 = vmatprep.subr.mxu0 0.0
    %3022 = vmatpush2.msra.mxu0 0.0
    %3023 = vmatprep.subr.mxu0 0.0
    %3024 = vmatpush2.msra.mxu0 0.0
    %3025 = vmatprep.subr.mxu0 0.0
    %3026 = vmatpush2.msra.mxu0 0.0
    %3027 = vmatprep.subr.mxu0 0.0
    %3028 = vmatpush2.msra.mxu0 0.0
    %3029 = vmatprep.subr.mxu0 0.0
    %3030 = vmatpush2.msra.mxu0 0.0
    %3031 = vmatprep.mubr.f32.mxu0 0.0
    %3032 = vmatmul.mubr.f32.gmra.mxu0 %v2959
    %v3033 = vpop.f32.mrf.mxu0
    %v3034 = vadd.f32 0.0, %v3033
    %v3035 = vpop.f32.mrf.mxu0
    %3036 = vmatprep.mubr.f32.mxu0 0.0
    %3037 = vmatmul.mubr.f32.gmra.mxu0 %v2962
    %v3038 = vpop.f32.mrf.mxu0
    %v3039 = vadd.f32 0.0, %v3038
    %v3040 = vpop.f32.mrf.mxu0
    %3041 = vmatprep.mubr.f32.mxu0 0.0
    %3042 = vmatmul.mubr.f32.gmra.mxu0 %v2965
    %v3043 = vpop.f32.mrf.mxu0
    %v3044 = vadd.f32 0.0, %v3043
    %v3045 = vpop.f32.mrf.mxu0
    %3046 = vdwg.mxu0
    %v3047 = vadd.f32 %v2854, %v3034
    %v3048 = vadd.f32 %v2855, %v3039
    %v3049 = vadd.f32 %v2856, %v3044
    %3050 = vrot.lane.b32.xlu0 %v2098, 48
    %v3051 = vpop.permute.xlu0 %3050
    %3052 = vrot.lane.b32.xlu0 %v2103, 48
    %v3053 = vpop.permute.xlu0 %3052
    %3054 = vrot.lane.b32.xlu0 %v2108, 48
    %v3055 = vpop.permute.xlu0 %3054
    %v3059 = vsel %vm752, %v2650, 0
    %v3062 = vsel %vm752, %v2651, 0
    %v3065 = vsel %vm752, %v2652, 0
    %v3067 = vsel %vm904, %v3055, 0
    %3069 = vmatprep.subr.mxu0 0.0
    %3070 = vmatpush1.msra.mxu0 0.0
    %3071 = vmatprep.subr.mxu0 0.0
    %3072 = vmatpush1.msra.mxu0 0.0
    %3073 = vmatprep.subr.mxu0 0.0
    %3074 = vmatpush1.msra.mxu0 0.0
    %3075 = vmatprep.subr.mxu0 0.0
    %3076 = vmatpush1.msra.mxu0 0.0
    %3077 = vmatprep.subr.mxu0 0.0
    %3078 = vmatpush1.msra.mxu0 0.0
    %3079 = vmatprep.subr.mxu0 0.0
    %3080 = vmatpush1.msra.mxu0 0.0
    %3081 = vmatprep.subr.mxu0 0.0
    %3082 = vmatpush1.msra.mxu0 0.0
    %3083 = vmatprep.subr.mxu0 0.0
    %3084 = vmatpush1.msra.mxu0 0.0
    %3085 = vmatprep.subr.mxu0 0.0
    %3086 = vmatpush1.msra.mxu0 0.0
    %3087 = vmatprep.subr.mxu0 0.0
    %3088 = vmatpush1.msra.mxu0 0.0
    %3089 = vmatprep.subr.mxu0 0.0
    %3090 = vmatpush1.msra.mxu0 0.0
    %3091 = vmatprep.subr.mxu0 0.0
    %3092 = vmatpush1.msra.mxu0 0.0
    %3093 = vmatprep.subr.mxu0 0.0
    %3094 = vmatpush1.msra.mxu0 0.0
    %3095 = vmatprep.subr.mxu0 0.0
    %3096 = vmatpush1.msra.mxu0 %v3067
    %3097 = vmatprep.subr.mxu0 0.0
    %3098 = vmatpush1.msra.mxu0 %v3053
    %3099 = vmatprep.subr.mxu0 0.0
    %3100 = vmatpush1.msra.mxu0 %v3051
    %3101 = vmatprep.subr.mxu0 0.0
    %3102 = vmatpush2.msra.mxu0 0.0
    %3103 = vmatprep.subr.mxu0 0.0
    %3104 = vmatpush2.msra.mxu0 0.0
    %3105 = vmatprep.subr.mxu0 0.0
    %3106 = vmatpush2.msra.mxu0 0.0
    %3107 = vmatprep.subr.mxu0 0.0
    %3108 = vmatpush2.msra.mxu0 0.0
    %3109 = vmatprep.subr.mxu0 0.0
    %3110 = vmatpush2.msra.mxu0 0.0
    %3111 = vmatprep.subr.mxu0 0.0
    %3112 = vmatpush2.msra.mxu0 0.0
    %3113 = vmatprep.subr.mxu0 0.0
    %3114 = vmatpush2.msra.mxu0 0.0
    %3115 = vmatprep.subr.mxu0 0.0
    %3116 = vmatpush2.msra.mxu0 0.0
    %3117 = vmatprep.subr.mxu0 0.0
    %3118 = vmatpush2.msra.mxu0 0.0
    %3119 = vmatprep.subr.mxu0 0.0
    %3120 = vmatpush2.msra.mxu0 0.0
    %3121 = vmatprep.subr.mxu0 0.0
    %3122 = vmatpush2.msra.mxu0 0.0
    %3123 = vmatprep.subr.mxu0 0.0
    %3124 = vmatpush2.msra.mxu0 0.0
    %3125 = vmatprep.subr.mxu0 0.0
    %3126 = vmatpush2.msra.mxu0 0.0
    %3127 = vmatprep.subr.mxu0 0.0
    %3128 = vmatpush2.msra.mxu0 0.0
    %3129 = vmatprep.subr.mxu0 0.0
    %3130 = vmatpush2.msra.mxu0 0.0
    %3131 = vmatprep.subr.mxu0 0.0
    %3132 = vmatpush2.msra.mxu0 0.0
    %3133 = vmatprep.mubr.f32.mxu0 0.0
    %3134 = vmatmul.mubr.f32.gmra.mxu0 %v3059
    %v3135 = vpop.f32.mrf.mxu0
    %v3136 = vadd.f32 0.0, %v3135
    %v3137 = vpop.f32.mrf.mxu0
    %3138 = vmatprep.mubr.f32.mxu0 0.0
    %3139 = vmatmul.mubr.f32.gmra.mxu0 %v3062
    %v3140 = vpop.f32.mrf.mxu0
    %v3141 = vadd.f32 0.0, %v3140
    %v3142 = vpop.f32.mrf.mxu0
    %3143 = vmatprep.mubr.f32.mxu0 0.0
    %3144 = vmatmul.mubr.f32.gmra.mxu0 %v3065
    %v3145 = vpop.f32.mrf.mxu0
    %v3146 = vadd.f32 0.0, %v3145
    %v3147 = vpop.f32.mrf.mxu0
    %3148 = vdwg.mxu0
    %s3149 = scalar_lea.vmem %s8, 48
    %v3150 = vld [vmem:[%s3149] sm:$0xff]
    %v3152 = vsel %vm347, %v3136, 0
    %v3155 = vsel %vm347, %v3141, 0
    %v3158 = vsel %vm347, %v3146, 0
    %3160 = vmatprep.subr.mxu0 0.0
    %3161 = vmatpush1.msra.mxu0 0.0
    %3162 = vmatprep.subr.mxu0 0.0
    %3163 = vmatpush1.msra.mxu0 0.0
    %3164 = vmatprep.subr.mxu0 0.0
    %3165 = vmatpush1.msra.mxu0 0.0
    %3166 = vmatprep.subr.mxu0 0.0
    %3167 = vmatpush1.msra.mxu0 0.0
    %3168 = vmatprep.subr.mxu0 0.0
    %3169 = vmatpush1.msra.mxu0 0.0
    %3170 = vmatprep.subr.mxu0 0.0
    %3171 = vmatpush1.msra.mxu0 0.0
    %3172 = vmatprep.subr.mxu0 0.0
    %3173 = vmatpush1.msra.mxu0 0.0
    %3174 = vmatprep.subr.mxu0 0.0
    %3175 = vmatpush1.msra.mxu0 0.0
    %3176 = vmatprep.subr.mxu0 0.0
    %3177 = vmatpush1.msra.mxu0 0.0
    %3178 = vmatprep.subr.mxu0 0.0
    %3179 = vmatpush1.msra.mxu0 0.0
    %3180 = vmatprep.subr.mxu0 0.0
    %3181 = vmatpush1.msra.mxu0 0.0
    %3182 = vmatprep.subr.mxu0 0.0
    %3183 = vmatpush1.msra.mxu0 0.0
    %3184 = vmatprep.subr.mxu0 0.0
    %3185 = vmatpush1.msra.mxu0 0.0
    %3186 = vmatprep.subr.mxu0 0.0
    %3187 = vmatpush1.msra.mxu0 0.0
    %3188 = vmatprep.subr.mxu0 0.0
    %3189 = vmatpush1.msra.mxu0 0.0
    %3190 = vmatprep.subr.mxu0 0.0
    %3191 = vmatpush1.msra.mxu0 %v3150
    %3192 = vmatprep.subr.mxu0 0.0
    %3193 = vmatpush2.msra.mxu0 0.0
    %3194 = vmatprep.subr.mxu0 0.0
    %3195 = vmatpush2.msra.mxu0 0.0
    %3196 = vmatprep.subr.mxu0 0.0
    %3197 = vmatpush2.msra.mxu0 0.0
    %3198 = vmatprep.subr.mxu0 0.0
    %3199 = vmatpush2.msra.mxu0 0.0
    %3200 = vmatprep.subr.mxu0 0.0
    %3201 = vmatpush2.msra.mxu0 0.0
    %3202 = vmatprep.subr.mxu0 0.0
    %3203 = vmatpush2.msra.mxu0 0.0
    %3204 = vmatprep.subr.mxu0 0.0
    %3205 = vmatpush2.msra.mxu0 0.0
    %3206 = vmatprep.subr.mxu0 0.0
    %3207 = vmatpush2.msra.mxu0 0.0
    %3208 = vmatprep.subr.mxu0 0.0
    %3209 = vmatpush2.msra.mxu0 0.0
    %3210 = vmatprep.subr.mxu0 0.0
    %3211 = vmatpush2.msra.mxu0 0.0
    %3212 = vmatprep.subr.mxu0 0.0
    %3213 = vmatpush2.msra.mxu0 0.0
    %3214 = vmatprep.subr.mxu0 0.0
    %3215 = vmatpush2.msra.mxu0 0.0
    %3216 = vmatprep.subr.mxu0 0.0
    %3217 = vmatpush2.msra.mxu0 0.0
    %3218 = vmatprep.subr.mxu0 0.0
    %3219 = vmatpush2.msra.mxu0 0.0
    %3220 = vmatprep.subr.mxu0 0.0
    %3221 = vmatpush2.msra.mxu0 0.0
    %3222 = vmatprep.subr.mxu0 0.0
    %3223 = vmatpush2.msra.mxu0 0.0
    %3224 = vmatprep.mubr.f32.mxu0 0.0
    %3225 = vmatmul.mubr.f32.gmra.mxu0 %v3152
    %v3226 = vpop.f32.mrf.mxu0
    %v3227 = vadd.f32 0.0, %v3226
    %v3228 = vpop.f32.mrf.mxu0
    %3229 = vmatprep.mubr.f32.mxu0 0.0
    %3230 = vmatmul.mubr.f32.gmra.mxu0 %v3155
    %v3231 = vpop.f32.mrf.mxu0
    %v3232 = vadd.f32 0.0, %v3231
    %v3233 = vpop.f32.mrf.mxu0
    %3234 = vmatprep.mubr.f32.mxu0 0.0
    %3235 = vmatmul.mubr.f32.gmra.mxu0 %v3158
    %v3236 = vpop.f32.mrf.mxu0
    %v3237 = vadd.f32 0.0, %v3236
    %v3238 = vpop.f32.mrf.mxu0
    %3239 = vdwg.mxu0
    %v3240 = vadd.f32 %v3047, %v3227
    %v3241 = vadd.f32 %v3048, %v3232
    %v3242 = vadd.f32 %v3049, %v3237
    %3243 = vrot.lane.b32.xlu0 %v2098, 40
    %v3244 = vpop.permute.xlu0 %3243
    %3245 = vrot.lane.b32.xlu0 %v2103, 40
    %v3246 = vpop.permute.xlu0 %3245
    %3247 = vrot.lane.b32.xlu0 %v2108, 40
    %v3248 = vpop.permute.xlu0 %3247
    %v3252 = vsel %vm752, %v2653, 0
    %v3255 = vsel %vm752, %v2654, 0
    %v3258 = vsel %vm752, %v2655, 0
    %v3260 = vsel %vm904, %v3248, 0
    %3262 = vmatprep.subr.mxu0 0.0
    %3263 = vmatpush1.msra.mxu0 0.0
    %3264 = vmatprep.subr.mxu0 0.0
    %3265 = vmatpush1.msra.mxu0 0.0
    %3266 = vmatprep.subr.mxu0 0.0
    %3267 = vmatpush1.msra.mxu0 0.0
    %3268 = vmatprep.subr.mxu0 0.0
    %3269 = vmatpush1.msra.mxu0 0.0
    %3270 = vmatprep.subr.mxu0 0.0
    %3271 = vmatpush1.msra.mxu0 0.0
    %3272 = vmatprep.subr.mxu0 0.0
    %3273 = vmatpush1.msra.mxu0 0.0
    %3274 = vmatprep.subr.mxu0 0.0
    %3275 = vmatpush1.msra.mxu0 0.0
    %3276 = vmatprep.subr.mxu0 0.0
    %3277 = vmatpush1.msra.mxu0 0.0
    %3278 = vmatprep.subr.mxu0 0.0
    %3279 = vmatpush1.msra.mxu0 0.0
    %3280 = vmatprep.subr.mxu0 0.0
    %3281 = vmatpush1.msra.mxu0 0.0
    %3282 = vmatprep.subr.mxu0 0.0
    %3283 = vmatpush1.msra.mxu0 0.0
    %3284 = vmatprep.subr.mxu0 0.0
    %3285 = vmatpush1.msra.mxu0 0.0
    %3286 = vmatprep.subr.mxu0 0.0
    %3287 = vmatpush1.msra.mxu0 0.0
    %3288 = vmatprep.subr.mxu0 0.0
    %3289 = vmatpush1.msra.mxu0 %v3260
    %3290 = vmatprep.subr.mxu0 0.0
    %3291 = vmatpush1.msra.mxu0 %v3246
    %3292 = vmatprep.subr.mxu0 0.0
    %3293 = vmatpush1.msra.mxu0 %v3244
    %3294 = vmatprep.subr.mxu0 0.0
    %3295 = vmatpush2.msra.mxu0 0.0
    %3296 = vmatprep.subr.mxu0 0.0
    %3297 = vmatpush2.msra.mxu0 0.0
    %3298 = vmatprep.subr.mxu0 0.0
    %3299 = vmatpush2.msra.mxu0 0.0
    %3300 = vmatprep.subr.mxu0 0.0
    %3301 = vmatpush2.msra.mxu0 0.0
    %3302 = vmatprep.subr.mxu0 0.0
    %3303 = vmatpush2.msra.mxu0 0.0
    %3304 = vmatprep.subr.mxu0 0.0
    %3305 = vmatpush2.msra.mxu0 0.0
    %3306 = vmatprep.subr.mxu0 0.0
    %3307 = vmatpush2.msra.mxu0 0.0
    %3308 = vmatprep.subr.mxu0 0.0
    %3309 = vmatpush2.msra.mxu0 0.0
    %3310 = vmatprep.subr.mxu0 0.0
    %3311 = vmatpush2.msra.mxu0 0.0
    %3312 = vmatprep.subr.mxu0 0.0
    %3313 = vmatpush2.msra.mxu0 0.0
    %3314 = vmatprep.subr.mxu0 0.0
    %3315 = vmatpush2.msra.mxu0 0.0
    %3316 = vmatprep.subr.mxu0 0.0
    %3317 = vmatpush2.msra.mxu0 0.0
    %3318 = vmatprep.subr.mxu0 0.0
    %3319 = vmatpush2.msra.mxu0 0.0
    %3320 = vmatprep.subr.mxu0 0.0
    %3321 = vmatpush2.msra.mxu0 0.0
    %3322 = vmatprep.subr.mxu0 0.0
    %3323 = vmatpush2.msra.mxu0 0.0
    %3324 = vmatprep.subr.mxu0 0.0
    %3325 = vmatpush2.msra.mxu0 0.0
    %3326 = vmatprep.mubr.f32.mxu0 0.0
    %3327 = vmatmul.mubr.f32.gmra.mxu0 %v3252
    %v3328 = vpop.f32.mrf.mxu0
    %v3329 = vadd.f32 0.0, %v3328
    %v3330 = vpop.f32.mrf.mxu0
    %3331 = vmatprep.mubr.f32.mxu0 0.0
    %3332 = vmatmul.mubr.f32.gmra.mxu0 %v3255
    %v3333 = vpop.f32.mrf.mxu0
    %v3334 = vadd.f32 0.0, %v3333
    %v3335 = vpop.f32.mrf.mxu0
    %3336 = vmatprep.mubr.f32.mxu0 0.0
    %3337 = vmatmul.mubr.f32.gmra.mxu0 %v3258
    %v3338 = vpop.f32.mrf.mxu0
    %v3339 = vadd.f32 0.0, %v3338
    %v3340 = vpop.f32.mrf.mxu0
    %3341 = vdwg.mxu0
    %s3342 = scalar_lea.vmem %s8, 56
    %v3343 = vld [vmem:[%s3342] sm:$0xff]
    %v3345 = vsel %vm347, %v3329, 0
    %v3348 = vsel %vm347, %v3334, 0
    %v3351 = vsel %vm347, %v3339, 0
    %3353 = vmatprep.subr.mxu0 0.0
    %3354 = vmatpush1.msra.mxu0 0.0
    %3355 = vmatprep.subr.mxu0 0.0
    %3356 = vmatpush1.msra.mxu0 0.0
    %3357 = vmatprep.subr.mxu0 0.0
    %3358 = vmatpush1.msra.mxu0 0.0
    %3359 = vmatprep.subr.mxu0 0.0
    %3360 = vmatpush1.msra.mxu0 0.0
    %3361 = vmatprep.subr.mxu0 0.0
    %3362 = vmatpush1.msra.mxu0 0.0
    %3363 = vmatprep.subr.mxu0 0.0
    %3364 = vmatpush1.msra.mxu0 0.0
    %3365 = vmatprep.subr.mxu0 0.0
    %3366 = vmatpush1.msra.mxu0 0.0
    %3367 = vmatprep.subr.mxu0 0.0
    %3368 = vmatpush1.msra.mxu0 0.0
    %3369 = vmatprep.subr.mxu0 0.0
    %3370 = vmatpush1.msra.mxu0 0.0
    %3371 = vmatprep.subr.mxu0 0.0
    %3372 = vmatpush1.msra.mxu0 0.0
    %3373 = vmatprep.subr.mxu0 0.0
    %3374 = vmatpush1.msra.mxu0 0.0
    %3375 = vmatprep.subr.mxu0 0.0
    %3376 = vmatpush1.msra.mxu0 0.0
    %3377 = vmatprep.subr.mxu0 0.0
    %3378 = vmatpush1.msra.mxu0 0.0
    %3379 = vmatprep.subr.mxu0 0.0
    %3380 = vmatpush1.msra.mxu0 0.0
    %3381 = vmatprep.subr.mxu0 0.0
    %3382 = vmatpush1.msra.mxu0 0.0
    %3383 = vmatprep.subr.mxu0 0.0
    %3384 = vmatpush1.msra.mxu0 %v3343
    %3385 = vmatprep.subr.mxu0 0.0
    %3386 = vmatpush2.msra.mxu0 0.0
    %3387 = vmatprep.subr.mxu0 0.0
    %3388 = vmatpush2.msra.mxu0 0.0
    %3389 = vmatprep.subr.mxu0 0.0
    %3390 = vmatpush2.msra.mxu0 0.0
    %3391 = vmatprep.subr.mxu0 0.0
    %3392 = vmatpush2.msra.mxu0 0.0
    %3393 = vmatprep.subr.mxu0 0.0
    %3394 = vmatpush2.msra.mxu0 0.0
    %3395 = vmatprep.subr.mxu0 0.0
    %3396 = vmatpush2.msra.mxu0 0.0
    %3397 = vmatprep.subr.mxu0 0.0
    %3398 = vmatpush2.msra.mxu0 0.0
    %3399 = vmatprep.subr.mxu0 0.0
    %3400 = vmatpush2.msra.mxu0 0.0
    %3401 = vmatprep.subr.mxu0 0.0
    %3402 = vmatpush2.msra.mxu0 0.0
    %3403 = vmatprep.subr.mxu0 0.0
    %3404 = vmatpush2.msra.mxu0 0.0
    %3405 = vmatprep.subr.mxu0 0.0
    %3406 = vmatpush2.msra.mxu0 0.0
    %3407 = vmatprep.subr.mxu0 0.0
    %3408 = vmatpush2.msra.mxu0 0.0
    %3409 = vmatprep.subr.mxu0 0.0
    %3410 = vmatpush2.msra.mxu0 0.0
    %3411 = vmatprep.subr.mxu0 0.0
    %3412 = vmatpush2.msra.mxu0 0.0
    %3413 = vmatprep.subr.mxu0 0.0
    %3414 = vmatpush2.msra.mxu0 0.0
    %3415 = vmatprep.subr.mxu0 0.0
    %3416 = vmatpush2.msra.mxu0 0.0
    %3417 = vmatprep.mubr.f32.mxu0 0.0
    %3418 = vmatmul.mubr.f32.gmra.mxu0 %v3345
    %v3419 = vpop.f32.mrf.mxu0
    %v3420 = vadd.f32 0.0, %v3419
    %v3421 = vpop.f32.mrf.mxu0
    %3422 = vmatprep.mubr.f32.mxu0 0.0
    %3423 = vmatmul.mubr.f32.gmra.mxu0 %v3348
    %v3424 = vpop.f32.mrf.mxu0
    %v3425 = vadd.f32 0.0, %v3424
    %v3426 = vpop.f32.mrf.mxu0
    %3427 = vmatprep.mubr.f32.mxu0 0.0
    %3428 = vmatmul.mubr.f32.gmra.mxu0 %v3351
    %v3429 = vpop.f32.mrf.mxu0
    %v3430 = vadd.f32 0.0, %v3429
    %v3431 = vpop.f32.mrf.mxu0
    %3432 = vdwg.mxu0
    %v3433 = vadd.f32 %v3240, %v3420
    %v3434 = vadd.f32 %v3241, %v3425
    %v3435 = vadd.f32 %v3242, %v3430
    %v3436 = vadd.f32 %v1945, %v3433
    %v3437 = vadd.f32 %v1946, %v3434
    %v3438 = vadd.f32 %v1947, %v3435
    %s3439 = scalar_lea.vmem %s10, 1
    %v3440 = vld [vmem:[%s3439] sm:$0x1]
    %s3441 = scalar_lea.vmem %s11, 1
    %v3442 = vld [vmem:[%s3441] sm:$0x1]
    %v3443 = vsel %vm178, %v3436, 0.0
    %3444 = vadd.xlane.f32.xlu0 %v3443
    %v3445 = vpop.xlane.xlu0 %3444
    %v3446 = vsel %vm178, %v3437, 0.0
    %3447 = vadd.xlane.f32.xlu0 %v3446
    %v3448 = vpop.xlane.xlu0 %3447
    %v3449 = vsel %vm185, %v3438, 0.0
    %3450 = vadd.xlane.f32.xlu0 %v3449
    %v3451 = vpop.xlane.xlu0 %3450
    %v3452 = vmul.f32 %v3445, %v189
    %v3453 = vmul.f32 %v3448, %v189
    %v3454 = vmul.f32 %v3451, %v189
    %v3455 = vsub.f32 %v3436, %v3452
    %v3456 = vsub.f32 %v3437, %v3453
    %v3457 = vsub.f32 %v3438, %v3454
    %v3458 = vmul.f32 %v3455, %v3455
    %v3459 = vmul.f32 %v3456, %v3456
    %v3460 = vmul.f32 %v3457, %v3457
    %v3461 = vsel %vm178, %v3458, 0.0
    %3462 = vadd.xlane.f32.xlu0 %v3461
    %v3463 = vpop.xlane.xlu0 %3462
    %v3464 = vsel %vm178, %v3459, 0.0
    %3465 = vadd.xlane.f32.xlu0 %v3464
    %v3466 = vpop.xlane.xlu0 %3465
    %v3467 = vsel %vm185, %v3460, 0.0
    %3468 = vadd.xlane.f32.xlu0 %v3467
    %v3469 = vpop.xlane.xlu0 %3468
    %v3470 = vmul.f32 %v3463, %v189
    %v3471 = vmul.f32 %v3466, %v189
    %v3472 = vmul.f32 %v3469, %v189
    %v3473 = vadd.f32 %v3470, 1e-06
    %v3474 = vadd.f32 %v3471, 1e-06
    %v3475 = vadd.f32 %v3472, 1e-06
    %v3476 = vrsqrt.pop %v3473
    %v3477 = vrsqrt.pop %v3474
    %v3478 = vrsqrt.pop %v3475
    %v3479 = vmul.f32 %v3455, %v3476
    %v3480 = vmul.f32 %v3456, %v3477
    %v3481 = vmul.f32 %v3457, %v3478
    %v3483 = vlaneseq
    %v3484 = vshrl.u32 %v3483, 7
    %v3485 = vsub.s32 0, %v3484
    %v3486 = vrot.slane %v3440, %v3485
    %v3488 = vmul.f32 %v3479, %v3486
    %v3489 = vmul.f32 %v3480, %v3486
    %v3490 = vmul.f32 %v3481, %v3486
    %v3492 = vlaneseq
    %v3493 = vshrl.u32 %v3492, 7
    %v3494 = vsub.s32 0, %v3493
    %v3495 = vrot.slane %v3442, %v3494
    %v3497 = vadd.f32 %v3488, %v3495
    %v3498 = vadd.f32 %v3489, %v3495
    %v3499 = vadd.f32 %v3490, %v3495
    %s3500 = scalar_lea.vmem %s12, 32
    %v3501 = vld [vmem:[%s3500] sm:$0xff]
    %v3502 = vld [vmem:[%s3500 + $0x8] sm:$0xff]
    %v3503 = vld [vmem:[%s3500 + $0x10] sm:$0xff]
    %v3504 = vld [vmem:[%s3500 + $0x18] sm:$0xff]
    %s3505 = scalar_lea.vmem %s13, 1
    %v3506 = vld [vmem:[%s3505] sm:$0x1]
    %v3508 = vlaneseq
    %v3509 = vshrl.u32 %v3508, 7
    %v3510 = vsub.s32 0, %v3509
    %v3511 = vrot.slane %v3506, %v3510
    %v3514 = vsel %vm178, %v3497, 0
    %v3517 = vsel %vm178, %v3498, 0
    %v3520 = vsel %vm178, %v3499, 0
    %3522 = vmatprep.subr.mxu0 0.0
    %3523 = vmatpush1.msra.mxu0 0.0
    %3524 = vmatprep.subr.mxu0 0.0
    %3525 = vmatpush1.msra.mxu0 0.0
    %3526 = vmatprep.subr.mxu0 0.0
    %3527 = vmatpush1.msra.mxu0 0.0
    %3528 = vmatprep.subr.mxu0 0.0
    %3529 = vmatpush1.msra.mxu0 0.0
    %3530 = vmatprep.subr.mxu0 0.0
    %3531 = vmatpush1.msra.mxu0 0.0
    %3532 = vmatprep.subr.mxu0 0.0
    %3533 = vmatpush1.msra.mxu0 0.0
    %3534 = vmatprep.subr.mxu0 0.0
    %3535 = vmatpush1.msra.mxu0 0.0
    %3536 = vmatprep.subr.mxu0 0.0
    %3537 = vmatpush1.msra.mxu0 0.0
    %3538 = vmatprep.subr.mxu0 0.0
    %3539 = vmatpush1.msra.mxu0 0.0
    %3540 = vmatprep.subr.mxu0 0.0
    %3541 = vmatpush1.msra.mxu0 0.0
    %3542 = vmatprep.subr.mxu0 0.0
    %3543 = vmatpush1.msra.mxu0 0.0
    %3544 = vmatprep.subr.mxu0 0.0
    %3545 = vmatpush1.msra.mxu0 0.0
    %3546 = vmatprep.subr.mxu0 0.0
    %3547 = vmatpush1.msra.mxu0 %v3504
    %3548 = vmatprep.subr.mxu0 0.0
    %3549 = vmatpush1.msra.mxu0 %v3503
    %3550 = vmatprep.subr.mxu0 0.0
    %3551 = vmatpush1.msra.mxu0 %v3502
    %3552 = vmatprep.subr.mxu0 0.0
    %3553 = vmatpush1.msra.mxu0 %v3501
    %3554 = vmatprep.subr.mxu0 0.0
    %3555 = vmatpush2.msra.mxu0 0.0
    %3556 = vmatprep.subr.mxu0 0.0
    %3557 = vmatpush2.msra.mxu0 0.0
    %3558 = vmatprep.subr.mxu0 0.0
    %3559 = vmatpush2.msra.mxu0 0.0
    %3560 = vmatprep.subr.mxu0 0.0
    %3561 = vmatpush2.msra.mxu0 0.0
    %3562 = vmatprep.subr.mxu0 0.0
    %3563 = vmatpush2.msra.mxu0 0.0
    %3564 = vmatprep.subr.mxu0 0.0
    %3565 = vmatpush2.msra.mxu0 0.0
    %3566 = vmatprep.subr.mxu0 0.0
    %3567 = vmatpush2.msra.mxu0 0.0
    %3568 = vmatprep.subr.mxu0 0.0
    %3569 = vmatpush2.msra.mxu0 0.0
    %3570 = vmatprep.subr.mxu0 0.0
    %3571 = vmatpush2.msra.mxu0 0.0
    %3572 = vmatprep.subr.mxu0 0.0
    %3573 = vmatpush2.msra.mxu0 0.0
    %3574 = vmatprep.subr.mxu0 0.0
    %3575 = vmatpush2.msra.mxu0 0.0
    %3576 = vmatprep.subr.mxu0 0.0
    %3577 = vmatpush2.msra.mxu0 0.0
    %3578 = vmatprep.subr.mxu0 0.0
    %3579 = vmatpush2.msra.mxu0 0.0
    %3580 = vmatprep.subr.mxu0 0.0
    %3581 = vmatpush2.msra.mxu0 0.0
    %3582 = vmatprep.subr.mxu0 0.0
    %3583 = vmatpush2.msra.mxu0 0.0
    %3584 = vmatprep.subr.mxu0 0.0
    %3585 = vmatpush2.msra.mxu0 0.0
    %3586 = vmatprep.mubr.f32.mxu0 0.0
    %3587 = vmatmul.mubr.f32.gmra.mxu0 %v3514
    %v3588 = vpop.f32.mrf.mxu0
    %v3589 = vadd.f32 %v3511, %v3588
    %v3590 = vpop.f32.mrf.mxu0
    %3591 = vmatprep.mubr.f32.mxu0 0.0
    %3592 = vmatmul.mubr.f32.gmra.mxu0 %v3517
    %v3593 = vpop.f32.mrf.mxu0
    %v3594 = vadd.f32 %v3511, %v3593
    %v3595 = vpop.f32.mrf.mxu0
    %3596 = vmatprep.mubr.f32.mxu0 0.0
    %3597 = vmatmul.mubr.f32.gmra.mxu0 %v3520
    %v3598 = vpop.f32.mrf.mxu0
    %v3599 = vadd.f32 %v3511, %v3598
    %v3600 = vpop.f32.mrf.mxu0
    %3601 = vdwg.mxu0
    %v3602 = vmul.f32 %v3589, 0.5
    %v3603 = vmul.f32 %v3594, 0.5
    %v3604 = vmul.f32 %v3599, 0.5
    %v3605 = vmul.f32 %v3589, 0.70710677
    %v3606 = vmul.f32 %v3594, 0.70710677
    %v3607 = vmul.f32 %v3599, 0.70710677
    %v3608 = verf.f32.pop %v3605
    %v3609 = verf.f32.pop %v3606
    %v3610 = verf.f32.pop %v3607
    %v3611 = vadd.f32 %v3608, 1.0
    %v3612 = vadd.f32 %v3609, 1.0
    %v3613 = vadd.f32 %v3610, 1.0
    %v3614 = vmul.f32 %v3602, %v3611
    %v3615 = vmul.f32 %v3603, %v3612
    %v3616 = vmul.f32 %v3604, %v3613
    %s3617 = scalar_lea.vmem %s14, 128
    %v3618 = vld [vmem:[%s3617] sm:$0xff]
    %v3619 = vld [vmem:[%s3617 + $0x8] sm:$0xff]
    %v3620 = vld [vmem:[%s3617 + $0x10] sm:$0xff]
    %v3621 = vld [vmem:[%s3617 + $0x18] sm:$0xff]
    %v3622 = vld [vmem:[%s3617 + $0x20] sm:$0xff]
    %v3623 = vld [vmem:[%s3617 + $0x28] sm:$0xff]
    %v3624 = vld [vmem:[%s3617 + $0x30] sm:$0xff]
    %v3625 = vld [vmem:[%s3617 + $0x38] sm:$0xff]
    %v3626 = vld [vmem:[%s3617 + $0x40] sm:$0xff]
    %v3627 = vld [vmem:[%s3617 + $0x48] sm:$0xff]
    %v3628 = vld [vmem:[%s3617 + $0x50] sm:$0xff]
    %v3629 = vld [vmem:[%s3617 + $0x58] sm:$0xff]
    %v3630 = vld [vmem:[%s3617 + $0x60] sm:$0xff]
    %v3631 = vld [vmem:[%s3617 + $0x68] sm:$0xff]
    %v3632 = vld [vmem:[%s3617 + $0x70] sm:$0xff]
    %v3633 = vld [vmem:[%s3617 + $0x78] sm:$0xff]
    %s3634 = scalar_lea.vmem %s15, 1
    %v3635 = vld [vmem:[%s3634] sm:$0x1]
    %v3637 = vlaneseq
    %v3638 = vshrl.u32 %v3637, 7
    %v3639 = vsub.s32 0, %v3638
    %v3640 = vrot.slane %v3635, %v3639
    %3642 = vmatprep.subr.mxu0 0.0
    %3643 = vmatpush1.msra.mxu0 %v3633
    %3644 = vmatprep.subr.mxu0 0.0
    %3645 = vmatpush1.msra.mxu0 %v3632
    %3646 = vmatprep.subr.mxu0 0.0
    %3647 = vmatpush1.msra.mxu0 %v3631
    %3648 = vmatprep.subr.mxu0 0.0
    %3649 = vmatpush1.msra.mxu0 %v3630
    %3650 = vmatprep.subr.mxu0 0.0
    %3651 = vmatpush1.msra.mxu0 %v3629
    %3652 = vmatprep.subr.mxu0 0.0
    %3653 = vmatpush1.msra.mxu0 %v3628
    %3654 = vmatprep.subr.mxu0 0.0
    %3655 = vmatpush1.msra.mxu0 %v3627
    %3656 = vmatprep.subr.mxu0 0.0
    %3657 = vmatpush1.msra.mxu0 %v3626
    %3658 = vmatprep.subr.mxu0 0.0
    %3659 = vmatpush1.msra.mxu0 %v3625
    %3660 = vmatprep.subr.mxu0 0.0
    %3661 = vmatpush1.msra.mxu0 %v3624
    %3662 = vmatprep.subr.mxu0 0.0
    %3663 = vmatpush1.msra.mxu0 %v3623
    %3664 = vmatprep.subr.mxu0 0.0
    %3665 = vmatpush1.msra.mxu0 %v3622
    %3666 = vmatprep.subr.mxu0 0.0
    %3667 = vmatpush1.msra.mxu0 %v3621
    %3668 = vmatprep.subr.mxu0 0.0
    %3669 = vmatpush1.msra.mxu0 %v3620
    %3670 = vmatprep.subr.mxu0 0.0
    %3671 = vmatpush1.msra.mxu0 %v3619
    %3672 = vmatprep.subr.mxu0 0.0
    %3673 = vmatpush1.msra.mxu0 %v3618
    %3674 = vmatprep.subr.mxu0 0.0
    %3675 = vmatpush2.msra.mxu0 0.0
    %3676 = vmatprep.subr.mxu0 0.0
    %3677 = vmatpush2.msra.mxu0 0.0
    %3678 = vmatprep.subr.mxu0 0.0
    %3679 = vmatpush2.msra.mxu0 0.0
    %3680 = vmatprep.subr.mxu0 0.0
    %3681 = vmatpush2.msra.mxu0 0.0
    %3682 = vmatprep.subr.mxu0 0.0
    %3683 = vmatpush2.msra.mxu0 0.0
    %3684 = vmatprep.subr.mxu0 0.0
    %3685 = vmatpush2.msra.mxu0 0.0
    %3686 = vmatprep.subr.mxu0 0.0
    %3687 = vmatpush2.msra.mxu0 0.0
    %3688 = vmatprep.subr.mxu0 0.0
    %3689 = vmatpush2.msra.mxu0 0.0
    %3690 = vmatprep.subr.mxu0 0.0
    %3691 = vmatpush2.msra.mxu0 0.0
    %3692 = vmatprep.subr.mxu0 0.0
    %3693 = vmatpush2.msra.mxu0 0.0
    %3694 = vmatprep.subr.mxu0 0.0
    %3695 = vmatpush2.msra.mxu0 0.0
    %3696 = vmatprep.subr.mxu0 0.0
    %3697 = vmatpush2.msra.mxu0 0.0
    %3698 = vmatprep.subr.mxu0 0.0
    %3699 = vmatpush2.msra.mxu0 0.0
    %3700 = vmatprep.subr.mxu0 0.0
    %3701 = vmatpush2.msra.mxu0 0.0
    %3702 = vmatprep.subr.mxu0 0.0
    %3703 = vmatpush2.msra.mxu0 0.0
    %3704 = vmatprep.subr.mxu0 0.0
    %3705 = vmatpush2.msra.mxu0 0.0
    %3706 = vmatprep.mubr.f32.mxu0 0.0
    %3707 = vmatmul.mubr.f32.gmra.mxu0 %v3614
    %v3708 = vpop.f32.mrf.mxu0
    %v3709 = vadd.f32 %v3640, %v3708
    %v3710 = vpop.f32.mrf.mxu0
    %3711 = vmatprep.mubr.f32.mxu0 0.0
    %3712 = vmatmul.mubr.f32.gmra.mxu0 %v3615
    %v3713 = vpop.f32.mrf.mxu0
    %v3714 = vadd.f32 %v3640, %v3713
    %v3715 = vpop.f32.mrf.mxu0
    %3716 = vmatprep.mubr.f32.mxu0 0.0
    %3717 = vmatmul.mubr.f32.gmra.mxu0 %v3616
    %v3718 = vpop.f32.mrf.mxu0
    %v3719 = vadd.f32 %v3640, %v3718
    %v3720 = vpop.f32.mrf.mxu0
    %3721 = vdwg.mxu0
    %v3722 = vadd.f32 %v3436, %v3709
    %v3723 = vadd.f32 %v3437, %v3714
    %v3724 = vadd.f32 %v3438, %v3719
    %v3725 = vld [vmem:[%s16] sm:$0x1]
    %v3726 = vld [vmem:[%s17] sm:$0x1]
    %v3727 = vsel %vm178, %v3722, 0.0
    %3728 = vadd.xlane.f32.xlu0 %v3727
    %v3729 = vpop.xlane.xlu0 %3728
    %v3730 = vsel %vm178, %v3723, 0.0
    %3731 = vadd.xlane.f32.xlu0 %v3730
    %v3732 = vpop.xlane.xlu0 %3731
    %v3733 = vsel %vm185, %v3724, 0.0
    %3734 = vadd.xlane.f32.xlu0 %v3733
    %v3735 = vpop.xlane.xlu0 %3734
    %v3736 = vmul.f32 %v3729, %v189
    %v3737 = vmul.f32 %v3732, %v189
    %v3738 = vmul.f32 %v3735, %v189
    %v3739 = vsub.f32 %v3722, %v3736
    %v3740 = vsub.f32 %v3723, %v3737
    %v3741 = vsub.f32 %v3724, %v3738
    %v3742 = vmul.f32 %v3739, %v3739
    %v3743 = vmul.f32 %v3740, %v3740
    %v3744 = vmul.f32 %v3741, %v3741
    %v3745 = vsel %vm178, %v3742, 0.0
    %3746 = vadd.xlane.f32.xlu0 %v3745
    %v3747 = vpop.xlane.xlu0 %3746
    %v3748 = vsel %vm178, %v3743, 0.0
    %3749 = vadd.xlane.f32.xlu0 %v3748
    %v3750 = vpop.xlane.xlu0 %3749
    %v3751 = vsel %vm185, %v3744, 0.0
    %3752 = vadd.xlane.f32.xlu0 %v3751
    %v3753 = vpop.xlane.xlu0 %3752
    %v3754 = vmul.f32 %v3747, %v189
    %v3755 = vmul.f32 %v3750, %v189
    %v3756 = vmul.f32 %v3753, %v189
    %v3757 = vadd.f32 %v3754, 1e-06
    %v3758 = vadd.f32 %v3755, 1e-06
    %v3759 = vadd.f32 %v3756, 1e-06
    %v3760 = vrsqrt.pop %v3757
    %v3761 = vrsqrt.pop %v3758
    %v3762 = vrsqrt.pop %v3759
    %v3763 = vmul.f32 %v3739, %v3760
    %v3764 = vmul.f32 %v3740, %v3761
    %v3765 = vmul.f32 %v3741, %v3762
    %v3767 = vlaneseq
    %v3768 = vshrl.u32 %v3767, 7
    %v3769 = vsub.s32 0, %v3768
    %v3770 = vrot.slane %v3725, %v3769
    %v3772 = vmul.f32 %v3763, %v3770
    %v3773 = vmul.f32 %v3764, %v3770
    %v3774 = vmul.f32 %v3765, %v3770
    %v3776 = vlaneseq
    %v3777 = vshrl.u32 %v3776, 7
    %v3778 = vsub.s32 0, %v3777
    %v3779 = vrot.slane %v3726, %v3778
    %v3781 = vadd.f32 %v3772, %v3779
    %v3782 = vadd.f32 %v3773, %v3779
    %v3783 = vadd.f32 %v3774, %v3779
    %v3784 = vld [vmem:[%s1] sm:$0x1]
    %v3786 = vsel %vm752, %v3784, 0
    %v3789 = vsel %vm904, %v3783, 0
    %3791 = vmatprep.subr.mxu0 0.0
    %3792 = vmatpush1.msra.mxu0 0.0
    %3793 = vmatprep.subr.mxu0 0.0
    %3794 = vmatpush1.msra.mxu0 0.0
    %3795 = vmatprep.subr.mxu0 0.0
    %3796 = vmatpush1.msra.mxu0 0.0
    %3797 = vmatprep.subr.mxu0 0.0
    %3798 = vmatpush1.msra.mxu0 0.0
    %3799 = vmatprep.subr.mxu0 0.0
    %3800 = vmatpush1.msra.mxu0 0.0
    %3801 = vmatprep.subr.mxu0 0.0
    %3802 = vmatpush1.msra.mxu0 0.0
    %3803 = vmatprep.subr.mxu0 0.0
    %3804 = vmatpush1.msra.mxu0 0.0
    %3805 = vmatprep.subr.mxu0 0.0
    %3806 = vmatpush1.msra.mxu0 0.0
    %3807 = vmatprep.subr.mxu0 0.0
    %3808 = vmatpush1.msra.mxu0 0.0
    %3809 = vmatprep.subr.mxu0 0.0
    %3810 = vmatpush1.msra.mxu0 0.0
    %3811 = vmatprep.subr.mxu0 0.0
    %3812 = vmatpush1.msra.mxu0 0.0
    %3813 = vmatprep.subr.mxu0 0.0
    %3814 = vmatpush1.msra.mxu0 0.0
    %3815 = vmatprep.subr.mxu0 0.0
    %3816 = vmatpush1.msra.mxu0 0.0
    %3817 = vmatprep.subr.mxu0 0.0
    %3818 = vmatpush1.msra.mxu0 %v3789
    %3819 = vmatprep.subr.mxu0 0.0
    %3820 = vmatpush1.msra.mxu0 %v3782
    %3821 = vmatprep.subr.mxu0 0.0
    %3822 = vmatpush1.msra.mxu0 %v3781
    %3823 = vmatprep.subr.mxu0 0.0
    %3824 = vmatpush2.msra.mxu0 0.0
    %3825 = vmatprep.subr.mxu0 0.0
    %3826 = vmatpush2.msra.mxu0 0.0
    %3827 = vmatprep.subr.mxu0 0.0
    %3828 = vmatpush2.msra.mxu0 0.0
    %3829 = vmatprep.subr.mxu0 0.0
    %3830 = vmatpush2.msra.mxu0 0.0
    %3831 = vmatprep.subr.mxu0 0.0
    %3832 = vmatpush2.msra.mxu0 0.0
    %3833 = vmatprep.subr.mxu0 0.0
    %3834 = vmatpush2.msra.mxu0 0.0
    %3835 = vmatprep.subr.mxu0 0.0
    %3836 = vmatpush2.msra.mxu0 0.0
    %3837 = vmatprep.subr.mxu0 0.0
    %3838 = vmatpush2.msra.mxu0 0.0
    %3839 = vmatprep.subr.mxu0 0.0
    %3840 = vmatpush2.msra.mxu0 0.0
    %3841 = vmatprep.subr.mxu0 0.0
    %3842 = vmatpush2.msra.mxu0 0.0
    %3843 = vmatprep.subr.mxu0 0.0
    %3844 = vmatpush2.msra.mxu0 0.0
    %3845 = vmatprep.subr.mxu0 0.0
    %3846 = vmatpush2.msra.mxu0 0.0
    %3847 = vmatprep.subr.mxu0 0.0
    %3848 = vmatpush2.msra.mxu0 0.0
    %3849 = vmatprep.subr.mxu0 0.0
    %3850 = vmatpush2.msra.mxu0 0.0
    %3851 = vmatprep.subr.mxu0 0.0
    %3852 = vmatpush2.msra.mxu0 0.0
    %3853 = vmatprep.subr.mxu0 0.0
    %3854 = vmatpush2.msra.mxu0 0.0
    %3855 = vmatprep.mubr.f32.mxu0 0.0
    %3856 = vmatmul.mubr.f32.gmra.mxu0 %v3786
    %v3857 = vpop.f32.mrf.mxu0
    %v3858 = vadd.f32 0.0, %v3857
    %v3859 = vpop.f32.mrf.mxu0
    %3860 = vdwg.mxu0
    %v3861 = vld [vmem:[%s18] sm:$0x1]
    %v3862 = vld [vmem:[%s19] sm:$0x1]
    %v3863 = vsel %vm185, %v3858, 0.0
    %3864 = vadd.xlane.f32.xlu0 %v3863
    %v3865 = vpop.xlane.xlu0 %3864
    %v3866 = vmul.f32 %v3865, %v189
    %v3867 = vsub.f32 %v3858, %v3866
    %v3868 = vmul.f32 %v3867, %v3867
    %v3869 = vsel %vm185, %v3868, 0.0
    %3870 = vadd.xlane.f32.xlu0 %v3869
    %v3871 = vpop.xlane.xlu0 %3870
    %v3872 = vmul.f32 %v3871, %v189
    %v3873 = vadd.f32 %v3872, 1e-06
    %v3874 = vrsqrt.pop %v3873
    %v3875 = vmul.f32 %v3867, %v3874
    %v3876 = vmul.f32 %v3875, %v3861
    %v3877 = vadd.f32 %v3876, %v3862
    %v3878 = vld [vmem:[%s20] sm:$0xff]
    %v3879 = vld [vmem:[%s20 + $0x8] sm:$0xff]
    %v3880 = vld [vmem:[%s20 + $0x10] sm:$0xff]
    %v3881 = vld [vmem:[%s20 + $0x18] sm:$0xff]
    %v3882 = vld [vmem:[%s21] sm:$0x1]
    %v3884 = vsel %vm178, %v3877, 0
    %3886 = vmatprep.subr.mxu0 0.0
    %3887 = vmatpush1.msra.mxu0 0.0
    %3888 = vmatprep.subr.mxu0 0.0
    %3889 = vmatpush1.msra.mxu0 0.0
    %3890 = vmatprep.subr.mxu0 0.0
    %3891 = vmatpush1.msra.mxu0 0.0
    %3892 = vmatprep.subr.mxu0 0.0
    %3893 = vmatpush1.msra.mxu0 0.0
    %3894 = vmatprep.subr.mxu0 0.0
    %3895 = vmatpush1.msra.mxu0 0.0
    %3896 = vmatprep.subr.mxu0 0.0
    %3897 = vmatpush1.msra.mxu0 0.0
    %3898 = vmatprep.subr.mxu0 0.0
    %3899 = vmatpush1.msra.mxu0 0.0
    %3900 = vmatprep.subr.mxu0 0.0
    %3901 = vmatpush1.msra.mxu0 0.0
    %3902 = vmatprep.subr.mxu0 0.0
    %3903 = vmatpush1.msra.mxu0 0.0
    %3904 = vmatprep.subr.mxu0 0.0
    %3905 = vmatpush1.msra.mxu0 0.0
    %3906 = vmatprep.subr.mxu0 0.0
    %3907 = vmatpush1.msra.mxu0 0.0
    %3908 = vmatprep.subr.mxu0 0.0
    %3909 = vmatpush1.msra.mxu0 0.0
    %3910 = vmatprep.subr.mxu0 0.0
    %3911 = vmatpush1.msra.mxu0 %v3881
    %3912 = vmatprep.subr.mxu0 0.0
    %3913 = vmatpush1.msra.mxu0 %v3880
    %3914 = vmatprep.subr.mxu0 0.0
    %3915 = vmatpush1.msra.mxu0 %v3879
    %3916 = vmatprep.subr.mxu0 0.0
    %3917 = vmatpush1.msra.mxu0 %v3878
    %3918 = vmatprep.subr.mxu0 0.0
    %3919 = vmatpush2.msra.mxu0 0.0
    %3920 = vmatprep.subr.mxu0 0.0
    %3921 = vmatpush2.msra.mxu0 0.0
    %3922 = vmatprep.subr.mxu0 0.0
    %3923 = vmatpush2.msra.mxu0 0.0
    %3924 = vmatprep.subr.mxu0 0.0
    %3925 = vmatpush2.msra.mxu0 0.0
    %3926 = vmatprep.subr.mxu0 0.0
    %3927 = vmatpush2.msra.mxu0 0.0
    %3928 = vmatprep.subr.mxu0 0.0
    %3929 = vmatpush2.msra.mxu0 0.0
    %3930 = vmatprep.subr.mxu0 0.0
    %3931 = vmatpush2.msra.mxu0 0.0
    %3932 = vmatprep.subr.mxu0 0.0
    %3933 = vmatpush2.msra.mxu0 0.0
    %3934 = vmatprep.subr.mxu0 0.0
    %3935 = vmatpush2.msra.mxu0 0.0
    %3936 = vmatprep.subr.mxu0 0.0
    %3937 = vmatpush2.msra.mxu0 0.0
    %3938 = vmatprep.subr.mxu0 0.0
    %3939 = vmatpush2.msra.mxu0 0.0
    %3940 = vmatprep.subr.mxu0 0.0
    %3941 = vmatpush2.msra.mxu0 0.0
    %3942 = vmatprep.subr.mxu0 0.0
    %3943 = vmatpush2.msra.mxu0 0.0
    %3944 = vmatprep.subr.mxu0 0.0
    %3945 = vmatpush2.msra.mxu0 0.0
    %3946 = vmatprep.subr.mxu0 0.0
    %3947 = vmatpush2.msra.mxu0 0.0
    %3948 = vmatprep.subr.mxu0 0.0
    %3949 = vmatpush2.msra.mxu0 0.0
    %3950 = vmatprep.mubr.f32.mxu0 0.0
    %3951 = vmatmul.mubr.f32.gmra.mxu0 %v3884
    %v3952 = vpop.f32.mrf.mxu0
    %v3953 = vadd.f32 %v3882, %v3952
    %v3954 = vpop.f32.mrf.mxu0
    %3955 = vdwg.mxu0
    %vm3956 = vcmask 57344
    %3957 = vst.msk [vmem:[#allocation2] sm:$0x1] %vm3956, %v3953
    %s3958 = scalar_lea.vmem %s0, 24
    %v3959 = vld [vmem:[%s3958] sm:$0xff]
    %v3960 = vld [vmem:[%s3958 + $0x8] sm:$0xff]
    %v3961 = vld [vmem:[%s3958 + $0x10] sm:$0x1]
    %v3962 = vld [vmem:[%s2] sm:$0xff]
    %v3963 = vld [vmem:[%s2 + $0x8] sm:$0xff]
    %v3964 = vld [vmem:[%s2 + $0x10] sm:$0xff]
    %v3965 = vld [vmem:[%s2 + $0x18] sm:$0xff]
    %v3966 = vld [vmem:[%s2 + $0x20] sm:$0xff]
    %v3967 = vld [vmem:[%s2 + $0x28] sm:$0xff]
    %v3968 = vld [vmem:[%s2 + $0x30] sm:$0xff]
    %v3969 = vld [vmem:[%s2 + $0x38] sm:$0xff]
    %v3970 = vld [vmem:[%s3] sm:$0xff]
    %v3971 = vld [vmem:[%s3 + $0x8] sm:$0xff]
    %v3972 = vld [vmem:[%s3 + $0x10] sm:$0x1]
    %v3974 = vsel %vm86, %v3959, 0
    %v3977 = vsel %vm86, %v3960, 0
    %v3980 = vsel %vm86, %v3961, 0
    %3982 = vmatprep.subr.mxu0 0.0
    %3983 = vmatpush1.msra.mxu0 0.0
    %3984 = vmatprep.subr.mxu0 0.0
    %3985 = vmatpush1.msra.mxu0 0.0
    %3986 = vmatprep.subr.mxu0 0.0
    %3987 = vmatpush1.msra.mxu0 0.0
    %3988 = vmatprep.subr.mxu0 0.0
    %3989 = vmatpush1.msra.mxu0 0.0
    %3990 = vmatprep.subr.mxu0 0.0
    %3991 = vmatpush1.msra.mxu0 0.0
    %3992 = vmatprep.subr.mxu0 0.0
    %3993 = vmatpush1.msra.mxu0 0.0
    %3994 = vmatprep.subr.mxu0 0.0
    %3995 = vmatpush1.msra.mxu0 0.0
    %3996 = vmatprep.subr.mxu0 0.0
    %3997 = vmatpush1.msra.mxu0 0.0
    %3998 = vmatprep.subr.mxu0 0.0
    %3999 = vmatpush1.msra.mxu0 %v3969
    %4000 = vmatprep.subr.mxu0 0.0
    %4001 = vmatpush1.msra.mxu0 %v3968
    %4002 = vmatprep.subr.mxu0 0.0
    %4003 = vmatpush1.msra.mxu0 %v3967
    %4004 = vmatprep.subr.mxu0 0.0
    %4005 = vmatpush1.msra.mxu0 %v3966
    %4006 = vmatprep.subr.mxu0 0.0
    %4007 = vmatpush1.msra.mxu0 %v3965
    %4008 = vmatprep.subr.mxu0 0.0
    %4009 = vmatpush1.msra.mxu0 %v3964
    %4010 = vmatprep.subr.mxu0 0.0
    %4011 = vmatpush1.msra.mxu0 %v3963
    %4012 = vmatprep.subr.mxu0 0.0
    %4013 = vmatpush1.msra.mxu0 %v3962
    %4014 = vmatprep.subr.mxu0 0.0
    %4015 = vmatpush2.msra.mxu0 0.0
    %4016 = vmatprep.subr.mxu0 0.0
    %4017 = vmatpush2.msra.mxu0 0.0
    %4018 = vmatprep.subr.mxu0 0.0
    %4019 = vmatpush2.msra.mxu0 0.0
    %4020 = vmatprep.subr.mxu0 0.0
    %4021 = vmatpush2.msra.mxu0 0.0
    %4022 = vmatprep.subr.mxu0 0.0
    %4023 = vmatpush2.msra.mxu0 0.0
    %4024 = vmatprep.subr.mxu0 0.0
    %4025 = vmatpush2.msra.mxu0 0.0
    %4026 = vmatprep.subr.mxu0 0.0
    %4027 = vmatpush2.msra.mxu0 0.0
    %4028 = vmatprep.subr.mxu0 0.0
    %4029 = vmatpush2.msra.mxu0 0.0
    %4030 = vmatprep.subr.mxu0 0.0
    %4031 = vmatpush2.msra.mxu0 0.0
    %4032 = vmatprep.subr.mxu0 0.0
    %4033 = vmatpush2.msra.mxu0 0.0
    %4034 = vmatprep.subr.mxu0 0.0
    %4035 = vmatpush2.msra.mxu0 0.0
    %4036 = vmatprep.subr.mxu0 0.0
    %4037 = vmatpush2.msra.mxu0 0.0
    %4038 = vmatprep.subr.mxu0 0.0
    %4039 = vmatpush2.msra.mxu0 0.0
    %4040 = vmatprep.subr.mxu0 0.0
    %4041 = vmatpush2.msra.mxu0 0.0
    %4042 = vmatprep.subr.mxu0 0.0
    %4043 = vmatpush2.msra.mxu0 0.0
    %4044 = vmatprep.subr.mxu0 0.0
    %4045 = vmatpush2.msra.mxu0 0.0
    %4046 = vmatprep.mubr.f32.mxu0 0.0
    %4047 = vmatmul.mubr.f32.gmra.mxu0 %v3974
    %v4048 = vpop.f32.mrf.mxu0
    %v4049 = vadd.f32 %v3970, %v4048
    %v4050 = vpop.f32.mrf.mxu0
    %4051 = vmatprep.mubr.f32.mxu0 0.0
    %4052 = vmatmul.mubr.f32.gmra.mxu0 %v3977
    %v4053 = vpop.f32.mrf.mxu0
    %v4054 = vadd.f32 %v3971, %v4053
    %v4055 = vpop.f32.mrf.mxu0
    %4056 = vmatprep.mubr.f32.mxu0 0.0
    %4057 = vmatmul.mubr.f32.gmra.mxu0 %v3980
    %v4058 = vpop.f32.mrf.mxu0
    %v4059 = vadd.f32 %v3972, %v4058
    %v4060 = vpop.f32.mrf.mxu0
    %4061 = vdwg.mxu0
    %v4062 = vld [vmem:[%s4] sm:$0x1]
    %v4063 = vld [vmem:[%s5] sm:$0x1]
    %v4064 = vsel %vm178, %v4049, 0.0
    %4065 = vadd.xlane.f32.xlu0 %v4064
    %v4066 = vpop.xlane.xlu0 %4065
    %v4067 = vsel %vm178, %v4054, 0.0
    %4068 = vadd.xlane.f32.xlu0 %v4067
    %v4069 = vpop.xlane.xlu0 %4068
    %v4070 = vsel %vm185, %v4059, 0.0
    %4071 = vadd.xlane.f32.xlu0 %v4070
    %v4072 = vpop.xlane.xlu0 %4071
    %v4073 = vmul.f32 %v4066, %v189
    %v4074 = vmul.f32 %v4069, %v189
    %v4075 = vmul.f32 %v4072, %v189
    %v4076 = vsub.f32 %v4049, %v4073
    %v4077 = vsub.f32 %v4054, %v4074
    %v4078 = vsub.f32 %v4059, %v4075
    %v4079 = vmul.f32 %v4076, %v4076
    %v4080 = vmul.f32 %v4077, %v4077
    %v4081 = vmul.f32 %v4078, %v4078
    %v4082 = vsel %vm178, %v4079, 0.0
    %4083 = vadd.xlane.f32.xlu0 %v4082
    %v4084 = vpop.xlane.xlu0 %4083
    %v4085 = vsel %vm178, %v4080, 0.0
    %4086 = vadd.xlane.f32.xlu0 %v4085
    %v4087 = vpop.xlane.xlu0 %4086
    %v4088 = vsel %vm185, %v4081, 0.0
    %4089 = vadd.xlane.f32.xlu0 %v4088
    %v4090 = vpop.xlane.xlu0 %4089
    %v4091 = vmul.f32 %v4084, %v189
    %v4092 = vmul.f32 %v4087, %v189
    %v4093 = vmul.f32 %v4090, %v189
    %v4094 = vadd.f32 %v4091, 1e-06
    %v4095 = vadd.f32 %v4092, 1e-06
    %v4096 = vadd.f32 %v4093, 1e-06
    %v4097 = vrsqrt.pop %v4094
    %v4098 = vrsqrt.pop %v4095
    %v4099 = vrsqrt.pop %v4096
    %v4100 = vmul.f32 %v4076, %v4097
    %v4101 = vmul.f32 %v4077, %v4098
    %v4102 = vmul.f32 %v4078, %v4099
    %v4104 = vlaneseq
    %v4105 = vshrl.u32 %v4104, 7
    %v4106 = vsub.s32 0, %v4105
    %v4107 = vrot.slane %v4062, %v4106
    %v4109 = vmul.f32 %v4100, %v4107
    %v4110 = vmul.f32 %v4101, %v4107
    %v4111 = vmul.f32 %v4102, %v4107
    %v4113 = vlaneseq
    %v4114 = vshrl.u32 %v4113, 7
    %v4115 = vsub.s32 0, %v4114
    %v4116 = vrot.slane %v4063, %v4115
    %v4118 = vadd.f32 %v4109, %v4116
    %v4119 = vadd.f32 %v4110, %v4116
    %v4120 = vadd.f32 %v4111, %v4116
    %v4121 = vld [vmem:[%s6] sm:$0xff]
    %v4122 = vld [vmem:[%s6 + $0x8] sm:$0xff]
    %v4123 = vld [vmem:[%s6 + $0x10] sm:$0xff]
    %v4124 = vld [vmem:[%s6 + $0x18] sm:$0xff]
    %v4125 = vld [vmem:[%s7] sm:$0x1]
    %v4127 = vlaneseq
    %v4128 = vshrl.u32 %v4127, 7
    %v4129 = vsub.s32 0, %v4128
    %v4130 = vrot.slane %v4125, %v4129
    %v4133 = vsel %vm178, %v4118, 0
    %v4136 = vsel %vm178, %v4119, 0
    %v4139 = vsel %vm178, %v4120, 0
    %4141 = vmatprep.subr.mxu0 0.0
    %4142 = vmatpush1.msra.mxu0 0.0
    %4143 = vmatprep.subr.mxu0 0.0
    %4144 = vmatpush1.msra.mxu0 0.0
    %4145 = vmatprep.subr.mxu0 0.0
    %4146 = vmatpush1.msra.mxu0 0.0
    %4147 = vmatprep.subr.mxu0 0.0
    %4148 = vmatpush1.msra.mxu0 0.0
    %4149 = vmatprep.subr.mxu0 0.0
    %4150 = vmatpush1.msra.mxu0 0.0
    %4151 = vmatprep.subr.mxu0 0.0
    %4152 = vmatpush1.msra.mxu0 0.0
    %4153 = vmatprep.subr.mxu0 0.0
    %4154 = vmatpush1.msra.mxu0 0.0
    %4155 = vmatprep.subr.mxu0 0.0
    %4156 = vmatpush1.msra.mxu0 0.0
    %4157 = vmatprep.subr.mxu0 0.0
    %4158 = vmatpush1.msra.mxu0 0.0
    %4159 = vmatprep.subr.mxu0 0.0
    %4160 = vmatpush1.msra.mxu0 0.0
    %4161 = vmatprep.subr.mxu0 0.0
    %4162 = vmatpush1.msra.mxu0 0.0
    %4163 = vmatprep.subr.mxu0 0.0
    %4164 = vmatpush1.msra.mxu0 0.0
    %4165 = vmatprep.subr.mxu0 0.0
    %4166 = vmatpush1.msra.mxu0 %v4124
    %4167 = vmatprep.subr.mxu0 0.0
    %4168 = vmatpush1.msra.mxu0 %v4123
    %4169 = vmatprep.subr.mxu0 0.0
    %4170 = vmatpush1.msra.mxu0 %v4122
    %4171 = vmatprep.subr.mxu0 0.0
    %4172 = vmatpush1.msra.mxu0 %v4121
    %4173 = vmatprep.subr.mxu0 0.0
    %4174 = vmatpush2.msra.mxu0 0.0
    %4175 = vmatprep.subr.mxu0 0.0
    %4176 = vmatpush2.msra.mxu0 0.0
    %4177 = vmatprep.subr.mxu0 0.0
    %4178 = vmatpush2.msra.mxu0 0.0
    %4179 = vmatprep.subr.mxu0 0.0
    %4180 = vmatpush2.msra.mxu0 0.0
    %4181 = vmatprep.subr.mxu0 0.0
    %4182 = vmatpush2.msra.mxu0 0.0
    %4183 = vmatprep.subr.mxu0 0.0
    %4184 = vmatpush2.msra.mxu0 0.0
    %4185 = vmatprep.subr.mxu0 0.0
    %4186 = vmatpush2.msra.mxu0 0.0
    %4187 = vmatprep.subr.mxu0 0.0
    %4188 = vmatpush2.msra.mxu0 0.0
    %4189 = vmatprep.subr.mxu0 0.0
    %4190 = vmatpush2.msra.mxu0 0.0
    %4191 = vmatprep.subr.mxu0 0.0
    %4192 = vmatpush2.msra.mxu0 0.0
    %4193 = vmatprep.subr.mxu0 0.0
    %4194 = vmatpush2.msra.mxu0 0.0
    %4195 = vmatprep.subr.mxu0 0.0
    %4196 = vmatpush2.msra.mxu0 0.0
    %4197 = vmatprep.subr.mxu0 0.0
    %4198 = vmatpush2.msra.mxu0 0.0
    %4199 = vmatprep.subr.mxu0 0.0
    %4200 = vmatpush2.msra.mxu0 0.0
    %4201 = vmatprep.subr.mxu0 0.0
    %4202 = vmatpush2.msra.mxu0 0.0
    %4203 = vmatprep.subr.mxu0 0.0
    %4204 = vmatpush2.msra.mxu0 0.0
    %4205 = vmatprep.mubr.f32.mxu0 0.0
    %4206 = vmatmul.mubr.f32.gmra.mxu0 %v4133
    %v4207 = vpop.f32.mrf.mxu0
    %v4208 = vadd.f32 %v4130, %v4207
    %v4209 = vpop.f32.mrf.mxu0
    %4210 = vmatprep.mubr.f32.mxu0 0.0
    %4211 = vmatmul.mubr.f32.gmra.mxu0 %v4136
    %v4212 = vpop.f32.mrf.mxu0
    %v4213 = vadd.f32 %v4130, %v4212
    %v4214 = vpop.f32.mrf.mxu0
    %4215 = vmatprep.mubr.f32.mxu0 0.0
    %4216 = vmatmul.mubr.f32.gmra.mxu0 %v4139
    %v4217 = vpop.f32.mrf.mxu0
    %v4218 = vadd.f32 %v4130, %v4217
    %v4219 = vpop.f32.mrf.mxu0
    %4220 = vdwg.mxu0
    %4224 = vrot.lane.b32.xlu0 %v4208, 96
    %v4225 = vpop.permute.xlu0 %4224
    %4226 = vrot.lane.b32.xlu0 %v4213, 96
    %v4227 = vpop.permute.xlu0 %4226
    %4228 = vrot.lane.b32.xlu0 %v4218, 96
    %v4229 = vpop.permute.xlu0 %4228
    %v4230 = vsel %vm347, %v4208, 0
    %v4232 = vsel %vm347, %v4213, 0
    %v4234 = vsel %vm347, %v4218, 0
    %v4236 = vsel %vm347, %v4225, 0
    %v4238 = vsel %vm347, %v4227, 0
    %v4240 = vsel %vm347, %v4229, 0
    %4242 = vmatprep.subr.mxu0 0.0
    %4243 = vmatpush1.xpose.msra.mxu0 0.0
    %4244 = vmatprep.subr.mxu0 0.0
    %4245 = vmatpush1.xpose.msra.mxu0 0.0
    %4246 = vmatprep.subr.mxu0 0.0
    %4247 = vmatpush1.xpose.msra.mxu0 0.0
    %4248 = vmatprep.subr.mxu0 0.0
    %4249 = vmatpush1.xpose.msra.mxu0 0.0
    %4250 = vmatprep.subr.mxu0 0.0
    %4251 = vmatpush1.xpose.msra.mxu0 0.0
    %4252 = vmatprep.subr.mxu0 0.0
    %4253 = vmatpush1.xpose.msra.mxu0 0.0
    %4254 = vmatprep.subr.mxu0 0.0
    %4255 = vmatpush1.xpose.msra.mxu0 0.0
    %4256 = vmatprep.subr.mxu0 0.0
    %4257 = vmatpush1.xpose.msra.mxu0 0.0
    %4258 = vmatprep.subr.mxu0 0.0
    %4259 = vmatpush1.xpose.msra.mxu0 0.0
    %4260 = vmatprep.subr.mxu0 0.0
    %4261 = vmatpush1.xpose.msra.mxu0 0.0
    %4262 = vmatprep.subr.mxu0 0.0
    %4263 = vmatpush1.xpose.msra.mxu0 0.0
    %4264 = vmatprep.subr.mxu0 0.0
    %4265 = vmatpush1.xpose.msra.mxu0 0.0
    %4266 = vmatprep.subr.mxu0 0.0
    %4267 = vmatpush1.xpose.msra.mxu0 0.0
    %4268 = vmatprep.subr.mxu0 0.0
    %4269 = vmatpush1.xpose.msra.mxu0 %v4240
    %4270 = vmatprep.subr.mxu0 0.0
    %4271 = vmatpush1.xpose.msra.mxu0 %v4238
    %4272 = vmatprep.subr.mxu0 0.0
    %4273 = vmatpush1.xpose.msra.mxu0 %v4236
    %4274 = vmatprep.subr.mxu0 0.0
    %4275 = vmatpush2.xpose.msra.mxu0 0.0
    %4276 = vmatprep.subr.mxu0 0.0
    %4277 = vmatpush2.xpose.msra.mxu0 0.0
    %4278 = vmatprep.subr.mxu0 0.0
    %4279 = vmatpush2.xpose.msra.mxu0 0.0
    %4280 = vmatprep.subr.mxu0 0.0
    %4281 = vmatpush2.xpose.msra.mxu0 0.0
    %4282 = vmatprep.subr.mxu0 0.0
    %4283 = vmatpush2.xpose.msra.mxu0 0.0
    %4284 = vmatprep.subr.mxu0 0.0
    %4285 = vmatpush2.xpose.msra.mxu0 0.0
    %4286 = vmatprep.subr.mxu0 0.0
    %4287 = vmatpush2.xpose.msra.mxu0 0.0
    %4288 = vmatprep.subr.mxu0 0.0
    %4289 = vmatpush2.xpose.msra.mxu0 0.0
    %4290 = vmatprep.subr.mxu0 0.0
    %4291 = vmatpush2.xpose.msra.mxu0 0.0
    %4292 = vmatprep.subr.mxu0 0.0
    %4293 = vmatpush2.xpose.msra.mxu0 0.0
    %4294 = vmatprep.subr.mxu0 0.0
    %4295 = vmatpush2.xpose.msra.mxu0 0.0
    %4296 = vmatprep.subr.mxu0 0.0
    %4297 = vmatpush2.xpose.msra.mxu0 0.0
    %4298 = vmatprep.subr.mxu0 0.0
    %4299 = vmatpush2.xpose.msra.mxu0 0.0
    %4300 = vmatprep.subr.mxu0 0.0
    %4301 = vmatpush2.xpose.msra.mxu0 0.0
    %4302 = vmatprep.subr.mxu0 0.0
    %4303 = vmatpush2.xpose.msra.mxu0 0.0
    %4304 = vmatprep.subr.mxu0 0.0
    %4305 = vmatpush2.xpose.msra.mxu0 0.0
    %4306 = vmatprep.mubr.f32.mxu0 0.0
    %4307 = vmatmul.mubr.f32.gmra.mxu0 %v4230
    %v4308 = vpop.f32.mrf.mxu0
    %v4309 = vadd.f32 0.0, %v4308
    %v4310 = vpop.f32.mrf.mxu0
    %4311 = vmatprep.mubr.f32.mxu0 0.0
    %4312 = vmatmul.mubr.f32.gmra.mxu0 %v4232
    %v4313 = vpop.f32.mrf.mxu0
    %v4314 = vadd.f32 0.0, %v4313
    %v4315 = vpop.f32.mrf.mxu0
    %4316 = vmatprep.mubr.f32.mxu0 0.0
    %4317 = vmatmul.mubr.f32.gmra.mxu0 %v4234
    %v4318 = vpop.f32.mrf.mxu0
    %v4319 = vadd.f32 0.0, %v4318
    %v4320 = vpop.f32.mrf.mxu0
    %4321 = vdwg.mxu0
    %4322 = vrot.lane.b32.xlu0 %v4208, 120
    %v4323 = vpop.permute.xlu0 %4322
    %4324 = vrot.lane.b32.xlu0 %v4213, 120
    %v4325 = vpop.permute.xlu0 %4324
    %4326 = vrot.lane.b32.xlu0 %v4218, 120
    %v4327 = vpop.permute.xlu0 %4326
    %4328 = vrot.lane.b32.xlu0 %v4208, 88
    %v4329 = vpop.permute.xlu0 %4328
    %4330 = vrot.lane.b32.xlu0 %v4213, 88
    %v4331 = vpop.permute.xlu0 %4330
    %4332 = vrot.lane.b32.xlu0 %v4218, 88
    %v4333 = vpop.permute.xlu0 %4332
    %v4334 = vsel %vm347, %v4323, 0
    %v4336 = vsel %vm347, %v4325, 0
    %v4338 = vsel %vm347, %v4327, 0
    %v4340 = vsel %vm347, %v4329, 0
    %v4342 = vsel %vm347, %v4331, 0
    %v4344 = vsel %vm347, %v4333, 0
    %4346 = vmatprep.subr.mxu0 0.0
    %4347 = vmatpush1.xpose.msra.mxu0 0.0
    %4348 = vmatprep.subr.mxu0 0.0
    %4349 = vmatpush1.xpose.msra.mxu0 0.0
    %4350 = vmatprep.subr.mxu0 0.0
    %4351 = vmatpush1.xpose.msra.mxu0 0.0
    %4352 = vmatprep.subr.mxu0 0.0
    %4353 = vmatpush1.xpose.msra.mxu0 0.0
    %4354 = vmatprep.subr.mxu0 0.0
    %4355 = vmatpush1.xpose.msra.mxu0 0.0
    %4356 = vmatprep.subr.mxu0 0.0
    %4357 = vmatpush1.xpose.msra.mxu0 0.0
    %4358 = vmatprep.subr.mxu0 0.0
    %4359 = vmatpush1.xpose.msra.mxu0 0.0
    %4360 = vmatprep.subr.mxu0 0.0
    %4361 = vmatpush1.xpose.msra.mxu0 0.0
    %4362 = vmatprep.subr.mxu0 0.0
    %4363 = vmatpush1.xpose.msra.mxu0 0.0
    %4364 = vmatprep.subr.mxu0 0.0
    %4365 = vmatpush1.xpose.msra.mxu0 0.0
    %4366 = vmatprep.subr.mxu0 0.0
    %4367 = vmatpush1.xpose.msra.mxu0 0.0
    %4368 = vmatprep.subr.mxu0 0.0
    %4369 = vmatpush1.xpose.msra.mxu0 0.0
    %4370 = vmatprep.subr.mxu0 0.0
    %4371 = vmatpush1.xpose.msra.mxu0 0.0
    %4372 = vmatprep.subr.mxu0 0.0
    %4373 = vmatpush1.xpose.msra.mxu0 %v4344
    %4374 = vmatprep.subr.mxu0 0.0
    %4375 = vmatpush1.xpose.msra.mxu0 %v4342
    %4376 = vmatprep.subr.mxu0 0.0
    %4377 = vmatpush1.xpose.msra.mxu0 %v4340
    %4378 = vmatprep.subr.mxu0 0.0
    %4379 = vmatpush2.xpose.msra.mxu0 0.0
    %4380 = vmatprep.subr.mxu0 0.0
    %4381 = vmatpush2.xpose.msra.mxu0 0.0
    %4382 = vmatprep.subr.mxu0 0.0
    %4383 = vmatpush2.xpose.msra.mxu0 0.0
    %4384 = vmatprep.subr.mxu0 0.0
    %4385 = vmatpush2.xpose.msra.mxu0 0.0
    %4386 = vmatprep.subr.mxu0 0.0
    %4387 = vmatpush2.xpose.msra.mxu0 0.0
    %4388 = vmatprep.subr.mxu0 0.0
    %4389 = vmatpush2.xpose.msra.mxu0 0.0
    %4390 = vmatprep.subr.mxu0 0.0
    %4391 = vmatpush2.xpose.msra.mxu0 0.0
    %4392 = vmatprep.subr.mxu0 0.0
    %4393 = vmatpush2.xpose.msra.mxu0 0.0
    %4394 = vmatprep.subr.mxu0 0.0
    %4395 = vmatpush2.xpose.msra.mxu0 0.0
    %4396 = vmatprep.subr.mxu0 0.0
    %4397 = vmatpush2.xpose.msra.mxu0 0.0
    %4398 = vmatprep.subr.mxu0 0.0
    %4399 = vmatpush2.xpose.msra.mxu0 0.0
    %4400 = vmatprep.subr.mxu0 0.0
    %4401 = vmatpush2.xpose.msra.mxu0 0.0
    %4402 = vmatprep.subr.mxu0 0.0
    %4403 = vmatpush2.xpose.msra.mxu0 0.0
    %4404 = vmatprep.subr.mxu0 0.0
    %4405 = vmatpush2.xpose.msra.mxu0 0.0
    %4406 = vmatprep.subr.mxu0 0.0
    %4407 = vmatpush2.xpose.msra.mxu0 0.0
    %4408 = vmatprep.subr.mxu0 0.0
    %4409 = vmatpush2.xpose.msra.mxu0 0.0
    %4410 = vmatprep.mubr.f32.mxu0 0.0
    %4411 = vmatmul.mubr.f32.gmra.mxu0 %v4334
    %v4412 = vpop.f32.mrf.mxu0
    %v4413 = vadd.f32 0.0, %v4412
    %v4414 = vpop.f32.mrf.mxu0
    %4415 = vmatprep.mubr.f32.mxu0 0.0
    %4416 = vmatmul.mubr.f32.gmra.mxu0 %v4336
    %v4417 = vpop.f32.mrf.mxu0
    %v4418 = vadd.f32 0.0, %v4417
    %v4419 = vpop.f32.mrf.mxu0
    %4420 = vmatprep.mubr.f32.mxu0 0.0
    %4421 = vmatmul.mubr.f32.gmra.mxu0 %v4338
    %v4422 = vpop.f32.mrf.mxu0
    %v4423 = vadd.f32 0.0, %v4422
    %v4424 = vpop.f32.mrf.mxu0
    %4425 = vdwg.mxu0
    %4426 = vrot.lane.b32.xlu0 %v4208, 112
    %v4427 = vpop.permute.xlu0 %4426
    %4428 = vrot.lane.b32.xlu0 %v4213, 112
    %v4429 = vpop.permute.xlu0 %4428
    %4430 = vrot.lane.b32.xlu0 %v4218, 112
    %v4431 = vpop.permute.xlu0 %4430
    %4432 = vrot.lane.b32.xlu0 %v4208, 80
    %v4433 = vpop.permute.xlu0 %4432
    %4434 = vrot.lane.b32.xlu0 %v4213, 80
    %v4435 = vpop.permute.xlu0 %4434
    %4436 = vrot.lane.b32.xlu0 %v4218, 80
    %v4437 = vpop.permute.xlu0 %4436
    %v4438 = vsel %vm347, %v4427, 0
    %v4440 = vsel %vm347, %v4429, 0
    %v4442 = vsel %vm347, %v4431, 0
    %v4444 = vsel %vm347, %v4433, 0
    %v4446 = vsel %vm347, %v4435, 0
    %v4448 = vsel %vm347, %v4437, 0
    %4450 = vmatprep.subr.mxu0 0.0
    %4451 = vmatpush1.xpose.msra.mxu0 0.0
    %4452 = vmatprep.subr.mxu0 0.0
    %4453 = vmatpush1.xpose.msra.mxu0 0.0
    %4454 = vmatprep.subr.mxu0 0.0
    %4455 = vmatpush1.xpose.msra.mxu0 0.0
    %4456 = vmatprep.subr.mxu0 0.0
    %4457 = vmatpush1.xpose.msra.mxu0 0.0
    %4458 = vmatprep.subr.mxu0 0.0
    %4459 = vmatpush1.xpose.msra.mxu0 0.0
    %4460 = vmatprep.subr.mxu0 0.0
    %4461 = vmatpush1.xpose.msra.mxu0 0.0
    %4462 = vmatprep.subr.mxu0 0.0
    %4463 = vmatpush1.xpose.msra.mxu0 0.0
    %4464 = vmatprep.subr.mxu0 0.0
    %4465 = vmatpush1.xpose.msra.mxu0 0.0
    %4466 = vmatprep.subr.mxu0 0.0
    %4467 = vmatpush1.xpose.msra.mxu0 0.0
    %4468 = vmatprep.subr.mxu0 0.0
    %4469 = vmatpush1.xpose.msra.mxu0 0.0
    %4470 = vmatprep.subr.mxu0 0.0
    %4471 = vmatpush1.xpose.msra.mxu0 0.0
    %4472 = vmatprep.subr.mxu0 0.0
    %4473 = vmatpush1.xpose.msra.mxu0 0.0
    %4474 = vmatprep.subr.mxu0 0.0
    %4475 = vmatpush1.xpose.msra.mxu0 0.0
    %4476 = vmatprep.subr.mxu0 0.0
    %4477 = vmatpush1.xpose.msra.mxu0 %v4448
    %4478 = vmatprep.subr.mxu0 0.0
    %4479 = vmatpush1.xpose.msra.mxu0 %v4446
    %4480 = vmatprep.subr.mxu0 0.0
    %4481 = vmatpush1.xpose.msra.mxu0 %v4444
    %4482 = vmatprep.subr.mxu0 0.0
    %4483 = vmatpush2.xpose.msra.mxu0 0.0
    %4484 = vmatprep.subr.mxu0 0.0
    %4485 = vmatpush2.xpose.msra.mxu0 0.0
    %4486 = vmatprep.subr.mxu0 0.0
    %4487 = vmatpush2.xpose.msra.mxu0 0.0
    %4488 = vmatprep.subr.mxu0 0.0
    %4489 = vmatpush2.xpose.msra.mxu0 0.0
    %4490 = vmatprep.subr.mxu0 0.0
    %4491 = vmatpush2.xpose.msra.mxu0 0.0
    %4492 = vmatprep.subr.mxu0 0.0
    %4493 = vmatpush2.xpose.msra.mxu0 0.0
    %4494 = vmatprep.subr.mxu0 0.0
    %4495 = vmatpush2.xpose.msra.mxu0 0.0
    %4496 = vmatprep.subr.mxu0 0.0
    %4497 = vmatpush2.xpose.msra.mxu0 0.0
    %4498 = vmatprep.subr.mxu0 0.0
    %4499 = vmatpush2.xpose.msra.mxu0 0.0
    %4500 = vmatprep.subr.mxu0 0.0
    %4501 = vmatpush2.xpose.msra.mxu0 0.0
    %4502 = vmatprep.subr.mxu0 0.0
    %4503 = vmatpush2.xpose.msra.mxu0 0.0
    %4504 = vmatprep.subr.mxu0 0.0
    %4505 = vmatpush2.xpose.msra.mxu0 0.0
    %4506 = vmatprep.subr.mxu0 0.0
    %4507 = vmatpush2.xpose.msra.mxu0 0.0
    %4508 = vmatprep.subr.mxu0 0.0
    %4509 = vmatpush2.xpose.msra.mxu0 0.0
    %4510 = vmatprep.subr.mxu0 0.0
    %4511 = vmatpush2.xpose.msra.mxu0 0.0
    %4512 = vmatprep.subr.mxu0 0.0
    %4513 = vmatpush2.xpose.msra.mxu0 0.0
    %4514 = vmatprep.mubr.f32.mxu0 0.0
    %4515 = vmatmul.mubr.f32.gmra.mxu0 %v4438
    %v4516 = vpop.f32.mrf.mxu0
    %v4517 = vadd.f32 0.0, %v4516
    %v4518 = vpop.f32.mrf.mxu0
    %4519 = vmatprep.mubr.f32.mxu0 0.0
    %4520 = vmatmul.mubr.f32.gmra.mxu0 %v4440
    %v4521 = vpop.f32.mrf.mxu0
    %v4522 = vadd.f32 0.0, %v4521
    %v4523 = vpop.f32.mrf.mxu0
    %4524 = vmatprep.mubr.f32.mxu0 0.0
    %4525 = vmatmul.mubr.f32.gmra.mxu0 %v4442
    %v4526 = vpop.f32.mrf.mxu0
    %v4527 = vadd.f32 0.0, %v4526
    %v4528 = vpop.f32.mrf.mxu0
    %4529 = vdwg.mxu0
    %4530 = vrot.lane.b32.xlu0 %v4208, 104
    %v4531 = vpop.permute.xlu0 %4530
    %4532 = vrot.lane.b32.xlu0 %v4213, 104
    %v4533 = vpop.permute.xlu0 %4532
    %4534 = vrot.lane.b32.xlu0 %v4218, 104
    %v4535 = vpop.permute.xlu0 %4534
    %4536 = vrot.lane.b32.xlu0 %v4208, 72
    %v4537 = vpop.permute.xlu0 %4536
    %4538 = vrot.lane.b32.xlu0 %v4213, 72
    %v4539 = vpop.permute.xlu0 %4538
    %4540 = vrot.lane.b32.xlu0 %v4218, 72
    %v4541 = vpop.permute.xlu0 %4540
    %v4542 = vsel %vm347, %v4531, 0
    %v4544 = vsel %vm347, %v4533, 0
    %v4546 = vsel %vm347, %v4535, 0
    %v4548 = vsel %vm347, %v4537, 0
    %v4550 = vsel %vm347, %v4539, 0
    %v4552 = vsel %vm347, %v4541, 0
    %4554 = vmatprep.subr.mxu0 0.0
    %4555 = vmatpush1.xpose.msra.mxu0 0.0
    %4556 = vmatprep.subr.mxu0 0.0
    %4557 = vmatpush1.xpose.msra.mxu0 0.0
    %4558 = vmatprep.subr.mxu0 0.0
    %4559 = vmatpush1.xpose.msra.mxu0 0.0
    %4560 = vmatprep.subr.mxu0 0.0
    %4561 = vmatpush1.xpose.msra.mxu0 0.0
    %4562 = vmatprep.subr.mxu0 0.0
    %4563 = vmatpush1.xpose.msra.mxu0 0.0
    %4564 = vmatprep.subr.mxu0 0.0
    %4565 = vmatpush1.xpose.msra.mxu0 0.0
    %4566 = vmatprep.subr.mxu0 0.0
    %4567 = vmatpush1.xpose.msra.mxu0 0.0
    %4568 = vmatprep.subr.mxu0 0.0
    %4569 = vmatpush1.xpose.msra.mxu0 0.0
    %4570 = vmatprep.subr.mxu0 0.0
    %4571 = vmatpush1.xpose.msra.mxu0 0.0
    %4572 = vmatprep.subr.mxu0 0.0
    %4573 = vmatpush1.xpose.msra.mxu0 0.0
    %4574 = vmatprep.subr.mxu0 0.0
    %4575 = vmatpush1.xpose.msra.mxu0 0.0
    %4576 = vmatprep.subr.mxu0 0.0
    %4577 = vmatpush1.xpose.msra.mxu0 0.0
    %4578 = vmatprep.subr.mxu0 0.0
    %4579 = vmatpush1.xpose.msra.mxu0 0.0
    %4580 = vmatprep.subr.mxu0 0.0
    %4581 = vmatpush1.xpose.msra.mxu0 %v4552
    %4582 = vmatprep.subr.mxu0 0.0
    %4583 = vmatpush1.xpose.msra.mxu0 %v4550
    %4584 = vmatprep.subr.mxu0 0.0
    %4585 = vmatpush1.xpose.msra.mxu0 %v4548
    %4586 = vmatprep.subr.mxu0 0.0
    %4587 = vmatpush2.xpose.msra.mxu0 0.0
    %4588 = vmatprep.subr.mxu0 0.0
    %4589 = vmatpush2.xpose.msra.mxu0 0.0
    %4590 = vmatprep.subr.mxu0 0.0
    %4591 = vmatpush2.xpose.msra.mxu0 0.0
    %4592 = vmatprep.subr.mxu0 0.0
    %4593 = vmatpush2.xpose.msra.mxu0 0.0
    %4594 = vmatprep.subr.mxu0 0.0
    %4595 = vmatpush2.xpose.msra.mxu0 0.0
    %4596 = vmatprep.subr.mxu0 0.0
    %4597 = vmatpush2.xpose.msra.mxu0 0.0
    %4598 = vmatprep.subr.mxu0 0.0
    %4599 = vmatpush2.xpose.msra.mxu0 0.0
    %4600 = vmatprep.subr.mxu0 0.0
    %4601 = vmatpush2.xpose.msra.mxu0 0.0
    %4602 = vmatprep.subr.mxu0 0.0
    %4603 = vmatpush2.xpose.msra.mxu0 0.0
    %4604 = vmatprep.subr.mxu0 0.0
    %4605 = vmatpush2.xpose.msra.mxu0 0.0
    %4606 = vmatprep.subr.mxu0 0.0
    %4607 = vmatpush2.xpose.msra.mxu0 0.0
    %4608 = vmatprep.subr.mxu0 0.0
    %4609 = vmatpush2.xpose.msra.mxu0 0.0
    %4610 = vmatprep.subr.mxu0 0.0
    %4611 = vmatpush2.xpose.msra.mxu0 0.0
    %4612 = vmatprep.subr.mxu0 0.0
    %4613 = vmatpush2.xpose.msra.mxu0 0.0
    %4614 = vmatprep.subr.mxu0 0.0
    %4615 = vmatpush2.xpose.msra.mxu0 0.0
    %4616 = vmatprep.subr.mxu0 0.0
    %4617 = vmatpush2.xpose.msra.mxu0 0.0
    %4618 = vmatprep.mubr.f32.mxu0 0.0
    %4619 = vmatmul.mubr.f32.gmra.mxu0 %v4542
    %v4620 = vpop.f32.mrf.mxu0
    %v4621 = vadd.f32 0.0, %v4620
    %v4622 = vpop.f32.mrf.mxu0
    %4623 = vmatprep.mubr.f32.mxu0 0.0
    %4624 = vmatmul.mubr.f32.gmra.mxu0 %v4544
    %v4625 = vpop.f32.mrf.mxu0
    %v4626 = vadd.f32 0.0, %v4625
    %v4627 = vpop.f32.mrf.mxu0
    %4628 = vmatprep.mubr.f32.mxu0 0.0
    %4629 = vmatmul.mubr.f32.gmra.mxu0 %v4546
    %v4630 = vpop.f32.mrf.mxu0
    %v4631 = vadd.f32 0.0, %v4630
    %v4632 = vpop.f32.mrf.mxu0
    %4633 = vdwg.mxu0
    %v4634 = vsel %vm752, %v4309, -inf
    %4635 = vmax.xlane.f32.xlu0 %v4634
    %v4636 = vpop.xlane.xlu0 %4635
    %v4637 = vsel %vm752, %v4314, -inf
    %4638 = vmax.xlane.f32.xlu0 %v4637
    %v4639 = vpop.xlane.xlu0 %4638
    %v4640 = vsel %vm759, %v4319, -inf
    %4641 = vmax.xlane.f32.xlu0 %v4640
    %v4642 = vpop.xlane.xlu0 %4641
    %v4643 = vsel %vm752, %v4413, -inf
    %4644 = vmax.xlane.f32.xlu0 %v4643
    %v4645 = vpop.xlane.xlu0 %4644
    %v4646 = vsel %vm752, %v4418, -inf
    %4647 = vmax.xlane.f32.xlu0 %v4646
    %v4648 = vpop.xlane.xlu0 %4647
    %v4649 = vsel %vm759, %v4423, -inf
    %4650 = vmax.xlane.f32.xlu0 %v4649
    %v4651 = vpop.xlane.xlu0 %4650
    %v4652 = vsel %vm752, %v4517, -inf
    %4653 = vmax.xlane.f32.xlu0 %v4652
    %v4654 = vpop.xlane.xlu0 %4653
    %v4655 = vsel %vm752, %v4522, -inf
    %4656 = vmax.xlane.f32.xlu0 %v4655
    %v4657 = vpop.xlane.xlu0 %4656
    %v4658 = vsel %vm759, %v4527, -inf
    %4659 = vmax.xlane.f32.xlu0 %v4658
    %v4660 = vpop.xlane.xlu0 %4659
    %v4661 = vsel %vm752, %v4621, -inf
    %4662 = vmax.xlane.f32.xlu0 %v4661
    %v4663 = vpop.xlane.xlu0 %4662
    %v4664 = vsel %vm752, %v4626, -inf
    %4665 = vmax.xlane.f32.xlu0 %v4664
    %v4666 = vpop.xlane.xlu0 %4665
    %v4667 = vsel %vm759, %v4631, -inf
    %4668 = vmax.xlane.f32.xlu0 %v4667
    %v4669 = vpop.xlane.xlu0 %4668
    %v4670 = vsub.f32 %v4309, %v4636
    %v4671 = vsub.f32 %v4314, %v4639
    %v4672 = vsub.f32 %v4319, %v4642
    %v4673 = vsub.f32 %v4413, %v4645
    %v4674 = vsub.f32 %v4418, %v4648
    %v4675 = vsub.f32 %v4423, %v4651
    %v4676 = vsub.f32 %v4517, %v4654
    %v4677 = vsub.f32 %v4522, %v4657
    %v4678 = vsub.f32 %v4527, %v4660
    %v4679 = vsub.f32 %v4621, %v4663
    %v4680 = vsub.f32 %v4626, %v4666
    %v4681 = vsub.f32 %v4631, %v4669
    %v4682 = vmul.f32 %v4670, 1.442695
    %v4683 = vpow.pop %v4682
    %v4684 = vmul.f32 %v4671, 1.442695
    %v4685 = vpow.pop %v4684
    %v4686 = vmul.f32 %v4672, 1.442695
    %v4687 = vpow.pop %v4686
    %v4688 = vmul.f32 %v4673, 1.442695
    %v4689 = vpow.pop %v4688
    %v4690 = vmul.f32 %v4674, 1.442695
    %v4691 = vpow.pop %v4690
    %v4692 = vmul.f32 %v4675, 1.442695
    %v4693 = vpow.pop %v4692
    %v4694 = vmul.f32 %v4676, 1.442695
    %v4695 = vpow.pop %v4694
    %v4696 = vmul.f32 %v4677, 1.442695
    %v4697 = vpow.pop %v4696
    %v4698 = vmul.f32 %v4678, 1.442695
    %v4699 = vpow.pop %v4698
    %v4700 = vmul.f32 %v4679, 1.442695
    %v4701 = vpow.pop %v4700
    %v4702 = vmul.f32 %v4680, 1.442695
    %v4703 = vpow.pop %v4702
    %v4704 = vmul.f32 %v4681, 1.442695
    %v4705 = vpow.pop %v4704
    %v4706 = vsel %vm752, %v4683, 0.0
    %4707 = vadd.xlane.f32.xlu0 %v4706
    %v4708 = vpop.xlane.xlu0 %4707
    %v4709 = vsel %vm752, %v4685, 0.0
    %4710 = vadd.xlane.f32.xlu0 %v4709
    %v4711 = vpop.xlane.xlu0 %4710
    %v4712 = vsel %vm759, %v4687, 0.0
    %4713 = vadd.xlane.f32.xlu0 %v4712
    %v4714 = vpop.xlane.xlu0 %4713
    %v4715 = vsel %vm752, %v4689, 0.0
    %4716 = vadd.xlane.f32.xlu0 %v4715
    %v4717 = vpop.xlane.xlu0 %4716
    %v4718 = vsel %vm752, %v4691, 0.0
    %4719 = vadd.xlane.f32.xlu0 %v4718
    %v4720 = vpop.xlane.xlu0 %4719
    %v4721 = vsel %vm759, %v4693, 0.0
    %4722 = vadd.xlane.f32.xlu0 %v4721
    %v4723 = vpop.xlane.xlu0 %4722
    %v4724 = vsel %vm752, %v4695, 0.0
    %4725 = vadd.xlane.f32.xlu0 %v4724
    %v4726 = vpop.xlane.xlu0 %4725
    %v4727 = vsel %vm752, %v4697, 0.0
    %4728 = vadd.xlane.f32.xlu0 %v4727
    %v4729 = vpop.xlane.xlu0 %4728
    %v4730 = vsel %vm759, %v4699, 0.0
    %4731 = vadd.xlane.f32.xlu0 %v4730
    %v4732 = vpop.xlane.xlu0 %4731
    %v4733 = vsel %vm752, %v4701, 0.0
    %4734 = vadd.xlane.f32.xlu0 %v4733
    %v4735 = vpop.xlane.xlu0 %4734
    %v4736 = vsel %vm752, %v4703, 0.0
    %4737 = vadd.xlane.f32.xlu0 %v4736
    %v4738 = vpop.xlane.xlu0 %4737
    %v4739 = vsel %vm759, %v4705, 0.0
    %4740 = vadd.xlane.f32.xlu0 %v4739
    %v4741 = vpop.xlane.xlu0 %4740
    %v4742 = vrcp.pop %v4708
    %v4743 = vrcp.pop %v4711
    %v4744 = vrcp.pop %v4714
    %v4745 = vrcp.pop %v4717
    %v4746 = vrcp.pop %v4720
    %v4747 = vrcp.pop %v4723
    %v4748 = vrcp.pop %v4726
    %v4749 = vrcp.pop %v4729
    %v4750 = vrcp.pop %v4732
    %v4751 = vrcp.pop %v4735
    %v4752 = vrcp.pop %v4738
    %v4753 = vrcp.pop %v4741
    %v4754 = vmul.f32 %v4683, %v4742
    %v4755 = vmul.f32 %v4685, %v4743
    %v4756 = vmul.f32 %v4687, %v4744
    %v4757 = vmul.f32 %v4689, %v4745
    %v4758 = vmul.f32 %v4691, %v4746
    %v4759 = vmul.f32 %v4693, %v4747
    %v4760 = vmul.f32 %v4695, %v4748
    %v4761 = vmul.f32 %v4697, %v4749
    %v4762 = vmul.f32 %v4699, %v4750
    %v4763 = vmul.f32 %v4701, %v4751
    %v4764 = vmul.f32 %v4703, %v4752
    %v4765 = vmul.f32 %v4705, %v4753
    %v4766 = vld [vmem:[%s9] sm:$0x1]
    %4767 = vrot.lane.b32.xlu0 %v4208, 64
    %v4768 = vpop.permute.xlu0 %4767
    %4769 = vrot.lane.b32.xlu0 %v4213, 64
    %v4770 = vpop.permute.xlu0 %4769
    %4771 = vrot.lane.b32.xlu0 %v4218, 64
    %v4772 = vpop.permute.xlu0 %4771
    %v4776 = vsel %vm752, %v4754, 0
    %v4779 = vsel %vm752, %v4755, 0
    %v4782 = vsel %vm752, %v4756, 0
    %v4784 = vsel %vm904, %v4772, 0
    %4786 = vmatprep.subr.mxu0 0.0
    %4787 = vmatpush1.msra.mxu0 0.0
    %4788 = vmatprep.subr.mxu0 0.0
    %4789 = vmatpush1.msra.mxu0 0.0
    %4790 = vmatprep.subr.mxu0 0.0
    %4791 = vmatpush1.msra.mxu0 0.0
    %4792 = vmatprep.subr.mxu0 0.0
    %4793 = vmatpush1.msra.mxu0 0.0
    %4794 = vmatprep.subr.mxu0 0.0
    %4795 = vmatpush1.msra.mxu0 0.0
    %4796 = vmatprep.subr.mxu0 0.0
    %4797 = vmatpush1.msra.mxu0 0.0
    %4798 = vmatprep.subr.mxu0 0.0
    %4799 = vmatpush1.msra.mxu0 0.0
    %4800 = vmatprep.subr.mxu0 0.0
    %4801 = vmatpush1.msra.mxu0 0.0
    %4802 = vmatprep.subr.mxu0 0.0
    %4803 = vmatpush1.msra.mxu0 0.0
    %4804 = vmatprep.subr.mxu0 0.0
    %4805 = vmatpush1.msra.mxu0 0.0
    %4806 = vmatprep.subr.mxu0 0.0
    %4807 = vmatpush1.msra.mxu0 0.0
    %4808 = vmatprep.subr.mxu0 0.0
    %4809 = vmatpush1.msra.mxu0 0.0
    %4810 = vmatprep.subr.mxu0 0.0
    %4811 = vmatpush1.msra.mxu0 0.0
    %4812 = vmatprep.subr.mxu0 0.0
    %4813 = vmatpush1.msra.mxu0 %v4784
    %4814 = vmatprep.subr.mxu0 0.0
    %4815 = vmatpush1.msra.mxu0 %v4770
    %4816 = vmatprep.subr.mxu0 0.0
    %4817 = vmatpush1.msra.mxu0 %v4768
    %4818 = vmatprep.subr.mxu0 0.0
    %4819 = vmatpush2.msra.mxu0 0.0
    %4820 = vmatprep.subr.mxu0 0.0
    %4821 = vmatpush2.msra.mxu0 0.0
    %4822 = vmatprep.subr.mxu0 0.0
    %4823 = vmatpush2.msra.mxu0 0.0
    %4824 = vmatprep.subr.mxu0 0.0
    %4825 = vmatpush2.msra.mxu0 0.0
    %4826 = vmatprep.subr.mxu0 0.0
    %4827 = vmatpush2.msra.mxu0 0.0
    %4828 = vmatprep.subr.mxu0 0.0
    %4829 = vmatpush2.msra.mxu0 0.0
    %4830 = vmatprep.subr.mxu0 0.0
    %4831 = vmatpush2.msra.mxu0 0.0
    %4832 = vmatprep.subr.mxu0 0.0
    %4833 = vmatpush2.msra.mxu0 0.0
    %4834 = vmatprep.subr.mxu0 0.0
    %4835 = vmatpush2.msra.mxu0 0.0
    %4836 = vmatprep.subr.mxu0 0.0
    %4837 = vmatpush2.msra.mxu0 0.0
    %4838 = vmatprep.subr.mxu0 0.0
    %4839 = vmatpush2.msra.mxu0 0.0
    %4840 = vmatprep.subr.mxu0 0.0
    %4841 = vmatpush2.msra.mxu0 0.0
    %4842 = vmatprep.subr.mxu0 0.0
    %4843 = vmatpush2.msra.mxu0 0.0
    %4844 = vmatprep.subr.mxu0 0.0
    %4845 = vmatpush2.msra.mxu0 0.0
    %4846 = vmatprep.subr.mxu0 0.0
    %4847 = vmatpush2.msra.mxu0 0.0
    %4848 = vmatprep.subr.mxu0 0.0
    %4849 = vmatpush2.msra.mxu0 0.0
    %4850 = vmatprep.mubr.f32.mxu0 0.0
    %4851 = vmatmul.mubr.f32.gmra.mxu0 %v4776
    %v4852 = vpop.f32.mrf.mxu0
    %v4853 = vadd.f32 0.0, %v4852
    %v4854 = vpop.f32.mrf.mxu0
    %4855 = vmatprep.mubr.f32.mxu0 0.0
    %4856 = vmatmul.mubr.f32.gmra.mxu0 %v4779
    %v4857 = vpop.f32.mrf.mxu0
    %v4858 = vadd.f32 0.0, %v4857
    %v4859 = vpop.f32.mrf.mxu0
    %4860 = vmatprep.mubr.f32.mxu0 0.0
    %4861 = vmatmul.mubr.f32.gmra.mxu0 %v4782
    %v4862 = vpop.f32.mrf.mxu0
    %v4863 = vadd.f32 0.0, %v4862
    %v4864 = vpop.f32.mrf.mxu0
    %4865 = vdwg.mxu0
    %v4866 = vld [vmem:[%s8] sm:$0xff]
    %v4868 = vsel %vm347, %v4853, 0
    %v4871 = vsel %vm347, %v4858, 0
    %v4874 = vsel %vm347, %v4863, 0
    %4876 = vmatprep.subr.mxu0 0.0
    %4877 = vmatpush1.msra.mxu0 0.0
    %4878 = vmatprep.subr.mxu0 0.0
    %4879 = vmatpush1.msra.mxu0 0.0
    %4880 = vmatprep.subr.mxu0 0.0
    %4881 = vmatpush1.msra.mxu0 0.0
    %4882 = vmatprep.subr.mxu0 0.0
    %4883 = vmatpush1.msra.mxu0 0.0
    %4884 = vmatprep.subr.mxu0 0.0
    %4885 = vmatpush1.msra.mxu0 0.0
    %4886 = vmatprep.subr.mxu0 0.0
    %4887 = vmatpush1.msra.mxu0 0.0
    %4888 = vmatprep.subr.mxu0 0.0
    %4889 = vmatpush1.msra.mxu0 0.0
    %4890 = vmatprep.subr.mxu0 0.0
    %4891 = vmatpush1.msra.mxu0 0.0
    %4892 = vmatprep.subr.mxu0 0.0
    %4893 = vmatpush1.msra.mxu0 0.0
    %4894 = vmatprep.subr.mxu0 0.0
    %4895 = vmatpush1.msra.mxu0 0.0
    %4896 = vmatprep.subr.mxu0 0.0
    %4897 = vmatpush1.msra.mxu0 0.0
    %4898 = vmatprep.subr.mxu0 0.0
    %4899 = vmatpush1.msra.mxu0 0.0
    %4900 = vmatprep.subr.mxu0 0.0
    %4901 = vmatpush1.msra.mxu0 0.0
    %4902 = vmatprep.subr.mxu0 0.0
    %4903 = vmatpush1.msra.mxu0 0.0
    %4904 = vmatprep.subr.mxu0 0.0
    %4905 = vmatpush1.msra.mxu0 0.0
    %4906 = vmatprep.subr.mxu0 0.0
    %4907 = vmatpush1.msra.mxu0 %v4866
    %4908 = vmatprep.subr.mxu0 0.0
    %4909 = vmatpush2.msra.mxu0 0.0
    %4910 = vmatprep.subr.mxu0 0.0
    %4911 = vmatpush2.msra.mxu0 0.0
    %4912 = vmatprep.subr.mxu0 0.0
    %4913 = vmatpush2.msra.mxu0 0.0
    %4914 = vmatprep.subr.mxu0 0.0
    %4915 = vmatpush2.msra.mxu0 0.0
    %4916 = vmatprep.subr.mxu0 0.0
    %4917 = vmatpush2.msra.mxu0 0.0
    %4918 = vmatprep.subr.mxu0 0.0
    %4919 = vmatpush2.msra.mxu0 0.0
    %4920 = vmatprep.subr.mxu0 0.0
    %4921 = vmatpush2.msra.mxu0 0.0
    %4922 = vmatprep.subr.mxu0 0.0
    %4923 = vmatpush2.msra.mxu0 0.0
    %4924 = vmatprep.subr.mxu0 0.0
    %4925 = vmatpush2.msra.mxu0 0.0
    %4926 = vmatprep.subr.mxu0 0.0
    %4927 = vmatpush2.msra.mxu0 0.0
    %4928 = vmatprep.subr.mxu0 0.0
    %4929 = vmatpush2.msra.mxu0 0.0
    %4930 = vmatprep.subr.mxu0 0.0
    %4931 = vmatpush2.msra.mxu0 0.0
    %4932 = vmatprep.subr.mxu0 0.0
    %4933 = vmatpush2.msra.mxu0 0.0
    %4934 = vmatprep.subr.mxu0 0.0
    %4935 = vmatpush2.msra.mxu0 0.0
    %4936 = vmatprep.subr.mxu0 0.0
    %4937 = vmatpush2.msra.mxu0 0.0
    %4938 = vmatprep.subr.mxu0 0.0
    %4939 = vmatpush2.msra.mxu0 0.0
    %4940 = vmatprep.mubr.f32.mxu0 0.0
    %4941 = vmatmul.mubr.f32.gmra.mxu0 %v4868
    %v4942 = vpop.f32.mrf.mxu0
    %v4943 = vadd.f32 0.0, %v4942
    %v4944 = vpop.f32.mrf.mxu0
    %4945 = vmatprep.mubr.f32.mxu0 0.0
    %4946 = vmatmul.mubr.f32.gmra.mxu0 %v4871
    %v4947 = vpop.f32.mrf.mxu0
    %v4948 = vadd.f32 0.0, %v4947
    %v4949 = vpop.f32.mrf.mxu0
    %4950 = vmatprep.mubr.f32.mxu0 0.0
    %4951 = vmatmul.mubr.f32.gmra.mxu0 %v4874
    %v4952 = vpop.f32.mrf.mxu0
    %v4953 = vadd.f32 0.0, %v4952
    %v4954 = vpop.f32.mrf.mxu0
    %4955 = vdwg.mxu0
    %v4957 = vlaneseq
    %v4958 = vshrl.u32 %v4957, 7
    %v4959 = vsub.s32 0, %v4958
    %v4960 = vrot.slane %v4766, %v4959
    %v4962 = vadd.f32 %v4960, %v4943
    %v4963 = vadd.f32 %v4960, %v4948
    %v4964 = vadd.f32 %v4960, %v4953
    %4965 = vrot.lane.b32.xlu0 %v4208, 56
    %v4966 = vpop.permute.xlu0 %4965
    %4967 = vrot.lane.b32.xlu0 %v4213, 56
    %v4968 = vpop.permute.xlu0 %4967
    %4969 = vrot.lane.b32.xlu0 %v4218, 56
    %v4970 = vpop.permute.xlu0 %4969
    %v4974 = vsel %vm752, %v4757, 0
    %v4977 = vsel %vm752, %v4758, 0
    %v4980 = vsel %vm752, %v4759, 0
    %v4982 = vsel %vm904, %v4970, 0
    %4984 = vmatprep.subr.mxu0 0.0
    %4985 = vmatpush1.msra.mxu0 0.0
    %4986 = vmatprep.subr.mxu0 0.0
    %4987 = vmatpush1.msra.mxu0 0.0
    %4988 = vmatprep.subr.mxu0 0.0
    %4989 = vmatpush1.msra.mxu0 0.0
    %4990 = vmatprep.subr.mxu0 0.0
    %4991 = vmatpush1.msra.mxu0 0.0
    %4992 = vmatprep.subr.mxu0 0.0
    %4993 = vmatpush1.msra.mxu0 0.0
    %4994 = vmatprep.subr.mxu0 0.0
    %4995 = vmatpush1.msra.mxu0 0.0
    %4996 = vmatprep.subr.mxu0 0.0
    %4997 = vmatpush1.msra.mxu0 0.0
    %4998 = vmatprep.subr.mxu0 0.0
    %4999 = vmatpush1.msra.mxu0 0.0
    %5000 = vmatprep.subr.mxu0 0.0
    %5001 = vmatpush1.msra.mxu0 0.0
    %5002 = vmatprep.subr.mxu0 0.0
    %5003 = vmatpush1.msra.mxu0 0.0
    %5004 = vmatprep.subr.mxu0 0.0
    %5005 = vmatpush1.msra.mxu0 0.0
    %5006 = vmatprep.subr.mxu0 0.0
    %5007 = vmatpush1.msra.mxu0 0.0
    %5008 = vmatprep.subr.mxu0 0.0
    %5009 = vmatpush1.msra.mxu0 0.0
    %5010 = vmatprep.subr.mxu0 0.0
    %5011 = vmatpush1.msra.mxu0 %v4982
    %5012 = vmatprep.subr.mxu0 0.0
    %5013 = vmatpush1.msra.mxu0 %v4968
    %5014 = vmatprep.subr.mxu0 0.0
    %5015 = vmatpush1.msra.mxu0 %v4966
    %5016 = vmatprep.subr.mxu0 0.0
    %5017 = vmatpush2.msra.mxu0 0.0
    %5018 = vmatprep.subr.mxu0 0.0
    %5019 = vmatpush2.msra.mxu0 0.0
    %5020 = vmatprep.subr.mxu0 0.0
    %5021 = vmatpush2.msra.mxu0 0.0
    %5022 = vmatprep.subr.mxu0 0.0
    %5023 = vmatpush2.msra.mxu0 0.0
    %5024 = vmatprep.subr.mxu0 0.0
    %5025 = vmatpush2.msra.mxu0 0.0
    %5026 = vmatprep.subr.mxu0 0.0
    %5027 = vmatpush2.msra.mxu0 0.0
    %5028 = vmatprep.subr.mxu0 0.0
    %5029 = vmatpush2.msra.mxu0 0.0
    %5030 = vmatprep.subr.mxu0 0.0
    %5031 = vmatpush2.msra.mxu0 0.0
    %5032 = vmatprep.subr.mxu0 0.0
    %5033 = vmatpush2.msra.mxu0 0.0
    %5034 = vmatprep.subr.mxu0 0.0
    %5035 = vmatpush2.msra.mxu0 0.0
    %5036 = vmatprep.subr.mxu0 0.0
    %5037 = vmatpush2.msra.mxu0 0.0
    %5038 = vmatprep.subr.mxu0 0.0
    %5039 = vmatpush2.msra.mxu0 0.0
    %5040 = vmatprep.subr.mxu0 0.0
    %5041 = vmatpush2.msra.mxu0 0.0
    %5042 = vmatprep.subr.mxu0 0.0
    %5043 = vmatpush2.msra.mxu0 0.0
    %5044 = vmatprep.subr.mxu0 0.0
    %5045 = vmatpush2.msra.mxu0 0.0
    %5046 = vmatprep.subr.mxu0 0.0
    %5047 = vmatpush2.msra.mxu0 0.0
    %5048 = vmatprep.mubr.f32.mxu0 0.0
    %5049 = vmatmul.mubr.f32.gmra.mxu0 %v4974
    %v5050 = vpop.f32.mrf.mxu0
    %v5051 = vadd.f32 0.0, %v5050
    %v5052 = vpop.f32.mrf.mxu0
    %5053 = vmatprep.mubr.f32.mxu0 0.0
    %5054 = vmatmul.mubr.f32.gmra.mxu0 %v4977
    %v5055 = vpop.f32.mrf.mxu0
    %v5056 = vadd.f32 0.0, %v5055
    %v5057 = vpop.f32.mrf.mxu0
    %5058 = vmatprep.mubr.f32.mxu0 0.0
    %5059 = vmatmul.mubr.f32.gmra.mxu0 %v4980
    %v5060 = vpop.f32.mrf.mxu0
    %v5061 = vadd.f32 0.0, %v5060
    %v5062 = vpop.f32.mrf.mxu0
    %5063 = vdwg.mxu0
    %v5064 = vld [vmem:[%s1185] sm:$0xff]
    %v5066 = vsel %vm347, %v5051, 0
    %v5069 = vsel %vm347, %v5056, 0
    %v5072 = vsel %vm347, %v5061, 0
    %5074 = vmatprep.subr.mxu0 0.0
    %5075 = vmatpush1.msra.mxu0 0.0
    %5076 = vmatprep.subr.mxu0 0.0
    %5077 = vmatpush1.msra.mxu0 0.0
    %5078 = vmatprep.subr.mxu0 0.0
    %5079 = vmatpush1.msra.mxu0 0.0
    %5080 = vmatprep.subr.mxu0 0.0
    %5081 = vmatpush1.msra.mxu0 0.0
    %5082 = vmatprep.subr.mxu0 0.0
    %5083 = vmatpush1.msra.mxu0 0.0
    %5084 = vmatprep.subr.mxu0 0.0
    %5085 = vmatpush1.msra.mxu0 0.0
    %5086 = vmatprep.subr.mxu0 0.0
    %5087 = vmatpush1.msra.mxu0 0.0
    %5088 = vmatprep.subr.mxu0 0.0
    %5089 = vmatpush1.msra.mxu0 0.0
    %5090 = vmatprep.subr.mxu0 0.0
    %5091 = vmatpush1.msra.mxu0 0.0
    %5092 = vmatprep.subr.mxu0 0.0
    %5093 = vmatpush1.msra.mxu0 0.0
    %5094 = vmatprep.subr.mxu0 0.0
    %5095 = vmatpush1.msra.mxu0 0.0
    %5096 = vmatprep.subr.mxu0 0.0
    %5097 = vmatpush1.msra.mxu0 0.0
    %5098 = vmatprep.subr.mxu0 0.0
    %5099 = vmatpush1.msra.mxu0 0.0
    %5100 = vmatprep.subr.mxu0 0.0
    %5101 = vmatpush1.msra.mxu0 0.0
    %5102 = vmatprep.subr.mxu0 0.0
    %5103 = vmatpush1.msra.mxu0 0.0
    %5104 = vmatprep.subr.mxu0 0.0
    %5105 = vmatpush1.msra.mxu0 %v5064
    %5106 = vmatprep.subr.mxu0 0.0
    %5107 = vmatpush2.msra.mxu0 0.0
    %5108 = vmatprep.subr.mxu0 0.0
    %5109 = vmatpush2.msra.mxu0 0.0
    %5110 = vmatprep.subr.mxu0 0.0
    %5111 = vmatpush2.msra.mxu0 0.0
    %5112 = vmatprep.subr.mxu0 0.0
    %5113 = vmatpush2.msra.mxu0 0.0
    %5114 = vmatprep.subr.mxu0 0.0
    %5115 = vmatpush2.msra.mxu0 0.0
    %5116 = vmatprep.subr.mxu0 0.0
    %5117 = vmatpush2.msra.mxu0 0.0
    %5118 = vmatprep.subr.mxu0 0.0
    %5119 = vmatpush2.msra.mxu0 0.0
    %5120 = vmatprep.subr.mxu0 0.0
    %5121 = vmatpush2.msra.mxu0 0.0
    %5122 = vmatprep.subr.mxu0 0.0
    %5123 = vmatpush2.msra.mxu0 0.0
    %5124 = vmatprep.subr.mxu0 0.0
    %5125 = vmatpush2.msra.mxu0 0.0
    %5126 = vmatprep.subr.mxu0 0.0
    %5127 = vmatpush2.msra.mxu0 0.0
    %5128 = vmatprep.subr.mxu0 0.0
    %5129 = vmatpush2.msra.mxu0 0.0
    %5130 = vmatprep.subr.mxu0 0.0
    %5131 = vmatpush2.msra.mxu0 0.0
    %5132 = vmatprep.subr.mxu0 0.0
    %5133 = vmatpush2.msra.mxu0 0.0
    %5134 = vmatprep.subr.mxu0 0.0
    %5135 = vmatpush2.msra.mxu0 0.0
    %5136 = vmatprep.subr.mxu0 0.0
    %5137 = vmatpush2.msra.mxu0 0.0
    %5138 = vmatprep.mubr.f32.mxu0 0.0
    %5139 = vmatmul.mubr.f32.gmra.mxu0 %v5066
    %v5140 = vpop.f32.mrf.mxu0
    %v5141 = vadd.f32 0.0, %v5140
    %v5142 = vpop.f32.mrf.mxu0
    %5143 = vmatprep.mubr.f32.mxu0 0.0
    %5144 = vmatmul.mubr.f32.gmra.mxu0 %v5069
    %v5145 = vpop.f32.mrf.mxu0
    %v5146 = vadd.f32 0.0, %v5145
    %v5147 = vpop.f32.mrf.mxu0
    %5148 = vmatprep.mubr.f32.mxu0 0.0
    %5149 = vmatmul.mubr.f32.gmra.mxu0 %v5072
    %v5150 = vpop.f32.mrf.mxu0
    %v5151 = vadd.f32 0.0, %v5150
    %v5152 = vpop.f32.mrf.mxu0
    %5153 = vdwg.mxu0
    %v5154 = vadd.f32 %v4962, %v5141
    %v5155 = vadd.f32 %v4963, %v5146
    %v5156 = vadd.f32 %v4964, %v5151
    %5157 = vrot.lane.b32.xlu0 %v4208, 48
    %v5158 = vpop.permute.xlu0 %5157
    %5159 = vrot.lane.b32.xlu0 %v4213, 48
    %v5160 = vpop.permute.xlu0 %5159
    %5161 = vrot.lane.b32.xlu0 %v4218, 48
    %v5162 = vpop.permute.xlu0 %5161
    %v5166 = vsel %vm752, %v4760, 0
    %v5169 = vsel %vm752, %v4761, 0
    %v5172 = vsel %vm752, %v4762, 0
    %v5174 = vsel %vm904, %v5162, 0
    %5176 = vmatprep.subr.mxu0 0.0
    %5177 = vmatpush1.msra.mxu0 0.0
    %5178 = vmatprep.subr.mxu0 0.0
    %5179 = vmatpush1.msra.mxu0 0.0
    %5180 = vmatprep.subr.mxu0 0.0
    %5181 = vmatpush1.msra.mxu0 0.0
    %5182 = vmatprep.subr.mxu0 0.0
    %5183 = vmatpush1.msra.mxu0 0.0
    %5184 = vmatprep.subr.mxu0 0.0
    %5185 = vmatpush1.msra.mxu0 0.0
    %5186 = vmatprep.subr.mxu0 0.0
    %5187 = vmatpush1.msra.mxu0 0.0
    %5188 = vmatprep.subr.mxu0 0.0
    %5189 = vmatpush1.msra.mxu0 0.0
    %5190 = vmatprep.subr.mxu0 0.0
    %5191 = vmatpush1.msra.mxu0 0.0
    %5192 = vmatprep.subr.mxu0 0.0
    %5193 = vmatpush1.msra.mxu0 0.0
    %5194 = vmatprep.subr.mxu0 0.0
    %5195 = vmatpush1.msra.mxu0 0.0
    %5196 = vmatprep.subr.mxu0 0.0
    %5197 = vmatpush1.msra.mxu0 0.0
    %5198 = vmatprep.subr.mxu0 0.0
    %5199 = vmatpush1.msra.mxu0 0.0
    %5200 = vmatprep.subr.mxu0 0.0
    %5201 = vmatpush1.msra.mxu0 0.0
    %5202 = vmatprep.subr.mxu0 0.0
    %5203 = vmatpush1.msra.mxu0 %v5174
    %5204 = vmatprep.subr.mxu0 0.0
    %5205 = vmatpush1.msra.mxu0 %v5160
    %5206 = vmatprep.subr.mxu0 0.0
    %5207 = vmatpush1.msra.mxu0 %v5158
    %5208 = vmatprep.subr.mxu0 0.0
    %5209 = vmatpush2.msra.mxu0 0.0
    %5210 = vmatprep.subr.mxu0 0.0
    %5211 = vmatpush2.msra.mxu0 0.0
    %5212 = vmatprep.subr.mxu0 0.0
    %5213 = vmatpush2.msra.mxu0 0.0
    %5214 = vmatprep.subr.mxu0 0.0
    %5215 = vmatpush2.msra.mxu0 0.0
    %5216 = vmatprep.subr.mxu0 0.0
    %5217 = vmatpush2.msra.mxu0 0.0
    %5218 = vmatprep.subr.mxu0 0.0
    %5219 = vmatpush2.msra.mxu0 0.0
    %5220 = vmatprep.subr.mxu0 0.0
    %5221 = vmatpush2.msra.mxu0 0.0
    %5222 = vmatprep.subr.mxu0 0.0
    %5223 = vmatpush2.msra.mxu0 0.0
    %5224 = vmatprep.subr.mxu0 0.0
    %5225 = vmatpush2.msra.mxu0 0.0
    %5226 = vmatprep.subr.mxu0 0.0
    %5227 = vmatpush2.msra.mxu0 0.0
    %5228 = vmatprep.subr.mxu0 0.0
    %5229 = vmatpush2.msra.mxu0 0.0
    %5230 = vmatprep.subr.mxu0 0.0
    %5231 = vmatpush2.msra.mxu0 0.0
    %5232 = vmatprep.subr.mxu0 0.0
    %5233 = vmatpush2.msra.mxu0 0.0
    %5234 = vmatprep.subr.mxu0 0.0
    %5235 = vmatpush2.msra.mxu0 0.0
    %5236 = vmatprep.subr.mxu0 0.0
    %5237 = vmatpush2.msra.mxu0 0.0
    %5238 = vmatprep.subr.mxu0 0.0
    %5239 = vmatpush2.msra.mxu0 0.0
    %5240 = vmatprep.mubr.f32.mxu0 0.0
    %5241 = vmatmul.mubr.f32.gmra.mxu0 %v5166
    %v5242 = vpop.f32.mrf.mxu0
    %v5243 = vadd.f32 0.0, %v5242
    %v5244 = vpop.f32.mrf.mxu0
    %5245 = vmatprep.mubr.f32.mxu0 0.0
    %5246 = vmatmul.mubr.f32.gmra.mxu0 %v5169
    %v5247 = vpop.f32.mrf.mxu0
    %v5248 = vadd.f32 0.0, %v5247
    %v5249 = vpop.f32.mrf.mxu0
    %5250 = vmatprep.mubr.f32.mxu0 0.0
    %5251 = vmatmul.mubr.f32.gmra.mxu0 %v5172
    %v5252 = vpop.f32.mrf.mxu0
    %v5253 = vadd.f32 0.0, %v5252
    %v5254 = vpop.f32.mrf.mxu0
    %5255 = vdwg.mxu0
    %v5256 = vld [vmem:[%s1378] sm:$0xff]
    %v5258 = vsel %vm347, %v5243, 0
    %v5261 = vsel %vm347, %v5248, 0
    %v5264 = vsel %vm347, %v5253, 0
    %5266 = vmatprep.subr.mxu0 0.0
    %5267 = vmatpush1.msra.mxu0 0.0
    %5268 = vmatprep.subr.mxu0 0.0
    %5269 = vmatpush1.msra.mxu0 0.0
    %5270 = vmatprep.subr.mxu0 0.0
    %5271 = vmatpush1.msra.mxu0 0.0
    %5272 = vmatprep.subr.mxu0 0.0
    %5273 = vmatpush1.msra.mxu0 0.0
    %5274 = vmatprep.subr.mxu0 0.0
    %5275 = vmatpush1.msra.mxu0 0.0
    %5276 = vmatprep.subr.mxu0 0.0
    %5277 = vmatpush1.msra.mxu0 0.0
    %5278 = vmatprep.subr.mxu0 0.0
    %5279 = vmatpush1.msra.mxu0 0.0
    %5280 = vmatprep.subr.mxu0 0.0
    %5281 = vmatpush1.msra.mxu0 0.0
    %5282 = vmatprep.subr.mxu0 0.0
    %5283 = vmatpush1.msra.mxu0 0.0
    %5284 = vmatprep.subr.mxu0 0.0
    %5285 = vmatpush1.msra.mxu0 0.0
    %5286 = vmatprep.subr.mxu0 0.0
    %5287 = vmatpush1.msra.mxu0 0.0
    %5288 = vmatprep.subr.mxu0 0.0
    %5289 = vmatpush1.msra.mxu0 0.0
    %5290 = vmatprep.subr.mxu0 0.0
    %5291 = vmatpush1.msra.mxu0 0.0
    %5292 = vmatprep.subr.mxu0 0.0
    %5293 = vmatpush1.msra.mxu0 0.0
    %5294 = vmatprep.subr.mxu0 0.0
    %5295 = vmatpush1.msra.mxu0 0.0
    %5296 = vmatprep.subr.mxu0 0.0
    %5297 = vmatpush1.msra.mxu0 %v5256
    %5298 = vmatprep.subr.mxu0 0.0
    %5299 = vmatpush2.msra.mxu0 0.0
    %5300 = vmatprep.subr.mxu0 0.0
    %5301 = vmatpush2.msra.mxu0 0.0
    %5302 = vmatprep.subr.mxu0 0.0
    %5303 = vmatpush2.msra.mxu0 0.0
    %5304 = vmatprep.subr.mxu0 0.0
    %5305 = vmatpush2.msra.mxu0 0.0
    %5306 = vmatprep.subr.mxu0 0.0
    %5307 = vmatpush2.msra.mxu0 0.0
    %5308 = vmatprep.subr.mxu0 0.0
    %5309 = vmatpush2.msra.mxu0 0.0
    %5310 = vmatprep.subr.mxu0 0.0
    %5311 = vmatpush2.msra.mxu0 0.0
    %5312 = vmatprep.subr.mxu0 0.0
    %5313 = vmatpush2.msra.mxu0 0.0
    %5314 = vmatprep.subr.mxu0 0.0
    %5315 = vmatpush2.msra.mxu0 0.0
    %5316 = vmatprep.subr.mxu0 0.0
    %5317 = vmatpush2.msra.mxu0 0.0
    %5318 = vmatprep.subr.mxu0 0.0
    %5319 = vmatpush2.msra.mxu0 0.0
    %5320 = vmatprep.subr.mxu0 0.0
    %5321 = vmatpush2.msra.mxu0 0.0
    %5322 = vmatprep.subr.mxu0 0.0
    %5323 = vmatpush2.msra.mxu0 0.0
    %5324 = vmatprep.subr.mxu0 0.0
    %5325 = vmatpush2.msra.mxu0 0.0
    %5326 = vmatprep.subr.mxu0 0.0
    %5327 = vmatpush2.msra.mxu0 0.0
    %5328 = vmatprep.subr.mxu0 0.0
    %5329 = vmatpush2.msra.mxu0 0.0
    %5330 = vmatprep.mubr.f32.mxu0 0.0
    %5331 = vmatmul.mubr.f32.gmra.mxu0 %v5258
    %v5332 = vpop.f32.mrf.mxu0
    %v5333 = vadd.f32 0.0, %v5332
    %v5334 = vpop.f32.mrf.mxu0
    %5335 = vmatprep.mubr.f32.mxu0 0.0
    %5336 = vmatmul.mubr.f32.gmra.mxu0 %v5261
    %v5337 = vpop.f32.mrf.mxu0
    %v5338 = vadd.f32 0.0, %v5337
    %v5339 = vpop.f32.mrf.mxu0
    %5340 = vmatprep.mubr.f32.mxu0 0.0
    %5341 = vmatmul.mubr.f32.gmra.mxu0 %v5264
    %v5342 = vpop.f32.mrf.mxu0
    %v5343 = vadd.f32 0.0, %v5342
    %v5344 = vpop.f32.mrf.mxu0
    %5345 = vdwg.mxu0
    %v5346 = vadd.f32 %v5154, %v5333
    %v5347 = vadd.f32 %v5155, %v5338
    %v5348 = vadd.f32 %v5156, %v5343
    %5349 = vrot.lane.b32.xlu0 %v4208, 40
    %v5350 = vpop.permute.xlu0 %5349
    %5351 = vrot.lane.b32.xlu0 %v4213, 40
    %v5352 = vpop.permute.xlu0 %5351
    %5353 = vrot.lane.b32.xlu0 %v4218, 40
    %v5354 = vpop.permute.xlu0 %5353
    %v5358 = vsel %vm752, %v4763, 0
    %v5361 = vsel %vm752, %v4764, 0
    %v5364 = vsel %vm752, %v4765, 0
    %v5366 = vsel %vm904, %v5354, 0
    %5368 = vmatprep.subr.mxu0 0.0
    %5369 = vmatpush1.msra.mxu0 0.0
    %5370 = vmatprep.subr.mxu0 0.0
    %5371 = vmatpush1.msra.mxu0 0.0
    %5372 = vmatprep.subr.mxu0 0.0
    %5373 = vmatpush1.msra.mxu0 0.0
    %5374 = vmatprep.subr.mxu0 0.0
    %5375 = vmatpush1.msra.mxu0 0.0
    %5376 = vmatprep.subr.mxu0 0.0
    %5377 = vmatpush1.msra.mxu0 0.0
    %5378 = vmatprep.subr.mxu0 0.0
    %5379 = vmatpush1.msra.mxu0 0.0
    %5380 = vmatprep.subr.mxu0 0.0
    %5381 = vmatpush1.msra.mxu0 0.0
    %5382 = vmatprep.subr.mxu0 0.0
    %5383 = vmatpush1.msra.mxu0 0.0
    %5384 = vmatprep.subr.mxu0 0.0
    %5385 = vmatpush1.msra.mxu0 0.0
    %5386 = vmatprep.subr.mxu0 0.0
    %5387 = vmatpush1.msra.mxu0 0.0
    %5388 = vmatprep.subr.mxu0 0.0
    %5389 = vmatpush1.msra.mxu0 0.0
    %5390 = vmatprep.subr.mxu0 0.0
    %5391 = vmatpush1.msra.mxu0 0.0
    %5392 = vmatprep.subr.mxu0 0.0
    %5393 = vmatpush1.msra.mxu0 0.0
    %5394 = vmatprep.subr.mxu0 0.0
    %5395 = vmatpush1.msra.mxu0 %v5366
    %5396 = vmatprep.subr.mxu0 0.0
    %5397 = vmatpush1.msra.mxu0 %v5352
    %5398 = vmatprep.subr.mxu0 0.0
    %5399 = vmatpush1.msra.mxu0 %v5350
    %5400 = vmatprep.subr.mxu0 0.0
    %5401 = vmatpush2.msra.mxu0 0.0
    %5402 = vmatprep.subr.mxu0 0.0
    %5403 = vmatpush2.msra.mxu0 0.0
    %5404 = vmatprep.subr.mxu0 0.0
    %5405 = vmatpush2.msra.mxu0 0.0
    %5406 = vmatprep.subr.mxu0 0.0
    %5407 = vmatpush2.msra.mxu0 0.0
    %5408 = vmatprep.subr.mxu0 0.0
    %5409 = vmatpush2.msra.mxu0 0.0
    %5410 = vmatprep.subr.mxu0 0.0
    %5411 = vmatpush2.msra.mxu0 0.0
    %5412 = vmatprep.subr.mxu0 0.0
    %5413 = vmatpush2.msra.mxu0 0.0
    %5414 = vmatprep.subr.mxu0 0.0
    %5415 = vmatpush2.msra.mxu0 0.0
    %5416 = vmatprep.subr.mxu0 0.0
    %5417 = vmatpush2.msra.mxu0 0.0
    %5418 = vmatprep.subr.mxu0 0.0
    %5419 = vmatpush2.msra.mxu0 0.0
    %5420 = vmatprep.subr.mxu0 0.0
    %5421 = vmatpush2.msra.mxu0 0.0
    %5422 = vmatprep.subr.mxu0 0.0
    %5423 = vmatpush2.msra.mxu0 0.0
    %5424 = vmatprep.subr.mxu0 0.0
    %5425 = vmatpush2.msra.mxu0 0.0
    %5426 = vmatprep.subr.mxu0 0.0
    %5427 = vmatpush2.msra.mxu0 0.0
    %5428 = vmatprep.subr.mxu0 0.0
    %5429 = vmatpush2.msra.mxu0 0.0
    %5430 = vmatprep.subr.mxu0 0.0
    %5431 = vmatpush2.msra.mxu0 0.0
    %5432 = vmatprep.mubr.f32.mxu0 0.0
    %5433 = vmatmul.mubr.f32.gmra.mxu0 %v5358
    %v5434 = vpop.f32.mrf.mxu0
    %v5435 = vadd.f32 0.0, %v5434
    %v5436 = vpop.f32.mrf.mxu0
    %5437 = vmatprep.mubr.f32.mxu0 0.0
    %5438 = vmatmul.mubr.f32.gmra.mxu0 %v5361
    %v5439 = vpop.f32.mrf.mxu0
    %v5440 = vadd.f32 0.0, %v5439
    %v5441 = vpop.f32.mrf.mxu0
    %5442 = vmatprep.mubr.f32.mxu0 0.0
    %5443 = vmatmul.mubr.f32.gmra.mxu0 %v5364
    %v5444 = vpop.f32.mrf.mxu0
    %v5445 = vadd.f32 0.0, %v5444
    %v5446 = vpop.f32.mrf.mxu0
    %5447 = vdwg.mxu0
    %v5448 = vld [vmem:[%s1571] sm:$0xff]
    %v5450 = vsel %vm347, %v5435, 0
    %v5453 = vsel %vm347, %v5440, 0
    %v5456 = vsel %vm347, %v5445, 0
    %5458 = vmatprep.subr.mxu0 0.0
    %5459 = vmatpush1.msra.mxu0 0.0
    %5460 = vmatprep.subr.mxu0 0.0
    %5461 = vmatpush1.msra.mxu0 0.0
    %5462 = vmatprep.subr.mxu0 0.0
    %5463 = vmatpush1.msra.mxu0 0.0
    %5464 = vmatprep.subr.mxu0 0.0
    %5465 = vmatpush1.msra.mxu0 0.0
    %5466 = vmatprep.subr.mxu0 0.0
    %5467 = vmatpush1.msra.mxu0 0.0
    %5468 = vmatprep.subr.mxu0 0.0
    %5469 = vmatpush1.msra.mxu0 0.0
    %5470 = vmatprep.subr.mxu0 0.0
    %5471 = vmatpush1.msra.mxu0 0.0
    %5472 = vmatprep.subr.mxu0 0.0
    %5473 = vmatpush1.msra.mxu0 0.0
    %5474 = vmatprep.subr.mxu0 0.0
    %5475 = vmatpush1.msra.mxu0 0.0
    %5476 = vmatprep.subr.mxu0 0.0
    %5477 = vmatpush1.msra.mxu0 0.0
    %5478 = vmatprep.subr.mxu0 0.0
    %5479 = vmatpush1.msra.mxu0 0.0
    %5480 = vmatprep.subr.mxu0 0.0
    %5481 = vmatpush1.msra.mxu0 0.0
    %5482 = vmatprep.subr.mxu0 0.0
    %5483 = vmatpush1.msra.mxu0 0.0
    %5484 = vmatprep.subr.mxu0 0.0
    %5485 = vmatpush1.msra.mxu0 0.0
    %5486 = vmatprep.subr.mxu0 0.0
    %5487 = vmatpush1.msra.mxu0 0.0
    %5488 = vmatprep.subr.mxu0 0.0
    %5489 = vmatpush1.msra.mxu0 %v5448
    %5490 = vmatprep.subr.mxu0 0.0
    %5491 = vmatpush2.msra.mxu0 0.0
    %5492 = vmatprep.subr.mxu0 0.0
    %5493 = vmatpush2.msra.mxu0 0.0
    %5494 = vmatprep.subr.mxu0 0.0
    %5495 = vmatpush2.msra.mxu0 0.0
    %5496 = vmatprep.subr.mxu0 0.0
    %5497 = vmatpush2.msra.mxu0 0.0
    %5498 = vmatprep.subr.mxu0 0.0
    %5499 = vmatpush2.msra.mxu0 0.0
    %5500 = vmatprep.subr.mxu0 0.0
    %5501 = vmatpush2.msra.mxu0 0.0
    %5502 = vmatprep.subr.mxu0 0.0
    %5503 = vmatpush2.msra.mxu0 0.0
    %5504 = vmatprep.subr.mxu0 0.0
    %5505 = vmatpush2.msra.mxu0 0.0
    %5506 = vmatprep.subr.mxu0 0.0
    %5507 = vmatpush2.msra.mxu0 0.0
    %5508 = vmatprep.subr.mxu0 0.0
    %5509 = vmatpush2.msra.mxu0 0.0
    %5510 = vmatprep.subr.mxu0 0.0
    %5511 = vmatpush2.msra.mxu0 0.0
    %5512 = vmatprep.subr.mxu0 0.0
    %5513 = vmatpush2.msra.mxu0 0.0
    %5514 = vmatprep.subr.mxu0 0.0
    %5515 = vmatpush2.msra.mxu0 0.0
    %5516 = vmatprep.subr.mxu0 0.0
    %5517 = vmatpush2.msra.mxu0 0.0
    %5518 = vmatprep.subr.mxu0 0.0
    %5519 = vmatpush2.msra.mxu0 0.0
    %5520 = vmatprep.subr.mxu0 0.0
    %5521 = vmatpush2.msra.mxu0 0.0
    %5522 = vmatprep.mubr.f32.mxu0 0.0
    %5523 = vmatmul.mubr.f32.gmra.mxu0 %v5450
    %v5524 = vpop.f32.mrf.mxu0
    %v5525 = vadd.f32 0.0, %v5524
    %v5526 = vpop.f32.mrf.mxu0
    %5527 = vmatprep.mubr.f32.mxu0 0.0
    %5528 = vmatmul.mubr.f32.gmra.mxu0 %v5453
    %v5529 = vpop.f32.mrf.mxu0
    %v5530 = vadd.f32 0.0, %v5529
    %v5531 = vpop.f32.mrf.mxu0
    %5532 = vmatprep.mubr.f32.mxu0 0.0
    %5533 = vmatmul.mubr.f32.gmra.mxu0 %v5456
    %v5534 = vpop.f32.mrf.mxu0
    %v5535 = vadd.f32 0.0, %v5534
    %v5536 = vpop.f32.mrf.mxu0
    %5537 = vdwg.mxu0
    %v5538 = vadd.f32 %v5346, %v5525
    %v5539 = vadd.f32 %v5347, %v5530
    %v5540 = vadd.f32 %v5348, %v5535
    %v5541 = vadd.f32 %v4049, %v5538
    %v5542 = vadd.f32 %v4054, %v5539
    %v5543 = vadd.f32 %v4059, %v5540
    %v5544 = vld [vmem:[%s10] sm:$0x1]
    %v5545 = vld [vmem:[%s11] sm:$0x1]
    %v5546 = vsel %vm178, %v5541, 0.0
    %5547 = vadd.xlane.f32.xlu0 %v5546
    %v5548 = vpop.xlane.xlu0 %5547
    %v5549 = vsel %vm178, %v5542, 0.0
    %5550 = vadd.xlane.f32.xlu0 %v5549
    %v5551 = vpop.xlane.xlu0 %5550
    %v5552 = vsel %vm185, %v5543, 0.0
    %5553 = vadd.xlane.f32.xlu0 %v5552
    %v5554 = vpop.xlane.xlu0 %5553
    %v5555 = vmul.f32 %v5548, %v189
    %v5556 = vmul.f32 %v5551, %v189
    %v5557 = vmul.f32 %v5554, %v189
    %v5558 = vsub.f32 %v5541, %v5555
    %v5559 = vsub.f32 %v5542, %v5556
    %v5560 = vsub.f32 %v5543, %v5557
    %v5561 = vmul.f32 %v5558, %v5558
    %v5562 = vmul.f32 %v5559, %v5559
    %v5563 = vmul.f32 %v5560, %v5560
    %v5564 = vsel %vm178, %v5561, 0.0
    %5565 = vadd.xlane.f32.xlu0 %v5564
    %v5566 = vpop.xlane.xlu0 %5565
    %v5567 = vsel %vm178, %v5562, 0.0
    %5568 = vadd.xlane.f32.xlu0 %v5567
    %v5569 = vpop.xlane.xlu0 %5568
    %v5570 = vsel %vm185, %v5563, 0.0
    %5571 = vadd.xlane.f32.xlu0 %v5570
    %v5572 = vpop.xlane.xlu0 %5571
    %v5573 = vmul.f32 %v5566, %v189
    %v5574 = vmul.f32 %v5569, %v189
    %v5575 = vmul.f32 %v5572, %v189
    %v5576 = vadd.f32 %v5573, 1e-06
    %v5577 = vadd.f32 %v5574, 1e-06
    %v5578 = vadd.f32 %v5575, 1e-06
    %v5579 = vrsqrt.pop %v5576
    %v5580 = vrsqrt.pop %v5577
    %v5581 = vrsqrt.pop %v5578
    %v5582 = vmul.f32 %v5558, %v5579
    %v5583 = vmul.f32 %v5559, %v5580
    %v5584 = vmul.f32 %v5560, %v5581
    %v5586 = vlaneseq
    %v5587 = vshrl.u32 %v5586, 7
    %v5588 = vsub.s32 0, %v5587
    %v5589 = vrot.slane %v5544, %v5588
    %v5591 = vmul.f32 %v5582, %v5589
    %v5592 = vmul.f32 %v5583, %v5589
    %v5593 = vmul.f32 %v5584, %v5589
    %v5595 = vlaneseq
    %v5596 = vshrl.u32 %v5595, 7
    %v5597 = vsub.s32 0, %v5596
    %v5598 = vrot.slane %v5545, %v5597
    %v5600 = vadd.f32 %v5591, %v5598
    %v5601 = vadd.f32 %v5592, %v5598
    %v5602 = vadd.f32 %v5593, %v5598
    %v5603 = vld [vmem:[%s12] sm:$0xff]
    %v5604 = vld [vmem:[%s12 + $0x8] sm:$0xff]
    %v5605 = vld [vmem:[%s12 + $0x10] sm:$0xff]
    %v5606 = vld [vmem:[%s12 + $0x18] sm:$0xff]
    %v5607 = vld [vmem:[%s13] sm:$0x1]
    %v5609 = vlaneseq
    %v5610 = vshrl.u32 %v5609, 7
    %v5611 = vsub.s32 0, %v5610
    %v5612 = vrot.slane %v5607, %v5611
    %v5615 = vsel %vm178, %v5600, 0
    %v5618 = vsel %vm178, %v5601, 0
    %v5621 = vsel %vm178, %v5602, 0
    %5623 = vmatprep.subr.mxu0 0.0
    %5624 = vmatpush1.msra.mxu0 0.0
    %5625 = vmatprep.subr.mxu0 0.0
    %5626 = vmatpush1.msra.mxu0 0.0
    %5627 = vmatprep.subr.mxu0 0.0
    %5628 = vmatpush1.msra.mxu0 0.0
    %5629 = vmatprep.subr.mxu0 0.0
    %5630 = vmatpush1.msra.mxu0 0.0
    %5631 = vmatprep.subr.mxu0 0.0
    %5632 = vmatpush1.msra.mxu0 0.0
    %5633 = vmatprep.subr.mxu0 0.0
    %5634 = vmatpush1.msra.mxu0 0.0
    %5635 = vmatprep.subr.mxu0 0.0
    %5636 = vmatpush1.msra.mxu0 0.0
    %5637 = vmatprep.subr.mxu0 0.0
    %5638 = vmatpush1.msra.mxu0 0.0
    %5639 = vmatprep.subr.mxu0 0.0
    %5640 = vmatpush1.msra.mxu0 0.0
    %5641 = vmatprep.subr.mxu0 0.0
    %5642 = vmatpush1.msra.mxu0 0.0
    %5643 = vmatprep.subr.mxu0 0.0
    %5644 = vmatpush1.msra.mxu0 0.0
    %5645 = vmatprep.subr.mxu0 0.0
    %5646 = vmatpush1.msra.mxu0 0.0
    %5647 = vmatprep.subr.mxu0 0.0
    %5648 = vmatpush1.msra.mxu0 %v5606
    %5649 = vmatprep.subr.mxu0 0.0
    %5650 = vmatpush1.msra.mxu0 %v5605
    %5651 = vmatprep.subr.mxu0 0.0
    %5652 = vmatpush1.msra.mxu0 %v5604
    %5653 = vmatprep.subr.mxu0 0.0
    %5654 = vmatpush1.msra.mxu0 %v5603
    %5655 = vmatprep.subr.mxu0 0.0
    %5656 = vmatpush2.msra.mxu0 0.0
    %5657 = vmatprep.subr.mxu0 0.0
    %5658 = vmatpush2.msra.mxu0 0.0
    %5659 = vmatprep.subr.mxu0 0.0
    %5660 = vmatpush2.msra.mxu0 0.0
    %5661 = vmatprep.subr.mxu0 0.0
    %5662 = vmatpush2.msra.mxu0 0.0
    %5663 = vmatprep.subr.mxu0 0.0
    %5664 = vmatpush2.msra.mxu0 0.0
    %5665 = vmatprep.subr.mxu0 0.0
    %5666 = vmatpush2.msra.mxu0 0.0
    %5667 = vmatprep.subr.mxu0 0.0
    %5668 = vmatpush2.msra.mxu0 0.0
    %5669 = vmatprep.subr.mxu0 0.0
    %5670 = vmatpush2.msra.mxu0 0.0
    %5671 = vmatprep.subr.mxu0 0.0
    %5672 = vmatpush2.msra.mxu0 0.0
    %5673 = vmatprep.subr.mxu0 0.0
    %5674 = vmatpush2.msra.mxu0 0.0
    %5675 = vmatprep.subr.mxu0 0.0
    %5676 = vmatpush2.msra.mxu0 0.0
    %5677 = vmatprep.subr.mxu0 0.0
    %5678 = vmatpush2.msra.mxu0 0.0
    %5679 = vmatprep.subr.mxu0 0.0
    %5680 = vmatpush2.msra.mxu0 0.0
    %5681 = vmatprep.subr.mxu0 0.0
    %5682 = vmatpush2.msra.mxu0 0.0
    %5683 = vmatprep.subr.mxu0 0.0
    %5684 = vmatpush2.msra.mxu0 0.0
    %5685 = vmatprep.subr.mxu0 0.0
    %5686 = vmatpush2.msra.mxu0 0.0
    %5687 = vmatprep.mubr.f32.mxu0 0.0
    %5688 = vmatmul.mubr.f32.gmra.mxu0 %v5615
    %v5689 = vpop.f32.mrf.mxu0
    %v5690 = vadd.f32 %v5612, %v5689
    %v5691 = vpop.f32.mrf.mxu0
    %5692 = vmatprep.mubr.f32.mxu0 0.0
    %5693 = vmatmul.mubr.f32.gmra.mxu0 %v5618
    %v5694 = vpop.f32.mrf.mxu0
    %v5695 = vadd.f32 %v5612, %v5694
    %v5696 = vpop.f32.mrf.mxu0
    %5697 = vmatprep.mubr.f32.mxu0 0.0
    %5698 = vmatmul.mubr.f32.gmra.mxu0 %v5621
    %v5699 = vpop.f32.mrf.mxu0
    %v5700 = vadd.f32 %v5612, %v5699
    %v5701 = vpop.f32.mrf.mxu0
    %5702 = vdwg.mxu0
    %v5703 = vmul.f32 %v5690, 0.5
    %v5704 = vmul.f32 %v5695, 0.5
    %v5705 = vmul.f32 %v5700, 0.5
    %v5706 = vmul.f32 %v5690, 0.70710677
    %v5707 = vmul.f32 %v5695, 0.70710677
    %v5708 = vmul.f32 %v5700, 0.70710677
    %v5709 = verf.f32.pop %v5706
    %v5710 = verf.f32.pop %v5707
    %v5711 = verf.f32.pop %v5708
    %v5712 = vadd.f32 %v5709, 1.0
    %v5713 = vadd.f32 %v5710, 1.0
    %v5714 = vadd.f32 %v5711, 1.0
    %v5715 = vmul.f32 %v5703, %v5712
    %v5716 = vmul.f32 %v5704, %v5713
    %v5717 = vmul.f32 %v5705, %v5714
    %v5718 = vld [vmem:[%s14] sm:$0xff]
    %v5719 = vld [vmem:[%s14 + $0x8] sm:$0xff]
    %v5720 = vld [vmem:[%s14 + $0x10] sm:$0xff]
    %v5721 = vld [vmem:[%s14 + $0x18] sm:$0xff]
    %v5722 = vld [vmem:[%s14 + $0x20] sm:$0xff]
    %v5723 = vld [vmem:[%s14 + $0x28] sm:$0xff]
    %v5724 = vld [vmem:[%s14 + $0x30] sm:$0xff]
    %v5725 = vld [vmem:[%s14 + $0x38] sm:$0xff]
    %v5726 = vld [vmem:[%s14 + $0x40] sm:$0xff]
    %v5727 = vld [vmem:[%s14 + $0x48] sm:$0xff]
    %v5728 = vld [vmem:[%s14 + $0x50] sm:$0xff]
    %v5729 = vld [vmem:[%s14 + $0x58] sm:$0xff]
    %v5730 = vld [vmem:[%s14 + $0x60] sm:$0xff]
    %v5731 = vld [vmem:[%s14 + $0x68] sm:$0xff]
    %v5732 = vld [vmem:[%s14 + $0x70] sm:$0xff]
    %v5733 = vld [vmem:[%s14 + $0x78] sm:$0xff]
    %v5734 = vld [vmem:[%s15] sm:$0x1]
    %v5736 = vlaneseq
    %v5737 = vshrl.u32 %v5736, 7
    %v5738 = vsub.s32 0, %v5737
    %v5739 = vrot.slane %v5734, %v5738
    %5741 = vmatprep.subr.mxu0 0.0
    %5742 = vmatpush1.msra.mxu0 %v5733
    %5743 = vmatprep.subr.mxu0 0.0
    %5744 = vmatpush1.msra.mxu0 %v5732
    %5745 = vmatprep.subr.mxu0 0.0
    %5746 = vmatpush1.msra.mxu0 %v5731
    %5747 = vmatprep.subr.mxu0 0.0
    %5748 = vmatpush1.msra.mxu0 %v5730
    %5749 = vmatprep.subr.mxu0 0.0
    %5750 = vmatpush1.msra.mxu0 %v5729
    %5751 = vmatprep.subr.mxu0 0.0
    %5752 = vmatpush1.msra.mxu0 %v5728
    %5753 = vmatprep.subr.mxu0 0.0
    %5754 = vmatpush1.msra.mxu0 %v5727
    %5755 = vmatprep.subr.mxu0 0.0
    %5756 = vmatpush1.msra.mxu0 %v5726
    %5757 = vmatprep.subr.mxu0 0.0
    %5758 = vmatpush1.msra.mxu0 %v5725
    %5759 = vmatprep.subr.mxu0 0.0
    %5760 = vmatpush1.msra.mxu0 %v5724
    %5761 = vmatprep.subr.mxu0 0.0
    %5762 = vmatpush1.msra.mxu0 %v5723
    %5763 = vmatprep.subr.mxu0 0.0
    %5764 = vmatpush1.msra.mxu0 %v5722
    %5765 = vmatprep.subr.mxu0 0.0
    %5766 = vmatpush1.msra.mxu0 %v5721
    %5767 = vmatprep.subr.mxu0 0.0
    %5768 = vmatpush1.msra.mxu0 %v5720
    %5769 = vmatprep.subr.mxu0 0.0
    %5770 = vmatpush1.msra.mxu0 %v5719
    %5771 = vmatprep.subr.mxu0 0.0
    %5772 = vmatpush1.msra.mxu0 %v5718
    %5773 = vmatprep.subr.mxu0 0.0
    %5774 = vmatpush2.msra.mxu0 0.0
    %5775 = vmatprep.subr.mxu0 0.0
    %5776 = vmatpush2.msra.mxu0 0.0
    %5777 = vmatprep.subr.mxu0 0.0
    %5778 = vmatpush2.msra.mxu0 0.0
    %5779 = vmatprep.subr.mxu0 0.0
    %5780 = vmatpush2.msra.mxu0 0.0
    %5781 = vmatprep.subr.mxu0 0.0
    %5782 = vmatpush2.msra.mxu0 0.0
    %5783 = vmatprep.subr.mxu0 0.0
    %5784 = vmatpush2.msra.mxu0 0.0
    %5785 = vmatprep.subr.mxu0 0.0
    %5786 = vmatpush2.msra.mxu0 0.0
    %5787 = vmatprep.subr.mxu0 0.0
    %5788 = vmatpush2.msra.mxu0 0.0
    %5789 = vmatprep.subr.mxu0 0.0
    %5790 = vmatpush2.msra.mxu0 0.0
    %5791 = vmatprep.subr.mxu0 0.0
    %5792 = vmatpush2.msra.mxu0 0.0
    %5793 = vmatprep.subr.mxu0 0.0
    %5794 = vmatpush2.msra.mxu0 0.0
    %5795 = vmatprep.subr.mxu0 0.0
    %5796 = vmatpush2.msra.mxu0 0.0
    %5797 = vmatprep.subr.mxu0 0.0
    %5798 = vmatpush2.msra.mxu0 0.0
    %5799 = vmatprep.subr.mxu0 0.0
    %5800 = vmatpush2.msra.mxu0 0.0
    %5801 = vmatprep.subr.mxu0 0.0
    %5802 = vmatpush2.msra.mxu0 0.0
    %5803 = vmatprep.subr.mxu0 0.0
    %5804 = vmatpush2.msra.mxu0 0.0
    %5805 = vmatprep.mubr.f32.mxu0 0.0
    %5806 = vmatmul.mubr.f32.gmra.mxu0 %v5715
    %v5807 = vpop.f32.mrf.mxu0
    %v5808 = vadd.f32 %v5739, %v5807
    %v5809 = vpop.f32.mrf.mxu0
    %5810 = vmatprep.mubr.f32.mxu0 0.0
    %5811 = vmatmul.mubr.f32.gmra.mxu0 %v5716
    %v5812 = vpop.f32.mrf.mxu0
    %v5813 = vadd.f32 %v5739, %v5812
    %v5814 = vpop.f32.mrf.mxu0
    %5815 = vmatprep.mubr.f32.mxu0 0.0
    %5816 = vmatmul.mubr.f32.gmra.mxu0 %v5717
    %v5817 = vpop.f32.mrf.mxu0
    %v5818 = vadd.f32 %v5739, %v5817
    %v5819 = vpop.f32.mrf.mxu0
    %5820 = vdwg.mxu0
    %v5821 = vadd.f32 %v5541, %v5808
    %v5822 = vadd.f32 %v5542, %v5813
    %v5823 = vadd.f32 %v5543, %v5818
    %v5824 = vld [vmem:[%s1948] sm:$0x1]
    %v5825 = vld [vmem:[%s1950] sm:$0x1]
    %v5826 = vsel %vm178, %v5821, 0.0
    %5827 = vadd.xlane.f32.xlu0 %v5826
    %v5828 = vpop.xlane.xlu0 %5827
    %v5829 = vsel %vm178, %v5822, 0.0
    %5830 = vadd.xlane.f32.xlu0 %v5829
    %v5831 = vpop.xlane.xlu0 %5830
    %v5832 = vsel %vm185, %v5823, 0.0
    %5833 = vadd.xlane.f32.xlu0 %v5832
    %v5834 = vpop.xlane.xlu0 %5833
    %v5835 = vmul.f32 %v5828, %v189
    %v5836 = vmul.f32 %v5831, %v189
    %v5837 = vmul.f32 %v5834, %v189
    %v5838 = vsub.f32 %v5821, %v5835
    %v5839 = vsub.f32 %v5822, %v5836
    %v5840 = vsub.f32 %v5823, %v5837
    %v5841 = vmul.f32 %v5838, %v5838
    %v5842 = vmul.f32 %v5839, %v5839
    %v5843 = vmul.f32 %v5840, %v5840
    %v5844 = vsel %vm178, %v5841, 0.0
    %5845 = vadd.xlane.f32.xlu0 %v5844
    %v5846 = vpop.xlane.xlu0 %5845
    %v5847 = vsel %vm178, %v5842, 0.0
    %5848 = vadd.xlane.f32.xlu0 %v5847
    %v5849 = vpop.xlane.xlu0 %5848
    %v5850 = vsel %vm185, %v5843, 0.0
    %5851 = vadd.xlane.f32.xlu0 %v5850
    %v5852 = vpop.xlane.xlu0 %5851
    %v5853 = vmul.f32 %v5846, %v189
    %v5854 = vmul.f32 %v5849, %v189
    %v5855 = vmul.f32 %v5852, %v189
    %v5856 = vadd.f32 %v5853, 1e-06
    %v5857 = vadd.f32 %v5854, 1e-06
    %v5858 = vadd.f32 %v5855, 1e-06
    %v5859 = vrsqrt.pop %v5856
    %v5860 = vrsqrt.pop %v5857
    %v5861 = vrsqrt.pop %v5858
    %v5862 = vmul.f32 %v5838, %v5859
    %v5863 = vmul.f32 %v5839, %v5860
    %v5864 = vmul.f32 %v5840, %v5861
    %v5866 = vlaneseq
    %v5867 = vshrl.u32 %v5866, 7
    %v5868 = vsub.s32 0, %v5867
    %v5869 = vrot.slane %v5824, %v5868
    %v5871 = vmul.f32 %v5862, %v5869
    %v5872 = vmul.f32 %v5863, %v5869
    %v5873 = vmul.f32 %v5864, %v5869
    %v5875 = vlaneseq
    %v5876 = vshrl.u32 %v5875, 7
    %v5877 = vsub.s32 0, %v5876
    %v5878 = vrot.slane %v5825, %v5877
    %v5880 = vadd.f32 %v5871, %v5878
    %v5881 = vadd.f32 %v5872, %v5878
    %v5882 = vadd.f32 %v5873, %v5878
    %v5883 = vld [vmem:[%s2009] sm:$0xff]
    %v5884 = vld [vmem:[%s2009 + $0x8] sm:$0xff]
    %v5885 = vld [vmem:[%s2009 + $0x10] sm:$0xff]
    %v5886 = vld [vmem:[%s2009 + $0x18] sm:$0xff]
    %v5887 = vld [vmem:[%s2014] sm:$0x1]
    %v5889 = vlaneseq
    %v5890 = vshrl.u32 %v5889, 7
    %v5891 = vsub.s32 0, %v5890
    %v5892 = vrot.slane %v5887, %v5891
    %v5895 = vsel %vm178, %v5880, 0
    %v5898 = vsel %vm178, %v5881, 0
    %v5901 = vsel %vm178, %v5882, 0
    %5903 = vmatprep.subr.mxu0 0.0
    %5904 = vmatpush1.msra.mxu0 0.0
    %5905 = vmatprep.subr.mxu0 0.0
    %5906 = vmatpush1.msra.mxu0 0.0
    %5907 = vmatprep.subr.mxu0 0.0
    %5908 = vmatpush1.msra.mxu0 0.0
    %5909 = vmatprep.subr.mxu0 0.0
    %5910 = vmatpush1.msra.mxu0 0.0
    %5911 = vmatprep.subr.mxu0 0.0
    %5912 = vmatpush1.msra.mxu0 0.0
    %5913 = vmatprep.subr.mxu0 0.0
    %5914 = vmatpush1.msra.mxu0 0.0
    %5915 = vmatprep.subr.mxu0 0.0
    %5916 = vmatpush1.msra.mxu0 0.0
    %5917 = vmatprep.subr.mxu0 0.0
    %5918 = vmatpush1.msra.mxu0 0.0
    %5919 = vmatprep.subr.mxu0 0.0
    %5920 = vmatpush1.msra.mxu0 0.0
    %5921 = vmatprep.subr.mxu0 0.0
    %5922 = vmatpush1.msra.mxu0 0.0
    %5923 = vmatprep.subr.mxu0 0.0
    %5924 = vmatpush1.msra.mxu0 0.0
    %5925 = vmatprep.subr.mxu0 0.0
    %5926 = vmatpush1.msra.mxu0 0.0
    %5927 = vmatprep.subr.mxu0 0.0
    %5928 = vmatpush1.msra.mxu0 %v5886
    %5929 = vmatprep.subr.mxu0 0.0
    %5930 = vmatpush1.msra.mxu0 %v5885
    %5931 = vmatprep.subr.mxu0 0.0
    %5932 = vmatpush1.msra.mxu0 %v5884
    %5933 = vmatprep.subr.mxu0 0.0
    %5934 = vmatpush1.msra.mxu0 %v5883
    %5935 = vmatprep.subr.mxu0 0.0
    %5936 = vmatpush2.msra.mxu0 0.0
    %5937 = vmatprep.subr.mxu0 0.0
    %5938 = vmatpush2.msra.mxu0 0.0
    %5939 = vmatprep.subr.mxu0 0.0
    %5940 = vmatpush2.msra.mxu0 0.0
    %5941 = vmatprep.subr.mxu0 0.0
    %5942 = vmatpush2.msra.mxu0 0.0
    %5943 = vmatprep.subr.mxu0 0.0
    %5944 = vmatpush2.msra.mxu0 0.0
    %5945 = vmatprep.subr.mxu0 0.0
    %5946 = vmatpush2.msra.mxu0 0.0
    %5947 = vmatprep.subr.mxu0 0.0
    %5948 = vmatpush2.msra.mxu0 0.0
    %5949 = vmatprep.subr.mxu0 0.0
    %5950 = vmatpush2.msra.mxu0 0.0
    %5951 = vmatprep.subr.mxu0 0.0
    %5952 = vmatpush2.msra.mxu0 0.0
    %5953 = vmatprep.subr.mxu0 0.0
    %5954 = vmatpush2.msra.mxu0 0.0
    %5955 = vmatprep.subr.mxu0 0.0
    %5956 = vmatpush2.msra.mxu0 0.0
    %5957 = vmatprep.subr.mxu0 0.0
    %5958 = vmatpush2.msra.mxu0 0.0
    %5959 = vmatprep.subr.mxu0 0.0
    %5960 = vmatpush2.msra.mxu0 0.0
    %5961 = vmatprep.subr.mxu0 0.0
    %5962 = vmatpush2.msra.mxu0 0.0
    %5963 = vmatprep.subr.mxu0 0.0
    %5964 = vmatpush2.msra.mxu0 0.0
    %5965 = vmatprep.subr.mxu0 0.0
    %5966 = vmatpush2.msra.mxu0 0.0
    %5967 = vmatprep.mubr.f32.mxu0 0.0
    %5968 = vmatmul.mubr.f32.gmra.mxu0 %v5895
    %v5969 = vpop.f32.mrf.mxu0
    %v5970 = vadd.f32 %v5892, %v5969
    %v5971 = vpop.f32.mrf.mxu0
    %5972 = vmatprep.mubr.f32.mxu0 0.0
    %5973 = vmatmul.mubr.f32.gmra.mxu0 %v5898
    %v5974 = vpop.f32.mrf.mxu0
    %v5975 = vadd.f32 %v5892, %v5974
    %v5976 = vpop.f32.mrf.mxu0
    %5977 = vmatprep.mubr.f32.mxu0 0.0
    %5978 = vmatmul.mubr.f32.gmra.mxu0 %v5901
    %v5979 = vpop.f32.mrf.mxu0
    %v5980 = vadd.f32 %v5892, %v5979
    %v5981 = vpop.f32.mrf.mxu0
    %5982 = vdwg.mxu0
    %5986 = vrot.lane.b32.xlu0 %v5970, 96
    %v5987 = vpop.permute.xlu0 %5986
    %5988 = vrot.lane.b32.xlu0 %v5975, 96
    %v5989 = vpop.permute.xlu0 %5988
    %5990 = vrot.lane.b32.xlu0 %v5980, 96
    %v5991 = vpop.permute.xlu0 %5990
    %v5992 = vsel %vm347, %v5970, 0
    %v5994 = vsel %vm347, %v5975, 0
    %v5996 = vsel %vm347, %v5980, 0
    %v5998 = vsel %vm347, %v5987, 0
    %v6000 = vsel %vm347, %v5989, 0
    %v6002 = vsel %vm347, %v5991, 0
    %6004 = vmatprep.subr.mxu0 0.0
    %6005 = vmatpush1.xpose.msra.mxu0 0.0
    %6006 = vmatprep.subr.mxu0 0.0
    %6007 = vmatpush1.xpose.msra.mxu0 0.0
    %6008 = vmatprep.subr.mxu0 0.0
    %6009 = vmatpush1.xpose.msra.mxu0 0.0
    %6010 = vmatprep.subr.mxu0 0.0
    %6011 = vmatpush1.xpose.msra.mxu0 0.0
    %6012 = vmatprep.subr.mxu0 0.0
    %6013 = vmatpush1.xpose.msra.mxu0 0.0
    %6014 = vmatprep.subr.mxu0 0.0
    %6015 = vmatpush1.xpose.msra.mxu0 0.0
    %6016 = vmatprep.subr.mxu0 0.0
    %6017 = vmatpush1.xpose.msra.mxu0 0.0
    %6018 = vmatprep.subr.mxu0 0.0
    %6019 = vmatpush1.xpose.msra.mxu0 0.0
    %6020 = vmatprep.subr.mxu0 0.0
    %6021 = vmatpush1.xpose.msra.mxu0 0.0
    %6022 = vmatprep.subr.mxu0 0.0
    %6023 = vmatpush1.xpose.msra.mxu0 0.0
    %6024 = vmatprep.subr.mxu0 0.0
    %6025 = vmatpush1.xpose.msra.mxu0 0.0
    %6026 = vmatprep.subr.mxu0 0.0
    %6027 = vmatpush1.xpose.msra.mxu0 0.0
    %6028 = vmatprep.subr.mxu0 0.0
    %6029 = vmatpush1.xpose.msra.mxu0 0.0
    %6030 = vmatprep.subr.mxu0 0.0
    %6031 = vmatpush1.xpose.msra.mxu0 %v6002
    %6032 = vmatprep.subr.mxu0 0.0
    %6033 = vmatpush1.xpose.msra.mxu0 %v6000
    %6034 = vmatprep.subr.mxu0 0.0
    %6035 = vmatpush1.xpose.msra.mxu0 %v5998
    %6036 = vmatprep.subr.mxu0 0.0
    %6037 = vmatpush2.xpose.msra.mxu0 0.0
    %6038 = vmatprep.subr.mxu0 0.0
    %6039 = vmatpush2.xpose.msra.mxu0 0.0
    %6040 = vmatprep.subr.mxu0 0.0
    %6041 = vmatpush2.xpose.msra.mxu0 0.0
    %6042 = vmatprep.subr.mxu0 0.0
    %6043 = vmatpush2.xpose.msra.mxu0 0.0
    %6044 = vmatprep.subr.mxu0 0.0
    %6045 = vmatpush2.xpose.msra.mxu0 0.0
    %6046 = vmatprep.subr.mxu0 0.0
    %6047 = vmatpush2.xpose.msra.mxu0 0.0
    %6048 = vmatprep.subr.mxu0 0.0
    %6049 = vmatpush2.xpose.msra.mxu0 0.0
    %6050 = vmatprep.subr.mxu0 0.0
    %6051 = vmatpush2.xpose.msra.mxu0 0.0
    %6052 = vmatprep.subr.mxu0 0.0
    %6053 = vmatpush2.xpose.msra.mxu0 0.0
    %6054 = vmatprep.subr.mxu0 0.0
    %6055 = vmatpush2.xpose.msra.mxu0 0.0
    %6056 = vmatprep.subr.mxu0 0.0
    %6057 = vmatpush2.xpose.msra.mxu0 0.0
    %6058 = vmatprep.subr.mxu0 0.0
    %6059 = vmatpush2.xpose.msra.mxu0 0.0
    %6060 = vmatprep.subr.mxu0 0.0
    %6061 = vmatpush2.xpose.msra.mxu0 0.0
    %6062 = vmatprep.subr.mxu0 0.0
    %6063 = vmatpush2.xpose.msra.mxu0 0.0
    %6064 = vmatprep.subr.mxu0 0.0
    %6065 = vmatpush2.xpose.msra.mxu0 0.0
    %6066 = vmatprep.subr.mxu0 0.0
    %6067 = vmatpush2.xpose.msra.mxu0 0.0
    %6068 = vmatprep.mubr.f32.mxu0 0.0
    %6069 = vmatmul.mubr.f32.gmra.mxu0 %v5992
    %v6070 = vpop.f32.mrf.mxu0
    %v6071 = vadd.f32 0.0, %v6070
    %v6072 = vpop.f32.mrf.mxu0
    %6073 = vmatprep.mubr.f32.mxu0 0.0
    %6074 = vmatmul.mubr.f32.gmra.mxu0 %v5994
    %v6075 = vpop.f32.mrf.mxu0
    %v6076 = vadd.f32 0.0, %v6075
    %v6077 = vpop.f32.mrf.mxu0
    %6078 = vmatprep.mubr.f32.mxu0 0.0
    %6079 = vmatmul.mubr.f32.gmra.mxu0 %v5996
    %v6080 = vpop.f32.mrf.mxu0
    %v6081 = vadd.f32 0.0, %v6080
    %v6082 = vpop.f32.mrf.mxu0
    %6083 = vdwg.mxu0
    %6084 = vrot.lane.b32.xlu0 %v5970, 120
    %v6085 = vpop.permute.xlu0 %6084
    %6086 = vrot.lane.b32.xlu0 %v5975, 120
    %v6087 = vpop.permute.xlu0 %6086
    %6088 = vrot.lane.b32.xlu0 %v5980, 120
    %v6089 = vpop.permute.xlu0 %6088
    %6090 = vrot.lane.b32.xlu0 %v5970, 88
    %v6091 = vpop.permute.xlu0 %6090
    %6092 = vrot.lane.b32.xlu0 %v5975, 88
    %v6093 = vpop.permute.xlu0 %6092
    %6094 = vrot.lane.b32.xlu0 %v5980, 88
    %v6095 = vpop.permute.xlu0 %6094
    %v6096 = vsel %vm347, %v6085, 0
    %v6098 = vsel %vm347, %v6087, 0
    %v6100 = vsel %vm347, %v6089, 0
    %v6102 = vsel %vm347, %v6091, 0
    %v6104 = vsel %vm347, %v6093, 0
    %v6106 = vsel %vm347, %v6095, 0
    %6108 = vmatprep.subr.mxu0 0.0
    %6109 = vmatpush1.xpose.msra.mxu0 0.0
    %6110 = vmatprep.subr.mxu0 0.0
    %6111 = vmatpush1.xpose.msra.mxu0 0.0
    %6112 = vmatprep.subr.mxu0 0.0
    %6113 = vmatpush1.xpose.msra.mxu0 0.0
    %6114 = vmatprep.subr.mxu0 0.0
    %6115 = vmatpush1.xpose.msra.mxu0 0.0
    %6116 = vmatprep.subr.mxu0 0.0
    %6117 = vmatpush1.xpose.msra.mxu0 0.0
    %6118 = vmatprep.subr.mxu0 0.0
    %6119 = vmatpush1.xpose.msra.mxu0 0.0
    %6120 = vmatprep.subr.mxu0 0.0
    %6121 = vmatpush1.xpose.msra.mxu0 0.0
    %6122 = vmatprep.subr.mxu0 0.0
    %6123 = vmatpush1.xpose.msra.mxu0 0.0
    %6124 = vmatprep.subr.mxu0 0.0
    %6125 = vmatpush1.xpose.msra.mxu0 0.0
    %6126 = vmatprep.subr.mxu0 0.0
    %6127 = vmatpush1.xpose.msra.mxu0 0.0
    %6128 = vmatprep.subr.mxu0 0.0
    %6129 = vmatpush1.xpose.msra.mxu0 0.0
    %6130 = vmatprep.subr.mxu0 0.0
    %6131 = vmatpush1.xpose.msra.mxu0 0.0
    %6132 = vmatprep.subr.mxu0 0.0
    %6133 = vmatpush1.xpose.msra.mxu0 0.0
    %6134 = vmatprep.subr.mxu0 0.0
    %6135 = vmatpush1.xpose.msra.mxu0 %v6106
    %6136 = vmatprep.subr.mxu0 0.0
    %6137 = vmatpush1.xpose.msra.mxu0 %v6104
    %6138 = vmatprep.subr.mxu0 0.0
    %6139 = vmatpush1.xpose.msra.mxu0 %v6102
    %6140 = vmatprep.subr.mxu0 0.0
    %6141 = vmatpush2.xpose.msra.mxu0 0.0
    %6142 = vmatprep.subr.mxu0 0.0
    %6143 = vmatpush2.xpose.msra.mxu0 0.0
    %6144 = vmatprep.subr.mxu0 0.0
    %6145 = vmatpush2.xpose.msra.mxu0 0.0
    %6146 = vmatprep.subr.mxu0 0.0
    %6147 = vmatpush2.xpose.msra.mxu0 0.0
    %6148 = vmatprep.subr.mxu0 0.0
    %6149 = vmatpush2.xpose.msra.mxu0 0.0
    %6150 = vmatprep.subr.mxu0 0.0
    %6151 = vmatpush2.xpose.msra.mxu0 0.0
    %6152 = vmatprep.subr.mxu0 0.0
    %6153 = vmatpush2.xpose.msra.mxu0 0.0
    %6154 = vmatprep.subr.mxu0 0.0
    %6155 = vmatpush2.xpose.msra.mxu0 0.0
    %6156 = vmatprep.subr.mxu0 0.0
    %6157 = vmatpush2.xpose.msra.mxu0 0.0
    %6158 = vmatprep.subr.mxu0 0.0
    %6159 = vmatpush2.xpose.msra.mxu0 0.0
    %6160 = vmatprep.subr.mxu0 0.0
    %6161 = vmatpush2.xpose.msra.mxu0 0.0
    %6162 = vmatprep.subr.mxu0 0.0
    %6163 = vmatpush2.xpose.msra.mxu0 0.0
    %6164 = vmatprep.subr.mxu0 0.0
    %6165 = vmatpush2.xpose.msra.mxu0 0.0
    %6166 = vmatprep.subr.mxu0 0.0
    %6167 = vmatpush2.xpose.msra.mxu0 0.0
    %6168 = vmatprep.subr.mxu0 0.0
    %6169 = vmatpush2.xpose.msra.mxu0 0.0
    %6170 = vmatprep.subr.mxu0 0.0
    %6171 = vmatpush2.xpose.msra.mxu0 0.0
    %6172 = vmatprep.mubr.f32.mxu0 0.0
    %6173 = vmatmul.mubr.f32.gmra.mxu0 %v6096
    %v6174 = vpop.f32.mrf.mxu0
    %v6175 = vadd.f32 0.0, %v6174
    %v6176 = vpop.f32.mrf.mxu0
    %6177 = vmatprep.mubr.f32.mxu0 0.0
    %6178 = vmatmul.mubr.f32.gmra.mxu0 %v6098
    %v6179 = vpop.f32.mrf.mxu0
    %v6180 = vadd.f32 0.0, %v6179
    %v6181 = vpop.f32.mrf.mxu0
    %6182 = vmatprep.mubr.f32.mxu0 0.0
    %6183 = vmatmul.mubr.f32.gmra.mxu0 %v6100
    %v6184 = vpop.f32.mrf.mxu0
    %v6185 = vadd.f32 0.0, %v6184
    %v6186 = vpop.f32.mrf.mxu0
    %6187 = vdwg.mxu0
    %6188 = vrot.lane.b32.xlu0 %v5970, 112
    %v6189 = vpop.permute.xlu0 %6188
    %6190 = vrot.lane.b32.xlu0 %v5975, 112
    %v6191 = vpop.permute.xlu0 %6190
    %6192 = vrot.lane.b32.xlu0 %v5980, 112
    %v6193 = vpop.permute.xlu0 %6192
    %6194 = vrot.lane.b32.xlu0 %v5970, 80
    %v6195 = vpop.permute.xlu0 %6194
    %6196 = vrot.lane.b32.xlu0 %v5975, 80
    %v6197 = vpop.permute.xlu0 %6196
    %6198 = vrot.lane.b32.xlu0 %v5980, 80
    %v6199 = vpop.permute.xlu0 %6198
    %v6200 = vsel %vm347, %v6189, 0
    %v6202 = vsel %vm347, %v6191, 0
    %v6204 = vsel %vm347, %v6193, 0
    %v6206 = vsel %vm347, %v6195, 0
    %v6208 = vsel %vm347, %v6197, 0
    %v6210 = vsel %vm347, %v6199, 0
    %6212 = vmatprep.subr.mxu0 0.0
    %6213 = vmatpush1.xpose.msra.mxu0 0.0
    %6214 = vmatprep.subr.mxu0 0.0
    %6215 = vmatpush1.xpose.msra.mxu0 0.0
    %6216 = vmatprep.subr.mxu0 0.0
    %6217 = vmatpush1.xpose.msra.mxu0 0.0
    %6218 = vmatprep.subr.mxu0 0.0
    %6219 = vmatpush1.xpose.msra.mxu0 0.0
    %6220 = vmatprep.subr.mxu0 0.0
    %6221 = vmatpush1.xpose.msra.mxu0 0.0
    %6222 = vmatprep.subr.mxu0 0.0
    %6223 = vmatpush1.xpose.msra.mxu0 0.0
    %6224 = vmatprep.subr.mxu0 0.0
    %6225 = vmatpush1.xpose.msra.mxu0 0.0
    %6226 = vmatprep.subr.mxu0 0.0
    %6227 = vmatpush1.xpose.msra.mxu0 0.0
    %6228 = vmatprep.subr.mxu0 0.0
    %6229 = vmatpush1.xpose.msra.mxu0 0.0
    %6230 = vmatprep.subr.mxu0 0.0
    %6231 = vmatpush1.xpose.msra.mxu0 0.0
    %6232 = vmatprep.subr.mxu0 0.0
    %6233 = vmatpush1.xpose.msra.mxu0 0.0
    %6234 = vmatprep.subr.mxu0 0.0
    %6235 = vmatpush1.xpose.msra.mxu0 0.0
    %6236 = vmatprep.subr.mxu0 0.0
    %6237 = vmatpush1.xpose.msra.mxu0 0.0
    %6238 = vmatprep.subr.mxu0 0.0
    %6239 = vmatpush1.xpose.msra.mxu0 %v6210
    %6240 = vmatprep.subr.mxu0 0.0
    %6241 = vmatpush1.xpose.msra.mxu0 %v6208
    %6242 = vmatprep.subr.mxu0 0.0
    %6243 = vmatpush1.xpose.msra.mxu0 %v6206
    %6244 = vmatprep.subr.mxu0 0.0
    %6245 = vmatpush2.xpose.msra.mxu0 0.0
    %6246 = vmatprep.subr.mxu0 0.0
    %6247 = vmatpush2.xpose.msra.mxu0 0.0
    %6248 = vmatprep.subr.mxu0 0.0
    %6249 = vmatpush2.xpose.msra.mxu0 0.0
    %6250 = vmatprep.subr.mxu0 0.0
    %6251 = vmatpush2.xpose.msra.mxu0 0.0
    %6252 = vmatprep.subr.mxu0 0.0
    %6253 = vmatpush2.xpose.msra.mxu0 0.0
    %6254 = vmatprep.subr.mxu0 0.0
    %6255 = vmatpush2.xpose.msra.mxu0 0.0
    %6256 = vmatprep.subr.mxu0 0.0
    %6257 = vmatpush2.xpose.msra.mxu0 0.0
    %6258 = vmatprep.subr.mxu0 0.0
    %6259 = vmatpush2.xpose.msra.mxu0 0.0
    %6260 = vmatprep.subr.mxu0 0.0
    %6261 = vmatpush2.xpose.msra.mxu0 0.0
    %6262 = vmatprep.subr.mxu0 0.0
    %6263 = vmatpush2.xpose.msra.mxu0 0.0
    %6264 = vmatprep.subr.mxu0 0.0
    %6265 = vmatpush2.xpose.msra.mxu0 0.0
    %6266 = vmatprep.subr.mxu0 0.0
    %6267 = vmatpush2.xpose.msra.mxu0 0.0
    %6268 = vmatprep.subr.mxu0 0.0
    %6269 = vmatpush2.xpose.msra.mxu0 0.0
    %6270 = vmatprep.subr.mxu0 0.0
    %6271 = vmatpush2.xpose.msra.mxu0 0.0
    %6272 = vmatprep.subr.mxu0 0.0
    %6273 = vmatpush2.xpose.msra.mxu0 0.0
    %6274 = vmatprep.subr.mxu0 0.0
    %6275 = vmatpush2.xpose.msra.mxu0 0.0
    %6276 = vmatprep.mubr.f32.mxu0 0.0
    %6277 = vmatmul.mubr.f32.gmra.mxu0 %v6200
    %v6278 = vpop.f32.mrf.mxu0
    %v6279 = vadd.f32 0.0, %v6278
    %v6280 = vpop.f32.mrf.mxu0
    %6281 = vmatprep.mubr.f32.mxu0 0.0
    %6282 = vmatmul.mubr.f32.gmra.mxu0 %v6202
    %v6283 = vpop.f32.mrf.mxu0
    %v6284 = vadd.f32 0.0, %v6283
    %v6285 = vpop.f32.mrf.mxu0
    %6286 = vmatprep.mubr.f32.mxu0 0.0
    %6287 = vmatmul.mubr.f32.gmra.mxu0 %v6204
    %v6288 = vpop.f32.mrf.mxu0
    %v6289 = vadd.f32 0.0, %v6288
    %v6290 = vpop.f32.mrf.mxu0
    %6291 = vdwg.mxu0
    %6292 = vrot.lane.b32.xlu0 %v5970, 104
    %v6293 = vpop.permute.xlu0 %6292
    %6294 = vrot.lane.b32.xlu0 %v5975, 104
    %v6295 = vpop.permute.xlu0 %6294
    %6296 = vrot.lane.b32.xlu0 %v5980, 104
    %v6297 = vpop.permute.xlu0 %6296
    %6298 = vrot.lane.b32.xlu0 %v5970, 72
    %v6299 = vpop.permute.xlu0 %6298
    %6300 = vrot.lane.b32.xlu0 %v5975, 72
    %v6301 = vpop.permute.xlu0 %6300
    %6302 = vrot.lane.b32.xlu0 %v5980, 72
    %v6303 = vpop.permute.xlu0 %6302
    %v6304 = vsel %vm347, %v6293, 0
    %v6306 = vsel %vm347, %v6295, 0
    %v6308 = vsel %vm347, %v6297, 0
    %v6310 = vsel %vm347, %v6299, 0
    %v6312 = vsel %vm347, %v6301, 0
    %v6314 = vsel %vm347, %v6303, 0
    %6316 = vmatprep.subr.mxu0 0.0
    %6317 = vmatpush1.xpose.msra.mxu0 0.0
    %6318 = vmatprep.subr.mxu0 0.0
    %6319 = vmatpush1.xpose.msra.mxu0 0.0
    %6320 = vmatprep.subr.mxu0 0.0
    %6321 = vmatpush1.xpose.msra.mxu0 0.0
    %6322 = vmatprep.subr.mxu0 0.0
    %6323 = vmatpush1.xpose.msra.mxu0 0.0
    %6324 = vmatprep.subr.mxu0 0.0
    %6325 = vmatpush1.xpose.msra.mxu0 0.0
    %6326 = vmatprep.subr.mxu0 0.0
    %6327 = vmatpush1.xpose.msra.mxu0 0.0
    %6328 = vmatprep.subr.mxu0 0.0
    %6329 = vmatpush1.xpose.msra.mxu0 0.0
    %6330 = vmatprep.subr.mxu0 0.0
    %6331 = vmatpush1.xpose.msra.mxu0 0.0
    %6332 = vmatprep.subr.mxu0 0.0
    %6333 = vmatpush1.xpose.msra.mxu0 0.0
    %6334 = vmatprep.subr.mxu0 0.0
    %6335 = vmatpush1.xpose.msra.mxu0 0.0
    %6336 = vmatprep.subr.mxu0 0.0
    %6337 = vmatpush1.xpose.msra.mxu0 0.0
    %6338 = vmatprep.subr.mxu0 0.0
    %6339 = vmatpush1.xpose.msra.mxu0 0.0
    %6340 = vmatprep.subr.mxu0 0.0
    %6341 = vmatpush1.xpose.msra.mxu0 0.0
    %6342 = vmatprep.subr.mxu0 0.0
    %6343 = vmatpush1.xpose.msra.mxu0 %v6314
    %6344 = vmatprep.subr.mxu0 0.0
    %6345 = vmatpush1.xpose.msra.mxu0 %v6312
    %6346 = vmatprep.subr.mxu0 0.0
    %6347 = vmatpush1.xpose.msra.mxu0 %v6310
    %6348 = vmatprep.subr.mxu0 0.0
    %6349 = vmatpush2.xpose.msra.mxu0 0.0
    %6350 = vmatprep.subr.mxu0 0.0
    %6351 = vmatpush2.xpose.msra.mxu0 0.0
    %6352 = vmatprep.subr.mxu0 0.0
    %6353 = vmatpush2.xpose.msra.mxu0 0.0
    %6354 = vmatprep.subr.mxu0 0.0
    %6355 = vmatpush2.xpose.msra.mxu0 0.0
    %6356 = vmatprep.subr.mxu0 0.0
    %6357 = vmatpush2.xpose.msra.mxu0 0.0
    %6358 = vmatprep.subr.mxu0 0.0
    %6359 = vmatpush2.xpose.msra.mxu0 0.0
    %6360 = vmatprep.subr.mxu0 0.0
    %6361 = vmatpush2.xpose.msra.mxu0 0.0
    %6362 = vmatprep.subr.mxu0 0.0
    %6363 = vmatpush2.xpose.msra.mxu0 0.0
    %6364 = vmatprep.subr.mxu0 0.0
    %6365 = vmatpush2.xpose.msra.mxu0 0.0
    %6366 = vmatprep.subr.mxu0 0.0
    %6367 = vmatpush2.xpose.msra.mxu0 0.0
    %6368 = vmatprep.subr.mxu0 0.0
    %6369 = vmatpush2.xpose.msra.mxu0 0.0
    %6370 = vmatprep.subr.mxu0 0.0
    %6371 = vmatpush2.xpose.msra.mxu0 0.0
    %6372 = vmatprep.subr.mxu0 0.0
    %6373 = vmatpush2.xpose.msra.mxu0 0.0
    %6374 = vmatprep.subr.mxu0 0.0
    %6375 = vmatpush2.xpose.msra.mxu0 0.0
    %6376 = vmatprep.subr.mxu0 0.0
    %6377 = vmatpush2.xpose.msra.mxu0 0.0
    %6378 = vmatprep.subr.mxu0 0.0
    %6379 = vmatpush2.xpose.msra.mxu0 0.0
    %6380 = vmatprep.mubr.f32.mxu0 0.0
    %6381 = vmatmul.mubr.f32.gmra.mxu0 %v6304
    %v6382 = vpop.f32.mrf.mxu0
    %v6383 = vadd.f32 0.0, %v6382
    %v6384 = vpop.f32.mrf.mxu0
    %6385 = vmatprep.mubr.f32.mxu0 0.0
    %6386 = vmatmul.mubr.f32.gmra.mxu0 %v6306
    %v6387 = vpop.f32.mrf.mxu0
    %v6388 = vadd.f32 0.0, %v6387
    %v6389 = vpop.f32.mrf.mxu0
    %6390 = vmatprep.mubr.f32.mxu0 0.0
    %6391 = vmatmul.mubr.f32.gmra.mxu0 %v6308
    %v6392 = vpop.f32.mrf.mxu0
    %v6393 = vadd.f32 0.0, %v6392
    %v6394 = vpop.f32.mrf.mxu0
    %6395 = vdwg.mxu0
    %v6396 = vsel %vm752, %v6071, -inf
    %6397 = vmax.xlane.f32.xlu0 %v6396
    %v6398 = vpop.xlane.xlu0 %6397
    %v6399 = vsel %vm752, %v6076, -inf
    %6400 = vmax.xlane.f32.xlu0 %v6399
    %v6401 = vpop.xlane.xlu0 %6400
    %v6402 = vsel %vm759, %v6081, -inf
    %6403 = vmax.xlane.f32.xlu0 %v6402
    %v6404 = vpop.xlane.xlu0 %6403
    %v6405 = vsel %vm752, %v6175, -inf
    %6406 = vmax.xlane.f32.xlu0 %v6405
    %v6407 = vpop.xlane.xlu0 %6406
    %v6408 = vsel %vm752, %v6180, -inf
    %6409 = vmax.xlane.f32.xlu0 %v6408
    %v6410 = vpop.xlane.xlu0 %6409
    %v6411 = vsel %vm759, %v6185, -inf
    %6412 = vmax.xlane.f32.xlu0 %v6411
    %v6413 = vpop.xlane.xlu0 %6412
    %v6414 = vsel %vm752, %v6279, -inf
    %6415 = vmax.xlane.f32.xlu0 %v6414
    %v6416 = vpop.xlane.xlu0 %6415
    %v6417 = vsel %vm752, %v6284, -inf
    %6418 = vmax.xlane.f32.xlu0 %v6417
    %v6419 = vpop.xlane.xlu0 %6418
    %v6420 = vsel %vm759, %v6289, -inf
    %6421 = vmax.xlane.f32.xlu0 %v6420
    %v6422 = vpop.xlane.xlu0 %6421
    %v6423 = vsel %vm752, %v6383, -inf
    %6424 = vmax.xlane.f32.xlu0 %v6423
    %v6425 = vpop.xlane.xlu0 %6424
    %v6426 = vsel %vm752, %v6388, -inf
    %6427 = vmax.xlane.f32.xlu0 %v6426
    %v6428 = vpop.xlane.xlu0 %6427
    %v6429 = vsel %vm759, %v6393, -inf
    %6430 = vmax.xlane.f32.xlu0 %v6429
    %v6431 = vpop.xlane.xlu0 %6430
    %v6432 = vsub.f32 %v6071, %v6398
    %v6433 = vsub.f32 %v6076, %v6401
    %v6434 = vsub.f32 %v6081, %v6404
    %v6435 = vsub.f32 %v6175, %v6407
    %v6436 = vsub.f32 %v6180, %v6410
    %v6437 = vsub.f32 %v6185, %v6413
    %v6438 = vsub.f32 %v6279, %v6416
    %v6439 = vsub.f32 %v6284, %v6419
    %v6440 = vsub.f32 %v6289, %v6422
    %v6441 = vsub.f32 %v6383, %v6425
    %v6442 = vsub.f32 %v6388, %v6428
    %v6443 = vsub.f32 %v6393, %v6431
    %v6444 = vmul.f32 %v6432, 1.442695
    %v6445 = vpow.pop %v6444
    %v6446 = vmul.f32 %v6433, 1.442695
    %v6447 = vpow.pop %v6446
    %v6448 = vmul.f32 %v6434, 1.442695
    %v6449 = vpow.pop %v6448
    %v6450 = vmul.f32 %v6435, 1.442695
    %v6451 = vpow.pop %v6450
    %v6452 = vmul.f32 %v6436, 1.442695
    %v6453 = vpow.pop %v6452
    %v6454 = vmul.f32 %v6437, 1.442695
    %v6455 = vpow.pop %v6454
    %v6456 = vmul.f32 %v6438, 1.442695
    %v6457 = vpow.pop %v6456
    %v6458 = vmul.f32 %v6439, 1.442695
    %v6459 = vpow.pop %v6458
    %v6460 = vmul.f32 %v6440, 1.442695
    %v6461 = vpow.pop %v6460
    %v6462 = vmul.f32 %v6441, 1.442695
    %v6463 = vpow.pop %v6462
    %v6464 = vmul.f32 %v6442, 1.442695
    %v6465 = vpow.pop %v6464
    %v6466 = vmul.f32 %v6443, 1.442695
    %v6467 = vpow.pop %v6466
    %v6468 = vsel %vm752, %v6445, 0.0
    %6469 = vadd.xlane.f32.xlu0 %v6468
    %v6470 = vpop.xlane.xlu0 %6469
    %v6471 = vsel %vm752, %v6447, 0.0
    %6472 = vadd.xlane.f32.xlu0 %v6471
    %v6473 = vpop.xlane.xlu0 %6472
    %v6474 = vsel %vm759, %v6449, 0.0
    %6475 = vadd.xlane.f32.xlu0 %v6474
    %v6476 = vpop.xlane.xlu0 %6475
    %v6477 = vsel %vm752, %v6451, 0.0
    %6478 = vadd.xlane.f32.xlu0 %v6477
    %v6479 = vpop.xlane.xlu0 %6478
    %v6480 = vsel %vm752, %v6453, 0.0
    %6481 = vadd.xlane.f32.xlu0 %v6480
    %v6482 = vpop.xlane.xlu0 %6481
    %v6483 = vsel %vm759, %v6455, 0.0
    %6484 = vadd.xlane.f32.xlu0 %v6483
    %v6485 = vpop.xlane.xlu0 %6484
    %v6486 = vsel %vm752, %v6457, 0.0
    %6487 = vadd.xlane.f32.xlu0 %v6486
    %v6488 = vpop.xlane.xlu0 %6487
    %v6489 = vsel %vm752, %v6459, 0.0
    %6490 = vadd.xlane.f32.xlu0 %v6489
    %v6491 = vpop.xlane.xlu0 %6490
    %v6492 = vsel %vm759, %v6461, 0.0
    %6493 = vadd.xlane.f32.xlu0 %v6492
    %v6494 = vpop.xlane.xlu0 %6493
    %v6495 = vsel %vm752, %v6463, 0.0
    %6496 = vadd.xlane.f32.xlu0 %v6495
    %v6497 = vpop.xlane.xlu0 %6496
    %v6498 = vsel %vm752, %v6465, 0.0
    %6499 = vadd.xlane.f32.xlu0 %v6498
    %v6500 = vpop.xlane.xlu0 %6499
    %v6501 = vsel %vm759, %v6467, 0.0
    %6502 = vadd.xlane.f32.xlu0 %v6501
    %v6503 = vpop.xlane.xlu0 %6502
    %v6504 = vrcp.pop %v6470
    %v6505 = vrcp.pop %v6473
    %v6506 = vrcp.pop %v6476
    %v6507 = vrcp.pop %v6479
    %v6508 = vrcp.pop %v6482
    %v6509 = vrcp.pop %v6485
    %v6510 = vrcp.pop %v6488
    %v6511 = vrcp.pop %v6491
    %v6512 = vrcp.pop %v6494
    %v6513 = vrcp.pop %v6497
    %v6514 = vrcp.pop %v6500
    %v6515 = vrcp.pop %v6503
    %v6516 = vmul.f32 %v6445, %v6504
    %v6517 = vmul.f32 %v6447, %v6505
    %v6518 = vmul.f32 %v6449, %v6506
    %v6519 = vmul.f32 %v6451, %v6507
    %v6520 = vmul.f32 %v6453, %v6508
    %v6521 = vmul.f32 %v6455, %v6509
    %v6522 = vmul.f32 %v6457, %v6510
    %v6523 = vmul.f32 %v6459, %v6511
    %v6524 = vmul.f32 %v6461, %v6512
    %v6525 = vmul.f32 %v6463, %v6513
    %v6526 = vmul.f32 %v6465, %v6514
    %v6527 = vmul.f32 %v6467, %v6515
    %v6528 = vld [vmem:[%s2656] sm:$0x1]
    %6529 = vrot.lane.b32.xlu0 %v5970, 64
    %v6530 = vpop.permute.xlu0 %6529
    %6531 = vrot.lane.b32.xlu0 %v5975, 64
    %v6532 = vpop.permute.xlu0 %6531
    %6533 = vrot.lane.b32.xlu0 %v5980, 64
    %v6534 = vpop.permute.xlu0 %6533
    %v6538 = vsel %vm752, %v6516, 0
    %v6541 = vsel %vm752, %v6517, 0
    %v6544 = vsel %vm752, %v6518, 0
    %v6546 = vsel %vm904, %v6534, 0
    %6548 = vmatprep.subr.mxu0 0.0
    %6549 = vmatpush1.msra.mxu0 0.0
    %6550 = vmatprep.subr.mxu0 0.0
    %6551 = vmatpush1.msra.mxu0 0.0
    %6552 = vmatprep.subr.mxu0 0.0
    %6553 = vmatpush1.msra.mxu0 0.0
    %6554 = vmatprep.subr.mxu0 0.0
    %6555 = vmatpush1.msra.mxu0 0.0
    %6556 = vmatprep.subr.mxu0 0.0
    %6557 = vmatpush1.msra.mxu0 0.0
    %6558 = vmatprep.subr.mxu0 0.0
    %6559 = vmatpush1.msra.mxu0 0.0
    %6560 = vmatprep.subr.mxu0 0.0
    %6561 = vmatpush1.msra.mxu0 0.0
    %6562 = vmatprep.subr.mxu0 0.0
    %6563 = vmatpush1.msra.mxu0 0.0
    %6564 = vmatprep.subr.mxu0 0.0
    %6565 = vmatpush1.msra.mxu0 0.0
    %6566 = vmatprep.subr.mxu0 0.0
    %6567 = vmatpush1.msra.mxu0 0.0
    %6568 = vmatprep.subr.mxu0 0.0
    %6569 = vmatpush1.msra.mxu0 0.0
    %6570 = vmatprep.subr.mxu0 0.0
    %6571 = vmatpush1.msra.mxu0 0.0
    %6572 = vmatprep.subr.mxu0 0.0
    %6573 = vmatpush1.msra.mxu0 0.0
    %6574 = vmatprep.subr.mxu0 0.0
    %6575 = vmatpush1.msra.mxu0 %v6546
    %6576 = vmatprep.subr.mxu0 0.0
    %6577 = vmatpush1.msra.mxu0 %v6532
    %6578 = vmatprep.subr.mxu0 0.0
    %6579 = vmatpush1.msra.mxu0 %v6530
    %6580 = vmatprep.subr.mxu0 0.0
    %6581 = vmatpush2.msra.mxu0 0.0
    %6582 = vmatprep.subr.mxu0 0.0
    %6583 = vmatpush2.msra.mxu0 0.0
    %6584 = vmatprep.subr.mxu0 0.0
    %6585 = vmatpush2.msra.mxu0 0.0
    %6586 = vmatprep.subr.mxu0 0.0
    %6587 = vmatpush2.msra.mxu0 0.0
    %6588 = vmatprep.subr.mxu0 0.0
    %6589 = vmatpush2.msra.mxu0 0.0
    %6590 = vmatprep.subr.mxu0 0.0
    %6591 = vmatpush2.msra.mxu0 0.0
    %6592 = vmatprep.subr.mxu0 0.0
    %6593 = vmatpush2.msra.mxu0 0.0
    %6594 = vmatprep.subr.mxu0 0.0
    %6595 = vmatpush2.msra.mxu0 0.0
    %6596 = vmatprep.subr.mxu0 0.0
    %6597 = vmatpush2.msra.mxu0 0.0
    %6598 = vmatprep.subr.mxu0 0.0
    %6599 = vmatpush2.msra.mxu0 0.0
    %6600 = vmatprep.subr.mxu0 0.0
    %6601 = vmatpush2.msra.mxu0 0.0
    %6602 = vmatprep.subr.mxu0 0.0
    %6603 = vmatpush2.msra.mxu0 0.0
    %6604 = vmatprep.subr.mxu0 0.0
    %6605 = vmatpush2.msra.mxu0 0.0
    %6606 = vmatprep.subr.mxu0 0.0
    %6607 = vmatpush2.msra.mxu0 0.0
    %6608 = vmatprep.subr.mxu0 0.0
    %6609 = vmatpush2.msra.mxu0 0.0
    %6610 = vmatprep.subr.mxu0 0.0
    %6611 = vmatpush2.msra.mxu0 0.0
    %6612 = vmatprep.mubr.f32.mxu0 0.0
    %6613 = vmatmul.mubr.f32.gmra.mxu0 %v6538
    %v6614 = vpop.f32.mrf.mxu0
    %v6615 = vadd.f32 0.0, %v6614
    %v6616 = vpop.f32.mrf.mxu0
    %6617 = vmatprep.mubr.f32.mxu0 0.0
    %6618 = vmatmul.mubr.f32.gmra.mxu0 %v6541
    %v6619 = vpop.f32.mrf.mxu0
    %v6620 = vadd.f32 0.0, %v6619
    %v6621 = vpop.f32.mrf.mxu0
    %6622 = vmatprep.mubr.f32.mxu0 0.0
    %6623 = vmatmul.mubr.f32.gmra.mxu0 %v6544
    %v6624 = vpop.f32.mrf.mxu0
    %v6625 = vadd.f32 0.0, %v6624
    %v6626 = vpop.f32.mrf.mxu0
    %6627 = vdwg.mxu0
    %v6628 = vld [vmem:[%s2757] sm:$0xff]
    %v6630 = vsel %vm347, %v6615, 0
    %v6633 = vsel %vm347, %v6620, 0
    %v6636 = vsel %vm347, %v6625, 0
    %6638 = vmatprep.subr.mxu0 0.0
    %6639 = vmatpush1.msra.mxu0 0.0
    %6640 = vmatprep.subr.mxu0 0.0
    %6641 = vmatpush1.msra.mxu0 0.0
    %6642 = vmatprep.subr.mxu0 0.0
    %6643 = vmatpush1.msra.mxu0 0.0
    %6644 = vmatprep.subr.mxu0 0.0
    %6645 = vmatpush1.msra.mxu0 0.0
    %6646 = vmatprep.subr.mxu0 0.0
    %6647 = vmatpush1.msra.mxu0 0.0
    %6648 = vmatprep.subr.mxu0 0.0
    %6649 = vmatpush1.msra.mxu0 0.0
    %6650 = vmatprep.subr.mxu0 0.0
    %6651 = vmatpush1.msra.mxu0 0.0
    %6652 = vmatprep.subr.mxu0 0.0
    %6653 = vmatpush1.msra.mxu0 0.0
    %6654 = vmatprep.subr.mxu0 0.0
    %6655 = vmatpush1.msra.mxu0 0.0
    %6656 = vmatprep.subr.mxu0 0.0
    %6657 = vmatpush1.msra.mxu0 0.0
    %6658 = vmatprep.subr.mxu0 0.0
    %6659 = vmatpush1.msra.mxu0 0.0
    %6660 = vmatprep.subr.mxu0 0.0
    %6661 = vmatpush1.msra.mxu0 0.0
    %6662 = vmatprep.subr.mxu0 0.0
    %6663 = vmatpush1.msra.mxu0 0.0
    %6664 = vmatprep.subr.mxu0 0.0
    %6665 = vmatpush1.msra.mxu0 0.0
    %6666 = vmatprep.subr.mxu0 0.0
    %6667 = vmatpush1.msra.mxu0 0.0
    %6668 = vmatprep.subr.mxu0 0.0
    %6669 = vmatpush1.msra.mxu0 %v6628
    %6670 = vmatprep.subr.mxu0 0.0
    %6671 = vmatpush2.msra.mxu0 0.0
    %6672 = vmatprep.subr.mxu0 0.0
    %6673 = vmatpush2.msra.mxu0 0.0
    %6674 = vmatprep.subr.mxu0 0.0
    %6675 = vmatpush2.msra.mxu0 0.0
    %6676 = vmatprep.subr.mxu0 0.0
    %6677 = vmatpush2.msra.mxu0 0.0
    %6678 = vmatprep.subr.mxu0 0.0
    %6679 = vmatpush2.msra.mxu0 0.0
    %6680 = vmatprep.subr.mxu0 0.0
    %6681 = vmatpush2.msra.mxu0 0.0
    %6682 = vmatprep.subr.mxu0 0.0
    %6683 = vmatpush2.msra.mxu0 0.0
    %6684 = vmatprep.subr.mxu0 0.0
    %6685 = vmatpush2.msra.mxu0 0.0
    %6686 = vmatprep.subr.mxu0 0.0
    %6687 = vmatpush2.msra.mxu0 0.0
    %6688 = vmatprep.subr.mxu0 0.0
    %6689 = vmatpush2.msra.mxu0 0.0
    %6690 = vmatprep.subr.mxu0 0.0
    %6691 = vmatpush2.msra.mxu0 0.0
    %6692 = vmatprep.subr.mxu0 0.0
    %6693 = vmatpush2.msra.mxu0 0.0
    %6694 = vmatprep.subr.mxu0 0.0
    %6695 = vmatpush2.msra.mxu0 0.0
    %6696 = vmatprep.subr.mxu0 0.0
    %6697 = vmatpush2.msra.mxu0 0.0
    %6698 = vmatprep.subr.mxu0 0.0
    %6699 = vmatpush2.msra.mxu0 0.0
    %6700 = vmatprep.subr.mxu0 0.0
    %6701 = vmatpush2.msra.mxu0 0.0
    %6702 = vmatprep.mubr.f32.mxu0 0.0
    %6703 = vmatmul.mubr.f32.gmra.mxu0 %v6630
    %v6704 = vpop.f32.mrf.mxu0
    %v6705 = vadd.f32 0.0, %v6704
    %v6706 = vpop.f32.mrf.mxu0
    %6707 = vmatprep.mubr.f32.mxu0 0.0
    %6708 = vmatmul.mubr.f32.gmra.mxu0 %v6633
    %v6709 = vpop.f32.mrf.mxu0
    %v6710 = vadd.f32 0.0, %v6709
    %v6711 = vpop.f32.mrf.mxu0
    %6712 = vmatprep.mubr.f32.mxu0 0.0
    %6713 = vmatmul.mubr.f32.gmra.mxu0 %v6636
    %v6714 = vpop.f32.mrf.mxu0
    %v6715 = vadd.f32 0.0, %v6714
    %v6716 = vpop.f32.mrf.mxu0
    %6717 = vdwg.mxu0
    %v6719 = vlaneseq
    %v6720 = vshrl.u32 %v6719, 7
    %v6721 = vsub.s32 0, %v6720
    %v6722 = vrot.slane %v6528, %v6721
    %v6724 = vadd.f32 %v6722, %v6705
    %v6725 = vadd.f32 %v6722, %v6710
    %v6726 = vadd.f32 %v6722, %v6715
    %6727 = vrot.lane.b32.xlu0 %v5970, 56
    %v6728 = vpop.permute.xlu0 %6727
    %6729 = vrot.lane.b32.xlu0 %v5975, 56
    %v6730 = vpop.permute.xlu0 %6729
    %6731 = vrot.lane.b32.xlu0 %v5980, 56
    %v6732 = vpop.permute.xlu0 %6731
    %v6736 = vsel %vm752, %v6519, 0
    %v6739 = vsel %vm752, %v6520, 0
    %v6742 = vsel %vm752, %v6521, 0
    %v6744 = vsel %vm904, %v6732, 0
    %6746 = vmatprep.subr.mxu0 0.0
    %6747 = vmatpush1.msra.mxu0 0.0
    %6748 = vmatprep.subr.mxu0 0.0
    %6749 = vmatpush1.msra.mxu0 0.0
    %6750 = vmatprep.subr.mxu0 0.0
    %6751 = vmatpush1.msra.mxu0 0.0
    %6752 = vmatprep.subr.mxu0 0.0
    %6753 = vmatpush1.msra.mxu0 0.0
    %6754 = vmatprep.subr.mxu0 0.0
    %6755 = vmatpush1.msra.mxu0 0.0
    %6756 = vmatprep.subr.mxu0 0.0
    %6757 = vmatpush1.msra.mxu0 0.0
    %6758 = vmatprep.subr.mxu0 0.0
    %6759 = vmatpush1.msra.mxu0 0.0
    %6760 = vmatprep.subr.mxu0 0.0
    %6761 = vmatpush1.msra.mxu0 0.0
    %6762 = vmatprep.subr.mxu0 0.0
    %6763 = vmatpush1.msra.mxu0 0.0
    %6764 = vmatprep.subr.mxu0 0.0
    %6765 = vmatpush1.msra.mxu0 0.0
    %6766 = vmatprep.subr.mxu0 0.0
    %6767 = vmatpush1.msra.mxu0 0.0
    %6768 = vmatprep.subr.mxu0 0.0
    %6769 = vmatpush1.msra.mxu0 0.0
    %6770 = vmatprep.subr.mxu0 0.0
    %6771 = vmatpush1.msra.mxu0 0.0
    %6772 = vmatprep.subr.mxu0 0.0
    %6773 = vmatpush1.msra.mxu0 %v6744
    %6774 = vmatprep.subr.mxu0 0.0
    %6775 = vmatpush1.msra.mxu0 %v6730
    %6776 = vmatprep.subr.mxu0 0.0
    %6777 = vmatpush1.msra.mxu0 %v6728
    %6778 = vmatprep.subr.mxu0 0.0
    %6779 = vmatpush2.msra.mxu0 0.0
    %6780 = vmatprep.subr.mxu0 0.0
    %6781 = vmatpush2.msra.mxu0 0.0
    %6782 = vmatprep.subr.mxu0 0.0
    %6783 = vmatpush2.msra.mxu0 0.0
    %6784 = vmatprep.subr.mxu0 0.0
    %6785 = vmatpush2.msra.mxu0 0.0
    %6786 = vmatprep.subr.mxu0 0.0
    %6787 = vmatpush2.msra.mxu0 0.0
    %6788 = vmatprep.subr.mxu0 0.0
    %6789 = vmatpush2.msra.mxu0 0.0
    %6790 = vmatprep.subr.mxu0 0.0
    %6791 = vmatpush2.msra.mxu0 0.0
    %6792 = vmatprep.subr.mxu0 0.0
    %6793 = vmatpush2.msra.mxu0 0.0
    %6794 = vmatprep.subr.mxu0 0.0
    %6795 = vmatpush2.msra.mxu0 0.0
    %6796 = vmatprep.subr.mxu0 0.0
    %6797 = vmatpush2.msra.mxu0 0.0
    %6798 = vmatprep.subr.mxu0 0.0
    %6799 = vmatpush2.msra.mxu0 0.0
    %6800 = vmatprep.subr.mxu0 0.0
    %6801 = vmatpush2.msra.mxu0 0.0
    %6802 = vmatprep.subr.mxu0 0.0
    %6803 = vmatpush2.msra.mxu0 0.0
    %6804 = vmatprep.subr.mxu0 0.0
    %6805 = vmatpush2.msra.mxu0 0.0
    %6806 = vmatprep.subr.mxu0 0.0
    %6807 = vmatpush2.msra.mxu0 0.0
    %6808 = vmatprep.subr.mxu0 0.0
    %6809 = vmatpush2.msra.mxu0 0.0
    %6810 = vmatprep.mubr.f32.mxu0 0.0
    %6811 = vmatmul.mubr.f32.gmra.mxu0 %v6736
    %v6812 = vpop.f32.mrf.mxu0
    %v6813 = vadd.f32 0.0, %v6812
    %v6814 = vpop.f32.mrf.mxu0
    %6815 = vmatprep.mubr.f32.mxu0 0.0
    %6816 = vmatmul.mubr.f32.gmra.mxu0 %v6739
    %v6817 = vpop.f32.mrf.mxu0
    %v6818 = vadd.f32 0.0, %v6817
    %v6819 = vpop.f32.mrf.mxu0
    %6820 = vmatprep.mubr.f32.mxu0 0.0
    %6821 = vmatmul.mubr.f32.gmra.mxu0 %v6742
    %v6822 = vpop.f32.mrf.mxu0
    %v6823 = vadd.f32 0.0, %v6822
    %v6824 = vpop.f32.mrf.mxu0
    %6825 = vdwg.mxu0
    %v6826 = vld [vmem:[%s2956] sm:$0xff]
    %v6828 = vsel %vm347, %v6813, 0
    %v6831 = vsel %vm347, %v6818, 0
    %v6834 = vsel %vm347, %v6823, 0
    %6836 = vmatprep.subr.mxu0 0.0
    %6837 = vmatpush1.msra.mxu0 0.0
    %6838 = vmatprep.subr.mxu0 0.0
    %6839 = vmatpush1.msra.mxu0 0.0
    %6840 = vmatprep.subr.mxu0 0.0
    %6841 = vmatpush1.msra.mxu0 0.0
    %6842 = vmatprep.subr.mxu0 0.0
    %6843 = vmatpush1.msra.mxu0 0.0
    %6844 = vmatprep.subr.mxu0 0.0
    %6845 = vmatpush1.msra.mxu0 0.0
    %6846 = vmatprep.subr.mxu0 0.0
    %6847 = vmatpush1.msra.mxu0 0.0
    %6848 = vmatprep.subr.mxu0 0.0
    %6849 = vmatpush1.msra.mxu0 0.0
    %6850 = vmatprep.subr.mxu0 0.0
    %6851 = vmatpush1.msra.mxu0 0.0
    %6852 = vmatprep.subr.mxu0 0.0
    %6853 = vmatpush1.msra.mxu0 0.0
    %6854 = vmatprep.subr.mxu0 0.0
    %6855 = vmatpush1.msra.mxu0 0.0
    %6856 = vmatprep.subr.mxu0 0.0
    %6857 = vmatpush1.msra.mxu0 0.0
    %6858 = vmatprep.subr.mxu0 0.0
    %6859 = vmatpush1.msra.mxu0 0.0
    %6860 = vmatprep.subr.mxu0 0.0
    %6861 = vmatpush1.msra.mxu0 0.0
    %6862 = vmatprep.subr.mxu0 0.0
    %6863 = vmatpush1.msra.mxu0 0.0
    %6864 = vmatprep.subr.mxu0 0.0
    %6865 = vmatpush1.msra.mxu0 0.0
    %6866 = vmatprep.subr.mxu0 0.0
    %6867 = vmatpush1.msra.mxu0 %v6826
    %6868 = vmatprep.subr.mxu0 0.0
    %6869 = vmatpush2.msra.mxu0 0.0
    %6870 = vmatprep.subr.mxu0 0.0
    %6871 = vmatpush2.msra.mxu0 0.0
    %6872 = vmatprep.subr.mxu0 0.0
    %6873 = vmatpush2.msra.mxu0 0.0
    %6874 = vmatprep.subr.mxu0 0.0
    %6875 = vmatpush2.msra.mxu0 0.0
    %6876 = vmatprep.subr.mxu0 0.0
    %6877 = vmatpush2.msra.mxu0 0.0
    %6878 = vmatprep.subr.mxu0 0.0
    %6879 = vmatpush2.msra.mxu0 0.0
    %6880 = vmatprep.subr.mxu0 0.0
    %6881 = vmatpush2.msra.mxu0 0.0
    %6882 = vmatprep.subr.mxu0 0.0
    %6883 = vmatpush2.msra.mxu0 0.0
    %6884 = vmatprep.subr.mxu0 0.0
    %6885 = vmatpush2.msra.mxu0 0.0
    %6886 = vmatprep.subr.mxu0 0.0
    %6887 = vmatpush2.msra.mxu0 0.0
    %6888 = vmatprep.subr.mxu0 0.0
    %6889 = vmatpush2.msra.mxu0 0.0
    %6890 = vmatprep.subr.mxu0 0.0
    %6891 = vmatpush2.msra.mxu0 0.0
    %6892 = vmatprep.subr.mxu0 0.0
    %6893 = vmatpush2.msra.mxu0 0.0
    %6894 = vmatprep.subr.mxu0 0.0
    %6895 = vmatpush2.msra.mxu0 0.0
    %6896 = vmatprep.subr.mxu0 0.0
    %6897 = vmatpush2.msra.mxu0 0.0
    %6898 = vmatprep.subr.mxu0 0.0
    %6899 = vmatpush2.msra.mxu0 0.0
    %6900 = vmatprep.mubr.f32.mxu0 0.0
    %6901 = vmatmul.mubr.f32.gmra.mxu0 %v6828
    %v6902 = vpop.f32.mrf.mxu0
    %v6903 = vadd.f32 0.0, %v6902
    %v6904 = vpop.f32.mrf.mxu0
    %6905 = vmatprep.mubr.f32.mxu0 0.0
    %6906 = vmatmul.mubr.f32.gmra.mxu0 %v6831
    %v6907 = vpop.f32.mrf.mxu0
    %v6908 = vadd.f32 0.0, %v6907
    %v6909 = vpop.f32.mrf.mxu0
    %6910 = vmatprep.mubr.f32.mxu0 0.0
    %6911 = vmatmul.mubr.f32.gmra.mxu0 %v6834
    %v6912 = vpop.f32.mrf.mxu0
    %v6913 = vadd.f32 0.0, %v6912
    %v6914 = vpop.f32.mrf.mxu0
    %6915 = vdwg.mxu0
    %v6916 = vadd.f32 %v6724, %v6903
    %v6917 = vadd.f32 %v6725, %v6908
    %v6918 = vadd.f32 %v6726, %v6913
    %6919 = vrot.lane.b32.xlu0 %v5970, 48
    %v6920 = vpop.permute.xlu0 %6919
    %6921 = vrot.lane.b32.xlu0 %v5975, 48
    %v6922 = vpop.permute.xlu0 %6921
    %6923 = vrot.lane.b32.xlu0 %v5980, 48
    %v6924 = vpop.permute.xlu0 %6923
    %v6928 = vsel %vm752, %v6522, 0
    %v6931 = vsel %vm752, %v6523, 0
    %v6934 = vsel %vm752, %v6524, 0
    %v6936 = vsel %vm904, %v6924, 0
    %6938 = vmatprep.subr.mxu0 0.0
    %6939 = vmatpush1.msra.mxu0 0.0
    %6940 = vmatprep.subr.mxu0 0.0
    %6941 = vmatpush1.msra.mxu0 0.0
    %6942 = vmatprep.subr.mxu0 0.0
    %6943 = vmatpush1.msra.mxu0 0.0
    %6944 = vmatprep.subr.mxu0 0.0
    %6945 = vmatpush1.msra.mxu0 0.0
    %6946 = vmatprep.subr.mxu0 0.0
    %6947 = vmatpush1.msra.mxu0 0.0
    %6948 = vmatprep.subr.mxu0 0.0
    %6949 = vmatpush1.msra.mxu0 0.0
    %6950 = vmatprep.subr.mxu0 0.0
    %6951 = vmatpush1.msra.mxu0 0.0
    %6952 = vmatprep.subr.mxu0 0.0
    %6953 = vmatpush1.msra.mxu0 0.0
    %6954 = vmatprep.subr.mxu0 0.0
    %6955 = vmatpush1.msra.mxu0 0.0
    %6956 = vmatprep.subr.mxu0 0.0
    %6957 = vmatpush1.msra.mxu0 0.0
    %6958 = vmatprep.subr.mxu0 0.0
    %6959 = vmatpush1.msra.mxu0 0.0
    %6960 = vmatprep.subr.mxu0 0.0
    %6961 = vmatpush1.msra.mxu0 0.0
    %6962 = vmatprep.subr.mxu0 0.0
    %6963 = vmatpush1.msra.mxu0 0.0
    %6964 = vmatprep.subr.mxu0 0.0
    %6965 = vmatpush1.msra.mxu0 %v6936
    %6966 = vmatprep.subr.mxu0 0.0
    %6967 = vmatpush1.msra.mxu0 %v6922
    %6968 = vmatprep.subr.mxu0 0.0
    %6969 = vmatpush1.msra.mxu0 %v6920
    %6970 = vmatprep.subr.mxu0 0.0
    %6971 = vmatpush2.msra.mxu0 0.0
    %6972 = vmatprep.subr.mxu0 0.0
    %6973 = vmatpush2.msra.mxu0 0.0
    %6974 = vmatprep.subr.mxu0 0.0
    %6975 = vmatpush2.msra.mxu0 0.0
    %6976 = vmatprep.subr.mxu0 0.0
    %6977 = vmatpush2.msra.mxu0 0.0
    %6978 = vmatprep.subr.mxu0 0.0
    %6979 = vmatpush2.msra.mxu0 0.0
    %6980 = vmatprep.subr.mxu0 0.0
    %6981 = vmatpush2.msra.mxu0 0.0
    %6982 = vmatprep.subr.mxu0 0.0
    %6983 = vmatpush2.msra.mxu0 0.0
    %6984 = vmatprep.subr.mxu0 0.0
    %6985 = vmatpush2.msra.mxu0 0.0
    %6986 = vmatprep.subr.mxu0 0.0
    %6987 = vmatpush2.msra.mxu0 0.0
    %6988 = vmatprep.subr.mxu0 0.0
    %6989 = vmatpush2.msra.mxu0 0.0
    %6990 = vmatprep.subr.mxu0 0.0
    %6991 = vmatpush2.msra.mxu0 0.0
    %6992 = vmatprep.subr.mxu0 0.0
    %6993 = vmatpush2.msra.mxu0 0.0
    %6994 = vmatprep.subr.mxu0 0.0
    %6995 = vmatpush2.msra.mxu0 0.0
    %6996 = vmatprep.subr.mxu0 0.0
    %6997 = vmatpush2.msra.mxu0 0.0
    %6998 = vmatprep.subr.mxu0 0.0
    %6999 = vmatpush2.msra.mxu0 0.0
    %7000 = vmatprep.subr.mxu0 0.0
    %7001 = vmatpush2.msra.mxu0 0.0
    %7002 = vmatprep.mubr.f32.mxu0 0.0
    %7003 = vmatmul.mubr.f32.gmra.mxu0 %v6928
    %v7004 = vpop.f32.mrf.mxu0
    %v7005 = vadd.f32 0.0, %v7004
    %v7006 = vpop.f32.mrf.mxu0
    %7007 = vmatprep.mubr.f32.mxu0 0.0
    %7008 = vmatmul.mubr.f32.gmra.mxu0 %v6931
    %v7009 = vpop.f32.mrf.mxu0
    %v7010 = vadd.f32 0.0, %v7009
    %v7011 = vpop.f32.mrf.mxu0
    %7012 = vmatprep.mubr.f32.mxu0 0.0
    %7013 = vmatmul.mubr.f32.gmra.mxu0 %v6934
    %v7014 = vpop.f32.mrf.mxu0
    %v7015 = vadd.f32 0.0, %v7014
    %v7016 = vpop.f32.mrf.mxu0
    %7017 = vdwg.mxu0
    %v7018 = vld [vmem:[%s3149] sm:$0xff]
    %v7020 = vsel %vm347, %v7005, 0
    %v7023 = vsel %vm347, %v7010, 0
    %v7026 = vsel %vm347, %v7015, 0
    %7028 = vmatprep.subr.mxu0 0.0
    %7029 = vmatpush1.msra.mxu0 0.0
    %7030 = vmatprep.subr.mxu0 0.0
    %7031 = vmatpush1.msra.mxu0 0.0
    %7032 = vmatprep.subr.mxu0 0.0
    %7033 = vmatpush1.msra.mxu0 0.0
    %7034 = vmatprep.subr.mxu0 0.0
    %7035 = vmatpush1.msra.mxu0 0.0
    %7036 = vmatprep.subr.mxu0 0.0
    %7037 = vmatpush1.msra.mxu0 0.0
    %7038 = vmatprep.subr.mxu0 0.0
    %7039 = vmatpush1.msra.mxu0 0.0
    %7040 = vmatprep.subr.mxu0 0.0
    %7041 = vmatpush1.msra.mxu0 0.0
    %7042 = vmatprep.subr.mxu0 0.0
    %7043 = vmatpush1.msra.mxu0 0.0
    %7044 = vmatprep.subr.mxu0 0.0
    %7045 = vmatpush1.msra.mxu0 0.0
    %7046 = vmatprep.subr.mxu0 0.0
    %7047 = vmatpush1.msra.mxu0 0.0
    %7048 = vmatprep.subr.mxu0 0.0
    %7049 = vmatpush1.msra.mxu0 0.0
    %7050 = vmatprep.subr.mxu0 0.0
    %7051 = vmatpush1.msra.mxu0 0.0
    %7052 = vmatprep.subr.mxu0 0.0
    %7053 = vmatpush1.msra.mxu0 0.0
    %7054 = vmatprep.subr.mxu0 0.0
    %7055 = vmatpush1.msra.mxu0 0.0
    %7056 = vmatprep.subr.mxu0 0.0
    %7057 = vmatpush1.msra.mxu0 0.0
    %7058 = vmatprep.subr.mxu0 0.0
    %7059 = vmatpush1.msra.mxu0 %v7018
    %7060 = vmatprep.subr.mxu0 0.0
    %7061 = vmatpush2.msra.mxu0 0.0
    %7062 = vmatprep.subr.mxu0 0.0
    %7063 = vmatpush2.msra.mxu0 0.0
    %7064 = vmatprep.subr.mxu0 0.0
    %7065 = vmatpush2.msra.mxu0 0.0
    %7066 = vmatprep.subr.mxu0 0.0
    %7067 = vmatpush2.msra.mxu0 0.0
    %7068 = vmatprep.subr.mxu0 0.0
    %7069 = vmatpush2.msra.mxu0 0.0
    %7070 = vmatprep.subr.mxu0 0.0
    %7071 = vmatpush2.msra.mxu0 0.0
    %7072 = vmatprep.subr.mxu0 0.0
    %7073 = vmatpush2.msra.mxu0 0.0
    %7074 = vmatprep.subr.mxu0 0.0
    %7075 = vmatpush2.msra.mxu0 0.0
    %7076 = vmatprep.subr.mxu0 0.0
    %7077 = vmatpush2.msra.mxu0 0.0
    %7078 = vmatprep.subr.mxu0 0.0
    %7079 = vmatpush2.msra.mxu0 0.0
    %7080 = vmatprep.subr.mxu0 0.0
    %7081 = vmatpush2.msra.mxu0 0.0
    %7082 = vmatprep.subr.mxu0 0.0
    %7083 = vmatpush2.msra.mxu0 0.0
    %7084 = vmatprep.subr.mxu0 0.0
    %7085 = vmatpush2.msra.mxu0 0.0
    %7086 = vmatprep.subr.mxu0 0.0
    %7087 = vmatpush2.msra.mxu0 0.0
    %7088 = vmatprep.subr.mxu0 0.0
    %7089 = vmatpush2.msra.mxu0 0.0
    %7090 = vmatprep.subr.mxu0 0.0
    %7091 = vmatpush2.msra.mxu0 0.0
    %7092 = vmatprep.mubr.f32.mxu0 0.0
    %7093 = vmatmul.mubr.f32.gmra.mxu0 %v7020
    %v7094 = vpop.f32.mrf.mxu0
    %v7095 = vadd.f32 0.0, %v7094
    %v7096 = vpop.f32.mrf.mxu0
    %7097 = vmatprep.mubr.f32.mxu0 0.0
    %7098 = vmatmul.mubr.f32.gmra.mxu0 %v7023
    %v7099 = vpop.f32.mrf.mxu0
    %v7100 = vadd.f32 0.0, %v7099
    %v7101 = vpop.f32.mrf.mxu0
    %7102 = vmatprep.mubr.f32.mxu0 0.0
    %7103 = vmatmul.mubr.f32.gmra.mxu0 %v7026
    %v7104 = vpop.f32.mrf.mxu0
    %v7105 = vadd.f32 0.0, %v7104
    %v7106 = vpop.f32.mrf.mxu0
    %7107 = vdwg.mxu0
    %v7108 = vadd.f32 %v6916, %v7095
    %v7109 = vadd.f32 %v6917, %v7100
    %v7110 = vadd.f32 %v6918, %v7105
    %7111 = vrot.lane.b32.xlu0 %v5970, 40
    %v7112 = vpop.permute.xlu0 %7111
    %7113 = vrot.lane.b32.xlu0 %v5975, 40
    %v7114 = vpop.permute.xlu0 %7113
    %7115 = vrot.lane.b32.xlu0 %v5980, 40
    %v7116 = vpop.permute.xlu0 %7115
    %v7120 = vsel %vm752, %v6525, 0
    %v7123 = vsel %vm752, %v6526, 0
    %v7126 = vsel %vm752, %v6527, 0
    %v7128 = vsel %vm904, %v7116, 0
    %7130 = vmatprep.subr.mxu0 0.0
    %7131 = vmatpush1.msra.mxu0 0.0
    %7132 = vmatprep.subr.mxu0 0.0
    %7133 = vmatpush1.msra.mxu0 0.0
    %7134 = vmatprep.subr.mxu0 0.0
    %7135 = vmatpush1.msra.mxu0 0.0
    %7136 = vmatprep.subr.mxu0 0.0
    %7137 = vmatpush1.msra.mxu0 0.0
    %7138 = vmatprep.subr.mxu0 0.0
    %7139 = vmatpush1.msra.mxu0 0.0
    %7140 = vmatprep.subr.mxu0 0.0
    %7141 = vmatpush1.msra.mxu0 0.0
    %7142 = vmatprep.subr.mxu0 0.0
    %7143 = vmatpush1.msra.mxu0 0.0
    %7144 = vmatprep.subr.mxu0 0.0
    %7145 = vmatpush1.msra.mxu0 0.0
    %7146 = vmatprep.subr.mxu0 0.0
    %7147 = vmatpush1.msra.mxu0 0.0
    %7148 = vmatprep.subr.mxu0 0.0
    %7149 = vmatpush1.msra.mxu0 0.0
    %7150 = vmatprep.subr.mxu0 0.0
    %7151 = vmatpush1.msra.mxu0 0.0
    %7152 = vmatprep.subr.mxu0 0.0
    %7153 = vmatpush1.msra.mxu0 0.0
    %7154 = vmatprep.subr.mxu0 0.0
    %7155 = vmatpush1.msra.mxu0 0.0
    %7156 = vmatprep.subr.mxu0 0.0
    %7157 = vmatpush1.msra.mxu0 %v7128
    %7158 = vmatprep.subr.mxu0 0.0
    %7159 = vmatpush1.msra.mxu0 %v7114
    %7160 = vmatprep.subr.mxu0 0.0
    %7161 = vmatpush1.msra.mxu0 %v7112
    %7162 = vmatprep.subr.mxu0 0.0
    %7163 = vmatpush2.msra.mxu0 0.0
    %7164 = vmatprep.subr.mxu0 0.0
    %7165 = vmatpush2.msra.mxu0 0.0
    %7166 = vmatprep.subr.mxu0 0.0
    %7167 = vmatpush2.msra.mxu0 0.0
    %7168 = vmatprep.subr.mxu0 0.0
    %7169 = vmatpush2.msra.mxu0 0.0
    %7170 = vmatprep.subr.mxu0 0.0
    %7171 = vmatpush2.msra.mxu0 0.0
    %7172 = vmatprep.subr.mxu0 0.0
    %7173 = vmatpush2.msra.mxu0 0.0
    %7174 = vmatprep.subr.mxu0 0.0
    %7175 = vmatpush2.msra.mxu0 0.0
    %7176 = vmatprep.subr.mxu0 0.0
    %7177 = vmatpush2.msra.mxu0 0.0
    %7178 = vmatprep.subr.mxu0 0.0
    %7179 = vmatpush2.msra.mxu0 0.0
    %7180 = vmatprep.subr.mxu0 0.0
    %7181 = vmatpush2.msra.mxu0 0.0
    %7182 = vmatprep.subr.mxu0 0.0
    %7183 = vmatpush2.msra.mxu0 0.0
    %7184 = vmatprep.subr.mxu0 0.0
    %7185 = vmatpush2.msra.mxu0 0.0
    %7186 = vmatprep.subr.mxu0 0.0
    %7187 = vmatpush2.msra.mxu0 0.0
    %7188 = vmatprep.subr.mxu0 0.0
    %7189 = vmatpush2.msra.mxu0 0.0
    %7190 = vmatprep.subr.mxu0 0.0
    %7191 = vmatpush2.msra.mxu0 0.0
    %7192 = vmatprep.subr.mxu0 0.0
    %7193 = vmatpush2.msra.mxu0 0.0
    %7194 = vmatprep.mubr.f32.mxu0 0.0
    %7195 = vmatmul.mubr.f32.gmra.mxu0 %v7120
    %v7196 = vpop.f32.mrf.mxu0
    %v7197 = vadd.f32 0.0, %v7196
    %v7198 = vpop.f32.mrf.mxu0
    %7199 = vmatprep.mubr.f32.mxu0 0.0
    %7200 = vmatmul.mubr.f32.gmra.mxu0 %v7123
    %v7201 = vpop.f32.mrf.mxu0
    %v7202 = vadd.f32 0.0, %v7201
    %v7203 = vpop.f32.mrf.mxu0
    %7204 = vmatprep.mubr.f32.mxu0 0.0
    %7205 = vmatmul.mubr.f32.gmra.mxu0 %v7126
    %v7206 = vpop.f32.mrf.mxu0
    %v7207 = vadd.f32 0.0, %v7206
    %v7208 = vpop.f32.mrf.mxu0
    %7209 = vdwg.mxu0
    %v7210 = vld [vmem:[%s3342] sm:$0xff]
    %v7212 = vsel %vm347, %v7197, 0
    %v7215 = vsel %vm347, %v7202, 0
    %v7218 = vsel %vm347, %v7207, 0
    %7220 = vmatprep.subr.mxu0 0.0
    %7221 = vmatpush1.msra.mxu0 0.0
    %7222 = vmatprep.subr.mxu0 0.0
    %7223 = vmatpush1.msra.mxu0 0.0
    %7224 = vmatprep.subr.mxu0 0.0
    %7225 = vmatpush1.msra.mxu0 0.0
    %7226 = vmatprep.subr.mxu0 0.0
    %7227 = vmatpush1.msra.mxu0 0.0
    %7228 = vmatprep.subr.mxu0 0.0
    %7229 = vmatpush1.msra.mxu0 0.0
    %7230 = vmatprep.subr.mxu0 0.0
    %7231 = vmatpush1.msra.mxu0 0.0
    %7232 = vmatprep.subr.mxu0 0.0
    %7233 = vmatpush1.msra.mxu0 0.0
    %7234 = vmatprep.subr.mxu0 0.0
    %7235 = vmatpush1.msra.mxu0 0.0
    %7236 = vmatprep.subr.mxu0 0.0
    %7237 = vmatpush1.msra.mxu0 0.0
    %7238 = vmatprep.subr.mxu0 0.0
    %7239 = vmatpush1.msra.mxu0 0.0
    %7240 = vmatprep.subr.mxu0 0.0
    %7241 = vmatpush1.msra.mxu0 0.0
    %7242 = vmatprep.subr.mxu0 0.0
    %7243 = vmatpush1.msra.mxu0 0.0
    %7244 = vmatprep.subr.mxu0 0.0
    %7245 = vmatpush1.msra.mxu0 0.0
    %7246 = vmatprep.subr.mxu0 0.0
    %7247 = vmatpush1.msra.mxu0 0.0
    %7248 = vmatprep.subr.mxu0 0.0
    %7249 = vmatpush1.msra.mxu0 0.0
    %7250 = vmatprep.subr.mxu0 0.0
    %7251 = vmatpush1.msra.mxu0 %v7210
    %7252 = vmatprep.subr.mxu0 0.0
    %7253 = vmatpush2.msra.mxu0 0.0
    %7254 = vmatprep.subr.mxu0 0.0
    %7255 = vmatpush2.msra.mxu0 0.0
    %7256 = vmatprep.subr.mxu0 0.0
    %7257 = vmatpush2.msra.mxu0 0.0
    %7258 = vmatprep.subr.mxu0 0.0
    %7259 = vmatpush2.msra.mxu0 0.0
    %7260 = vmatprep.subr.mxu0 0.0
    %7261 = vmatpush2.msra.mxu0 0.0
    %7262 = vmatprep.subr.mxu0 0.0
    %7263 = vmatpush2.msra.mxu0 0.0
    %7264 = vmatprep.subr.mxu0 0.0
    %7265 = vmatpush2.msra.mxu0 0.0
    %7266 = vmatprep.subr.mxu0 0.0
    %7267 = vmatpush2.msra.mxu0 0.0
    %7268 = vmatprep.subr.mxu0 0.0
    %7269 = vmatpush2.msra.mxu0 0.0
    %7270 = vmatprep.subr.mxu0 0.0
    %7271 = vmatpush2.msra.mxu0 0.0
    %7272 = vmatprep.subr.mxu0 0.0
    %7273 = vmatpush2.msra.mxu0 0.0
    %7274 = vmatprep.subr.mxu0 0.0
    %7275 = vmatpush2.msra.mxu0 0.0
    %7276 = vmatprep.subr.mxu0 0.0
    %7277 = vmatpush2.msra.mxu0 0.0
    %7278 = vmatprep.subr.mxu0 0.0
    %7279 = vmatpush2.msra.mxu0 0.0
    %7280 = vmatprep.subr.mxu0 0.0
    %7281 = vmatpush2.msra.mxu0 0.0
    %7282 = vmatprep.subr.mxu0 0.0
    %7283 = vmatpush2.msra.mxu0 0.0
    %7284 = vmatprep.mubr.f32.mxu0 0.0
    %7285 = vmatmul.mubr.f32.gmra.mxu0 %v7212
    %v7286 = vpop.f32.mrf.mxu0
    %v7287 = vadd.f32 0.0, %v7286
    %v7288 = vpop.f32.mrf.mxu0
    %7289 = vmatprep.mubr.f32.mxu0 0.0
    %7290 = vmatmul.mubr.f32.gmra.mxu0 %v7215
    %v7291 = vpop.f32.mrf.mxu0
    %v7292 = vadd.f32 0.0, %v7291
    %v7293 = vpop.f32.mrf.mxu0
    %7294 = vmatprep.mubr.f32.mxu0 0.0
    %7295 = vmatmul.mubr.f32.gmra.mxu0 %v7218
    %v7296 = vpop.f32.mrf.mxu0
    %v7297 = vadd.f32 0.0, %v7296
    %v7298 = vpop.f32.mrf.mxu0
    %7299 = vdwg.mxu0
    %v7300 = vadd.f32 %v7108, %v7287
    %v7301 = vadd.f32 %v7109, %v7292
    %v7302 = vadd.f32 %v7110, %v7297
    %v7303 = vadd.f32 %v5821, %v7300
    %v7304 = vadd.f32 %v5822, %v7301
    %v7305 = vadd.f32 %v5823, %v7302
    %v7306 = vld [vmem:[%s3439] sm:$0x1]
    %v7307 = vld [vmem:[%s3441] sm:$0x1]
    %v7308 = vsel %vm178, %v7303, 0.0
    %7309 = vadd.xlane.f32.xlu0 %v7308
    %v7310 = vpop.xlane.xlu0 %7309
    %v7311 = vsel %vm178, %v7304, 0.0
    %7312 = vadd.xlane.f32.xlu0 %v7311
    %v7313 = vpop.xlane.xlu0 %7312
    %v7314 = vsel %vm185, %v7305, 0.0
    %7315 = vadd.xlane.f32.xlu0 %v7314
    %v7316 = vpop.xlane.xlu0 %7315
    %v7317 = vmul.f32 %v7310, %v189
    %v7318 = vmul.f32 %v7313, %v189
    %v7319 = vmul.f32 %v7316, %v189
    %v7320 = vsub.f32 %v7303, %v7317
    %v7321 = vsub.f32 %v7304, %v7318
    %v7322 = vsub.f32 %v7305, %v7319
    %v7323 = vmul.f32 %v7320, %v7320
    %v7324 = vmul.f32 %v7321, %v7321
    %v7325 = vmul.f32 %v7322, %v7322
    %v7326 = vsel %vm178, %v7323, 0.0
    %7327 = vadd.xlane.f32.xlu0 %v7326
    %v7328 = vpop.xlane.xlu0 %7327
    %v7329 = vsel %vm178, %v7324, 0.0
    %7330 = vadd.xlane.f32.xlu0 %v7329
    %v7331 = vpop.xlane.xlu0 %7330
    %v7332 = vsel %vm185, %v7325, 0.0
    %7333 = vadd.xlane.f32.xlu0 %v7332
    %v7334 = vpop.xlane.xlu0 %7333
    %v7335 = vmul.f32 %v7328, %v189
    %v7336 = vmul.f32 %v7331, %v189
    %v7337 = vmul.f32 %v7334, %v189
    %v7338 = vadd.f32 %v7335, 1e-06
    %v7339 = vadd.f32 %v7336, 1e-06
    %v7340 = vadd.f32 %v7337, 1e-06
    %v7341 = vrsqrt.pop %v7338
    %v7342 = vrsqrt.pop %v7339
    %v7343 = vrsqrt.pop %v7340
    %v7344 = vmul.f32 %v7320, %v7341
    %v7345 = vmul.f32 %v7321, %v7342
    %v7346 = vmul.f32 %v7322, %v7343
    %v7348 = vlaneseq
    %v7349 = vshrl.u32 %v7348, 7
    %v7350 = vsub.s32 0, %v7349
    %v7351 = vrot.slane %v7306, %v7350
    %v7353 = vmul.f32 %v7344, %v7351
    %v7354 = vmul.f32 %v7345, %v7351
    %v7355 = vmul.f32 %v7346, %v7351
    %v7357 = vlaneseq
    %v7358 = vshrl.u32 %v7357, 7
    %v7359 = vsub.s32 0, %v7358
    %v7360 = vrot.slane %v7307, %v7359
    %v7362 = vadd.f32 %v7353, %v7360
    %v7363 = vadd.f32 %v7354, %v7360
    %v7364 = vadd.f32 %v7355, %v7360
    %v7365 = vld [vmem:[%s3500] sm:$0xff]
    %v7366 = vld [vmem:[%s3500 + $0x8] sm:$0xff]
    %v7367 = vld [vmem:[%s3500 + $0x10] sm:$0xff]
    %v7368 = vld [vmem:[%s3500 + $0x18] sm:$0xff]
    %v7369 = vld [vmem:[%s3505] sm:$0x1]
    %v7371 = vlaneseq
    %v7372 = vshrl.u32 %v7371, 7
    %v7373 = vsub.s32 0, %v7372
    %v7374 = vrot.slane %v7369, %v7373
    %v7377 = vsel %vm178, %v7362, 0
    %v7380 = vsel %vm178, %v7363, 0
    %v7383 = vsel %vm178, %v7364, 0
    %7385 = vmatprep.subr.mxu0 0.0
    %7386 = vmatpush1.msra.mxu0 0.0
    %7387 = vmatprep.subr.mxu0 0.0
    %7388 = vmatpush1.msra.mxu0 0.0
    %7389 = vmatprep.subr.mxu0 0.0
    %7390 = vmatpush1.msra.mxu0 0.0
    %7391 = vmatprep.subr.mxu0 0.0
    %7392 = vmatpush1.msra.mxu0 0.0
    %7393 = vmatprep.subr.mxu0 0.0
    %7394 = vmatpush1.msra.mxu0 0.0
    %7395 = vmatprep.subr.mxu0 0.0
    %7396 = vmatpush1.msra.mxu0 0.0
    %7397 = vmatprep.subr.mxu0 0.0
    %7398 = vmatpush1.msra.mxu0 0.0
    %7399 = vmatprep.subr.mxu0 0.0
    %7400 = vmatpush1.msra.mxu0 0.0
    %7401 = vmatprep.subr.mxu0 0.0
    %7402 = vmatpush1.msra.mxu0 0.0
    %7403 = vmatprep.subr.mxu0 0.0
    %7404 = vmatpush1.msra.mxu0 0.0
    %7405 = vmatprep.subr.mxu0 0.0
    %7406 = vmatpush1.msra.mxu0 0.0
    %7407 = vmatprep.subr.mxu0 0.0
    %7408 = vmatpush1.msra.mxu0 0.0
    %7409 = vmatprep.subr.mxu0 0.0
    %7410 = vmatpush1.msra.mxu0 %v7368
    %7411 = vmatprep.subr.mxu0 0.0
    %7412 = vmatpush1.msra.mxu0 %v7367
    %7413 = vmatprep.subr.mxu0 0.0
    %7414 = vmatpush1.msra.mxu0 %v7366
    %7415 = vmatprep.subr.mxu0 0.0
    %7416 = vmatpush1.msra.mxu0 %v7365
    %7417 = vmatprep.subr.mxu0 0.0
    %7418 = vmatpush2.msra.mxu0 0.0
    %7419 = vmatprep.subr.mxu0 0.0
    %7420 = vmatpush2.msra.mxu0 0.0
    %7421 = vmatprep.subr.mxu0 0.0
    %7422 = vmatpush2.msra.mxu0 0.0
    %7423 = vmatprep.subr.mxu0 0.0
    %7424 = vmatpush2.msra.mxu0 0.0
    %7425 = vmatprep.subr.mxu0 0.0
    %7426 = vmatpush2.msra.mxu0 0.0
    %7427 = vmatprep.subr.mxu0 0.0
    %7428 = vmatpush2.msra.mxu0 0.0
    %7429 = vmatprep.subr.mxu0 0.0
    %7430 = vmatpush2.msra.mxu0 0.0
    %7431 = vmatprep.subr.mxu0 0.0
    %7432 = vmatpush2.msra.mxu0 0.0
    %7433 = vmatprep.subr.mxu0 0.0
    %7434 = vmatpush2.msra.mxu0 0.0
    %7435 = vmatprep.subr.mxu0 0.0
    %7436 = vmatpush2.msra.mxu0 0.0
    %7437 = vmatprep.subr.mxu0 0.0
    %7438 = vmatpush2.msra.mxu0 0.0
    %7439 = vmatprep.subr.mxu0 0.0
    %7440 = vmatpush2.msra.mxu0 0.0
    %7441 = vmatprep.subr.mxu0 0.0
    %7442 = vmatpush2.msra.mxu0 0.0
    %7443 = vmatprep.subr.mxu0 0.0
    %7444 = vmatpush2.msra.mxu0 0.0
    %7445 = vmatprep.subr.mxu0 0.0
    %7446 = vmatpush2.msra.mxu0 0.0
    %7447 = vmatprep.subr.mxu0 0.0
    %7448 = vmatpush2.msra.mxu0 0.0
    %7449 = vmatprep.mubr.f32.mxu0 0.0
    %7450 = vmatmul.mubr.f32.gmra.mxu0 %v7377
    %v7451 = vpop.f32.mrf.mxu0
    %v7452 = vadd.f32 %v7374, %v7451
    %v7453 = vpop.f32.mrf.mxu0
    %7454 = vmatprep.mubr.f32.mxu0 0.0
    %7455 = vmatmul.mubr.f32.gmra.mxu0 %v7380
    %v7456 = vpop.f32.mrf.mxu0
    %v7457 = vadd.f32 %v7374, %v7456
    %v7458 = vpop.f32.mrf.mxu0
    %7459 = vmatprep.mubr.f32.mxu0 0.0
    %7460 = vmatmul.mubr.f32.gmra.mxu0 %v7383
    %v7461 = vpop.f32.mrf.mxu0
    %v7462 = vadd.f32 %v7374, %v7461
    %v7463 = vpop.f32.mrf.mxu0
    %7464 = vdwg.mxu0
    %v7465 = vmul.f32 %v7452, 0.5
    %v7466 = vmul.f32 %v7457, 0.5
    %v7467 = vmul.f32 %v7462, 0.5
    %v7468 = vmul.f32 %v7452, 0.70710677
    %v7469 = vmul.f32 %v7457, 0.70710677
    %v7470 = vmul.f32 %v7462, 0.70710677
    %v7471 = verf.f32.pop %v7468
    %v7472 = verf.f32.pop %v7469
    %v7473 = verf.f32.pop %v7470
    %v7474 = vadd.f32 %v7471, 1.0
    %v7475 = vadd.f32 %v7472, 1.0
    %v7476 = vadd.f32 %v7473, 1.0
    %v7477 = vmul.f32 %v7465, %v7474
    %v7478 = vmul.f32 %v7466, %v7475
    %v7479 = vmul.f32 %v7467, %v7476
    %v7480 = vld [vmem:[%s3617] sm:$0xff]
    %v7481 = vld [vmem:[%s3617 + $0x8] sm:$0xff]
    %v7482 = vld [vmem:[%s3617 + $0x10] sm:$0xff]
    %v7483 = vld [vmem:[%s3617 + $0x18] sm:$0xff]
    %v7484 = vld [vmem:[%s3617 + $0x20] sm:$0xff]
    %v7485 = vld [vmem:[%s3617 + $0x28] sm:$0xff]
    %v7486 = vld [vmem:[%s3617 + $0x30] sm:$0xff]
    %v7487 = vld [vmem:[%s3617 + $0x38] sm:$0xff]
    %v7488 = vld [vmem:[%s3617 + $0x40] sm:$0xff]
    %v7489 = vld [vmem:[%s3617 + $0x48] sm:$0xff]
    %v7490 = vld [vmem:[%s3617 + $0x50] sm:$0xff]
    %v7491 = vld [vmem:[%s3617 + $0x58] sm:$0xff]
    %v7492 = vld [vmem:[%s3617 + $0x60] sm:$0xff]
    %v7493 = vld [vmem:[%s3617 + $0x68] sm:$0xff]
    %v7494 = vld [vmem:[%s3617 + $0x70] sm:$0xff]
    %v7495 = vld [vmem:[%s3617 + $0x78] sm:$0xff]
    %v7496 = vld [vmem:[%s3634] sm:$0x1]
    %v7498 = vlaneseq
    %v7499 = vshrl.u32 %v7498, 7
    %v7500 = vsub.s32 0, %v7499
    %v7501 = vrot.slane %v7496, %v7500
    %7503 = vmatprep.subr.mxu0 0.0
    %7504 = vmatpush1.msra.mxu0 %v7495
    %7505 = vmatprep.subr.mxu0 0.0
    %7506 = vmatpush1.msra.mxu0 %v7494
    %7507 = vmatprep.subr.mxu0 0.0
    %7508 = vmatpush1.msra.mxu0 %v7493
    %7509 = vmatprep.subr.mxu0 0.0
    %7510 = vmatpush1.msra.mxu0 %v7492
    %7511 = vmatprep.subr.mxu0 0.0
    %7512 = vmatpush1.msra.mxu0 %v7491
    %7513 = vmatprep.subr.mxu0 0.0
    %7514 = vmatpush1.msra.mxu0 %v7490
    %7515 = vmatprep.subr.mxu0 0.0
    %7516 = vmatpush1.msra.mxu0 %v7489
    %7517 = vmatprep.subr.mxu0 0.0
    %7518 = vmatpush1.msra.mxu0 %v7488
    %7519 = vmatprep.subr.mxu0 0.0
    %7520 = vmatpush1.msra.mxu0 %v7487
    %7521 = vmatprep.subr.mxu0 0.0
    %7522 = vmatpush1.msra.mxu0 %v7486
    %7523 = vmatprep.subr.mxu0 0.0
    %7524 = vmatpush1.msra.mxu0 %v7485
    %7525 = vmatprep.subr.mxu0 0.0
    %7526 = vmatpush1.msra.mxu0 %v7484
    %7527 = vmatprep.subr.mxu0 0.0
    %7528 = vmatpush1.msra.mxu0 %v7483
    %7529 = vmatprep.subr.mxu0 0.0
    %7530 = vmatpush1.msra.mxu0 %v7482
    %7531 = vmatprep.subr.mxu0 0.0
    %7532 = vmatpush1.msra.mxu0 %v7481
    %7533 = vmatprep.subr.mxu0 0.0
    %7534 = vmatpush1.msra.mxu0 %v7480
    %7535 = vmatprep.subr.mxu0 0.0
    %7536 = vmatpush2.msra.mxu0 0.0
    %7537 = vmatprep.subr.mxu0 0.0
    %7538 = vmatpush2.msra.mxu0 0.0
    %7539 = vmatprep.subr.mxu0 0.0
    %7540 = vmatpush2.msra.mxu0 0.0
    %7541 = vmatprep.subr.mxu0 0.0
    %7542 = vmatpush2.msra.mxu0 0.0
    %7543 = vmatprep.subr.mxu0 0.0
    %7544 = vmatpush2.msra.mxu0 0.0
    %7545 = vmatprep.subr.mxu0 0.0
    %7546 = vmatpush2.msra.mxu0 0.0
    %7547 = vmatprep.subr.mxu0 0.0
    %7548 = vmatpush2.msra.mxu0 0.0
    %7549 = vmatprep.subr.mxu0 0.0
    %7550 = vmatpush2.msra.mxu0 0.0
    %7551 = vmatprep.subr.mxu0 0.0
    %7552 = vmatpush2.msra.mxu0 0.0
    %7553 = vmatprep.subr.mxu0 0.0
    %7554 = vmatpush2.msra.mxu0 0.0
    %7555 = vmatprep.subr.mxu0 0.0
    %7556 = vmatpush2.msra.mxu0 0.0
    %7557 = vmatprep.subr.mxu0 0.0
    %7558 = vmatpush2.msra.mxu0 0.0
    %7559 = vmatprep.subr.mxu0 0.0
    %7560 = vmatpush2.msra.mxu0 0.0
    %7561 = vmatprep.subr.mxu0 0.0
    %7562 = vmatpush2.msra.mxu0 0.0
    %7563 = vmatprep.subr.mxu0 0.0
    %7564 = vmatpush2.msra.mxu0 0.0
    %7565 = vmatprep.subr.mxu0 0.0
    %7566 = vmatpush2.msra.mxu0 0.0
    %7567 = vmatprep.mubr.f32.mxu0 0.0
    %7568 = vmatmul.mubr.f32.gmra.mxu0 %v7477
    %v7569 = vpop.f32.mrf.mxu0
    %v7570 = vadd.f32 %v7501, %v7569
    %v7571 = vpop.f32.mrf.mxu0
    %7572 = vmatprep.mubr.f32.mxu0 0.0
    %7573 = vmatmul.mubr.f32.gmra.mxu0 %v7478
    %v7574 = vpop.f32.mrf.mxu0
    %v7575 = vadd.f32 %v7501, %v7574
    %v7576 = vpop.f32.mrf.mxu0
    %7577 = vmatprep.mubr.f32.mxu0 0.0
    %7578 = vmatmul.mubr.f32.gmra.mxu0 %v7479
    %v7579 = vpop.f32.mrf.mxu0
    %v7580 = vadd.f32 %v7501, %v7579
    %v7581 = vpop.f32.mrf.mxu0
    %7582 = vdwg.mxu0
    %v7583 = vadd.f32 %v7303, %v7570
    %v7584 = vadd.f32 %v7304, %v7575
    %v7585 = vadd.f32 %v7305, %v7580
    %v7586 = vld [vmem:[%s16] sm:$0x1]
    %v7587 = vld [vmem:[%s17] sm:$0x1]
    %v7588 = vsel %vm178, %v7583, 0.0
    %7589 = vadd.xlane.f32.xlu0 %v7588
    %v7590 = vpop.xlane.xlu0 %7589
    %v7591 = vsel %vm178, %v7584, 0.0
    %7592 = vadd.xlane.f32.xlu0 %v7591
    %v7593 = vpop.xlane.xlu0 %7592
    %v7594 = vsel %vm185, %v7585, 0.0
    %7595 = vadd.xlane.f32.xlu0 %v7594
    %v7596 = vpop.xlane.xlu0 %7595
    %v7597 = vmul.f32 %v7590, %v189
    %v7598 = vmul.f32 %v7593, %v189
    %v7599 = vmul.f32 %v7596, %v189
    %v7600 = vsub.f32 %v7583, %v7597
    %v7601 = vsub.f32 %v7584, %v7598
    %v7602 = vsub.f32 %v7585, %v7599
    %v7603 = vmul.f32 %v7600, %v7600
    %v7604 = vmul.f32 %v7601, %v7601
    %v7605 = vmul.f32 %v7602, %v7602
    %v7606 = vsel %vm178, %v7603, 0.0
    %7607 = vadd.xlane.f32.xlu0 %v7606
    %v7608 = vpop.xlane.xlu0 %7607
    %v7609 = vsel %vm178, %v7604, 0.0
    %7610 = vadd.xlane.f32.xlu0 %v7609
    %v7611 = vpop.xlane.xlu0 %7610
    %v7612 = vsel %vm185, %v7605, 0.0
    %7613 = vadd.xlane.f32.xlu0 %v7612
    %v7614 = vpop.xlane.xlu0 %7613
    %v7615 = vmul.f32 %v7608, %v189
    %v7616 = vmul.f32 %v7611, %v189
    %v7617 = vmul.f32 %v7614, %v189
    %v7618 = vadd.f32 %v7615, 1e-06
    %v7619 = vadd.f32 %v7616, 1e-06
    %v7620 = vadd.f32 %v7617, 1e-06
    %v7621 = vrsqrt.pop %v7618
    %v7622 = vrsqrt.pop %v7619
    %v7623 = vrsqrt.pop %v7620
    %v7624 = vmul.f32 %v7600, %v7621
    %v7625 = vmul.f32 %v7601, %v7622
    %v7626 = vmul.f32 %v7602, %v7623
    %v7628 = vlaneseq
    %v7629 = vshrl.u32 %v7628, 7
    %v7630 = vsub.s32 0, %v7629
    %v7631 = vrot.slane %v7586, %v7630
    %v7633 = vmul.f32 %v7624, %v7631
    %v7634 = vmul.f32 %v7625, %v7631
    %v7635 = vmul.f32 %v7626, %v7631
    %v7637 = vlaneseq
    %v7638 = vshrl.u32 %v7637, 7
    %v7639 = vsub.s32 0, %v7638
    %v7640 = vrot.slane %v7587, %v7639
    %v7642 = vadd.f32 %v7633, %v7640
    %v7643 = vadd.f32 %v7634, %v7640
    %v7644 = vadd.f32 %v7635, %v7640
    %s7645 = scalar_lea.vmem %s1, 1
    %v7646 = vld [vmem:[%s7645] sm:$0x1]
    %v7648 = vsel %vm752, %v7646, 0
    %v7651 = vsel %vm904, %v7644, 0
    %7653 = vmatprep.subr.mxu0 0.0
    %7654 = vmatpush1.msra.mxu0 0.0
    %7655 = vmatprep.subr.mxu0 0.0
    %7656 = vmatpush1.msra.mxu0 0.0
    %7657 = vmatprep.subr.mxu0 0.0
    %7658 = vmatpush1.msra.mxu0 0.0
    %7659 = vmatprep.subr.mxu0 0.0
    %7660 = vmatpush1.msra.mxu0 0.0
    %7661 = vmatprep.subr.mxu0 0.0
    %7662 = vmatpush1.msra.mxu0 0.0
    %7663 = vmatprep.subr.mxu0 0.0
    %7664 = vmatpush1.msra.mxu0 0.0
    %7665 = vmatprep.subr.mxu0 0.0
    %7666 = vmatpush1.msra.mxu0 0.0
    %7667 = vmatprep.subr.mxu0 0.0
    %7668 = vmatpush1.msra.mxu0 0.0
    %7669 = vmatprep.subr.mxu0 0.0
    %7670 = vmatpush1.msra.mxu0 0.0
    %7671 = vmatprep.subr.mxu0 0.0
    %7672 = vmatpush1.msra.mxu0 0.0
    %7673 = vmatprep.subr.mxu0 0.0
    %7674 = vmatpush1.msra.mxu0 0.0
    %7675 = vmatprep.subr.mxu0 0.0
    %7676 = vmatpush1.msra.mxu0 0.0
    %7677 = vmatprep.subr.mxu0 0.0
    %7678 = vmatpush1.msra.mxu0 0.0
    %7679 = vmatprep.subr.mxu0 0.0
    %7680 = vmatpush1.msra.mxu0 %v7651
    %7681 = vmatprep.subr.mxu0 0.0
    %7682 = vmatpush1.msra.mxu0 %v7643
    %7683 = vmatprep.subr.mxu0 0.0
    %7684 = vmatpush1.msra.mxu0 %v7642
    %7685 = vmatprep.subr.mxu0 0.0
    %7686 = vmatpush2.msra.mxu0 0.0
    %7687 = vmatprep.subr.mxu0 0.0
    %7688 = vmatpush2.msra.mxu0 0.0
    %7689 = vmatprep.subr.mxu0 0.0
    %7690 = vmatpush2.msra.mxu0 0.0
    %7691 = vmatprep.subr.mxu0 0.0
    %7692 = vmatpush2.msra.mxu0 0.0
    %7693 = vmatprep.subr.mxu0 0.0
    %7694 = vmatpush2.msra.mxu0 0.0
    %7695 = vmatprep.subr.mxu0 0.0
    %7696 = vmatpush2.msra.mxu0 0.0
    %7697 = vmatprep.subr.mxu0 0.0
    %7698 = vmatpush2.msra.mxu0 0.0
    %7699 = vmatprep.subr.mxu0 0.0
    %7700 = vmatpush2.msra.mxu0 0.0
    %7701 = vmatprep.subr.mxu0 0.0
    %7702 = vmatpush2.msra.mxu0 0.0
    %7703 = vmatprep.subr.mxu0 0.0
    %7704 = vmatpush2.msra.mxu0 0.0
    %7705 = vmatprep.subr.mxu0 0.0
    %7706 = vmatpush2.msra.mxu0 0.0
    %7707 = vmatprep.subr.mxu0 0.0
    %7708 = vmatpush2.msra.mxu0 0.0
    %7709 = vmatprep.subr.mxu0 0.0
    %7710 = vmatpush2.msra.mxu0 0.0
    %7711 = vmatprep.subr.mxu0 0.0
    %7712 = vmatpush2.msra.mxu0 0.0
    %7713 = vmatprep.subr.mxu0 0.0
    %7714 = vmatpush2.msra.mxu0 0.0
    %7715 = vmatprep.subr.mxu0 0.0
    %7716 = vmatpush2.msra.mxu0 0.0
    %7717 = vmatprep.mubr.f32.mxu0 0.0
    %7718 = vmatmul.mubr.f32.gmra.mxu0 %v7648
    %v7719 = vpop.f32.mrf.mxu0
    %v7720 = vadd.f32 0.0, %v7719
    %v7721 = vpop.f32.mrf.mxu0
    %7722 = vdwg.mxu0
    %v7723 = vld [vmem:[%s18] sm:$0x1]
    %v7724 = vld [vmem:[%s19] sm:$0x1]
    %v7725 = vsel %vm185, %v7720, 0.0
    %7726 = vadd.xlane.f32.xlu0 %v7725
    %v7727 = vpop.xlane.xlu0 %7726
    %v7728 = vmul.f32 %v7727, %v189
    %v7729 = vsub.f32 %v7720, %v7728
    %v7730 = vmul.f32 %v7729, %v7729
    %v7731 = vsel %vm185, %v7730, 0.0
    %7732 = vadd.xlane.f32.xlu0 %v7731
    %v7733 = vpop.xlane.xlu0 %7732
    %v7734 = vmul.f32 %v7733, %v189
    %v7735 = vadd.f32 %v7734, 1e-06
    %v7736 = vrsqrt.pop %v7735
    %v7737 = vmul.f32 %v7729, %v7736
    %v7738 = vmul.f32 %v7737, %v7723
    %v7739 = vadd.f32 %v7738, %v7724
    %v7740 = vld [vmem:[%s20] sm:$0xff]
    %v7741 = vld [vmem:[%s20 + $0x8] sm:$0xff]
    %v7742 = vld [vmem:[%s20 + $0x10] sm:$0xff]
    %v7743 = vld [vmem:[%s20 + $0x18] sm:$0xff]
    %v7744 = vld [vmem:[%s21] sm:$0x1]
    %v7746 = vsel %vm178, %v7739, 0
    %7748 = vmatprep.subr.mxu0 0.0
    %7749 = vmatpush1.msra.mxu0 0.0
    %7750 = vmatprep.subr.mxu0 0.0
    %7751 = vmatpush1.msra.mxu0 0.0
    %7752 = vmatprep.subr.mxu0 0.0
    %7753 = vmatpush1.msra.mxu0 0.0
    %7754 = vmatprep.subr.mxu0 0.0
    %7755 = vmatpush1.msra.mxu0 0.0
    %7756 = vmatprep.subr.mxu0 0.0
    %7757 = vmatpush1.msra.mxu0 0.0
    %7758 = vmatprep.subr.mxu0 0.0
    %7759 = vmatpush1.msra.mxu0 0.0
    %7760 = vmatprep.subr.mxu0 0.0
    %7761 = vmatpush1.msra.mxu0 0.0
    %7762 = vmatprep.subr.mxu0 0.0
    %7763 = vmatpush1.msra.mxu0 0.0
    %7764 = vmatprep.subr.mxu0 0.0
    %7765 = vmatpush1.msra.mxu0 0.0
    %7766 = vmatprep.subr.mxu0 0.0
    %7767 = vmatpush1.msra.mxu0 0.0
    %7768 = vmatprep.subr.mxu0 0.0
    %7769 = vmatpush1.msra.mxu0 0.0
    %7770 = vmatprep.subr.mxu0 0.0
    %7771 = vmatpush1.msra.mxu0 0.0
    %7772 = vmatprep.subr.mxu0 0.0
    %7773 = vmatpush1.msra.mxu0 %v7743
    %7774 = vmatprep.subr.mxu0 0.0
    %7775 = vmatpush1.msra.mxu0 %v7742
    %7776 = vmatprep.subr.mxu0 0.0
    %7777 = vmatpush1.msra.mxu0 %v7741
    %7778 = vmatprep.subr.mxu0 0.0
    %7779 = vmatpush1.msra.mxu0 %v7740
    %7780 = vmatprep.subr.mxu0 0.0
    %7781 = vmatpush2.msra.mxu0 0.0
    %7782 = vmatprep.subr.mxu0 0.0
    %7783 = vmatpush2.msra.mxu0 0.0
    %7784 = vmatprep.subr.mxu0 0.0
    %7785 = vmatpush2.msra.mxu0 0.0
    %7786 = vmatprep.subr.mxu0 0.0
    %7787 = vmatpush2.msra.mxu0 0.0
    %7788 = vmatprep.subr.mxu0 0.0
    %7789 = vmatpush2.msra.mxu0 0.0
    %7790 = vmatprep.subr.mxu0 0.0
    %7791 = vmatpush2.msra.mxu0 0.0
    %7792 = vmatprep.subr.mxu0 0.0
    %7793 = vmatpush2.msra.mxu0 0.0
    %7794 = vmatprep.subr.mxu0 0.0
    %7795 = vmatpush2.msra.mxu0 0.0
    %7796 = vmatprep.subr.mxu0 0.0
    %7797 = vmatpush2.msra.mxu0 0.0
    %7798 = vmatprep.subr.mxu0 0.0
    %7799 = vmatpush2.msra.mxu0 0.0
    %7800 = vmatprep.subr.mxu0 0.0
    %7801 = vmatpush2.msra.mxu0 0.0
    %7802 = vmatprep.subr.mxu0 0.0
    %7803 = vmatpush2.msra.mxu0 0.0
    %7804 = vmatprep.subr.mxu0 0.0
    %7805 = vmatpush2.msra.mxu0 0.0
    %7806 = vmatprep.subr.mxu0 0.0
    %7807 = vmatpush2.msra.mxu0 0.0
    %7808 = vmatprep.subr.mxu0 0.0
    %7809 = vmatpush2.msra.mxu0 0.0
    %7810 = vmatprep.subr.mxu0 0.0
    %7811 = vmatpush2.msra.mxu0 0.0
    %7812 = vmatprep.mubr.f32.mxu0 0.0
    %7813 = vmatmul.mubr.f32.gmra.mxu0 %v7746
    %v7814 = vpop.f32.mrf.mxu0
    %v7815 = vadd.f32 %v7744, %v7814
    %v7816 = vpop.f32.mrf.mxu0
    %7817 = vdwg.mxu0
    %s7818 = scalar_lea.vmem [#allocation2], 1
    %7819 = vst.msk [vmem:[%s7818] sm:$0x1] %vm3956, %v7815
    // Predicated region
    $region90: #{late_mask_vit_forward.1} parent=1 // pred_check
      _
    $region91: #{late_mask_vit_forward.1} parent=1 // pred_check_branch
      %7821 = sbr.rel (0) target = $region93
    $region92: #{late_mask_vit_forward.1} parent=1 // pred_region
      %s7823 = ssub.s32 32, 32
      %7824 = vsyncadd [#allocation3], %s7823
      %s7825 = sshll.u32 [#allocation2], 4
      %s7826 = int_to_ptr.vmem [resolvable:$true] %s7825
      %7831 = dma.vmem_to_hbm [thread:$0]  %s7826, 32, %s22, [#allocation3], 16, 16, 1
    $region93: #{late_mask_vit_forward.1} parent=1 // pred_fallthru
      _
    // Predicated region
    $region94: #{late_mask_vit_forward.1} parent=1 // pred_check
      _
    $region95: #{late_mask_vit_forward.1} parent=1 // pred_check_branch
      %7833 = sbr.rel (0) target = $region97
    $region96: #{late_mask_vit_forward.1} parent=1 // pred_region
      %7834 = dma.done [#allocation3], 32
    $region97: #{late_mask_vit_forward.1} parent=1 // pred_fallthru
      _
    %7835 = vsyncpa [#allocation3], 1

</llo_original>
